<compile_context>
chip_gen: v5e
topology: v5e:2x2
jax: 0.10.0
libtpu: 0.0.40
codegen_flags: <defaults>
</compile_context>

<pallas_src>
import numpy as np

import jax
import jax.numpy as jnp
from jax.experimental import pallas as pl
from jax.experimental.pallas import tpu as pltpu

EPS = 1e-5          # BatchNorm eps
D = 16              # small "d" for the test (module default is 128)
R = 4               # small "r" for the test (module default is 16)


# ----------------------- prep: banded lane weights ------------------------- #
def _pack_conv(w, b, stride, pad, hin, win):
    """Forward Conv2d (OIHW weight) -> (wcat, sel, bias, hout, wout)."""
    cout, cin, kh, kw = w.shape
    hout = (hin + 2 * pad - kh) // stride + 1
    wout = (win + 2 * pad - kw) // stride + 1
    nin, nout = win * cin, wout * cout
    wb = np.zeros((kh, nin, nout), np.float32)
    for ki in range(kh):
        for kj in range(kw):
            wt = w[:, :, ki, kj].T                          # (cin, cout)
            for wo in range(wout):
                wi = stride * wo - pad + kj
                if 0 <= wi < win:
                    wb[ki, wi * cin:(wi + 1) * cin, wo * cout:(wo + 1) * cout] = wt
    sel = np.zeros((kh, hout, hin), np.float32)
    for ki in range(kh):
        for ho in range(hout):
            hi = stride * ho - pad + ki
            if 0 <= hi < hin:
                sel[ki, ho, hi] = 1.0
    wcat = wb.transpose(1, 0, 2).reshape(nin, kh * nout)
    bias = np.tile(b, wout).reshape(1, nout)
    return wcat, sel, bias, hout, wout


def _pack_convT(w, b, stride, pad, hin, win):
    """ConvTranspose2d (IOHW weight) -> (wcat, sel, bias, hout, wout)."""
    cin, cout, kh, kw = w.shape
    hout = (hin - 1) * stride - 2 * pad + kh
    wout = (win - 1) * stride - 2 * pad + kw
    nin, nout = win * cin, wout * cout
    wb = np.zeros((kh, nin, nout), np.float32)
    for ki in range(kh):
        for kj in range(kw):
            wt = w[:, :, ki, kj]                            # (cin, cout)
            for wi in range(win):
                wo = stride * wi + kj - pad
                if 0 <= wo < wout:
                    wb[ki, wi * cin:(wi + 1) * cin, wo * cout:(wo + 1) * cout] = wt
    sel = np.zeros((kh, hout, hin), np.float32)
    for ki in range(kh):
        for hi in range(hin):
            ho = stride * hi + ki - pad
            if 0 <= ho < hout:
                sel[ki, ho, hi] = 1.0
    wcat = wb.transpose(1, 0, 2).reshape(nin, kh * nout)
    bias = np.tile(b, wout).reshape(1, nout)
    return wcat, sel, bias, hout, wout


def prepare_params(params, d, r, hw=32):
    P = {k: tuple(np.asarray(a, np.float32) for a in v) for k, v in params.items()}

    def fold(name, transposed):
        w, b = P[name]
        if name + "_bn" in P:
            g, beta, mean, var = P[name + "_bn"]
            s = g / np.sqrt(var + EPS)
            w = w * (s[None, :, None, None] if transposed else s[:, None, None, None])
            b = (b - mean) * s + beta
        return w, b

    weights = []
    flops = 0

    def add_spatial(wcat, sel, bias, wdtype):
        nonlocal flops
        nin, ncat = wcat.shape
        taps, hout, hin = sel.shape
        nout = bias.shape[1]
        flops += 2 * hin * nin * ncat + 2 * taps * hout * hin * nout
        weights.extend([jnp.asarray(wcat, wdtype), jnp.asarray(sel), jnp.asarray(bias)])

    H = W = hw
    # Encoder spatial convs (BN folded, bf16 banded weights).
    for name in ("Econv1", "Econv2", "Econv3"):
        w, b = fold(name, False)
        wcat, sel, bias, H, W = _pack_conv(w, b, 2, 1, H, W)
        add_spatial(wcat, sel, bias, jnp.bfloat16)

    # Econv4: 4x4 "valid" conv -> 1x1 map (row tap ki reads input row ki).
    w, b = fold("Econv4", False)
    wcat4, _, bias4, H, W = _pack_conv(w, b, 1, 0, H, W)            # -> 1x1
    weights.extend([jnp.asarray(wcat4), jnp.asarray(bias4)])
    flops += 2 * 4 * wcat4.shape[0] * wcat4.shape[1]

    # Econv5 (1x1) and deconv0 (1x1 transposed + BN) as plain matrices.
    w5, b5 = P["Econv5"]
    weights.extend([jnp.asarray(np.ascontiguousarray(w5[:, :, 0, 0].T)),
                    jnp.asarray(b5.reshape(1, -1))])
    w0, b0 = fold("deconv0", True)
    weights.extend([jnp.asarray(np.ascontiguousarray(w0[:, :, 0, 0])),
                    jnp.asarray(b0.reshape(1, -1))])

    # deconv1: 1x1 -> 4x4 map (+BN).  Output row oy == lane block oy of wcat.
    w1, b1 = fold("deconv1", True)
    wcat1, _, bias1, H, W = _pack_convT(w1, b1, 1, 0, 1, 1)         # -> 4x4
    weights.extend([jnp.asarray(wcat1), jnp.asarray(bias1)])
    flops += 2 * 8 * wcat1.shape[0] * wcat1.shape[1]

    # Decoder stride-2 transposed convs (BN folded where present, bf16).
    for name in ("deconv2", "deconv3", "deconv4"):
        w, b = fold(name, True)
        wcat, sel, bias, H, W = _pack_convT(w, b, 2, 1, H, W)
        add_spatial(wcat, sel, bias, jnp.bfloat16)

    return {"weights": tuple(weights), "r": int(r), "flops_per_image": int(flops)}


# ------------------------------ fused kernel ------------------------------- #
def _generator1_kernel(x_ref,
                       we1, s1, b1, we2, s2, b2, we3, s3, b3,
                       we4, b4, we5, b5, wd0, bd0, wd1, bd1,
                       wd2, sd2, bd2, wd3, sd3, bd3, wd4, sd4, bd4,
                       out_ref, v_ref):
    f32 = jnp.float32

    def conv(x, wcat_ref, sel_ref, bias_ref, relu=True):
        # x: (hin, nin) f32.  y = x @ [WB_0 | ... | WB_{k-1}]; per row tap ki
        # select the source rows with the tiny S_ki matrix and accumulate.
        taps, hout, hin = sel_ref.shape
        nout = bias_ref.shape[1]
        y = jnp.dot(x.astype(wcat_ref.dtype), wcat_ref[...],
                    preferred_element_type=f32)                     # (hin, taps*nout)
        acc = None
        for ki in range(taps):
            blk = jnp.dot(sel_ref[ki], y[:, ki * nout:(ki + 1) * nout],
                          preferred_element_type=f32)               # (hout, nout)
            acc = blk if acc is None else acc + blk
        acc = acc + bias_ref[...]
        return jnp.maximum(acc, 0.0) if relu else acc

    x = x_ref[0]                                                    # (32, 32) f32
    h = conv(x, we1, s1, b1)                                        # (16, 256)
    h = conv(h, we2, s2, b2)                                        # (8, 256)
    h = conv(h, we3, s3, b3)                                        # (4, 256)

    # --- bottleneck tail (kept f32) ------------------------------------ #
    dch = b4.shape[1]
    y4 = jnp.dot(h, we4[...], preferred_element_type=f32)           # (4, 4*dch)
    acc = None
    for ki in range(we4.shape[1] // dch):
        blk = y4[ki:ki + 1, ki * dch:(ki + 1) * dch]
        acc = blk if acc is None else acc + blk
    h4 = jnp.maximum(acc + b4[...], 0.0)                            # (1, dch)

    h8 = jnp.broadcast_to(h4, (8, dch))                             # MXU-friendly M
    t = jnp.tanh(jnp.dot(h8, we5[...], preferred_element_type=f32) + b5[...])
    # +/-1 quantization: identical to round((t+1)/2)*2-1 (half rounds to even).
    v8 = jnp.where(t > 0.0, 1.0, -1.0).astype(f32)                  # (8, r)
    v_ref[0] = v8[0:1, :]

    g8 = jnp.maximum(jnp.dot(v8, wd0[...], preferred_element_type=f32) + bd0[...], 0.0)
    y1 = jnp.dot(g8, wd1[...], preferred_element_type=f32)          # (8, taps*n1)
    n1 = bd1.shape[1]
    taps1 = wd1.shape[1] // n1
    ridx = jax.lax.broadcasted_iota(jnp.int32, (taps1, 1), 0)
    acc = None
    for oy in range(taps1):
        row = (ridx == oy).astype(f32) * y1[0:1, oy * n1:(oy + 1) * n1]
        acc = row if acc is None else acc + row
    g = jnp.maximum(acc + bd1[...], 0.0)                            # (4, 256)

    # --- decoder --------------------------------------------------------- #
    g = conv(g, wd2, sd2, bd2)                                      # (8, 256)
    g = conv(g, wd3, sd3, bd3)                                      # (16, 256)
    o = conv(g, wd4, sd4, bd4, relu=False)                          # (32, 32)
    out_ref[0] = o


# ------------------------------ forward pass ------------------------------- #
def generator1_forward(prep, input_nchw):
    weights = prep["weights"]
    r = prep["r"]
    B, _, H, W = input_nchw.shape
    x = input_nchw.reshape(B, H, W).astype(jnp.float32)

    in_specs = [pl.BlockSpec((1, H, W), lambda i: (i, 0, 0))]
    for a in weights:
        in_specs.append(pl.BlockSpec(a.shape, lambda i, _n=a.ndim: (0,) * _n))

    out_shape = (jax.ShapeDtypeStruct((B, H, W), jnp.float32),
                 jax.ShapeDtypeStruct((B, 1, r), jnp.float32))
    out_specs = (pl.BlockSpec((1, H, W), lambda i: (i, 0, 0)),
                 pl.BlockSpec((1, 1, r), lambda i: (i, 0, 0)))

    weight_bytes = int(sum(int(a.size) * a.dtype.itemsize for a in weights))
    cost = pl.CostEstimate(
        flops=int(B * prep["flops_per_image"]),
        transcendentals=int(B * 8 * r),
        bytes_accessed=int(weight_bytes + 2 * B * H * W * 4 + B * r * 4))

    out_img, v = pl.pallas_call(
        _generator1_kernel,
        out_shape=out_shape,
        grid=(B,),
        in_specs=in_specs,
        out_specs=out_specs,
        compiler_params=pltpu.CompilerParams(
            dimension_semantics=("parallel",),
            vmem_limit_bytes=32 * 1024 * 1024),
        cost_estimate=cost,
    )(x, *weights)
    return out_img.reshape(B, 1, H, W), v.reshape(B, r, 1, 1)


# ------------------------------- parameters -------------------------------- #
def init_params(key, d=D, r=R):
    ks = iter(jax.random.split(key, 64))

    def w_init(shape, fan_in, gain=2.0):
        return (gain / fan_in) ** 0.5 * jax.random.normal(next(ks), shape, jnp.float32)

    def bn_init(c):
        g = 1.0 + 0.2 * jax.random.normal(next(ks), (c,), jnp.float32)
        beta = 0.1 * jax.random.normal(next(ks), (c,), jnp.float32)
        m = 0.1 * jax.random.normal(next(ks), (c,), jnp.float32)
        v = 1.0 + 0.2 * jnp.abs(jax.random.normal(next(ks), (c,), jnp.float32))
        return (g, beta, m, v)

    p = {}
    p["Econv1"] = (w_init((d, 1, 4, 4), 16), jnp.zeros((d,), jnp.float32))
    p["Econv1_bn"] = bn_init(d)
    p["Econv2"] = (w_init((2 * d, d, 4, 4), d * 16), jnp.zeros((2 * d,), jnp.float32))
    p["Econv2_bn"] = bn_init(2 * d)
    p["Econv3"] = (w_init((4 * d, 2 * d, 4, 4), 2 * d * 16), jnp.zeros((4 * d,), jnp.float32))
    p["Econv3_bn"] = bn_init(4 * d)
    p["Econv4"] = (w_init((d, 4 * d, 4, 4), 4 * d * 16), jnp.zeros((d,), jnp.float32))
    p["Econv4_bn"] = bn_init(d)
    # Econv5: small weights + strong alternating bias keep |tanh| well away
    # from the +/-1 quantization boundary (robust to bf16 upstream error).
    e5_w = 0.01 * jax.random.normal(next(ks), (r, d, 1, 1), jnp.float32)
    e5_b = jnp.where(jnp.arange(r) % 2 == 0, 1.0, -1.0).astype(jnp.float32)
    p["Econv5"] = (e5_w, e5_b)
    p["deconv0"] = (w_init((r, d, 1, 1), r), jnp.zeros((d,), jnp.float32))
    p["deconv0_bn"] = bn_init(d)
    p["deconv1"] = (w_init((d, 4 * d, 4, 4), d), jnp.zeros((4 * d,), jnp.float32))
    p["deconv1_bn"] = bn_init(4 * d)
    p["deconv2"] = (w_init((4 * d, 2 * d, 4, 4), 4 * d * 4), jnp.zeros((2 * d,), jnp.float32))
    p["deconv2_bn"] = bn_init(2 * d)
    p["deconv3"] = (w_init((2 * d, d, 4, 4), 2 * d * 4), jnp.zeros((d,), jnp.float32))
    p["deconv3_bn"] = bn_init(d)
    p["deconv4"] = (w_init((d, 1, 4, 4), d * 4, gain=1.0), jnp.zeros((1,), jnp.float32))
    return p


# ---------------------------- pure-JAX reference --------------------------- #
def _bn_ref(x, bn):
    g, beta, m, v = bn
    rs = lambda a: a.reshape(1, -1, 1, 1)
    return (x - rs(m)) * (rs(g) / jnp.sqrt(rs(v) + EPS)) + rs(beta)


def reference_forward(params, inp):
    hi = jax.lax.Precision.HIGHEST

    def conv(x, w, b, s, p):
        y = jax.lax.conv_general_dilated(
            x, w, window_strides=(s, s), padding=((p, p), (p, p)),
            dimension_numbers=("NCHW", "OIHW", "NCHW"), precision=hi)
        return y + b.reshape(1, -1, 1, 1)

    def convt(x, w, b, s, p):
        k = w.shape[2]
        wf = jnp.flip(w, axis=(2, 3)).transpose(1, 0, 2, 3)
        y = jax.lax.conv_general_dilated(
            x, wf, window_strides=(1, 1),
            padding=((k - 1 - p, k - 1 - p),) * 2,
            lhs_dilation=(s, s),
            dimension_numbers=("NCHW", "OIHW", "NCHW"), precision=hi)
        return y + b.reshape(1, -1, 1, 1)

    relu = lambda a: jnp.maximum(a, 0.0)
    h = relu(_bn_ref(conv(inp, *params["Econv1"], 2, 1), params["Econv1_bn"]))
    h = relu(_bn_ref(conv(h, *params["Econv2"], 2, 1), params["Econv2_bn"]))
    h = relu(_bn_ref(conv(h, *params["Econv3"], 2, 1), params["Econv3_bn"]))
    h = relu(_bn_ref(conv(h, *params["Econv4"], 1, 0), params["Econv4_bn"]))
    t = jnp.tanh(conv(h, *params["Econv5"], 1, 0))
    v = jnp.round((t + 1.0) / 2.0) * 2.0 - 1.0
    g = relu(_bn_ref(convt(v, *params["deconv0"], 1, 0), params["deconv0_bn"]))
    g = relu(_bn_ref(convt(g, *params["deconv1"], 1, 0), params["deconv1_bn"]))
    g = relu(_bn_ref(convt(g, *params["deconv2"], 2, 1), params["deconv2_bn"]))
    g = relu(_bn_ref(convt(g, *params["deconv3"], 2, 1), params["deconv3_bn"]))
    out = convt(g, *params["deconv4"], 2, 1)
    return out, v


if __name__ == "__main__":
    key = jax.random.PRNGKey(0)
    kp, kx = jax.random.split(key)
    d, r, B = D, R, 2
    params = init_params(kp, d=d, r=r)
    prep = prepare_params(params, d, r, hw=32)

    # 32x32 input so the 4x4 valid conv at the bottleneck sees a 4x4 map.
    inp = jax.random.normal(kx, (B, 1, 32, 32), dtype=jnp.float32)

    out, v = jax.block_until_ready(
        jax.jit(lambda t: generator1_forward(prep, t))(inp))
    assert out.shape == (B, 1, 32, 32), out.shape
    assert v.shape == (B, r, 1, 1), v.shape

    out_ref, v_ref = jax.block_until_ready(
        jax.jit(lambda t: reference_forward(params, t))(inp))

    v_err = float(jnp.max(jnp.abs(v - v_ref)))
    x_err = float(jnp.max(jnp.abs(out - out_ref)))
    tol = 1e-2 + 3e-2 * float(jnp.max(jnp.abs(out_ref)))
    assert v_err < 1e-6, f"v mismatch vs reference: {v_err}"
    assert x_err < tol, f"x mismatch vs reference: {x_err} (tol {tol})"

    print("KERNEL_OK")
</pallas_src>

<mosaic_0001>
module attributes {stable_mosaic.version = 11 : i64} {
  func.func @_generator1_kernel(%arg0: i32, %arg1: memref<1x32x32xf32, #tpu.memory_space<vmem>>, %arg2: memref<32x1024xbf16, #tpu.memory_space<vmem>>, %arg3: memref<4x16x32xf32, #tpu.memory_space<vmem>>, %arg4: memref<1x256xf32, #tpu.memory_space<vmem>>, %arg5: memref<256x1024xbf16, #tpu.memory_space<vmem>>, %arg6: memref<4x8x16xf32, #tpu.memory_space<vmem>>, %arg7: memref<1x256xf32, #tpu.memory_space<vmem>>, %arg8: memref<256x1024xbf16, #tpu.memory_space<vmem>>, %arg9: memref<4x4x8xf32, #tpu.memory_space<vmem>>, %arg10: memref<1x256xf32, #tpu.memory_space<vmem>>, %arg11: memref<256x64xf32, #tpu.memory_space<vmem>>, %arg12: memref<1x16xf32, #tpu.memory_space<vmem>>, %arg13: memref<16x4xf32, #tpu.memory_space<vmem>>, %arg14: memref<1x4xf32, #tpu.memory_space<vmem>>, %arg15: memref<4x16xf32, #tpu.memory_space<vmem>>, %arg16: memref<1x16xf32, #tpu.memory_space<vmem>>, %arg17: memref<16x1024xf32, #tpu.memory_space<vmem>>, %arg18: memref<1x256xf32, #tpu.memory_space<vmem>>, %arg19: memref<256x1024xbf16, #tpu.memory_space<vmem>>, %arg20: memref<4x8x4xf32, #tpu.memory_space<vmem>>, %arg21: memref<1x256xf32, #tpu.memory_space<vmem>>, %arg22: memref<256x1024xbf16, #tpu.memory_space<vmem>>, %arg23: memref<4x16x8xf32, #tpu.memory_space<vmem>>, %arg24: memref<1x256xf32, #tpu.memory_space<vmem>>, %arg25: memref<256x128xbf16, #tpu.memory_space<vmem>>, %arg26: memref<4x32x16xf32, #tpu.memory_space<vmem>>, %arg27: memref<1x32xf32, #tpu.memory_space<vmem>>, %arg28: memref<1x32x32xf32, #tpu.memory_space<vmem>>, %arg29: memref<1x1x4xf32, #tpu.memory_space<vmem>>) attributes {dimension_semantics = [#tpu.dimension_semantics<parallel>], iteration_bounds = array<i64: 2>, scalar_prefetch = 0 : i64, scratch_operands = 0 : i64, tpu.core_type = #tpu.core_type<tc>, window_params = [{transform_indices = @transform_0, window_bounds = array<i64: 1, 32, 32>}, {pipeline_mode = #tpu.pipeline_mode<synchronous>, transform_indices = @transform_1, window_bounds = array<i64: 32, 1024>}, {pipeline_mode = #tpu.pipeline_mode<synchronous>, transform_indices = @transform_2, window_bounds = array<i64: 4, 16, 32>}, {pipeline_mode = #tpu.pipeline_mode<synchronous>, transform_indices = @transform_3, window_bounds = array<i64: 1, 256>}, {pipeline_mode = #tpu.pipeline_mode<synchronous>, transform_indices = @transform_4, window_bounds = array<i64: 256, 1024>}, {pipeline_mode = #tpu.pipeline_mode<synchronous>, transform_indices = @transform_5, window_bounds = array<i64: 4, 8, 16>}, {pipeline_mode = #tpu.pipeline_mode<synchronous>, transform_indices = @transform_6, window_bounds = array<i64: 1, 256>}, {pipeline_mode = #tpu.pipeline_mode<synchronous>, transform_indices = @transform_7, window_bounds = array<i64: 256, 1024>}, {pipeline_mode = #tpu.pipeline_mode<synchronous>, transform_indices = @transform_8, window_bounds = array<i64: 4, 4, 8>}, {pipeline_mode = #tpu.pipeline_mode<synchronous>, transform_indices = @transform_9, window_bounds = array<i64: 1, 256>}, {pipeline_mode = #tpu.pipeline_mode<synchronous>, transform_indices = @transform_10, window_bounds = array<i64: 256, 64>}, {pipeline_mode = #tpu.pipeline_mode<synchronous>, transform_indices = @transform_11, window_bounds = array<i64: 1, 16>}, {pipeline_mode = #tpu.pipeline_mode<synchronous>, transform_indices = @transform_12, window_bounds = array<i64: 16, 4>}, {pipeline_mode = #tpu.pipeline_mode<synchronous>, transform_indices = @transform_13, window_bounds = array<i64: 1, 4>}, {pipeline_mode = #tpu.pipeline_mode<synchronous>, transform_indices = @transform_14, window_bounds = array<i64: 4, 16>}, {pipeline_mode = #tpu.pipeline_mode<synchronous>, transform_indices = @transform_15, window_bounds = array<i64: 1, 16>}, {pipeline_mode = #tpu.pipeline_mode<synchronous>, transform_indices = @transform_16, window_bounds = array<i64: 16, 1024>}, {pipeline_mode = #tpu.pipeline_mode<synchronous>, transform_indices = @transform_17, window_bounds = array<i64: 1, 256>}, {pipeline_mode = #tpu.pipeline_mode<synchronous>, transform_indices = @transform_18, window_bounds = array<i64: 256, 1024>}, {pipeline_mode = #tpu.pipeline_mode<synchronous>, transform_indices = @transform_19, window_bounds = array<i64: 4, 8, 4>}, {pipeline_mode = #tpu.pipeline_mode<synchronous>, transform_indices = @transform_20, window_bounds = array<i64: 1, 256>}, {pipeline_mode = #tpu.pipeline_mode<synchronous>, transform_indices = @transform_21, window_bounds = array<i64: 256, 1024>}, {pipeline_mode = #tpu.pipeline_mode<synchronous>, transform_indices = @transform_22, window_bounds = array<i64: 4, 16, 8>}, {pipeline_mode = #tpu.pipeline_mode<synchronous>, transform_indices = @transform_23, window_bounds = array<i64: 1, 256>}, {pipeline_mode = #tpu.pipeline_mode<synchronous>, transform_indices = @transform_24, window_bounds = array<i64: 256, 128>}, {pipeline_mode = #tpu.pipeline_mode<synchronous>, transform_indices = @transform_25, window_bounds = array<i64: 4, 32, 16>}, {pipeline_mode = #tpu.pipeline_mode<synchronous>, transform_indices = @transform_26, window_bounds = array<i64: 1, 32>}, {transform_indices = @transform_27, window_bounds = array<i64: 1, 32, 32>}, {transform_indices = @transform_28, window_bounds = array<i64: 1, 1, 4>}]} {
    %c0 = arith.constant 0 : index
    %c0_0 = arith.constant 0 : index
    %c0_1 = arith.constant 0 : index
    %0 = vector.load %arg1[%c0, %c0_0, %c0_1] : memref<1x32x32xf32, #tpu.memory_space<vmem>>, vector<1x32x32xf32>
    %1 = vector.shape_cast %0 : vector<1x32x32xf32> to vector<32x32xf32>
    %2 = arith.truncf %1 : vector<32x32xf32> to vector<32x32xbf16>
    %c0_2 = arith.constant 0 : index
    %c0_3 = arith.constant 0 : index
    %3 = vector.load %arg2[%c0_2, %c0_3] : memref<32x1024xbf16, #tpu.memory_space<vmem>>, vector<32x1024xbf16>
    %cst = arith.constant dense<0.000000e+00> : vector<32x1024xf32>
    %4 = tpu.matmul %2, %3, %cst {dimension_numbers = #tpu.dot_dimension_numbers<[1], [0], [0], [1], [0, 0, 1, 1], [], []>} : vector<32x32xbf16>, vector<32x1024xbf16>, vector<32x1024xf32> -> vector<32x1024xf32>
    %c0_4 = arith.constant 0 : index
    %c0_5 = arith.constant 0 : index
    %c0_6 = arith.constant 0 : index
    %5 = vector.load %arg3[%c0_4, %c0_5, %c0_6] : memref<4x16x32xf32, #tpu.memory_space<vmem>>, vector<1x16x32xf32>
    %6 = vector.shape_cast %5 : vector<1x16x32xf32> to vector<16x32xf32>
    %7 = vector.extract_strided_slice %4 {offsets = [0, 0], sizes = [32, 256], strides = [1, 1]} : vector<32x1024xf32> to vector<32x256xf32>
    %cst_7 = arith.constant dense<0.000000e+00> : vector<16x256xf32>
    %8 = tpu.matmul %6, %7, %cst_7 {dimension_numbers = #tpu.dot_dimension_numbers<[1], [0], [0], [1], [0, 0, 1, 1], [], []>} : vector<16x32xf32>, vector<32x256xf32>, vector<16x256xf32> -> vector<16x256xf32>
    %c1 = arith.constant 1 : index
    %c0_8 = arith.constant 0 : index
    %c0_9 = arith.constant 0 : index
    %9 = vector.load %arg3[%c1, %c0_8, %c0_9] : memref<4x16x32xf32, #tpu.memory_space<vmem>>, vector<1x16x32xf32>
    %10 = vector.shape_cast %9 : vector<1x16x32xf32> to vector<16x32xf32>
    %11 = vector.extract_strided_slice %4 {offsets = [0, 256], sizes = [32, 256], strides = [1, 1]} : vector<32x1024xf32> to vector<32x256xf32>
    %cst_10 = arith.constant dense<0.000000e+00> : vector<16x256xf32>
    %12 = tpu.matmul %10, %11, %cst_10 {dimension_numbers = #tpu.dot_dimension_numbers<[1], [0], [0], [1], [0, 0, 1, 1], [], []>} : vector<16x32xf32>, vector<32x256xf32>, vector<16x256xf32> -> vector<16x256xf32>
    %13 = arith.addf %8, %12 : vector<16x256xf32>
    %c2 = arith.constant 2 : index
    %c0_11 = arith.constant 0 : index
    %c0_12 = arith.constant 0 : index
    %14 = vector.load %arg3[%c2, %c0_11, %c0_12] : memref<4x16x32xf32, #tpu.memory_space<vmem>>, vector<1x16x32xf32>
    %15 = vector.shape_cast %14 : vector<1x16x32xf32> to vector<16x32xf32>
    %16 = vector.extract_strided_slice %4 {offsets = [0, 512], sizes = [32, 256], strides = [1, 1]} : vector<32x1024xf32> to vector<32x256xf32>
    %cst_13 = arith.constant dense<0.000000e+00> : vector<16x256xf32>
    %17 = tpu.matmul %15, %16, %cst_13 {dimension_numbers = #tpu.dot_dimension_numbers<[1], [0], [0], [1], [0, 0, 1, 1], [], []>} : vector<16x32xf32>, vector<32x256xf32>, vector<16x256xf32> -> vector<16x256xf32>
    %18 = arith.addf %13, %17 : vector<16x256xf32>
    %c3 = arith.constant 3 : index
    %c0_14 = arith.constant 0 : index
    %c0_15 = arith.constant 0 : index
    %19 = vector.load %arg3[%c3, %c0_14, %c0_15] : memref<4x16x32xf32, #tpu.memory_space<vmem>>, vector<1x16x32xf32>
    %20 = vector.shape_cast %19 : vector<1x16x32xf32> to vector<16x32xf32>
    %21 = vector.extract_strided_slice %4 {offsets = [0, 768], sizes = [32, 256], strides = [1, 1]} : vector<32x1024xf32> to vector<32x256xf32>
    %cst_16 = arith.constant dense<0.000000e+00> : vector<16x256xf32>
    %22 = tpu.matmul %20, %21, %cst_16 {dimension_numbers = #tpu.dot_dimension_numbers<[1], [0], [0], [1], [0, 0, 1, 1], [], []>} : vector<16x32xf32>, vector<32x256xf32>, vector<16x256xf32> -> vector<16x256xf32>
    %23 = arith.addf %18, %22 : vector<16x256xf32>
    %c0_17 = arith.constant 0 : index
    %c0_18 = arith.constant 0 : index
    %24 = vector.load %arg4[%c0_17, %c0_18] : memref<1x256xf32, #tpu.memory_space<vmem>>, vector<1x256xf32>
    %25 = vector.broadcast %24 : vector<1x256xf32> to vector<16x256xf32>
    %26 = arith.addf %23, %25 : vector<16x256xf32>
    %cst_19 = arith.constant 0.000000e+00 : f32
    %27 = vector.broadcast %cst_19 : f32 to vector<16x256xf32>
    %28 = arith.maximumf %26, %27 : vector<16x256xf32>
    %29 = arith.truncf %28 : vector<16x256xf32> to vector<16x256xbf16>
    %c0_20 = arith.constant 0 : index
    %c0_21 = arith.constant 0 : index
    %30 = vector.load %arg5[%c0_20, %c0_21] : memref<256x1024xbf16, #tpu.memory_space<vmem>>, vector<256x1024xbf16>
    %cst_22 = arith.constant dense<0.000000e+00> : vector<16x1024xf32>
    %31 = tpu.matmul %29, %30, %cst_22 {dimension_numbers = #tpu.dot_dimension_numbers<[1], [0], [0], [1], [0, 0, 1, 1], [], []>} : vector<16x256xbf16>, vector<256x1024xbf16>, vector<16x1024xf32> -> vector<16x1024xf32>
    %c0_23 = arith.constant 0 : index
    %c0_24 = arith.constant 0 : index
    %c0_25 = arith.constant 0 : index
    %32 = vector.load %arg6[%c0_23, %c0_24, %c0_25] : memref<4x8x16xf32, #tpu.memory_space<vmem>>, vector<1x8x16xf32>
    %33 = vector.shape_cast %32 : vector<1x8x16xf32> to vector<8x16xf32>
    %34 = vector.extract_strided_slice %31 {offsets = [0, 0], sizes = [16, 256], strides = [1, 1]} : vector<16x1024xf32> to vector<16x256xf32>
    %cst_26 = arith.constant dense<0.000000e+00> : vector<8x256xf32>
    %35 = tpu.matmul %33, %34, %cst_26 {dimension_numbers = #tpu.dot_dimension_numbers<[1], [0], [0], [1], [0, 0, 1, 1], [], []>} : vector<8x16xf32>, vector<16x256xf32>, vector<8x256xf32> -> vector<8x256xf32>
    %c1_27 = arith.constant 1 : index
    %c0_28 = arith.constant 0 : index
    %c0_29 = arith.constant 0 : index
    %36 = vector.load %arg6[%c1_27, %c0_28, %c0_29] : memref<4x8x16xf32, #tpu.memory_space<vmem>>, vector<1x8x16xf32>
    %37 = vector.shape_cast %36 : vector<1x8x16xf32> to vector<8x16xf32>
    %38 = vector.extract_strided_slice %31 {offsets = [0, 256], sizes = [16, 256], strides = [1, 1]} : vector<16x1024xf32> to vector<16x256xf32>
    %cst_30 = arith.constant dense<0.000000e+00> : vector<8x256xf32>
    %39 = tpu.matmul %37, %38, %cst_30 {dimension_numbers = #tpu.dot_dimension_numbers<[1], [0], [0], [1], [0, 0, 1, 1], [], []>} : vector<8x16xf32>, vector<16x256xf32>, vector<8x256xf32> -> vector<8x256xf32>
    %40 = arith.addf %35, %39 : vector<8x256xf32>
    %c2_31 = arith.constant 2 : index
    %c0_32 = arith.constant 0 : index
    %c0_33 = arith.constant 0 : index
    %41 = vector.load %arg6[%c2_31, %c0_32, %c0_33] : memref<4x8x16xf32, #tpu.memory_space<vmem>>, vector<1x8x16xf32>
    %42 = vector.shape_cast %41 : vector<1x8x16xf32> to vector<8x16xf32>
    %43 = vector.extract_strided_slice %31 {offsets = [0, 512], sizes = [16, 256], strides = [1, 1]} : vector<16x1024xf32> to vector<16x256xf32>
    %cst_34 = arith.constant dense<0.000000e+00> : vector<8x256xf32>
    %44 = tpu.matmul %42, %43, %cst_34 {dimension_numbers = #tpu.dot_dimension_numbers<[1], [0], [0], [1], [0, 0, 1, 1], [], []>} : vector<8x16xf32>, vector<16x256xf32>, vector<8x256xf32> -> vector<8x256xf32>
    %45 = arith.addf %40, %44 : vector<8x256xf32>
    %c3_35 = arith.constant 3 : index
    %c0_36 = arith.constant 0 : index
    %c0_37 = arith.constant 0 : index
    %46 = vector.load %arg6[%c3_35, %c0_36, %c0_37] : memref<4x8x16xf32, #tpu.memory_space<vmem>>, vector<1x8x16xf32>
    %47 = vector.shape_cast %46 : vector<1x8x16xf32> to vector<8x16xf32>
    %48 = vector.extract_strided_slice %31 {offsets = [0, 768], sizes = [16, 256], strides = [1, 1]} : vector<16x1024xf32> to vector<16x256xf32>
    %cst_38 = arith.constant dense<0.000000e+00> : vector<8x256xf32>
    %49 = tpu.matmul %47, %48, %cst_38 {dimension_numbers = #tpu.dot_dimension_numbers<[1], [0], [0], [1], [0, 0, 1, 1], [], []>} : vector<8x16xf32>, vector<16x256xf32>, vector<8x256xf32> -> vector<8x256xf32>
    %50 = arith.addf %45, %49 : vector<8x256xf32>
    %c0_39 = arith.constant 0 : index
    %c0_40 = arith.constant 0 : index
    %51 = vector.load %arg7[%c0_39, %c0_40] : memref<1x256xf32, #tpu.memory_space<vmem>>, vector<1x256xf32>
    %52 = vector.broadcast %51 : vector<1x256xf32> to vector<8x256xf32>
    %53 = arith.addf %50, %52 : vector<8x256xf32>
    %cst_41 = arith.constant 0.000000e+00 : f32
    %54 = vector.broadcast %cst_41 : f32 to vector<8x256xf32>
    %55 = arith.maximumf %53, %54 : vector<8x256xf32>
    %56 = arith.truncf %55 : vector<8x256xf32> to vector<8x256xbf16>
    %c0_42 = arith.constant 0 : index
    %c0_43 = arith.constant 0 : index
    %57 = vector.load %arg8[%c0_42, %c0_43] : memref<256x1024xbf16, #tpu.memory_space<vmem>>, vector<256x1024xbf16>
    %cst_44 = arith.constant dense<0.000000e+00> : vector<8x1024xf32>
    %58 = tpu.matmul %56, %57, %cst_44 {dimension_numbers = #tpu.dot_dimension_numbers<[1], [0], [0], [1], [0, 0, 1, 1], [], []>} : vector<8x256xbf16>, vector<256x1024xbf16>, vector<8x1024xf32> -> vector<8x1024xf32>
    %c0_45 = arith.constant 0 : index
    %c0_46 = arith.constant 0 : index
    %c0_47 = arith.constant 0 : index
    %59 = vector.load %arg9[%c0_45, %c0_46, %c0_47] : memref<4x4x8xf32, #tpu.memory_space<vmem>>, vector<1x4x8xf32>
    %60 = vector.shape_cast %59 : vector<1x4x8xf32> to vector<4x8xf32>
    %61 = vector.extract_strided_slice %58 {offsets = [0, 0], sizes = [8, 256], strides = [1, 1]} : vector<8x1024xf32> to vector<8x256xf32>
    %cst_48 = arith.constant dense<0.000000e+00> : vector<4x256xf32>
    %62 = tpu.matmul %60, %61, %cst_48 {dimension_numbers = #tpu.dot_dimension_numbers<[1], [0], [0], [1], [0, 0, 1, 1], [], []>} : vector<4x8xf32>, vector<8x256xf32>, vector<4x256xf32> -> vector<4x256xf32>
    %c1_49 = arith.constant 1 : index
    %c0_50 = arith.constant 0 : index
    %c0_51 = arith.constant 0 : index
    %63 = vector.load %arg9[%c1_49, %c0_50, %c0_51] : memref<4x4x8xf32, #tpu.memory_space<vmem>>, vector<1x4x8xf32>
    %64 = vector.shape_cast %63 : vector<1x4x8xf32> to vector<4x8xf32>
    %65 = vector.extract_strided_slice %58 {offsets = [0, 256], sizes = [8, 256], strides = [1, 1]} : vector<8x1024xf32> to vector<8x256xf32>
    %cst_52 = arith.constant dense<0.000000e+00> : vector<4x256xf32>
    %66 = tpu.matmul %64, %65, %cst_52 {dimension_numbers = #tpu.dot_dimension_numbers<[1], [0], [0], [1], [0, 0, 1, 1], [], []>} : vector<4x8xf32>, vector<8x256xf32>, vector<4x256xf32> -> vector<4x256xf32>
    %67 = arith.addf %62, %66 : vector<4x256xf32>
    %c2_53 = arith.constant 2 : index
    %c0_54 = arith.constant 0 : index
    %c0_55 = arith.constant 0 : index
    %68 = vector.load %arg9[%c2_53, %c0_54, %c0_55] : memref<4x4x8xf32, #tpu.memory_space<vmem>>, vector<1x4x8xf32>
    %69 = vector.shape_cast %68 : vector<1x4x8xf32> to vector<4x8xf32>
    %70 = vector.extract_strided_slice %58 {offsets = [0, 512], sizes = [8, 256], strides = [1, 1]} : vector<8x1024xf32> to vector<8x256xf32>
    %cst_56 = arith.constant dense<0.000000e+00> : vector<4x256xf32>
    %71 = tpu.matmul %69, %70, %cst_56 {dimension_numbers = #tpu.dot_dimension_numbers<[1], [0], [0], [1], [0, 0, 1, 1], [], []>} : vector<4x8xf32>, vector<8x256xf32>, vector<4x256xf32> -> vector<4x256xf32>
    %72 = arith.addf %67, %71 : vector<4x256xf32>
    %c3_57 = arith.constant 3 : index
    %c0_58 = arith.constant 0 : index
    %c0_59 = arith.constant 0 : index
    %73 = vector.load %arg9[%c3_57, %c0_58, %c0_59] : memref<4x4x8xf32, #tpu.memory_space<vmem>>, vector<1x4x8xf32>
    %74 = vector.shape_cast %73 : vector<1x4x8xf32> to vector<4x8xf32>
    %75 = vector.extract_strided_slice %58 {offsets = [0, 768], sizes = [8, 256], strides = [1, 1]} : vector<8x1024xf32> to vector<8x256xf32>
    %cst_60 = arith.constant dense<0.000000e+00> : vector<4x256xf32>
    %76 = tpu.matmul %74, %75, %cst_60 {dimension_numbers = #tpu.dot_dimension_numbers<[1], [0], [0], [1], [0, 0, 1, 1], [], []>} : vector<4x8xf32>, vector<8x256xf32>, vector<4x256xf32> -> vector<4x256xf32>
    %77 = arith.addf %72, %76 : vector<4x256xf32>
    %c0_61 = arith.constant 0 : index
    %c0_62 = arith.constant 0 : index
    %78 = vector.load %arg10[%c0_61, %c0_62] : memref<1x256xf32, #tpu.memory_space<vmem>>, vector<1x256xf32>
    %79 = vector.broadcast %78 : vector<1x256xf32> to vector<4x256xf32>
    %80 = arith.addf %77, %79 : vector<4x256xf32>
    %cst_63 = arith.constant 0.000000e+00 : f32
    %81 = vector.broadcast %cst_63 : f32 to vector<4x256xf32>
    %82 = arith.maximumf %80, %81 : vector<4x256xf32>
    %c0_64 = arith.constant 0 : index
    %c0_65 = arith.constant 0 : index
    %83 = vector.load %arg11[%c0_64, %c0_65] : memref<256x64xf32, #tpu.memory_space<vmem>>, vector<256x64xf32>
    %cst_66 = arith.constant dense<0.000000e+00> : vector<4x64xf32>
    %84 = tpu.matmul %82, %83, %cst_66 {dimension_numbers = #tpu.dot_dimension_numbers<[1], [0], [0], [1], [0, 0, 1, 1], [], []>} : vector<4x256xf32>, vector<256x64xf32>, vector<4x64xf32> -> vector<4x64xf32>
    %85 = vector.extract_strided_slice %84 {offsets = [0, 0], sizes = [1, 16], strides = [1, 1]} : vector<4x64xf32> to vector<1x16xf32>
    %86 = vector.extract_strided_slice %84 {offsets = [1, 16], sizes = [1, 16], strides = [1, 1]} : vector<4x64xf32> to vector<1x16xf32>
    %87 = arith.addf %85, %86 : vector<1x16xf32>
    %88 = vector.extract_strided_slice %84 {offsets = [2, 32], sizes = [1, 16], strides = [1, 1]} : vector<4x64xf32> to vector<1x16xf32>
    %89 = arith.addf %87, %88 : vector<1x16xf32>
    %90 = vector.extract_strided_slice %84 {offsets = [3, 48], sizes = [1, 16], strides = [1, 1]} : vector<4x64xf32> to vector<1x16xf32>
    %91 = arith.addf %89, %90 : vector<1x16xf32>
    %c0_67 = arith.constant 0 : index
    %c0_68 = arith.constant 0 : index
    %92 = vector.load %arg12[%c0_67, %c0_68] : memref<1x16xf32, #tpu.memory_space<vmem>>, vector<1x16xf32>
    %93 = arith.addf %91, %92 : vector<1x16xf32>
    %cst_69 = arith.constant 0.000000e+00 : f32
    %94 = vector.broadcast %cst_69 : f32 to vector<1x16xf32>
    %95 = arith.maximumf %93, %94 : vector<1x16xf32>
    %96 = vector.shape_cast %95 : vector<1x16xf32> to vector<1x16xf32>
    %97 = vector.broadcast %96 : vector<1x16xf32> to vector<8x16xf32>
    %c0_70 = arith.constant 0 : index
    %c0_71 = arith.constant 0 : index
    %98 = vector.load %arg13[%c0_70, %c0_71] : memref<16x4xf32, #tpu.memory_space<vmem>>, vector<16x4xf32>
    %cst_72 = arith.constant dense<0.000000e+00> : vector<8x4xf32>
    %99 = tpu.matmul %97, %98, %cst_72 {dimension_numbers = #tpu.dot_dimension_numbers<[1], [0], [0], [1], [0, 0, 1, 1], [], []>} : vector<8x16xf32>, vector<16x4xf32>, vector<8x4xf32> -> vector<8x4xf32>
    %c0_73 = arith.constant 0 : index
    %c0_74 = arith.constant 0 : index
    %100 = vector.load %arg14[%c0_73, %c0_74] : memref<1x4xf32, #tpu.memory_space<vmem>>, vector<1x4xf32>
    %101 = vector.broadcast %100 : vector<1x4xf32> to vector<8x4xf32>
    %102 = arith.addf %99, %101 : vector<8x4xf32>
    %103 = math.tanh %102 : vector<8x4xf32>
    %cst_75 = arith.constant 0.000000e+00 : f32
    %104 = vector.broadcast %cst_75 : f32 to vector<8x4xf32>
    %105 = arith.cmpf ogt, %103, %104 : vector<8x4xf32>
    %cst_76 = arith.constant 1.000000e+00 : f32
    %cst_77 = arith.constant -1.000000e+00 : f32
    %106 = vector.broadcast %cst_76 : f32 to vector<8x4xf32>
    %107 = vector.broadcast %cst_77 : f32 to vector<8x4xf32>
    %108 = arith.select %105, %106, %107 : vector<8x4xi1>, vector<8x4xf32>
    %109 = vector.extract_strided_slice %108 {offsets = [0, 0], sizes = [1, 4], strides = [1, 1]} : vector<8x4xf32> to vector<1x4xf32>
    %c0_78 = arith.constant 0 : index
    %c0_79 = arith.constant 0 : index
    %c0_80 = arith.constant 0 : index
    %110 = vector.load %arg29[%c0_78, %c0_79, %c0_80] : memref<1x1x4xf32, #tpu.memory_space<vmem>>, vector<1x1x4xf32>
    %111 = vector.shape_cast %110 : vector<1x1x4xf32> to vector<1x4xf32>
    %112 = vector.shape_cast %109 : vector<1x4xf32> to vector<1x1x4xf32>
    tpu.vector_store %arg29[%c0_78, %c0_79, %c0_80], %112 {strides = array<i32>} : memref<1x1x4xf32, #tpu.memory_space<vmem>>, vector<1x1x4xf32>,
    %c0_81 = arith.constant 0 : index
    %c0_82 = arith.constant 0 : index
    %113 = vector.load %arg15[%c0_81, %c0_82] : memref<4x16xf32, #tpu.memory_space<vmem>>, vector<4x16xf32>
    %cst_83 = arith.constant dense<0.000000e+00> : vector<8x16xf32>
    %114 = tpu.matmul %108, %113, %cst_83 {dimension_numbers = #tpu.dot_dimension_numbers<[1], [0], [0], [1], [0, 0, 1, 1], [], []>} : vector<8x4xf32>, vector<4x16xf32>, vector<8x16xf32> -> vector<8x16xf32>
    %c0_84 = arith.constant 0 : index
    %c0_85 = arith.constant 0 : index
    %115 = vector.load %arg16[%c0_84, %c0_85] : memref<1x16xf32, #tpu.memory_space<vmem>>, vector<1x16xf32>
    %116 = vector.broadcast %115 : vector<1x16xf32> to vector<8x16xf32>
    %117 = arith.addf %114, %116 : vector<8x16xf32>
    %cst_86 = arith.constant 0.000000e+00 : f32
    %118 = vector.broadcast %cst_86 : f32 to vector<8x16xf32>
    %119 = arith.maximumf %117, %118 : vector<8x16xf32>
    %c0_87 = arith.constant 0 : index
    %c0_88 = arith.constant 0 : index
    %120 = vector.load %arg17[%c0_87, %c0_88] : memref<16x1024xf32, #tpu.memory_space<vmem>>, vector<16x1024xf32>
    %cst_89 = arith.constant dense<0.000000e+00> : vector<8x1024xf32>
    %121 = tpu.matmul %119, %120, %cst_89 {dimension_numbers = #tpu.dot_dimension_numbers<[1], [0], [0], [1], [0, 0, 1, 1], [], []>} : vector<8x16xf32>, vector<16x1024xf32>, vector<8x1024xf32> -> vector<8x1024xf32>
    %122 = tpu.iota {dimensions = array<i32: 0>} : vector<4x1xi32>
    %c0_i32 = arith.constant 0 : i32
    %123 = vector.broadcast %c0_i32 : i32 to vector<4x1xi32>
    %124 = arith.cmpi eq, %122, %123 : vector<4x1xi32>
    %125 = arith.extui %124 : vector<4x1xi1> to vector<4x1xi32>
    %126 = arith.sitofp %125 : vector<4x1xi32> to vector<4x1xf32>
    %127 = vector.extract_strided_slice %121 {offsets = [0, 0], sizes = [1, 256], strides = [1, 1]} : vector<8x1024xf32> to vector<1x256xf32>
    %128 = vector.broadcast %126 : vector<4x1xf32> to vector<4x256xf32>
    %129 = vector.broadcast %127 : vector<1x256xf32> to vector<4x256xf32>
    %130 = arith.mulf %128, %129 : vector<4x256xf32>
    %c1_i32 = arith.constant 1 : i32
    %131 = vector.broadcast %c1_i32 : i32 to vector<4x1xi32>
    %132 = arith.cmpi eq, %122, %131 : vector<4x1xi32>
    %133 = arith.extui %132 : vector<4x1xi1> to vector<4x1xi32>
    %134 = arith.sitofp %133 : vector<4x1xi32> to vector<4x1xf32>
    %135 = vector.extract_strided_slice %121 {offsets = [0, 256], sizes = [1, 256], strides = [1, 1]} : vector<8x1024xf32> to vector<1x256xf32>
    %136 = vector.broadcast %134 : vector<4x1xf32> to vector<4x256xf32>
    %137 = vector.broadcast %135 : vector<1x256xf32> to vector<4x256xf32>
    %138 = arith.mulf %136, %137 : vector<4x256xf32>
    %139 = arith.addf %130, %138 : vector<4x256xf32>
    %c2_i32 = arith.constant 2 : i32
    %140 = vector.broadcast %c2_i32 : i32 to vector<4x1xi32>
    %141 = arith.cmpi eq, %122, %140 : vector<4x1xi32>
    %142 = arith.extui %141 : vector<4x1xi1> to vector<4x1xi32>
    %143 = arith.sitofp %142 : vector<4x1xi32> to vector<4x1xf32>
    %144 = vector.extract_strided_slice %121 {offsets = [0, 512], sizes = [1, 256], strides = [1, 1]} : vector<8x1024xf32> to vector<1x256xf32>
    %145 = vector.broadcast %143 : vector<4x1xf32> to vector<4x256xf32>
    %146 = vector.broadcast %144 : vector<1x256xf32> to vector<4x256xf32>
    %147 = arith.mulf %145, %146 : vector<4x256xf32>
    %148 = arith.addf %139, %147 : vector<4x256xf32>
    %c3_i32 = arith.constant 3 : i32
    %149 = vector.broadcast %c3_i32 : i32 to vector<4x1xi32>
    %150 = arith.cmpi eq, %122, %149 : vector<4x1xi32>
    %151 = arith.extui %150 : vector<4x1xi1> to vector<4x1xi32>
    %152 = arith.sitofp %151 : vector<4x1xi32> to vector<4x1xf32>
    %153 = vector.extract_strided_slice %121 {offsets = [0, 768], sizes = [1, 256], strides = [1, 1]} : vector<8x1024xf32> to vector<1x256xf32>
    %154 = vector.broadcast %152 : vector<4x1xf32> to vector<4x256xf32>
    %155 = vector.broadcast %153 : vector<1x256xf32> to vector<4x256xf32>
    %156 = arith.mulf %154, %155 : vector<4x256xf32>
    %157 = arith.addf %148, %156 : vector<4x256xf32>
    %c0_90 = arith.constant 0 : index
    %c0_91 = arith.constant 0 : index
    %158 = vector.load %arg18[%c0_90, %c0_91] : memref<1x256xf32, #tpu.memory_space<vmem>>, vector<1x256xf32>
    %159 = vector.broadcast %158 : vector<1x256xf32> to vector<4x256xf32>
    %160 = arith.addf %157, %159 : vector<4x256xf32>
    %cst_92 = arith.constant 0.000000e+00 : f32
    %161 = vector.broadcast %cst_92 : f32 to vector<4x256xf32>
    %162 = arith.maximumf %160, %161 : vector<4x256xf32>
    %163 = arith.truncf %162 : vector<4x256xf32> to vector<4x256xbf16>
    %c0_93 = arith.constant 0 : index
    %c0_94 = arith.constant 0 : index
    %164 = vector.load %arg19[%c0_93, %c0_94] : memref<256x1024xbf16, #tpu.memory_space<vmem>>, vector<256x1024xbf16>
    %cst_95 = arith.constant dense<0.000000e+00> : vector<4x1024xf32>
    %165 = tpu.matmul %163, %164, %cst_95 {dimension_numbers = #tpu.dot_dimension_numbers<[1], [0], [0], [1], [0, 0, 1, 1], [], []>} : vector<4x256xbf16>, vector<256x1024xbf16>, vector<4x1024xf32> -> vector<4x1024xf32>
    %c0_96 = arith.constant 0 : index
    %c0_97 = arith.constant 0 : index
    %c0_98 = arith.constant 0 : index
    %166 = vector.load %arg20[%c0_96, %c0_97, %c0_98] : memref<4x8x4xf32, #tpu.memory_space<vmem>>, vector<1x8x4xf32>
    %167 = vector.shape_cast %166 : vector<1x8x4xf32> to vector<8x4xf32>
    %168 = vector.extract_strided_slice %165 {offsets = [0, 0], sizes = [4, 256], strides = [1, 1]} : vector<4x1024xf32> to vector<4x256xf32>
    %cst_99 = arith.constant dense<0.000000e+00> : vector<8x256xf32>
    %169 = tpu.matmul %167, %168, %cst_99 {dimension_numbers = #tpu.dot_dimension_numbers<[1], [0], [0], [1], [0, 0, 1, 1], [], []>} : vector<8x4xf32>, vector<4x256xf32>, vector<8x256xf32> -> vector<8x256xf32>
    %c1_100 = arith.constant 1 : index
    %c0_101 = arith.constant 0 : index
    %c0_102 = arith.constant 0 : index
    %170 = vector.load %arg20[%c1_100, %c0_101, %c0_102] : memref<4x8x4xf32, #tpu.memory_space<vmem>>, vector<1x8x4xf32>
    %171 = vector.shape_cast %170 : vector<1x8x4xf32> to vector<8x4xf32>
    %172 = vector.extract_strided_slice %165 {offsets = [0, 256], sizes = [4, 256], strides = [1, 1]} : vector<4x1024xf32> to vector<4x256xf32>
    %cst_103 = arith.constant dense<0.000000e+00> : vector<8x256xf32>
    %173 = tpu.matmul %171, %172, %cst_103 {dimension_numbers = #tpu.dot_dimension_numbers<[1], [0], [0], [1], [0, 0, 1, 1], [], []>} : vector<8x4xf32>, vector<4x256xf32>, vector<8x256xf32> -> vector<8x256xf32>
    %174 = arith.addf %169, %173 : vector<8x256xf32>
    %c2_104 = arith.constant 2 : index
    %c0_105 = arith.constant 0 : index
    %c0_106 = arith.constant 0 : index
    %175 = vector.load %arg20[%c2_104, %c0_105, %c0_106] : memref<4x8x4xf32, #tpu.memory_space<vmem>>, vector<1x8x4xf32>
    %176 = vector.shape_cast %175 : vector<1x8x4xf32> to vector<8x4xf32>
    %177 = vector.extract_strided_slice %165 {offsets = [0, 512], sizes = [4, 256], strides = [1, 1]} : vector<4x1024xf32> to vector<4x256xf32>
    %cst_107 = arith.constant dense<0.000000e+00> : vector<8x256xf32>
    %178 = tpu.matmul %176, %177, %cst_107 {dimension_numbers = #tpu.dot_dimension_numbers<[1], [0], [0], [1], [0, 0, 1, 1], [], []>} : vector<8x4xf32>, vector<4x256xf32>, vector<8x256xf32> -> vector<8x256xf32>
    %179 = arith.addf %174, %178 : vector<8x256xf32>
    %c3_108 = arith.constant 3 : index
    %c0_109 = arith.constant 0 : index
    %c0_110 = arith.constant 0 : index
    %180 = vector.load %arg20[%c3_108, %c0_109, %c0_110] : memref<4x8x4xf32, #tpu.memory_space<vmem>>, vector<1x8x4xf32>
    %181 = vector.shape_cast %180 : vector<1x8x4xf32> to vector<8x4xf32>
    %182 = vector.extract_strided_slice %165 {offsets = [0, 768], sizes = [4, 256], strides = [1, 1]} : vector<4x1024xf32> to vector<4x256xf32>
    %cst_111 = arith.constant dense<0.000000e+00> : vector<8x256xf32>
    %183 = tpu.matmul %181, %182, %cst_111 {dimension_numbers = #tpu.dot_dimension_numbers<[1], [0], [0], [1], [0, 0, 1, 1], [], []>} : vector<8x4xf32>, vector<4x256xf32>, vector<8x256xf32> -> vector<8x256xf32>
    %184 = arith.addf %179, %183 : vector<8x256xf32>
    %c0_112 = arith.constant 0 : index
    %c0_113 = arith.constant 0 : index
    %185 = vector.load %arg21[%c0_112, %c0_113] : memref<1x256xf32, #tpu.memory_space<vmem>>, vector<1x256xf32>
    %186 = vector.broadcast %185 : vector<1x256xf32> to vector<8x256xf32>
    %187 = arith.addf %184, %186 : vector<8x256xf32>
    %cst_114 = arith.constant 0.000000e+00 : f32
    %188 = vector.broadcast %cst_114 : f32 to vector<8x256xf32>
    %189 = arith.maximumf %187, %188 : vector<8x256xf32>
    %190 = arith.truncf %189 : vector<8x256xf32> to vector<8x256xbf16>
    %c0_115 = arith.constant 0 : index
    %c0_116 = arith.constant 0 : index
    %191 = vector.load %arg22[%c0_115, %c0_116] : memref<256x1024xbf16, #tpu.memory_space<vmem>>, vector<256x1024xbf16>
    %cst_117 = arith.constant dense<0.000000e+00> : vector<8x1024xf32>
    %192 = tpu.matmul %190, %191, %cst_117 {dimension_numbers = #tpu.dot_dimension_numbers<[1], [0], [0], [1], [0, 0, 1, 1], [], []>} : vector<8x256xbf16>, vector<256x1024xbf16>, vector<8x1024xf32> -> vector<8x1024xf32>
    %c0_118 = arith.constant 0 : index
    %c0_119 = arith.constant 0 : index
    %c0_120 = arith.constant 0 : index
    %193 = vector.load %arg23[%c0_118, %c0_119, %c0_120] : memref<4x16x8xf32, #tpu.memory_space<vmem>>, vector<1x16x8xf32>
    %194 = vector.shape_cast %193 : vector<1x16x8xf32> to vector<16x8xf32>
    %195 = vector.extract_strided_slice %192 {offsets = [0, 0], sizes = [8, 256], strides = [1, 1]} : vector<8x1024xf32> to vector<8x256xf32>
    %cst_121 = arith.constant dense<0.000000e+00> : vector<16x256xf32>
    %196 = tpu.matmul %194, %195, %cst_121 {dimension_numbers = #tpu.dot_dimension_numbers<[1], [0], [0], [1], [0, 0, 1, 1], [], []>} : vector<16x8xf32>, vector<8x256xf32>, vector<16x256xf32> -> vector<16x256xf32>
    %c1_122 = arith.constant 1 : index
    %c0_123 = arith.constant 0 : index
    %c0_124 = arith.constant 0 : index
    %197 = vector.load %arg23[%c1_122, %c0_123, %c0_124] : memref<4x16x8xf32, #tpu.memory_space<vmem>>, vector<1x16x8xf32>
    %198 = vector.shape_cast %197 : vector<1x16x8xf32> to vector<16x8xf32>
    %199 = vector.extract_strided_slice %192 {offsets = [0, 256], sizes = [8, 256], strides = [1, 1]} : vector<8x1024xf32> to vector<8x256xf32>
    %cst_125 = arith.constant dense<0.000000e+00> : vector<16x256xf32>
    %200 = tpu.matmul %198, %199, %cst_125 {dimension_numbers = #tpu.dot_dimension_numbers<[1], [0], [0], [1], [0, 0, 1, 1], [], []>} : vector<16x8xf32>, vector<8x256xf32>, vector<16x256xf32> -> vector<16x256xf32>
    %201 = arith.addf %196, %200 : vector<16x256xf32>
    %c2_126 = arith.constant 2 : index
    %c0_127 = arith.constant 0 : index
    %c0_128 = arith.constant 0 : index
    %202 = vector.load %arg23[%c2_126, %c0_127, %c0_128] : memref<4x16x8xf32, #tpu.memory_space<vmem>>, vector<1x16x8xf32>
    %203 = vector.shape_cast %202 : vector<1x16x8xf32> to vector<16x8xf32>
    %204 = vector.extract_strided_slice %192 {offsets = [0, 512], sizes = [8, 256], strides = [1, 1]} : vector<8x1024xf32> to vector<8x256xf32>
    %cst_129 = arith.constant dense<0.000000e+00> : vector<16x256xf32>
    %205 = tpu.matmul %203, %204, %cst_129 {dimension_numbers = #tpu.dot_dimension_numbers<[1], [0], [0], [1], [0, 0, 1, 1], [], []>} : vector<16x8xf32>, vector<8x256xf32>, vector<16x256xf32> -> vector<16x256xf32>
    %206 = arith.addf %201, %205 : vector<16x256xf32>
    %c3_130 = arith.constant 3 : index
    %c0_131 = arith.constant 0 : index
    %c0_132 = arith.constant 0 : index
    %207 = vector.load %arg23[%c3_130, %c0_131, %c0_132] : memref<4x16x8xf32, #tpu.memory_space<vmem>>, vector<1x16x8xf32>
    %208 = vector.shape_cast %207 : vector<1x16x8xf32> to vector<16x8xf32>
    %209 = vector.extract_strided_slice %192 {offsets = [0, 768], sizes = [8, 256], strides = [1, 1]} : vector<8x1024xf32> to vector<8x256xf32>
    %cst_133 = arith.constant dense<0.000000e+00> : vector<16x256xf32>
    %210 = tpu.matmul %208, %209, %cst_133 {dimension_numbers = #tpu.dot_dimension_numbers<[1], [0], [0], [1], [0, 0, 1, 1], [], []>} : vector<16x8xf32>, vector<8x256xf32>, vector<16x256xf32> -> vector<16x256xf32>
    %211 = arith.addf %206, %210 : vector<16x256xf32>
    %c0_134 = arith.constant 0 : index
    %c0_135 = arith.constant 0 : index
    %212 = vector.load %arg24[%c0_134, %c0_135] : memref<1x256xf32, #tpu.memory_space<vmem>>, vector<1x256xf32>
    %213 = vector.broadcast %212 : vector<1x256xf32> to vector<16x256xf32>
    %214 = arith.addf %211, %213 : vector<16x256xf32>
    %cst_136 = arith.constant 0.000000e+00 : f32
    %215 = vector.broadcast %cst_136 : f32 to vector<16x256xf32>
    %216 = arith.maximumf %214, %215 : vector<16x256xf32>
    %217 = arith.truncf %216 : vector<16x256xf32> to vector<16x256xbf16>
    %c0_137 = arith.constant 0 : index
    %c0_138 = arith.constant 0 : index
    %218 = vector.load %arg25[%c0_137, %c0_138] : memref<256x128xbf16, #tpu.memory_space<vmem>>, vector<256x128xbf16>
    %cst_139 = arith.constant dense<0.000000e+00> : vector<16x128xf32>
    %219 = tpu.matmul %217, %218, %cst_139 {dimension_numbers = #tpu.dot_dimension_numbers<[1], [0], [0], [1], [0, 0, 1, 1], [], []>} : vector<16x256xbf16>, vector<256x128xbf16>, vector<16x128xf32> -> vector<16x128xf32>
    %c0_140 = arith.constant 0 : index
    %c0_141 = arith.constant 0 : index
    %c0_142 = arith.constant 0 : index
    %220 = vector.load %arg26[%c0_140, %c0_141, %c0_142] : memref<4x32x16xf32, #tpu.memory_space<vmem>>, vector<1x32x16xf32>
    %221 = vector.shape_cast %220 : vector<1x32x16xf32> to vector<32x16xf32>
    %222 = vector.extract_strided_slice %219 {offsets = [0, 0], sizes = [16, 32], strides = [1, 1]} : vector<16x128xf32> to vector<16x32xf32>
    %cst_143 = arith.constant dense<0.000000e+00> : vector<32x32xf32>
    %223 = tpu.matmul %221, %222, %cst_143 {dimension_numbers = #tpu.dot_dimension_numbers<[1], [0], [0], [1], [0, 0, 1, 1], [], []>} : vector<32x16xf32>, vector<16x32xf32>, vector<32x32xf32> -> vector<32x32xf32>
    %c1_144 = arith.constant 1 : index
    %c0_145 = arith.constant 0 : index
    %c0_146 = arith.constant 0 : index
    %224 = vector.load %arg26[%c1_144, %c0_145, %c0_146] : memref<4x32x16xf32, #tpu.memory_space<vmem>>, vector<1x32x16xf32>
    %225 = vector.shape_cast %224 : vector<1x32x16xf32> to vector<32x16xf32>
    %226 = vector.extract_strided_slice %219 {offsets = [0, 32], sizes = [16, 32], strides = [1, 1]} : vector<16x128xf32> to vector<16x32xf32>
    %cst_147 = arith.constant dense<0.000000e+00> : vector<32x32xf32>
    %227 = tpu.matmul %225, %226, %cst_147 {dimension_numbers = #tpu.dot_dimension_numbers<[1], [0], [0], [1], [0, 0, 1, 1], [], []>} : vector<32x16xf32>, vector<16x32xf32>, vector<32x32xf32> -> vector<32x32xf32>
    %228 = arith.addf %223, %227 : vector<32x32xf32>
    %c2_148 = arith.constant 2 : index
    %c0_149 = arith.constant 0 : index
    %c0_150 = arith.constant 0 : index
    %229 = vector.load %arg26[%c2_148, %c0_149, %c0_150] : memref<4x32x16xf32, #tpu.memory_space<vmem>>, vector<1x32x16xf32>
    %230 = vector.shape_cast %229 : vector<1x32x16xf32> to vector<32x16xf32>
    %231 = vector.extract_strided_slice %219 {offsets = [0, 64], sizes = [16, 32], strides = [1, 1]} : vector<16x128xf32> to vector<16x32xf32>
    %cst_151 = arith.constant dense<0.000000e+00> : vector<32x32xf32>
    %232 = tpu.matmul %230, %231, %cst_151 {dimension_numbers = #tpu.dot_dimension_numbers<[1], [0], [0], [1], [0, 0, 1, 1], [], []>} : vector<32x16xf32>, vector<16x32xf32>, vector<32x32xf32> -> vector<32x32xf32>
    %233 = arith.addf %228, %232 : vector<32x32xf32>
    %c3_152 = arith.constant 3 : index
    %c0_153 = arith.constant 0 : index
    %c0_154 = arith.constant 0 : index
    %234 = vector.load %arg26[%c3_152, %c0_153, %c0_154] : memref<4x32x16xf32, #tpu.memory_space<vmem>>, vector<1x32x16xf32>
    %235 = vector.shape_cast %234 : vector<1x32x16xf32> to vector<32x16xf32>
    %236 = vector.extract_strided_slice %219 {offsets = [0, 96], sizes = [16, 32], strides = [1, 1]} : vector<16x128xf32> to vector<16x32xf32>
    %cst_155 = arith.constant dense<0.000000e+00> : vector<32x32xf32>
    %237 = tpu.matmul %235, %236, %cst_155 {dimension_numbers = #tpu.dot_dimension_numbers<[1], [0], [0], [1], [0, 0, 1, 1], [], []>} : vector<32x16xf32>, vector<16x32xf32>, vector<32x32xf32> -> vector<32x32xf32>
    %238 = arith.addf %233, %237 : vector<32x32xf32>
    %c0_156 = arith.constant 0 : index
    %c0_157 = arith.constant 0 : index
    %239 = vector.load %arg27[%c0_156, %c0_157] : memref<1x32xf32, #tpu.memory_space<vmem>>, vector<1x32xf32>
    %240 = vector.broadcast %239 : vector<1x32xf32> to vector<32x32xf32>
    %241 = arith.addf %238, %240 : vector<32x32xf32>
    %c0_158 = arith.constant 0 : index
    %c0_159 = arith.constant 0 : index
    %c0_160 = arith.constant 0 : index
    %242 = vector.load %arg28[%c0_158, %c0_159, %c0_160] : memref<1x32x32xf32, #tpu.memory_space<vmem>>, vector<1x32x32xf32>
    %243 = vector.shape_cast %242 : vector<1x32x32xf32> to vector<32x32xf32>
    %244 = vector.shape_cast %241 : vector<32x32xf32> to vector<1x32x32xf32>
    tpu.vector_store %arg28[%c0_158, %c0_159, %c0_160], %244 {strides = array<i32>} : memref<1x32x32xf32, #tpu.memory_space<vmem>>, vector<1x32x32xf32>,
    return
  }
  func.func @transform_0(%arg0: i32) -> (i32, i32, i32) {
    %c0_i32 = arith.constant 0 : i32
    %c0_i32_0 = arith.constant 0 : i32
    %c0_i32_1 = arith.constant 0 : i32
    return %arg0, %c0_i32, %c0_i32_0 : i32, i32, i32
  }
  func.func @transform_1(%arg0: i32) -> (i32, i32) {
    %c0_i32 = arith.constant 0 : i32
    %c0_i32_0 = arith.constant 0 : i32
    %c0_i32_1 = arith.constant 0 : i32
    return %c0_i32, %c0_i32_0 : i32, i32
  }
  func.func @transform_2(%arg0: i32) -> (i32, i32, i32) {
    %c0_i32 = arith.constant 0 : i32
    %c0_i32_0 = arith.constant 0 : i32
    %c0_i32_1 = arith.constant 0 : i32
    %c0_i32_2 = arith.constant 0 : i32
    return %c0_i32, %c0_i32_0, %c0_i32_1 : i32, i32, i32
  }
  func.func @transform_3(%arg0: i32) -> (i32, i32) {
    %c0_i32 = arith.constant 0 : i32
    %c0_i32_0 = arith.constant 0 : i32
    %c0_i32_1 = arith.constant 0 : i32
    return %c0_i32, %c0_i32_0 : i32, i32
  }
  func.func @transform_4(%arg0: i32) -> (i32, i32) {
    %c0_i32 = arith.constant 0 : i32
    %c0_i32_0 = arith.constant 0 : i32
    %c0_i32_1 = arith.constant 0 : i32
    return %c0_i32, %c0_i32_0 : i32, i32
  }
  func.func @transform_5(%arg0: i32) -> (i32, i32, i32) {
    %c0_i32 = arith.constant 0 : i32
    %c0_i32_0 = arith.constant 0 : i32
    %c0_i32_1 = arith.constant 0 : i32
    %c0_i32_2 = arith.constant 0 : i32
    return %c0_i32, %c0_i32_0, %c0_i32_1 : i32, i32, i32
  }
  func.func @transform_6(%arg0: i32) -> (i32, i32) {
    %c0_i32 = arith.constant 0 : i32
    %c0_i32_0 = arith.constant 0 : i32
    %c0_i32_1 = arith.constant 0 : i32
    return %c0_i32, %c0_i32_0 : i32, i32
  }
  func.func @transform_7(%arg0: i32) -> (i32, i32) {
    %c0_i32 = arith.constant 0 : i32
    %c0_i32_0 = arith.constant 0 : i32
    %c0_i32_1 = arith.constant 0 : i32
    return %c0_i32, %c0_i32_0 : i32, i32
  }
  func.func @transform_8(%arg0: i32) -> (i32, i32, i32) {
    %c0_i32 = arith.constant 0 : i32
    %c0_i32_0 = arith.constant 0 : i32
    %c0_i32_1 = arith.constant 0 : i32
    %c0_i32_2 = arith.constant 0 : i32
    return %c0_i32, %c0_i32_0, %c0_i32_1 : i32, i32, i32
  }
  func.func @transform_9(%arg0: i32) -> (i32, i32) {
    %c0_i32 = arith.constant 0 : i32
    %c0_i32_0 = arith.constant 0 : i32
    %c0_i32_1 = arith.constant 0 : i32
    return %c0_i32, %c0_i32_0 : i32, i32
  }
  func.func @transform_10(%arg0: i32) -> (i32, i32) {
    %c0_i32 = arith.constant 0 : i32
    %c0_i32_0 = arith.constant 0 : i32
    %c0_i32_1 = arith.constant 0 : i32
    return %c0_i32, %c0_i32_0 : i32, i32
  }
  func.func @transform_11(%arg0: i32) -> (i32, i32) {
    %c0_i32 = arith.constant 0 : i32
    %c0_i32_0 = arith.constant 0 : i32
    %c0_i32_1 = arith.constant 0 : i32
    return %c0_i32, %c0_i32_0 : i32, i32
  }
  func.func @transform_12(%arg0: i32) -> (i32, i32) {
    %c0_i32 = arith.constant 0 : i32
    %c0_i32_0 = arith.constant 0 : i32
    %c0_i32_1 = arith.constant 0 : i32
    return %c0_i32, %c0_i32_0 : i32, i32
  }
  func.func @transform_13(%arg0: i32) -> (i32, i32) {
    %c0_i32 = arith.constant 0 : i32
    %c0_i32_0 = arith.constant 0 : i32
    %c0_i32_1 = arith.constant 0 : i32
    return %c0_i32, %c0_i32_0 : i32, i32
  }
  func.func @transform_14(%arg0: i32) -> (i32, i32) {
    %c0_i32 = arith.constant 0 : i32
    %c0_i32_0 = arith.constant 0 : i32
    %c0_i32_1 = arith.constant 0 : i32
    return %c0_i32, %c0_i32_0 : i32, i32
  }
  func.func @transform_15(%arg0: i32) -> (i32, i32) {
    %c0_i32 = arith.constant 0 : i32
    %c0_i32_0 = arith.constant 0 : i32
    %c0_i32_1 = arith.constant 0 : i32
    return %c0_i32, %c0_i32_0 : i32, i32
  }
  func.func @transform_16(%arg0: i32) -> (i32, i32) {
    %c0_i32 = arith.constant 0 : i32
    %c0_i32_0 = arith.constant 0 : i32
    %c0_i32_1 = arith.constant 0 : i32
    return %c0_i32, %c0_i32_0 : i32, i32
  }
  func.func @transform_17(%arg0: i32) -> (i32, i32) {
    %c0_i32 = arith.constant 0 : i32
    %c0_i32_0 = arith.constant 0 : i32
    %c0_i32_1 = arith.constant 0 : i32
    return %c0_i32, %c0_i32_0 : i32, i32
  }
  func.func @transform_18(%arg0: i32) -> (i32, i32) {
    %c0_i32 = arith.constant 0 : i32
    %c0_i32_0 = arith.constant 0 : i32
    %c0_i32_1 = arith.constant 0 : i32
    return %c0_i32, %c0_i32_0 : i32, i32
  }
  func.func @transform_19(%arg0: i32) -> (i32, i32, i32) {
    %c0_i32 = arith.constant 0 : i32
    %c0_i32_0 = arith.constant 0 : i32
    %c0_i32_1 = arith.constant 0 : i32
    %c0_i32_2 = arith.constant 0 : i32
    return %c0_i32, %c0_i32_0, %c0_i32_1 : i32, i32, i32
  }
  func.func @transform_20(%arg0: i32) -> (i32, i32) {
    %c0_i32 = arith.constant 0 : i32
    %c0_i32_0 = arith.constant 0 : i32
    %c0_i32_1 = arith.constant 0 : i32
    return %c0_i32, %c0_i32_0 : i32, i32
  }
  func.func @transform_21(%arg0: i32) -> (i32, i32) {
    %c0_i32 = arith.constant 0 : i32
    %c0_i32_0 = arith.constant 0 : i32
    %c0_i32_1 = arith.constant 0 : i32
    return %c0_i32, %c0_i32_0 : i32, i32
  }
  func.func @transform_22(%arg0: i32) -> (i32, i32, i32) {
    %c0_i32 = arith.constant 0 : i32
    %c0_i32_0 = arith.constant 0 : i32
    %c0_i32_1 = arith.constant 0 : i32
    %c0_i32_2 = arith.constant 0 : i32
    return %c0_i32, %c0_i32_0, %c0_i32_1 : i32, i32, i32
  }
  func.func @transform_23(%arg0: i32) -> (i32, i32) {
    %c0_i32 = arith.constant 0 : i32
    %c0_i32_0 = arith.constant 0 : i32
    %c0_i32_1 = arith.constant 0 : i32
    return %c0_i32, %c0_i32_0 : i32, i32
  }
  func.func @transform_24(%arg0: i32) -> (i32, i32) {
    %c0_i32 = arith.constant 0 : i32
    %c0_i32_0 = arith.constant 0 : i32
    %c0_i32_1 = arith.constant 0 : i32
    return %c0_i32, %c0_i32_0 : i32, i32
  }
  func.func @transform_25(%arg0: i32) -> (i32, i32, i32) {
    %c0_i32 = arith.constant 0 : i32
    %c0_i32_0 = arith.constant 0 : i32
    %c0_i32_1 = arith.constant 0 : i32
    %c0_i32_2 = arith.constant 0 : i32
    return %c0_i32, %c0_i32_0, %c0_i32_1 : i32, i32, i32
  }
  func.func @transform_26(%arg0: i32) -> (i32, i32) {
    %c0_i32 = arith.constant 0 : i32
    %c0_i32_0 = arith.constant 0 : i32
    %c0_i32_1 = arith.constant 0 : i32
    return %c0_i32, %c0_i32_0 : i32, i32
  }
  func.func @transform_27(%arg0: i32) -> (i32, i32, i32) {
    %c0_i32 = arith.constant 0 : i32
    %c0_i32_0 = arith.constant 0 : i32
    %c0_i32_1 = arith.constant 0 : i32
    return %arg0, %c0_i32, %c0_i32_0 : i32, i32, i32
  }
  func.func @transform_28(%arg0: i32) -> (i32, i32, i32) {
    %c0_i32 = arith.constant 0 : i32
    %c0_i32_0 = arith.constant 0 : i32
    %c0_i32_1 = arith.constant 0 : i32
    return %arg0, %c0_i32, %c0_i32_0 : i32, i32, i32
  }
}

</mosaic_0001>

<llo_original>
// kernel: _lambda_.1
$region0: #{_lambda_.1}
  #allocation0 [shape = 'u32[]', space=smem, size = 0x4, offset = 0x4, fixed_abs, tag = 'smem constant byte address 0x4 - core index']
  #allocation1 [shape = 'u32[72,128]{1,0:T(1,128)}', space=vmem, size = 0x9000, scoped, tag = 'internal scratch']
  %s0 = inlined_call_operand.hbm [shape: f32[2,32,32], index: 0, kind: input, shape index: {}]
  %s1 = inlined_call_operand.hbm [shape: bf16[32,1024], index: 1, kind: input, shape index: {}]
  %s2 = inlined_call_operand.hbm [shape: f32[4,16,32], index: 2, kind: input, shape index: {}]
  %s3 = inlined_call_operand.hbm [shape: f32[1,256], index: 3, kind: input, shape index: {}]
  %s4 = inlined_call_operand.hbm [shape: bf16[256,1024], index: 4, kind: input, shape index: {}]
  %s5 = inlined_call_operand.hbm [shape: f32[4,8,16], index: 5, kind: input, shape index: {}]
  %s6 = inlined_call_operand.hbm [shape: f32[1,256], index: 6, kind: input, shape index: {}]
  %s7 = inlined_call_operand.hbm [shape: bf16[256,1024], index: 7, kind: input, shape index: {}]
  %s8 = inlined_call_operand.hbm [shape: f32[4,4,8], index: 8, kind: input, shape index: {}]
  %s9 = inlined_call_operand.vmem [shape: f32[1,256], index: 9, kind: input, shape index: {}]
  %s10 = inlined_call_operand.hbm [shape: f32[256,64], index: 10, kind: input, shape index: {}]
  %s11 = inlined_call_operand.hbm [shape: f32[1,16], index: 11, kind: input, shape index: {}]
  %s12 = inlined_call_operand.hbm [shape: f32[16,4], index: 12, kind: input, shape index: {}]
  %s13 = inlined_call_operand.vmem [shape: f32[1,4], index: 13, kind: input, shape index: {}]
  %s14 = inlined_call_operand.vmem [shape: f32[4,16], index: 14, kind: input, shape index: {}]
  %s15 = inlined_call_operand.vmem [shape: f32[1,16], index: 15, kind: input, shape index: {}]
  %s16 = inlined_call_operand.hbm [shape: f32[16,1024], index: 16, kind: input, shape index: {}]
  %s17 = inlined_call_operand.vmem [shape: f32[1,256], index: 17, kind: input, shape index: {}]
  %s18 = inlined_call_operand.hbm [shape: bf16[256,1024], index: 18, kind: input, shape index: {}]
  %s19 = inlined_call_operand.hbm [shape: f32[4,8,4], index: 19, kind: input, shape index: {}]
  %s20 = inlined_call_operand.vmem [shape: f32[1,256], index: 20, kind: input, shape index: {}]
  %s21 = inlined_call_operand.hbm [shape: bf16[256,1024], index: 21, kind: input, shape index: {}]
  %s22 = inlined_call_operand.hbm [shape: f32[4,16,8], index: 22, kind: input, shape index: {}]
  %s23 = inlined_call_operand.vmem [shape: f32[1,256], index: 23, kind: input, shape index: {}]
  %s24 = inlined_call_operand.hbm [shape: bf16[256,128], index: 24, kind: input, shape index: {}]
  %s25 = inlined_call_operand.hbm [shape: f32[4,32,16], index: 25, kind: input, shape index: {}]
  %s26 = inlined_call_operand.vmem [shape: f32[1,32], index: 26, kind: input, shape index: {}]
  %s27 = inlined_call_operand.hbm [shape: f32[2,32,32], index: 27, kind: output, shape index: {0}]
  %s28 = inlined_call_operand.hbm [shape: f32[2,1,4], index: 28, kind: output, shape index: {1}]
  %29 = xla_tuple %s27, %s28
  %s30 = sld [smem:[#allocation0]]
  $region225: #{_lambda_.1} parent=0
    _
  %s32 = ssub.s32 1, %s30
  %s33 = scalar_select 0, %s32, %s30
  $region1: #{_lambda_.1} parent=0
    #allocation2 [shape = 'u8[32768]{0}', space=vmem, size = 0x8000, scoped, tag = 'input window, operand 0']
    #allocation3 [shape = 's32[2]{0}', space=sflag, size = 0x8, scoped, tag = 'scoped memory for _lambda_.1']
    #allocation4 [shape = 's32[2]{0}', space=sflag, size = 0x8, scoped, tag = 'scoped memory for _lambda_.1']
    #allocation5 [shape = 'u8[65536]{0}', space=vmem, size = 0x10000, scoped, tag = 'input window, operand 1, single buffered']
    #allocation6 [shape = 's32[1]{0}', space=sflag, size = 0x4, scoped, tag = 'scoped memory for _lambda_.1']
    #allocation7 [shape = 'u8[32768]{0}', space=vmem, size = 0x8000, scoped, tag = 'input window, operand 2, single buffered']
    #allocation8 [shape = 'u8[1024]{0}', space=vmem, size = 0x400, scoped, tag = 'input window, operand 3, single buffered']
    #allocation9 [shape = 's32[1]{0}', space=sflag, size = 0x4, scoped, tag = 'scoped memory for _lambda_.1']
    #allocation10 [shape = 'u8[524288]{0}', space=vmem, size = 0x80000, scoped, tag = 'input window, operand 4, single buffered']
    #allocation11 [shape = 'u8[16384]{0}', space=vmem, size = 0x4000, scoped, tag = 'input window, operand 5, single buffered']
    #allocation12 [shape = 's32[1]{0}', space=sflag, size = 0x4, scoped, tag = 'scoped memory for _lambda_.1']
    #allocation13 [shape = 'u8[1024]{0}', space=vmem, size = 0x400, scoped, tag = 'input window, operand 6, single buffered']
    #allocation14 [shape = 'u8[524288]{0}', space=vmem, size = 0x80000, scoped, tag = 'input window, operand 7, single buffered']
    #allocation15 [shape = 's32[1]{0}', space=sflag, size = 0x4, scoped, tag = 'scoped memory for _lambda_.1']
    #allocation16 [shape = 'u8[8192]{0}', space=vmem, size = 0x2000, scoped, tag = 'input window, operand 8, single buffered']
    #allocation17 [shape = 'u8[131072]{0}', space=vmem, size = 0x20000, scoped, tag = 'input window, operand 10, single buffered']
    #allocation18 [shape = 's32[1]{0}', space=sflag, size = 0x4, scoped, tag = 'scoped memory for _lambda_.1']
    #allocation19 [shape = 'u8[512]{0}', space=vmem, size = 0x400, scoped, tag = 'input window, operand 11, single buffered']
    #allocation20 [shape = 'u8[8192]{0}', space=vmem, size = 0x2000, scoped, tag = 'input window, operand 12, single buffered']
    #allocation21 [shape = 's32[1]{0}', space=sflag, size = 0x4, scoped, tag = 'scoped memory for _lambda_.1']
    #allocation22 [shape = 'u8[65536]{0}', space=vmem, size = 0x10000, scoped, tag = 'input window, operand 16, single buffered']
    #allocation23 [shape = 'u8[524288]{0}', space=vmem, size = 0x80000, scoped, tag = 'input window, operand 18, single buffered']
    #allocation24 [shape = 's32[1]{0}', space=sflag, size = 0x4, scoped, tag = 'scoped memory for _lambda_.1']
    #allocation25 [shape = 'u8[16384]{0}', space=vmem, size = 0x4000, scoped, tag = 'input window, operand 19, single buffered']
    #allocation26 [shape = 'u8[524288]{0}', space=vmem, size = 0x80000, scoped, tag = 'input window, operand 21, single buffered']
    #allocation27 [shape = 's32[1]{0}', space=sflag, size = 0x4, scoped, tag = 'scoped memory for _lambda_.1']
    #allocation28 [shape = 'u8[32768]{0}', space=vmem, size = 0x8000, scoped, tag = 'input window, operand 22, single buffered']
    #allocation29 [shape = 'u8[65536]{0}', space=vmem, size = 0x10000, scoped, tag = 'input window, operand 24, single buffered']
    #allocation30 [shape = 's32[1]{0}', space=sflag, size = 0x4, scoped, tag = 'scoped memory for _lambda_.1']
    #allocation31 [shape = 'u8[65536]{0}', space=vmem, size = 0x10000, scoped, tag = 'input window, operand 25, single buffered']
    #allocation32 [shape = 'u8[32768]{0}', space=vmem, size = 0x8000, scoped, tag = 'output window, operand 0']
    #allocation33 [shape = 'u8[1024]{0}', space=vmem, size = 0x400, scoped, tag = 'output window, operand 1']
    #allocation34 [shape = 's32[2]{0}', space=sflag, size = 0x8, scoped, tag = 'scoped memory for _lambda_.1']
    %34 = vsyncpa [#allocation3], 0
    %s35 = scalar_lea.sflag [#allocation3], 1
    %36 = vsyncpa %s35, 0
    %37 = vsyncpa [#allocation6], 0
    %38 = vsyncpa [#allocation9], 0
    %39 = vsyncpa [#allocation12], 0
    %40 = vsyncpa [#allocation15], 0
    %41 = vsyncpa [#allocation18], 0
    %42 = vsyncpa [#allocation21], 0
    %43 = vsyncpa [#allocation24], 0
    %44 = vsyncpa [#allocation27], 0
    %45 = vsyncpa [#allocation30], 0
    %46 = vsyncpa [#allocation4], 0
    %s47 = scalar_lea.sflag [#allocation4], 1
    %48 = vsyncpa %s47, 0
    %49 = vsyncpa [#allocation34], 0
    %s50 = scalar_lea.sflag [#allocation34], 1
    %51 = vsyncpa %s50, 0
    loop: start=0, step=1, limit=4
    $region2: #{_lambda_.1} parent=1 // loop_pre_header
      _
    $region3: #{_lambda_.1} parent=1 // loop_header
      %s53 = sphi 0, %s57
      %p54 = scmp.ge.s32.totalorder %s53, 4
      %s63 = sphi 0, %s65
      %s66 = sphi 0, %s63
      %s67 = sphi 0, %s66
      %s83 = sphi 0, %s67
      %s87 = sphi 0, %s87
      %s89 = sphi 0, %s87
      %s90 = sphi 0, %s89
      %s104 = sphi 0, %s90
      %s108 = sphi 0, %s108
      %s110 = sphi 0, %s108
      %s111 = sphi 0, %s110
      %s125 = sphi 0, %s111
      %s129 = sphi 0, %s129
      %s131 = sphi 0, %s129
      %s132 = sphi 0, %s131
      %s146 = sphi 0, %s132
      %s150 = sphi 0, %s150
      %s152 = sphi 0, %s150
      %s153 = sphi 0, %s152
      %s167 = sphi 0, %s153
      %s171 = sphi 0, %s171
      %s173 = sphi 0, %s171
      %s174 = sphi 0, %s173
      %s188 = sphi 0, %s174
      %s192 = sphi 0, %s192
      %s194 = sphi 0, %s192
      %s195 = sphi 0, %s194
      %s209 = sphi 0, %s195
      %s213 = sphi 0, %s213
      %s215 = sphi 0, %s213
      %s216 = sphi 0, %s215
      %s230 = sphi 0, %s216
      %s234 = sphi 0, %s234
      %s236 = sphi 0, %s234
      %s237 = sphi 0, %s236
      %s251 = sphi 0, %s237
      %s255 = sphi 0, %s255
      %s257 = sphi 0, %s255
      %s258 = sphi 0, %s257
      %s272 = sphi 0, %s258
      %s276 = sphi 0, %s276
      %s278 = sphi 0, %s276
      %s279 = sphi 0, %s278
      %s293 = sphi 0, %s279
      %s297 = sphi 0, %s297
      %s299 = sphi 0, %s297
      %s300 = sphi 0, %s299
      %s314 = sphi 0, %s300
      %s318 = sphi 0, %s318
      %s320 = sphi 0, %s318
      %s321 = sphi 0, %s320
      %s335 = sphi 0, %s321
      %s339 = sphi 0, %s339
      %s341 = sphi 0, %s339
      %s342 = sphi 0, %s341
      %s356 = sphi 0, %s342
      %s360 = sphi 0, %s360
      %s362 = sphi 0, %s360
      %s363 = sphi 0, %s362
      %s377 = sphi 0, %s363
      %s381 = sphi 0, %s381
      %s383 = sphi 0, %s381
      %s384 = sphi 0, %s383
      %s398 = sphi 0, %s384
      %s402 = sphi 0, %s402
      %s404 = sphi 0, %s402
      %s405 = sphi 0, %s404
      %s419 = sphi 0, %s405
      %s423 = sphi 0, %s423
      %s425 = sphi 0, %s423
      %s426 = sphi 0, %s425
      %s440 = sphi 0, %s426
      %s444 = sphi 0, %s444
      %s446 = sphi 0, %s444
      %s447 = sphi 0, %s446
      %s461 = sphi 0, %s447
      %s465 = sphi 0, %s465
      %s467 = sphi 0, %s465
      %s468 = sphi 0, %s467
      %s482 = sphi 0, %s468
      %s486 = sphi 0, %s486
      %s488 = sphi 0, %s486
      %s489 = sphi 0, %s488
      %s503 = sphi 0, %s489
      %s507 = sphi 0, %s507
      %s509 = sphi 0, %s507
      %s510 = sphi 0, %s509
      %s524 = sphi 0, %s510
      %s528 = sphi 0, %s528
      %s530 = sphi 0, %s528
      %s531 = sphi 0, %s530
      %s545 = sphi 0, %s531
      %s549 = sphi 0, %s549
      %s551 = sphi 0, %s549
      %s552 = sphi 0, %s551
      %s566 = sphi 0, %s552
      %s570 = sphi 0, %s570
      %s572 = sphi 0, %s570
      %s573 = sphi 0, %s572
      %s587 = sphi 0, %s573
      %s591 = sphi 0, %s591
      %s593 = sphi 0, %s591
      %s594 = sphi 0, %s593
      %s608 = sphi 0, %s594
      %s612 = sphi 0, %s612
      %s614 = sphi 0, %s612
      %s615 = sphi 0, %s614
      %s629 = sphi 0, %s615
      %s635 = sphi 0, %s637
      %s638 = sphi 0, %s635
      %s639 = sphi 0, %s638
      %s655 = sphi 0, %s639
      %s661 = sphi 0, %s663
      %s664 = sphi 0, %s661
      %s665 = sphi 0, %s664
      %s681 = sphi 0, %s665
    $region4: #{_lambda_.1} parent=1 // loop_header_branch
      %56 = sbr.rel (%p54) target = $region8
    $region5: #{_lambda_.1} parent=1 // loop_body
      %s58 = ssub.s32 %s53, 1
      %s59 = ssub.s32 %s53, 2
      %s60 = sadd.s32 %s53, 1
      %s61 = ssub.s32 %s53, %s60
      %p62 = scmp.eq.s32.totalorder %s61, 0
      %s64 = sadd.s32 %s63, 1
      %s65 = scalar_select %p62, %s63, %s64
      %p68 = pneg %p62
      %p69 = scmp.eq.s32.totalorder %s53, 1
      %p70 = por %p68, %p69
      %p71 = scmp.ne.s32.totalorder %s63, %s66
      %p72 = scmp.eq.s32.totalorder %s53, 0
      %p73 = por %p71, %p72
      %p74 = scmp.ne.s32.totalorder %s63, %s66
      %p75 = scmp.eq.s32.totalorder %s58, 1
      %p76 = por %p74, %p75
      %p77 = scmp.ne.s32.totalorder %s66, %s67
      %p78 = scmp.eq.s32.totalorder %s58, 0
      %p79 = por %p77, %p78
      %p80 = scmp.ne.s32.totalorder %s66, %s67
      %p81 = scmp.eq.s32.totalorder %s59, 1
      %p82 = por %p80, %p81
      %p84 = scmp.ne.s32.totalorder %s67, %s83
      %p85 = scmp.eq.s32.totalorder %s59, 0
      %p86 = por %p84, %p85
      %s88 = sadd.s32 %s87, 1
      %p91 = scmp.eq.s32.totalorder %s53, 1
      %p92 = scmp.ne.s32.totalorder %s87, %s89
      %p93 = scmp.eq.s32.totalorder %s53, 0
      %p94 = por %p92, %p93
      %p95 = scmp.ne.s32.totalorder %s87, %s89
      %p96 = scmp.eq.s32.totalorder %s58, 1
      %p97 = por %p95, %p96
      %p98 = scmp.ne.s32.totalorder %s89, %s90
      %p99 = scmp.eq.s32.totalorder %s58, 0
      %p100 = por %p98, %p99
      %p101 = scmp.ne.s32.totalorder %s89, %s90
      %p102 = scmp.eq.s32.totalorder %s59, 1
      %p103 = por %p101, %p102
      %p105 = scmp.ne.s32.totalorder %s90, %s104
      %p106 = scmp.eq.s32.totalorder %s59, 0
      %p107 = por %p105, %p106
      %s109 = sadd.s32 %s108, 1
      %p112 = scmp.eq.s32.totalorder %s53, 1
      %p113 = scmp.ne.s32.totalorder %s108, %s110
      %p114 = scmp.eq.s32.totalorder %s53, 0
      %p115 = por %p113, %p114
      %p116 = scmp.ne.s32.totalorder %s108, %s110
      %p117 = scmp.eq.s32.totalorder %s58, 1
      %p118 = por %p116, %p117
      %p119 = scmp.ne.s32.totalorder %s110, %s111
      %p120 = scmp.eq.s32.totalorder %s58, 0
      %p121 = por %p119, %p120
      %p122 = scmp.ne.s32.totalorder %s110, %s111
      %p123 = scmp.eq.s32.totalorder %s59, 1
      %p124 = por %p122, %p123
      %p126 = scmp.ne.s32.totalorder %s111, %s125
      %p127 = scmp.eq.s32.totalorder %s59, 0
      %p128 = por %p126, %p127
      %s130 = sadd.s32 %s129, 1
      %p133 = scmp.eq.s32.totalorder %s53, 1
      %p134 = scmp.ne.s32.totalorder %s129, %s131
      %p135 = scmp.eq.s32.totalorder %s53, 0
      %p136 = por %p134, %p135
      %p137 = scmp.ne.s32.totalorder %s129, %s131
      %p138 = scmp.eq.s32.totalorder %s58, 1
      %p139 = por %p137, %p138
      %p140 = scmp.ne.s32.totalorder %s131, %s132
      %p141 = scmp.eq.s32.totalorder %s58, 0
      %p142 = por %p140, %p141
      %p143 = scmp.ne.s32.totalorder %s131, %s132
      %p144 = scmp.eq.s32.totalorder %s59, 1
      %p145 = por %p143, %p144
      %p147 = scmp.ne.s32.totalorder %s132, %s146
      %p148 = scmp.eq.s32.totalorder %s59, 0
      %p149 = por %p147, %p148
      %s151 = sadd.s32 %s150, 1
      %p154 = scmp.eq.s32.totalorder %s53, 1
      %p155 = scmp.ne.s32.totalorder %s150, %s152
      %p156 = scmp.eq.s32.totalorder %s53, 0
      %p157 = por %p155, %p156
      %p158 = scmp.ne.s32.totalorder %s150, %s152
      %p159 = scmp.eq.s32.totalorder %s58, 1
      %p160 = por %p158, %p159
      %p161 = scmp.ne.s32.totalorder %s152, %s153
      %p162 = scmp.eq.s32.totalorder %s58, 0
      %p163 = por %p161, %p162
      %p164 = scmp.ne.s32.totalorder %s152, %s153
      %p165 = scmp.eq.s32.totalorder %s59, 1
      %p166 = por %p164, %p165
      %p168 = scmp.ne.s32.totalorder %s153, %s167
      %p169 = scmp.eq.s32.totalorder %s59, 0
      %p170 = por %p168, %p169
      %s172 = sadd.s32 %s171, 1
      %p175 = scmp.eq.s32.totalorder %s53, 1
      %p176 = scmp.ne.s32.totalorder %s171, %s173
      %p177 = scmp.eq.s32.totalorder %s53, 0
      %p178 = por %p176, %p177
      %p179 = scmp.ne.s32.totalorder %s171, %s173
      %p180 = scmp.eq.s32.totalorder %s58, 1
      %p181 = por %p179, %p180
      %p182 = scmp.ne.s32.totalorder %s173, %s174
      %p183 = scmp.eq.s32.totalorder %s58, 0
      %p184 = por %p182, %p183
      %p185 = scmp.ne.s32.totalorder %s173, %s174
      %p186 = scmp.eq.s32.totalorder %s59, 1
      %p187 = por %p185, %p186
      %p189 = scmp.ne.s32.totalorder %s174, %s188
      %p190 = scmp.eq.s32.totalorder %s59, 0
      %p191 = por %p189, %p190
      %s193 = sadd.s32 %s192, 1
      %p196 = scmp.eq.s32.totalorder %s53, 1
      %p197 = scmp.ne.s32.totalorder %s192, %s194
      %p198 = scmp.eq.s32.totalorder %s53, 0
      %p199 = por %p197, %p198
      %p200 = scmp.ne.s32.totalorder %s192, %s194
      %p201 = scmp.eq.s32.totalorder %s58, 1
      %p202 = por %p200, %p201
      %p203 = scmp.ne.s32.totalorder %s194, %s195
      %p204 = scmp.eq.s32.totalorder %s58, 0
      %p205 = por %p203, %p204
      %p206 = scmp.ne.s32.totalorder %s194, %s195
      %p207 = scmp.eq.s32.totalorder %s59, 1
      %p208 = por %p206, %p207
      %p210 = scmp.ne.s32.totalorder %s195, %s209
      %p211 = scmp.eq.s32.totalorder %s59, 0
      %p212 = por %p210, %p211
      %s214 = sadd.s32 %s213, 1
      %p217 = scmp.eq.s32.totalorder %s53, 1
      %p218 = scmp.ne.s32.totalorder %s213, %s215
      %p219 = scmp.eq.s32.totalorder %s53, 0
      %p220 = por %p218, %p219
      %p221 = scmp.ne.s32.totalorder %s213, %s215
      %p222 = scmp.eq.s32.totalorder %s58, 1
      %p223 = por %p221, %p222
      %p224 = scmp.ne.s32.totalorder %s215, %s216
      %p225 = scmp.eq.s32.totalorder %s58, 0
      %p226 = por %p224, %p225
      %p227 = scmp.ne.s32.totalorder %s215, %s216
      %p228 = scmp.eq.s32.totalorder %s59, 1
      %p229 = por %p227, %p228
      %p231 = scmp.ne.s32.totalorder %s216, %s230
      %p232 = scmp.eq.s32.totalorder %s59, 0
      %p233 = por %p231, %p232
      %s235 = sadd.s32 %s234, 1
      %p238 = scmp.eq.s32.totalorder %s53, 1
      %p239 = scmp.ne.s32.totalorder %s234, %s236
      %p240 = scmp.eq.s32.totalorder %s53, 0
      %p241 = por %p239, %p240
      %p242 = scmp.ne.s32.totalorder %s234, %s236
      %p243 = scmp.eq.s32.totalorder %s58, 1
      %p244 = por %p242, %p243
      %p245 = scmp.ne.s32.totalorder %s236, %s237
      %p246 = scmp.eq.s32.totalorder %s58, 0
      %p247 = por %p245, %p246
      %p248 = scmp.ne.s32.totalorder %s236, %s237
      %p249 = scmp.eq.s32.totalorder %s59, 1
      %p250 = por %p248, %p249
      %p252 = scmp.ne.s32.totalorder %s237, %s251
      %p253 = scmp.eq.s32.totalorder %s59, 0
      %p254 = por %p252, %p253
      %s256 = sadd.s32 %s255, 1
      %p259 = scmp.eq.s32.totalorder %s53, 1
      %p260 = scmp.ne.s32.totalorder %s255, %s257
      %p261 = scmp.eq.s32.totalorder %s53, 0
      %p262 = por %p260, %p261
      %p263 = scmp.ne.s32.totalorder %s255, %s257
      %p264 = scmp.eq.s32.totalorder %s58, 1
      %p265 = por %p263, %p264
      %p266 = scmp.ne.s32.totalorder %s257, %s258
      %p267 = scmp.eq.s32.totalorder %s58, 0
      %p268 = por %p266, %p267
      %p269 = scmp.ne.s32.totalorder %s257, %s258
      %p270 = scmp.eq.s32.totalorder %s59, 1
      %p271 = por %p269, %p270
      %p273 = scmp.ne.s32.totalorder %s258, %s272
      %p274 = scmp.eq.s32.totalorder %s59, 0
      %p275 = por %p273, %p274
      %s277 = sadd.s32 %s276, 1
      %p280 = scmp.eq.s32.totalorder %s53, 1
      %p281 = scmp.ne.s32.totalorder %s276, %s278
      %p282 = scmp.eq.s32.totalorder %s53, 0
      %p283 = por %p281, %p282
      %p284 = scmp.ne.s32.totalorder %s276, %s278
      %p285 = scmp.eq.s32.totalorder %s58, 1
      %p286 = por %p284, %p285
      %p287 = scmp.ne.s32.totalorder %s278, %s279
      %p288 = scmp.eq.s32.totalorder %s58, 0
      %p289 = por %p287, %p288
      %p290 = scmp.ne.s32.totalorder %s278, %s279
      %p291 = scmp.eq.s32.totalorder %s59, 1
      %p292 = por %p290, %p291
      %p294 = scmp.ne.s32.totalorder %s279, %s293
      %p295 = scmp.eq.s32.totalorder %s59, 0
      %p296 = por %p294, %p295
      %s298 = sadd.s32 %s297, 1
      %p301 = scmp.eq.s32.totalorder %s53, 1
      %p302 = scmp.ne.s32.totalorder %s297, %s299
      %p303 = scmp.eq.s32.totalorder %s53, 0
      %p304 = por %p302, %p303
      %p305 = scmp.ne.s32.totalorder %s297, %s299
      %p306 = scmp.eq.s32.totalorder %s58, 1
      %p307 = por %p305, %p306
      %p308 = scmp.ne.s32.totalorder %s299, %s300
      %p309 = scmp.eq.s32.totalorder %s58, 0
      %p310 = por %p308, %p309
      %p311 = scmp.ne.s32.totalorder %s299, %s300
      %p312 = scmp.eq.s32.totalorder %s59, 1
      %p313 = por %p311, %p312
      %p315 = scmp.ne.s32.totalorder %s300, %s314
      %p316 = scmp.eq.s32.totalorder %s59, 0
      %p317 = por %p315, %p316
      %s319 = sadd.s32 %s318, 1
      %p322 = scmp.eq.s32.totalorder %s53, 1
      %p323 = scmp.ne.s32.totalorder %s318, %s320
      %p324 = scmp.eq.s32.totalorder %s53, 0
      %p325 = por %p323, %p324
      %p326 = scmp.ne.s32.totalorder %s318, %s320
      %p327 = scmp.eq.s32.totalorder %s58, 1
      %p328 = por %p326, %p327
      %p329 = scmp.ne.s32.totalorder %s320, %s321
      %p330 = scmp.eq.s32.totalorder %s58, 0
      %p331 = por %p329, %p330
      %p332 = scmp.ne.s32.totalorder %s320, %s321
      %p333 = scmp.eq.s32.totalorder %s59, 1
      %p334 = por %p332, %p333
      %p336 = scmp.ne.s32.totalorder %s321, %s335
      %p337 = scmp.eq.s32.totalorder %s59, 0
      %p338 = por %p336, %p337
      %s340 = sadd.s32 %s339, 1
      %p343 = scmp.eq.s32.totalorder %s53, 1
      %p344 = scmp.ne.s32.totalorder %s339, %s341
      %p345 = scmp.eq.s32.totalorder %s53, 0
      %p346 = por %p344, %p345
      %p347 = scmp.ne.s32.totalorder %s339, %s341
      %p348 = scmp.eq.s32.totalorder %s58, 1
      %p349 = por %p347, %p348
      %p350 = scmp.ne.s32.totalorder %s341, %s342
      %p351 = scmp.eq.s32.totalorder %s58, 0
      %p352 = por %p350, %p351
      %p353 = scmp.ne.s32.totalorder %s341, %s342
      %p354 = scmp.eq.s32.totalorder %s59, 1
      %p355 = por %p353, %p354
      %p357 = scmp.ne.s32.totalorder %s342, %s356
      %p358 = scmp.eq.s32.totalorder %s59, 0
      %p359 = por %p357, %p358
      %s361 = sadd.s32 %s360, 1
      %p364 = scmp.eq.s32.totalorder %s53, 1
      %p365 = scmp.ne.s32.totalorder %s360, %s362
      %p366 = scmp.eq.s32.totalorder %s53, 0
      %p367 = por %p365, %p366
      %p368 = scmp.ne.s32.totalorder %s360, %s362
      %p369 = scmp.eq.s32.totalorder %s58, 1
      %p370 = por %p368, %p369
      %p371 = scmp.ne.s32.totalorder %s362, %s363
      %p372 = scmp.eq.s32.totalorder %s58, 0
      %p373 = por %p371, %p372
      %p374 = scmp.ne.s32.totalorder %s362, %s363
      %p375 = scmp.eq.s32.totalorder %s59, 1
      %p376 = por %p374, %p375
      %p378 = scmp.ne.s32.totalorder %s363, %s377
      %p379 = scmp.eq.s32.totalorder %s59, 0
      %p380 = por %p378, %p379
      %s382 = sadd.s32 %s381, 1
      %p385 = scmp.eq.s32.totalorder %s53, 1
      %p386 = scmp.ne.s32.totalorder %s381, %s383
      %p387 = scmp.eq.s32.totalorder %s53, 0
      %p388 = por %p386, %p387
      %p389 = scmp.ne.s32.totalorder %s381, %s383
      %p390 = scmp.eq.s32.totalorder %s58, 1
      %p391 = por %p389, %p390
      %p392 = scmp.ne.s32.totalorder %s383, %s384
      %p393 = scmp.eq.s32.totalorder %s58, 0
      %p394 = por %p392, %p393
      %p395 = scmp.ne.s32.totalorder %s383, %s384
      %p396 = scmp.eq.s32.totalorder %s59, 1
      %p397 = por %p395, %p396
      %p399 = scmp.ne.s32.totalorder %s384, %s398
      %p400 = scmp.eq.s32.totalorder %s59, 0
      %p401 = por %p399, %p400
      %s403 = sadd.s32 %s402, 1
      %p406 = scmp.eq.s32.totalorder %s53, 1
      %p407 = scmp.ne.s32.totalorder %s402, %s404
      %p408 = scmp.eq.s32.totalorder %s53, 0
      %p409 = por %p407, %p408
      %p410 = scmp.ne.s32.totalorder %s402, %s404
      %p411 = scmp.eq.s32.totalorder %s58, 1
      %p412 = por %p410, %p411
      %p413 = scmp.ne.s32.totalorder %s404, %s405
      %p414 = scmp.eq.s32.totalorder %s58, 0
      %p415 = por %p413, %p414
      %p416 = scmp.ne.s32.totalorder %s404, %s405
      %p417 = scmp.eq.s32.totalorder %s59, 1
      %p418 = por %p416, %p417
      %p420 = scmp.ne.s32.totalorder %s405, %s419
      %p421 = scmp.eq.s32.totalorder %s59, 0
      %p422 = por %p420, %p421
      %s424 = sadd.s32 %s423, 1
      %p427 = scmp.eq.s32.totalorder %s53, 1
      %p428 = scmp.ne.s32.totalorder %s423, %s425
      %p429 = scmp.eq.s32.totalorder %s53, 0
      %p430 = por %p428, %p429
      %p431 = scmp.ne.s32.totalorder %s423, %s425
      %p432 = scmp.eq.s32.totalorder %s58, 1
      %p433 = por %p431, %p432
      %p434 = scmp.ne.s32.totalorder %s425, %s426
      %p435 = scmp.eq.s32.totalorder %s58, 0
      %p436 = por %p434, %p435
      %p437 = scmp.ne.s32.totalorder %s425, %s426
      %p438 = scmp.eq.s32.totalorder %s59, 1
      %p439 = por %p437, %p438
      %p441 = scmp.ne.s32.totalorder %s426, %s440
      %p442 = scmp.eq.s32.totalorder %s59, 0
      %p443 = por %p441, %p442
      %s445 = sadd.s32 %s444, 1
      %p448 = scmp.eq.s32.totalorder %s53, 1
      %p449 = scmp.ne.s32.totalorder %s444, %s446
      %p450 = scmp.eq.s32.totalorder %s53, 0
      %p451 = por %p449, %p450
      %p452 = scmp.ne.s32.totalorder %s444, %s446
      %p453 = scmp.eq.s32.totalorder %s58, 1
      %p454 = por %p452, %p453
      %p455 = scmp.ne.s32.totalorder %s446, %s447
      %p456 = scmp.eq.s32.totalorder %s58, 0
      %p457 = por %p455, %p456
      %p458 = scmp.ne.s32.totalorder %s446, %s447
      %p459 = scmp.eq.s32.totalorder %s59, 1
      %p460 = por %p458, %p459
      %p462 = scmp.ne.s32.totalorder %s447, %s461
      %p463 = scmp.eq.s32.totalorder %s59, 0
      %p464 = por %p462, %p463
      %s466 = sadd.s32 %s465, 1
      %p469 = scmp.eq.s32.totalorder %s53, 1
      %p470 = scmp.ne.s32.totalorder %s465, %s467
      %p471 = scmp.eq.s32.totalorder %s53, 0
      %p472 = por %p470, %p471
      %p473 = scmp.ne.s32.totalorder %s465, %s467
      %p474 = scmp.eq.s32.totalorder %s58, 1
      %p475 = por %p473, %p474
      %p476 = scmp.ne.s32.totalorder %s467, %s468
      %p477 = scmp.eq.s32.totalorder %s58, 0
      %p478 = por %p476, %p477
      %p479 = scmp.ne.s32.totalorder %s467, %s468
      %p480 = scmp.eq.s32.totalorder %s59, 1
      %p481 = por %p479, %p480
      %p483 = scmp.ne.s32.totalorder %s468, %s482
      %p484 = scmp.eq.s32.totalorder %s59, 0
      %p485 = por %p483, %p484
      %s487 = sadd.s32 %s486, 1
      %p490 = scmp.eq.s32.totalorder %s53, 1
      %p491 = scmp.ne.s32.totalorder %s486, %s488
      %p492 = scmp.eq.s32.totalorder %s53, 0
      %p493 = por %p491, %p492
      %p494 = scmp.ne.s32.totalorder %s486, %s488
      %p495 = scmp.eq.s32.totalorder %s58, 1
      %p496 = por %p494, %p495
      %p497 = scmp.ne.s32.totalorder %s488, %s489
      %p498 = scmp.eq.s32.totalorder %s58, 0
      %p499 = por %p497, %p498
      %p500 = scmp.ne.s32.totalorder %s488, %s489
      %p501 = scmp.eq.s32.totalorder %s59, 1
      %p502 = por %p500, %p501
      %p504 = scmp.ne.s32.totalorder %s489, %s503
      %p505 = scmp.eq.s32.totalorder %s59, 0
      %p506 = por %p504, %p505
      %s508 = sadd.s32 %s507, 1
      %p511 = scmp.eq.s32.totalorder %s53, 1
      %p512 = scmp.ne.s32.totalorder %s507, %s509
      %p513 = scmp.eq.s32.totalorder %s53, 0
      %p514 = por %p512, %p513
      %p515 = scmp.ne.s32.totalorder %s507, %s509
      %p516 = scmp.eq.s32.totalorder %s58, 1
      %p517 = por %p515, %p516
      %p518 = scmp.ne.s32.totalorder %s509, %s510
      %p519 = scmp.eq.s32.totalorder %s58, 0
      %p520 = por %p518, %p519
      %p521 = scmp.ne.s32.totalorder %s509, %s510
      %p522 = scmp.eq.s32.totalorder %s59, 1
      %p523 = por %p521, %p522
      %p525 = scmp.ne.s32.totalorder %s510, %s524
      %p526 = scmp.eq.s32.totalorder %s59, 0
      %p527 = por %p525, %p526
      %s529 = sadd.s32 %s528, 1
      %p532 = scmp.eq.s32.totalorder %s53, 1
      %p533 = scmp.ne.s32.totalorder %s528, %s530
      %p534 = scmp.eq.s32.totalorder %s53, 0
      %p535 = por %p533, %p534
      %p536 = scmp.ne.s32.totalorder %s528, %s530
      %p537 = scmp.eq.s32.totalorder %s58, 1
      %p538 = por %p536, %p537
      %p539 = scmp.ne.s32.totalorder %s530, %s531
      %p540 = scmp.eq.s32.totalorder %s58, 0
      %p541 = por %p539, %p540
      %p542 = scmp.ne.s32.totalorder %s530, %s531
      %p543 = scmp.eq.s32.totalorder %s59, 1
      %p544 = por %p542, %p543
      %p546 = scmp.ne.s32.totalorder %s531, %s545
      %p547 = scmp.eq.s32.totalorder %s59, 0
      %p548 = por %p546, %p547
      %s550 = sadd.s32 %s549, 1
      %p553 = scmp.eq.s32.totalorder %s53, 1
      %p554 = scmp.ne.s32.totalorder %s549, %s551
      %p555 = scmp.eq.s32.totalorder %s53, 0
      %p556 = por %p554, %p555
      %p557 = scmp.ne.s32.totalorder %s549, %s551
      %p558 = scmp.eq.s32.totalorder %s58, 1
      %p559 = por %p557, %p558
      %p560 = scmp.ne.s32.totalorder %s551, %s552
      %p561 = scmp.eq.s32.totalorder %s58, 0
      %p562 = por %p560, %p561
      %p563 = scmp.ne.s32.totalorder %s551, %s552
      %p564 = scmp.eq.s32.totalorder %s59, 1
      %p565 = por %p563, %p564
      %p567 = scmp.ne.s32.totalorder %s552, %s566
      %p568 = scmp.eq.s32.totalorder %s59, 0
      %p569 = por %p567, %p568
      %s571 = sadd.s32 %s570, 1
      %p574 = scmp.eq.s32.totalorder %s53, 1
      %p575 = scmp.ne.s32.totalorder %s570, %s572
      %p576 = scmp.eq.s32.totalorder %s53, 0
      %p577 = por %p575, %p576
      %p578 = scmp.ne.s32.totalorder %s570, %s572
      %p579 = scmp.eq.s32.totalorder %s58, 1
      %p580 = por %p578, %p579
      %p581 = scmp.ne.s32.totalorder %s572, %s573
      %p582 = scmp.eq.s32.totalorder %s58, 0
      %p583 = por %p581, %p582
      %p584 = scmp.ne.s32.totalorder %s572, %s573
      %p585 = scmp.eq.s32.totalorder %s59, 1
      %p586 = por %p584, %p585
      %p588 = scmp.ne.s32.totalorder %s573, %s587
      %p589 = scmp.eq.s32.totalorder %s59, 0
      %p590 = por %p588, %p589
      %s592 = sadd.s32 %s591, 1
      %p595 = scmp.eq.s32.totalorder %s53, 1
      %p596 = scmp.ne.s32.totalorder %s591, %s593
      %p597 = scmp.eq.s32.totalorder %s53, 0
      %p598 = por %p596, %p597
      %p599 = scmp.ne.s32.totalorder %s591, %s593
      %p600 = scmp.eq.s32.totalorder %s58, 1
      %p601 = por %p599, %p600
      %p602 = scmp.ne.s32.totalorder %s593, %s594
      %p603 = scmp.eq.s32.totalorder %s58, 0
      %p604 = por %p602, %p603
      %p605 = scmp.ne.s32.totalorder %s593, %s594
      %p606 = scmp.eq.s32.totalorder %s59, 1
      %p607 = por %p605, %p606
      %p609 = scmp.ne.s32.totalorder %s594, %s608
      %p610 = scmp.eq.s32.totalorder %s59, 0
      %p611 = por %p609, %p610
      %s613 = sadd.s32 %s612, 1
      %p616 = scmp.eq.s32.totalorder %s53, 1
      %p617 = scmp.ne.s32.totalorder %s612, %s614
      %p618 = scmp.eq.s32.totalorder %s53, 0
      %p619 = por %p617, %p618
      %p620 = scmp.ne.s32.totalorder %s612, %s614
      %p621 = scmp.eq.s32.totalorder %s58, 1
      %p622 = por %p620, %p621
      %p623 = scmp.ne.s32.totalorder %s614, %s615
      %p624 = scmp.eq.s32.totalorder %s58, 0
      %p625 = por %p623, %p624
      %p626 = scmp.ne.s32.totalorder %s614, %s615
      %p627 = scmp.eq.s32.totalorder %s59, 1
      %p628 = por %p626, %p627
      %p630 = scmp.ne.s32.totalorder %s615, %s629
      %p631 = scmp.eq.s32.totalorder %s59, 0
      %p632 = por %p630, %p631
      %s633 = ssub.s32 %s53, %s60
      %p634 = scmp.eq.s32.totalorder %s633, 0
      %s636 = sadd.s32 %s635, 1
      %s637 = scalar_select %p634, %s635, %s636
      %p640 = pneg %p634
      %p641 = scmp.eq.s32.totalorder %s53, 1
      %p642 = por %p640, %p641
      %p643 = scmp.ne.s32.totalorder %s635, %s638
      %p644 = scmp.eq.s32.totalorder %s53, 0
      %p645 = por %p643, %p644
      %p646 = scmp.ne.s32.totalorder %s635, %s638
      %p647 = scmp.eq.s32.totalorder %s58, 1
      %p648 = por %p646, %p647
      %p649 = scmp.ne.s32.totalorder %s638, %s639
      %p650 = scmp.eq.s32.totalorder %s58, 0
      %p651 = por %p649, %p650
      %p652 = scmp.ne.s32.totalorder %s638, %s639
      %p653 = scmp.eq.s32.totalorder %s59, 1
      %p654 = por %p652, %p653
      %p656 = scmp.ne.s32.totalorder %s639, %s655
      %p657 = scmp.eq.s32.totalorder %s59, 0
      %p658 = por %p656, %p657
      %s659 = ssub.s32 %s53, %s60
      %p660 = scmp.eq.s32.totalorder %s659, 0
      %s662 = sadd.s32 %s661, 1
      %s663 = scalar_select %p660, %s661, %s662
      %p666 = pneg %p660
      %p667 = scmp.eq.s32.totalorder %s53, 1
      %p668 = por %p666, %p667
      %p669 = scmp.ne.s32.totalorder %s661, %s664
      %p670 = scmp.eq.s32.totalorder %s53, 0
      %p671 = por %p669, %p670
      %p672 = scmp.ne.s32.totalorder %s661, %s664
      %p673 = scmp.eq.s32.totalorder %s58, 1
      %p674 = por %p672, %p673
      %p675 = scmp.ne.s32.totalorder %s664, %s665
      %p676 = scmp.eq.s32.totalorder %s58, 0
      %p677 = por %p675, %p676
      %p678 = scmp.ne.s32.totalorder %s664, %s665
      %p679 = scmp.eq.s32.totalorder %s59, 1
      %p680 = por %p678, %p679
      %p682 = scmp.ne.s32.totalorder %s665, %s681
      %p683 = scmp.eq.s32.totalorder %s59, 0
      %p684 = por %p682, %p683
      %p685 = scmp.le.s32.totalorder 1, %s53
      %p686 = scmp.lt.s32.totalorder %s53, 3
      %p687 = pnand %p685, %p686
      %p688 = pneg %p687
      // Predicated region
      $region9: #{_lambda_.1} parent=5 // pred_check
        _
      $region10: #{_lambda_.1} parent=5 // pred_check_branch
        %690 = sbr.rel (%p687) target = $region12
      $region11: #{_lambda_.1} parent=5 // pred_region
        %s691 = ssub.s32 %s53, 1
        // Predicated region
        $region13: #{_lambda_.1} parent=11 // pred_check
          %p692 = pneg %p100
        $region14: #{_lambda_.1} parent=11 // pred_check_branch
          %694 = sbr.rel (%p692) target = $region16
        $region15: #{_lambda_.1} parent=11 // pred_region
          %696 = vsyncadd [#allocation6], 0
          %s697 = sshll.u32 %s1, 4
          %s698 = int_to_ptr.hbm [resolvable:$true] %s697
          %s699 = sshll.u32 [#allocation5], 4
          %s700 = int_to_ptr.vmem [resolvable:$true] %s699
          %705 = dma.hbm_to_vmem [thread:$0]  %s698, 2048, %s700, [#allocation6], 512, 512, 32
        $region16: #{_lambda_.1} parent=11 // pred_fallthru
          _
        // Predicated region
        $region17: #{_lambda_.1} parent=11 // pred_check
          %p706 = pneg %p121
        $region18: #{_lambda_.1} parent=11 // pred_check_branch
          %708 = sbr.rel (%p706) target = $region20
        $region19: #{_lambda_.1} parent=11 // pred_region
          %710 = vsyncadd [#allocation6], 0
          %s711 = sshll.u32 %s2, 4
          %s712 = int_to_ptr.hbm [resolvable:$true] %s711
          %s713 = sshll.u32 [#allocation7], 4
          %s714 = int_to_ptr.vmem [resolvable:$true] %s713
          %719 = dma.hbm_to_vmem [thread:$0]  %s712, 1024, %s714, [#allocation6], 128, 128, 8
        $region20: #{_lambda_.1} parent=11 // pred_fallthru
          _
        // Predicated region
        $region21: #{_lambda_.1} parent=11 // pred_check
          %p720 = pneg %p142
        $region22: #{_lambda_.1} parent=11 // pred_check_branch
          %722 = sbr.rel (%p720) target = $region24
        $region23: #{_lambda_.1} parent=11 // pred_region
          %724 = vsyncadd [#allocation9], 0
          %s726 = sshll.u32 %s3, 4
          %s727 = int_to_ptr.hbm [resolvable:$true] %s726
          %s728 = sshll.u32 [#allocation8], 4
          %s729 = int_to_ptr.vmem [resolvable:$true] %s728
          %731 = dma.hbm_to_vmem [thread:$0]  %s727, 32, %s729, [#allocation9]
        $region24: #{_lambda_.1} parent=11 // pred_fallthru
          _
        // Predicated region
        $region25: #{_lambda_.1} parent=11 // pred_check
          %p732 = pneg %p163
        $region26: #{_lambda_.1} parent=11 // pred_check_branch
          %734 = sbr.rel (%p732) target = $region28
        $region27: #{_lambda_.1} parent=11 // pred_region
          %736 = vsyncadd [#allocation9], 0
          %s737 = sshll.u32 %s4, 4
          %s738 = int_to_ptr.hbm [resolvable:$true] %s737
          %s739 = sshll.u32 [#allocation10], 4
          %s740 = int_to_ptr.vmem [resolvable:$true] %s739
          %745 = dma.hbm_to_vmem [thread:$0]  %s738, 16384, %s740, [#allocation9], 512, 512, 32
        $region28: #{_lambda_.1} parent=11 // pred_fallthru
          _
        // Predicated region
        $region29: #{_lambda_.1} parent=11 // pred_check
          %p746 = pneg %p184
        $region30: #{_lambda_.1} parent=11 // pred_check_branch
          %748 = sbr.rel (%p746) target = $region32
        $region31: #{_lambda_.1} parent=11 // pred_region
          %750 = vsyncadd [#allocation12], 0
          %s751 = sshll.u32 %s5, 4
          %s752 = int_to_ptr.hbm [resolvable:$true] %s751
          %s753 = sshll.u32 [#allocation11], 4
          %s754 = int_to_ptr.vmem [resolvable:$true] %s753
          %759 = dma.hbm_to_vmem [thread:$0]  %s752, 512, %s754, [#allocation12], 128, 128, 8
        $region32: #{_lambda_.1} parent=11 // pred_fallthru
          _
        // Predicated region
        $region33: #{_lambda_.1} parent=11 // pred_check
          %p760 = pneg %p205
        $region34: #{_lambda_.1} parent=11 // pred_check_branch
          %762 = sbr.rel (%p760) target = $region36
        $region35: #{_lambda_.1} parent=11 // pred_region
          %764 = vsyncadd [#allocation12], 0
          %s766 = sshll.u32 %s6, 4
          %s767 = int_to_ptr.hbm [resolvable:$true] %s766
          %s768 = sshll.u32 [#allocation13], 4
          %s769 = int_to_ptr.vmem [resolvable:$true] %s768
          %771 = dma.hbm_to_vmem [thread:$0]  %s767, 32, %s769, [#allocation12]
        $region36: #{_lambda_.1} parent=11 // pred_fallthru
          _
        // Predicated region
        $region37: #{_lambda_.1} parent=11 // pred_check
          %p772 = pneg %p226
        $region38: #{_lambda_.1} parent=11 // pred_check_branch
          %774 = sbr.rel (%p772) target = $region40
        $region39: #{_lambda_.1} parent=11 // pred_region
          %776 = vsyncadd [#allocation15], 0
          %s777 = sshll.u32 %s7, 4
          %s778 = int_to_ptr.hbm [resolvable:$true] %s777
          %s779 = sshll.u32 [#allocation14], 4
          %s780 = int_to_ptr.vmem [resolvable:$true] %s779
          %785 = dma.hbm_to_vmem [thread:$0]  %s778, 16384, %s780, [#allocation15], 512, 512, 32
        $region40: #{_lambda_.1} parent=11 // pred_fallthru
          _
        // Predicated region
        $region41: #{_lambda_.1} parent=11 // pred_check
          %p786 = pneg %p247
        $region42: #{_lambda_.1} parent=11 // pred_check_branch
          %788 = sbr.rel (%p786) target = $region44
        $region43: #{_lambda_.1} parent=11 // pred_region
          %790 = vsyncadd [#allocation15], 0
          %s791 = sshll.u32 %s8, 4
          %s792 = int_to_ptr.hbm [resolvable:$true] %s791
          %s793 = sshll.u32 [#allocation16], 4
          %s794 = int_to_ptr.vmem [resolvable:$true] %s793
          %799 = dma.hbm_to_vmem [thread:$0]  %s792, 256, %s794, [#allocation15], 64, 64, 4
        $region44: #{_lambda_.1} parent=11 // pred_fallthru
          _
        // Predicated region
        $region45: #{_lambda_.1} parent=11 // pred_check
          %p800 = pneg %p268
        $region46: #{_lambda_.1} parent=11 // pred_check_branch
          %802 = sbr.rel (%p800) target = $region48
        $region47: #{_lambda_.1} parent=11 // pred_region
          _
        $region48: #{_lambda_.1} parent=11 // pred_fallthru
          _
        // Predicated region
        $region49: #{_lambda_.1} parent=11 // pred_check
          %p803 = pneg %p289
        $region50: #{_lambda_.1} parent=11 // pred_check_branch
          %805 = sbr.rel (%p803) target = $region52
        $region51: #{_lambda_.1} parent=11 // pred_region
          %807 = vsyncadd [#allocation18], 0
          %s808 = sshll.u32 %s10, 4
          %s809 = int_to_ptr.hbm [resolvable:$true] %s808
          %s810 = sshll.u32 [#allocation17], 4
          %s811 = int_to_ptr.vmem [resolvable:$true] %s810
          %816 = dma.hbm_to_vmem [thread:$0]  %s809, 4096, %s811, [#allocation18], 128, 128, 8
        $region52: #{_lambda_.1} parent=11 // pred_fallthru
          _
        // Predicated region
        $region53: #{_lambda_.1} parent=11 // pred_check
          %p817 = pneg %p310
        $region54: #{_lambda_.1} parent=11 // pred_check_branch
          %819 = sbr.rel (%p817) target = $region56
        $region55: #{_lambda_.1} parent=11 // pred_region
          %821 = vsyncadd [#allocation18], 0
          %s823 = sshll.u32 %s11, 4
          %s824 = int_to_ptr.hbm [resolvable:$true] %s823
          %s825 = sshll.u32 [#allocation19], 4
          %s826 = int_to_ptr.vmem [resolvable:$true] %s825
          %828 = dma.hbm_to_vmem [thread:$0]  %s824, 16, %s826, [#allocation18]
        $region56: #{_lambda_.1} parent=11 // pred_fallthru
          _
        // Predicated region
        $region57: #{_lambda_.1} parent=11 // pred_check
          %p829 = pneg %p331
        $region58: #{_lambda_.1} parent=11 // pred_check_branch
          %831 = sbr.rel (%p829) target = $region60
        $region59: #{_lambda_.1} parent=11 // pred_region
          %833 = vsyncadd [#allocation21], 0
          %s834 = sshll.u32 %s12, 4
          %s835 = int_to_ptr.hbm [resolvable:$true] %s834
          %s836 = sshll.u32 [#allocation20], 4
          %s837 = int_to_ptr.vmem [resolvable:$true] %s836
          %842 = dma.hbm_to_vmem [thread:$0]  %s835, 256, %s837, [#allocation21], 128, 128, 8
        $region60: #{_lambda_.1} parent=11 // pred_fallthru
          _
        // Predicated region
        $region61: #{_lambda_.1} parent=11 // pred_check
          %p843 = pneg %p352
        $region62: #{_lambda_.1} parent=11 // pred_check_branch
          %845 = sbr.rel (%p843) target = $region64
        $region63: #{_lambda_.1} parent=11 // pred_region
          _
        $region64: #{_lambda_.1} parent=11 // pred_fallthru
          _
        // Predicated region
        $region65: #{_lambda_.1} parent=11 // pred_check
          %p846 = pneg %p373
        $region66: #{_lambda_.1} parent=11 // pred_check_branch
          %848 = sbr.rel (%p846) target = $region68
        $region67: #{_lambda_.1} parent=11 // pred_region
          _
        $region68: #{_lambda_.1} parent=11 // pred_fallthru
          _
        // Predicated region
        $region69: #{_lambda_.1} parent=11 // pred_check
          %p849 = pneg %p394
        $region70: #{_lambda_.1} parent=11 // pred_check_branch
          %851 = sbr.rel (%p849) target = $region72
        $region71: #{_lambda_.1} parent=11 // pred_region
          _
        $region72: #{_lambda_.1} parent=11 // pred_fallthru
          _
        // Predicated region
        $region73: #{_lambda_.1} parent=11 // pred_check
          %p852 = pneg %p415
        $region74: #{_lambda_.1} parent=11 // pred_check_branch
          %854 = sbr.rel (%p852) target = $region76
        $region75: #{_lambda_.1} parent=11 // pred_region
          %856 = vsyncadd [#allocation21], 0
          %s857 = sshll.u32 %s16, 4
          %s858 = int_to_ptr.hbm [resolvable:$true] %s857
          %s859 = sshll.u32 [#allocation22], 4
          %s860 = int_to_ptr.vmem [resolvable:$true] %s859
          %865 = dma.hbm_to_vmem [thread:$0]  %s858, 2048, %s860, [#allocation21], 1024, 1024, 64
        $region76: #{_lambda_.1} parent=11 // pred_fallthru
          _
        // Predicated region
        $region77: #{_lambda_.1} parent=11 // pred_check
          %p866 = pneg %p436
        $region78: #{_lambda_.1} parent=11 // pred_check_branch
          %868 = sbr.rel (%p866) target = $region80
        $region79: #{_lambda_.1} parent=11 // pred_region
          _
        $region80: #{_lambda_.1} parent=11 // pred_fallthru
          _
        // Predicated region
        $region81: #{_lambda_.1} parent=11 // pred_check
          %p869 = pneg %p457
        $region82: #{_lambda_.1} parent=11 // pred_check_branch
          %871 = sbr.rel (%p869) target = $region84
        $region83: #{_lambda_.1} parent=11 // pred_region
          %873 = vsyncadd [#allocation24], 0
          %s874 = sshll.u32 %s18, 4
          %s875 = int_to_ptr.hbm [resolvable:$true] %s874
          %s876 = sshll.u32 [#allocation23], 4
          %s877 = int_to_ptr.vmem [resolvable:$true] %s876
          %882 = dma.hbm_to_vmem [thread:$0]  %s875, 16384, %s877, [#allocation24], 512, 512, 32
        $region84: #{_lambda_.1} parent=11 // pred_fallthru
          _
        // Predicated region
        $region85: #{_lambda_.1} parent=11 // pred_check
          %p883 = pneg %p478
        $region86: #{_lambda_.1} parent=11 // pred_check_branch
          %885 = sbr.rel (%p883) target = $region88
        $region87: #{_lambda_.1} parent=11 // pred_region
          %887 = vsyncadd [#allocation24], 0
          %s888 = sshll.u32 %s19, 4
          %s889 = int_to_ptr.hbm [resolvable:$true] %s888
          %s890 = sshll.u32 [#allocation25], 4
          %s891 = int_to_ptr.vmem [resolvable:$true] %s890
          %896 = dma.hbm_to_vmem [thread:$0]  %s889, 512, %s891, [#allocation24], 128, 128, 8
        $region88: #{_lambda_.1} parent=11 // pred_fallthru
          _
        // Predicated region
        $region89: #{_lambda_.1} parent=11 // pred_check
          %p897 = pneg %p499
        $region90: #{_lambda_.1} parent=11 // pred_check_branch
          %899 = sbr.rel (%p897) target = $region92
        $region91: #{_lambda_.1} parent=11 // pred_region
          _
        $region92: #{_lambda_.1} parent=11 // pred_fallthru
          _
        // Predicated region
        $region93: #{_lambda_.1} parent=11 // pred_check
          %p900 = pneg %p520
        $region94: #{_lambda_.1} parent=11 // pred_check_branch
          %902 = sbr.rel (%p900) target = $region96
        $region95: #{_lambda_.1} parent=11 // pred_region
          %904 = vsyncadd [#allocation27], 0
          %s905 = sshll.u32 %s21, 4
          %s906 = int_to_ptr.hbm [resolvable:$true] %s905
          %s907 = sshll.u32 [#allocation26], 4
          %s908 = int_to_ptr.vmem [resolvable:$true] %s907
          %913 = dma.hbm_to_vmem [thread:$0]  %s906, 16384, %s908, [#allocation27], 512, 512, 32
        $region96: #{_lambda_.1} parent=11 // pred_fallthru
          _
        // Predicated region
        $region97: #{_lambda_.1} parent=11 // pred_check
          %p914 = pneg %p541
        $region98: #{_lambda_.1} parent=11 // pred_check_branch
          %916 = sbr.rel (%p914) target = $region100
        $region99: #{_lambda_.1} parent=11 // pred_region
          %918 = vsyncadd [#allocation27], 0
          %s919 = sshll.u32 %s22, 4
          %s920 = int_to_ptr.hbm [resolvable:$true] %s919
          %s921 = sshll.u32 [#allocation28], 4
          %s922 = int_to_ptr.vmem [resolvable:$true] %s921
          %927 = dma.hbm_to_vmem [thread:$0]  %s920, 1024, %s922, [#allocation27], 128, 128, 8
        $region100: #{_lambda_.1} parent=11 // pred_fallthru
          _
        // Predicated region
        $region101: #{_lambda_.1} parent=11 // pred_check
          %p928 = pneg %p562
        $region102: #{_lambda_.1} parent=11 // pred_check_branch
          %930 = sbr.rel (%p928) target = $region104
        $region103: #{_lambda_.1} parent=11 // pred_region
          _
        $region104: #{_lambda_.1} parent=11 // pred_fallthru
          _
        // Predicated region
        $region105: #{_lambda_.1} parent=11 // pred_check
          %p931 = pneg %p583
        $region106: #{_lambda_.1} parent=11 // pred_check_branch
          %933 = sbr.rel (%p931) target = $region108
        $region107: #{_lambda_.1} parent=11 // pred_region
          %935 = vsyncadd [#allocation30], 0
          %s936 = sshll.u32 %s24, 4
          %s937 = int_to_ptr.hbm [resolvable:$true] %s936
          %s938 = sshll.u32 [#allocation29], 4
          %s939 = int_to_ptr.vmem [resolvable:$true] %s938
          %944 = dma.hbm_to_vmem [thread:$0]  %s937, 2048, %s939, [#allocation30], 64, 64, 4
        $region108: #{_lambda_.1} parent=11 // pred_fallthru
          _
        // Predicated region
        $region109: #{_lambda_.1} parent=11 // pred_check
          %p945 = pneg %p604
        $region110: #{_lambda_.1} parent=11 // pred_check_branch
          %947 = sbr.rel (%p945) target = $region112
        $region111: #{_lambda_.1} parent=11 // pred_region
          %949 = vsyncadd [#allocation30], 0
          %s950 = sshll.u32 %s25, 4
          %s951 = int_to_ptr.hbm [resolvable:$true] %s950
          %s952 = sshll.u32 [#allocation31], 4
          %s953 = int_to_ptr.vmem [resolvable:$true] %s952
          %958 = dma.hbm_to_vmem [thread:$0]  %s951, 2048, %s953, [#allocation30], 128, 128, 8
        $region112: #{_lambda_.1} parent=11 // pred_fallthru
          _
        // Predicated region
        $region113: #{_lambda_.1} parent=11 // pred_check
          %p959 = pneg %p625
        $region114: #{_lambda_.1} parent=11 // pred_check_branch
          %961 = sbr.rel (%p959) target = $region116
        $region115: #{_lambda_.1} parent=11 // pred_region
          _
        $region116: #{_lambda_.1} parent=11 // pred_fallthru
          _
      $region12: #{_lambda_.1} parent=5 // pred_fallthru
        _
      %p962 = scmp.lt.s32.totalorder %s53, 2
      // Predicated region
      $region117: #{_lambda_.1} parent=5 // pred_check
        %p963 = pneg %p962
      $region118: #{_lambda_.1} parent=5 // pred_check_branch
        %965 = sbr.rel (%p963) target = $region120
      $region119: #{_lambda_.1} parent=5 // pred_region
        // Predicated region
        $region121: #{_lambda_.1} parent=119 // pred_check
          %p966 = pneg %p73
        $region122: #{_lambda_.1} parent=119 // pred_check_branch
          %968 = sbr.rel (%p966) target = $region124
        $region123: #{_lambda_.1} parent=119 // pred_region
          %s969 = sand.u32 %s63, 1
          %s970 = scalar_lea.sflag [#allocation3], %s969
          %s971 = sand.u32 %s63, 1
          %s972 = smul.addr %s971, 32
          %s973 = scalar_lea.vmem [#allocation2], %s972
          %975 = vsyncadd %s970, 0
          %s976 = smul.addr %s53, 4
          %s977 = smul.addr %s976, 8
          %s978 = scalar_lea.hbm %s0, %s977
          %s979 = sshll.u32 %s978, 4
          %s980 = int_to_ptr.hbm [resolvable:$true] %s979
          %s981 = sshll.u32 %s973, 4
          %s982 = int_to_ptr.vmem [resolvable:$true] %s981
          %987 = dma.hbm_to_vmem [thread:$0]  %s980, 512, %s982, %s970, 128, 128, 8
        $region124: #{_lambda_.1} parent=119 // pred_fallthru
          _
      $region120: #{_lambda_.1} parent=5 // pred_fallthru
        _
      %p988 = scmp.le.s32.totalorder 1, %s53
      %p989 = scmp.lt.s32.totalorder %s53, 3
      %p990 = pnand %p988, %p989
      %p991 = pneg %p990
      // Predicated region
      $region125: #{_lambda_.1} parent=5 // pred_check
        _
      $region126: #{_lambda_.1} parent=5 // pred_check_branch
        %993 = sbr.rel (%p990) target = $region128
      $region127: #{_lambda_.1} parent=5 // pred_region
        %s994 = ssub.s32 %s53, 1
        %s995 = sand.u32 %s66, 1
        %s996 = scalar_lea.sflag [#allocation3], %s995
        %s997 = sand.u32 %s66, 1
        %s998 = smul.addr %s997, 32
        %s999 = scalar_lea.vmem [#allocation2], %s998
        // Predicated region
        $region129: #{_lambda_.1} parent=127 // pred_check
          %p1000 = pneg %p79
        $region130: #{_lambda_.1} parent=127 // pred_check_branch
          %1002 = sbr.rel (%p1000) target = $region132
        $region131: #{_lambda_.1} parent=127 // pred_region
          %1004 = dma.done %s996, 512
        $region132: #{_lambda_.1} parent=127 // pred_fallthru
          _
        // Predicated region
        $region133: #{_lambda_.1} parent=127 // pred_check
          %p1005 = pneg %p100
        $region134: #{_lambda_.1} parent=127 // pred_check_branch
          %1007 = sbr.rel (%p1005) target = $region136
        $region135: #{_lambda_.1} parent=127 // pred_region
          %1009 = dma.done [#allocation6], 2048
        $region136: #{_lambda_.1} parent=127 // pred_fallthru
          _
        // Predicated region
        $region137: #{_lambda_.1} parent=127 // pred_check
          %p1010 = pneg %p121
        $region138: #{_lambda_.1} parent=127 // pred_check_branch
          %1012 = sbr.rel (%p1010) target = $region140
        $region139: #{_lambda_.1} parent=127 // pred_region
          %1014 = dma.done [#allocation6], 1024
        $region140: #{_lambda_.1} parent=127 // pred_fallthru
          _
        // Predicated region
        $region141: #{_lambda_.1} parent=127 // pred_check
          %p1015 = pneg %p142
        $region142: #{_lambda_.1} parent=127 // pred_check_branch
          %1017 = sbr.rel (%p1015) target = $region144
        $region143: #{_lambda_.1} parent=127 // pred_region
          %1019 = dma.done [#allocation9], 32
        $region144: #{_lambda_.1} parent=127 // pred_fallthru
          _
        // Predicated region
        $region145: #{_lambda_.1} parent=127 // pred_check
          %p1020 = pneg %p163
        $region146: #{_lambda_.1} parent=127 // pred_check_branch
          %1022 = sbr.rel (%p1020) target = $region148
        $region147: #{_lambda_.1} parent=127 // pred_region
          %1024 = dma.done [#allocation9], 16384
        $region148: #{_lambda_.1} parent=127 // pred_fallthru
          _
        // Predicated region
        $region149: #{_lambda_.1} parent=127 // pred_check
          %p1025 = pneg %p184
        $region150: #{_lambda_.1} parent=127 // pred_check_branch
          %1027 = sbr.rel (%p1025) target = $region152
        $region151: #{_lambda_.1} parent=127 // pred_region
          %1029 = dma.done [#allocation12], 512
        $region152: #{_lambda_.1} parent=127 // pred_fallthru
          _
        // Predicated region
        $region153: #{_lambda_.1} parent=127 // pred_check
          %p1030 = pneg %p205
        $region154: #{_lambda_.1} parent=127 // pred_check_branch
          %1032 = sbr.rel (%p1030) target = $region156
        $region155: #{_lambda_.1} parent=127 // pred_region
          %1034 = dma.done [#allocation12], 32
        $region156: #{_lambda_.1} parent=127 // pred_fallthru
          _
        // Predicated region
        $region157: #{_lambda_.1} parent=127 // pred_check
          %p1035 = pneg %p226
        $region158: #{_lambda_.1} parent=127 // pred_check_branch
          %1037 = sbr.rel (%p1035) target = $region160
        $region159: #{_lambda_.1} parent=127 // pred_region
          %1039 = dma.done [#allocation15], 16384
        $region160: #{_lambda_.1} parent=127 // pred_fallthru
          _
        // Predicated region
        $region161: #{_lambda_.1} parent=127 // pred_check
          %p1040 = pneg %p247
        $region162: #{_lambda_.1} parent=127 // pred_check_branch
          %1042 = sbr.rel (%p1040) target = $region164
        $region163: #{_lambda_.1} parent=127 // pred_region
          %1044 = dma.done [#allocation15], 256
        $region164: #{_lambda_.1} parent=127 // pred_fallthru
          _
        // Predicated region
        $region165: #{_lambda_.1} parent=127 // pred_check
          %p1045 = pneg %p289
        $region166: #{_lambda_.1} parent=127 // pred_check_branch
          %1047 = sbr.rel (%p1045) target = $region168
        $region167: #{_lambda_.1} parent=127 // pred_region
          %1049 = dma.done [#allocation18], 4096
        $region168: #{_lambda_.1} parent=127 // pred_fallthru
          _
        // Predicated region
        $region169: #{_lambda_.1} parent=127 // pred_check
          %p1050 = pneg %p310
        $region170: #{_lambda_.1} parent=127 // pred_check_branch
          %1052 = sbr.rel (%p1050) target = $region172
        $region171: #{_lambda_.1} parent=127 // pred_region
          %1054 = dma.done [#allocation18], 16
        $region172: #{_lambda_.1} parent=127 // pred_fallthru
          _
        // Predicated region
        $region173: #{_lambda_.1} parent=127 // pred_check
          %p1055 = pneg %p331
        $region174: #{_lambda_.1} parent=127 // pred_check_branch
          %1057 = sbr.rel (%p1055) target = $region176
        $region175: #{_lambda_.1} parent=127 // pred_region
          %1059 = dma.done [#allocation21], 256
        $region176: #{_lambda_.1} parent=127 // pred_fallthru
          _
        // Predicated region
        $region177: #{_lambda_.1} parent=127 // pred_check
          %p1060 = pneg %p415
        $region178: #{_lambda_.1} parent=127 // pred_check_branch
          %1062 = sbr.rel (%p1060) target = $region180
        $region179: #{_lambda_.1} parent=127 // pred_region
          %1064 = dma.done [#allocation21], 2048
        $region180: #{_lambda_.1} parent=127 // pred_fallthru
          _
        // Predicated region
        $region181: #{_lambda_.1} parent=127 // pred_check
          %p1065 = pneg %p457
        $region182: #{_lambda_.1} parent=127 // pred_check_branch
          %1067 = sbr.rel (%p1065) target = $region184
        $region183: #{_lambda_.1} parent=127 // pred_region
          %1069 = dma.done [#allocation24], 16384
        $region184: #{_lambda_.1} parent=127 // pred_fallthru
          _
        // Predicated region
        $region185: #{_lambda_.1} parent=127 // pred_check
          %p1070 = pneg %p478
        $region186: #{_lambda_.1} parent=127 // pred_check_branch
          %1072 = sbr.rel (%p1070) target = $region188
        $region187: #{_lambda_.1} parent=127 // pred_region
          %1074 = dma.done [#allocation24], 512
        $region188: #{_lambda_.1} parent=127 // pred_fallthru
          _
        // Predicated region
        $region189: #{_lambda_.1} parent=127 // pred_check
          %p1075 = pneg %p520
        $region190: #{_lambda_.1} parent=127 // pred_check_branch
          %1077 = sbr.rel (%p1075) target = $region192
        $region191: #{_lambda_.1} parent=127 // pred_region
          %1079 = dma.done [#allocation27], 16384
        $region192: #{_lambda_.1} parent=127 // pred_fallthru
          _
        // Predicated region
        $region193: #{_lambda_.1} parent=127 // pred_check
          %p1080 = pneg %p541
        $region194: #{_lambda_.1} parent=127 // pred_check_branch
          %1082 = sbr.rel (%p1080) target = $region196
        $region195: #{_lambda_.1} parent=127 // pred_region
          %1084 = dma.done [#allocation27], 1024
        $region196: #{_lambda_.1} parent=127 // pred_fallthru
          _
        // Predicated region
        $region197: #{_lambda_.1} parent=127 // pred_check
          %p1085 = pneg %p583
        $region198: #{_lambda_.1} parent=127 // pred_check_branch
          %1087 = sbr.rel (%p1085) target = $region200
        $region199: #{_lambda_.1} parent=127 // pred_region
          %1089 = dma.done [#allocation30], 2048
        $region200: #{_lambda_.1} parent=127 // pred_fallthru
          _
        // Predicated region
        $region201: #{_lambda_.1} parent=127 // pred_check
          %p1090 = pneg %p604
        $region202: #{_lambda_.1} parent=127 // pred_check_branch
          %1092 = sbr.rel (%p1090) target = $region204
        $region203: #{_lambda_.1} parent=127 // pred_region
          %1094 = dma.done [#allocation30], 2048
        $region204: #{_lambda_.1} parent=127 // pred_fallthru
          _
        %s1095 = sand.u32 %s66, 1
        %s1096 = scalar_lea.sflag [#allocation3], %s1095
        %s1097 = sand.u32 %s66, 1
        %s1098 = smul.addr %s1097, 32
        %s1099 = scalar_lea.vmem [#allocation2], %s1098
        %p1100 = pneg %p79
        %p1101 = pneg %p76
        %p1102 = pneg %p100
        %p1103 = pneg %p97
        %p1104 = pneg %p121
        %p1105 = pneg %p118
        %p1106 = pneg %p142
        %p1107 = pneg %p139
        %p1108 = pneg %p163
        %p1109 = pneg %p160
        %p1110 = pneg %p184
        %p1111 = pneg %p181
        %p1112 = pneg %p205
        %p1113 = pneg %p202
        %p1114 = pneg %p226
        %p1115 = pneg %p223
        %p1116 = pneg %p247
        %p1117 = pneg %p244
        %p1118 = pneg %p268
        %p1119 = pneg %p265
        %p1120 = pneg %p289
        %p1121 = pneg %p286
        %p1122 = pneg %p310
        %p1123 = pneg %p307
        %p1124 = pneg %p331
        %p1125 = pneg %p328
        %p1126 = pneg %p352
        %p1127 = pneg %p349
        %p1128 = pneg %p373
        %p1129 = pneg %p370
        %p1130 = pneg %p394
        %p1131 = pneg %p391
        %p1132 = pneg %p415
        %p1133 = pneg %p412
        %p1134 = pneg %p436
        %p1135 = pneg %p433
        %p1136 = pneg %p457
        %p1137 = pneg %p454
        %p1138 = pneg %p478
        %p1139 = pneg %p475
        %p1140 = pneg %p499
        %p1141 = pneg %p496
        %p1142 = pneg %p520
        %p1143 = pneg %p517
        %p1144 = pneg %p541
        %p1145 = pneg %p538
        %p1146 = pneg %p562
        %p1147 = pneg %p559
        %p1148 = pneg %p583
        %p1149 = pneg %p580
        %p1150 = pneg %p604
        %p1151 = pneg %p601
        %p1152 = pneg %p625
        %p1153 = pneg %p622
        %p1154 = pneg %p651
        %p1155 = pneg %p648
        %s1156 = sand.u32 %s638, 1
        %s1157 = scalar_lea.sflag [#allocation4], %s1156
        %s1158 = sand.u32 %s638, 1
        %s1159 = smul.addr %s1158, 32
        %s1160 = scalar_lea.vmem [#allocation32], %s1159
        %p1161 = pneg %p677
        %p1162 = pneg %p674
        %s1163 = sand.u32 %s664, 1
        %s1164 = scalar_lea.sflag [#allocation34], %s1163
        %s1165 = sand.u32 %s664, 1
        %s1166 = scalar_lea.vmem [#allocation33], %s1165
        %v1168 = vld [vmem:[%s999] sm:$0xff]
        %v1169 = vld [vmem:[%s999 + $0x8] sm:$0xff]
        %v1170 = vld [vmem:[%s999 + $0x10] sm:$0xff]
        %v1171 = vld [vmem:[%s999 + $0x18] sm:$0xff]
        %v1172 = vpack.c.bf16 %v1169, %v1168
        %v1173 = vpack.c.bf16 %v1171, %v1170
        %v1174 = vld [vmem:[#allocation5] sm:$0xff]
        %v1175 = vld [vmem:[#allocation5 + $0x8] sm:$0xff]
        %v1176 = vld [vmem:[#allocation5 + $0x10] sm:$0xff]
        %v1177 = vld [vmem:[#allocation5 + $0x18] sm:$0xff]
        %v1178 = vld [vmem:[#allocation5 + $0x20] sm:$0xff]
        %v1179 = vld [vmem:[#allocation5 + $0x28] sm:$0xff]
        %v1180 = vld [vmem:[#allocation5 + $0x30] sm:$0xff]
        %v1181 = vld [vmem:[#allocation5 + $0x38] sm:$0xff]
        %v1182 = vld [vmem:[#allocation5 + $0x40] sm:$0xff]
        %v1183 = vld [vmem:[#allocation5 + $0x48] sm:$0xff]
        %v1184 = vld [vmem:[#allocation5 + $0x50] sm:$0xff]
        %v1185 = vld [vmem:[#allocation5 + $0x58] sm:$0xff]
        %v1186 = vld [vmem:[#allocation5 + $0x60] sm:$0xff]
        %v1187 = vld [vmem:[#allocation5 + $0x68] sm:$0xff]
        %v1188 = vld [vmem:[#allocation5 + $0x70] sm:$0xff]
        %v1189 = vld [vmem:[#allocation5 + $0x78] sm:$0xff]
        %v1206 = vunpack.c.l.b16 %v1174
        %v1207 = vunpack.c.h.b16 %v1174
        %v1208 = vunpack.c.l.b16 %v1175
        %v1209 = vunpack.c.h.b16 %v1175
        %v1210 = vunpack.c.l.b16 %v1176
        %v1211 = vunpack.c.h.b16 %v1176
        %v1212 = vunpack.c.l.b16 %v1177
        %v1213 = vunpack.c.h.b16 %v1177
        %v1214 = vunpack.c.l.b16 %v1178
        %v1215 = vunpack.c.h.b16 %v1178
        %v1216 = vunpack.c.l.b16 %v1179
        %v1217 = vunpack.c.h.b16 %v1179
        %v1218 = vunpack.c.l.b16 %v1180
        %v1219 = vunpack.c.h.b16 %v1180
        %v1220 = vunpack.c.l.b16 %v1181
        %v1221 = vunpack.c.h.b16 %v1181
        %v1222 = vunpack.c.l.b16 %v1182
        %v1223 = vunpack.c.h.b16 %v1182
        %v1224 = vunpack.c.l.b16 %v1183
        %v1225 = vunpack.c.h.b16 %v1183
        %v1226 = vunpack.c.l.b16 %v1184
        %v1227 = vunpack.c.h.b16 %v1184
        %v1228 = vunpack.c.l.b16 %v1185
        %v1229 = vunpack.c.h.b16 %v1185
        %v1230 = vunpack.c.l.b16 %v1186
        %v1231 = vunpack.c.h.b16 %v1186
        %v1232 = vunpack.c.l.b16 %v1187
        %v1233 = vunpack.c.h.b16 %v1187
        %v1234 = vunpack.c.l.b16 %v1188
        %v1235 = vunpack.c.h.b16 %v1188
        %v1236 = vunpack.c.l.b16 %v1189
        %v1237 = vunpack.c.h.b16 %v1189
        %v1238 = vpack.c.b16 %v1214, %v1206
        %v1239 = vpack.c.b16 %v1215, %v1207
        %v1240 = vpack.c.b16 %v1216, %v1208
        %v1241 = vpack.c.b16 %v1217, %v1209
        %v1242 = vpack.c.b16 %v1218, %v1210
        %v1243 = vpack.c.b16 %v1219, %v1211
        %v1244 = vpack.c.b16 %v1220, %v1212
        %v1245 = vpack.c.b16 %v1221, %v1213
        %v1246 = vpack.c.b16 %v1230, %v1222
        %v1247 = vpack.c.b16 %v1231, %v1223
        %v1248 = vpack.c.b16 %v1232, %v1224
        %v1249 = vpack.c.b16 %v1233, %v1225
        %v1250 = vpack.c.b16 %v1234, %v1226
        %v1251 = vpack.c.b16 %v1235, %v1227
        %v1252 = vpack.c.b16 %v1236, %v1228
        %v1253 = vpack.c.b16 %v1237, %v1229
        %vm1270 = vcmask 261120
        %v1272 = vsel %vm1270, %v1172, 0
        %v1275 = vsel %vm1270, %v1173, 0
        %1277 = vmatpush.bf16.msra.mxu0 0
        %1278 = vmatpush.bf16.msra.mxu0 0
        %1279 = vmatpush.bf16.msra.mxu0 0
        %1280 = vmatpush.bf16.msra.mxu0 0
        %1281 = vmatpush.bf16.msra.mxu0 0
        %1282 = vmatpush.bf16.msra.mxu0 0
        %1283 = vmatpush.bf16.msra.mxu0 %v1246
        %1284 = vmatpush.bf16.msra.mxu0 %v1238
        %1285 = vmatmul.bf16.gmra.mxu0 %v1272
        %v1286 = vpop.f32.mrf.mxu0
        %v1287 = vadd.f32 0.0, %v1286
        %v1288 = vpop.f32.mrf.mxu0
        %v1289 = vadd.f32 0.0, %v1288
        %1290 = vmatmul.bf16.gmra.mxu0 %v1275
        %v1291 = vpop.f32.mrf.mxu0
        %v1292 = vadd.f32 0.0, %v1291
        %v1293 = vpop.f32.mrf.mxu0
        %v1294 = vadd.f32 0.0, %v1293
        %1295 = vdwg.mxu0
        %1296 = vmatpush.bf16.msra.mxu0 0
        %1297 = vmatpush.bf16.msra.mxu0 0
        %1298 = vmatpush.bf16.msra.mxu0 0
        %1299 = vmatpush.bf16.msra.mxu0 0
        %1300 = vmatpush.bf16.msra.mxu0 0
        %1301 = vmatpush.bf16.msra.mxu0 0
        %1302 = vmatpush.bf16.msra.mxu0 %v1247
        %1303 = vmatpush.bf16.msra.mxu0 %v1239
        %1304 = vmatmul.bf16.gmra.mxu0 %v1272
        %v1305 = vpop.f32.mrf.mxu0
        %v1306 = vadd.f32 0.0, %v1305
        %v1307 = vpop.f32.mrf.mxu0
        %v1308 = vadd.f32 0.0, %v1307
        %1309 = vmatmul.bf16.gmra.mxu0 %v1275
        %v1310 = vpop.f32.mrf.mxu0
        %v1311 = vadd.f32 0.0, %v1310
        %v1312 = vpop.f32.mrf.mxu0
        %v1313 = vadd.f32 0.0, %v1312
        %1314 = vdwg.mxu0
        %1315 = vmatpush.bf16.msra.mxu0 0
        %1316 = vmatpush.bf16.msra.mxu0 0
        %1317 = vmatpush.bf16.msra.mxu0 0
        %1318 = vmatpush.bf16.msra.mxu0 0
        %1319 = vmatpush.bf16.msra.mxu0 0
        %1320 = vmatpush.bf16.msra.mxu0 0
        %1321 = vmatpush.bf16.msra.mxu0 %v1248
        %1322 = vmatpush.bf16.msra.mxu0 %v1240
        %1323 = vmatmul.bf16.gmra.mxu0 %v1272
        %v1324 = vpop.f32.mrf.mxu0
        %v1325 = vadd.f32 0.0, %v1324
        %v1326 = vpop.f32.mrf.mxu0
        %v1327 = vadd.f32 0.0, %v1326
        %1328 = vmatmul.bf16.gmra.mxu0 %v1275
        %v1329 = vpop.f32.mrf.mxu0
        %v1330 = vadd.f32 0.0, %v1329
        %v1331 = vpop.f32.mrf.mxu0
        %v1332 = vadd.f32 0.0, %v1331
        %1333 = vdwg.mxu0
        %1334 = vmatpush.bf16.msra.mxu0 0
        %1335 = vmatpush.bf16.msra.mxu0 0
        %1336 = vmatpush.bf16.msra.mxu0 0
        %1337 = vmatpush.bf16.msra.mxu0 0
        %1338 = vmatpush.bf16.msra.mxu0 0
        %1339 = vmatpush.bf16.msra.mxu0 0
        %1340 = vmatpush.bf16.msra.mxu0 %v1249
        %1341 = vmatpush.bf16.msra.mxu0 %v1241
        %1342 = vmatmul.bf16.gmra.mxu0 %v1272
        %v1343 = vpop.f32.mrf.mxu0
        %v1344 = vadd.f32 0.0, %v1343
        %v1345 = vpop.f32.mrf.mxu0
        %v1346 = vadd.f32 0.0, %v1345
        %1347 = vmatmul.bf16.gmra.mxu0 %v1275
        %v1348 = vpop.f32.mrf.mxu0
        %v1349 = vadd.f32 0.0, %v1348
        %v1350 = vpop.f32.mrf.mxu0
        %v1351 = vadd.f32 0.0, %v1350
        %1352 = vdwg.mxu0
        %1353 = vmatpush.bf16.msra.mxu0 0
        %1354 = vmatpush.bf16.msra.mxu0 0
        %1355 = vmatpush.bf16.msra.mxu0 0
        %1356 = vmatpush.bf16.msra.mxu0 0
        %1357 = vmatpush.bf16.msra.mxu0 0
        %1358 = vmatpush.bf16.msra.mxu0 0
        %1359 = vmatpush.bf16.msra.mxu0 %v1250
        %1360 = vmatpush.bf16.msra.mxu0 %v1242
        %1361 = vmatmul.bf16.gmra.mxu0 %v1272
        %v1362 = vpop.f32.mrf.mxu0
        %v1363 = vadd.f32 0.0, %v1362
        %v1364 = vpop.f32.mrf.mxu0
        %v1365 = vadd.f32 0.0, %v1364
        %1366 = vmatmul.bf16.gmra.mxu0 %v1275
        %v1367 = vpop.f32.mrf.mxu0
        %v1368 = vadd.f32 0.0, %v1367
        %v1369 = vpop.f32.mrf.mxu0
        %v1370 = vadd.f32 0.0, %v1369
        %1371 = vdwg.mxu0
        %1372 = vmatpush.bf16.msra.mxu0 0
        %1373 = vmatpush.bf16.msra.mxu0 0
        %1374 = vmatpush.bf16.msra.mxu0 0
        %1375 = vmatpush.bf16.msra.mxu0 0
        %1376 = vmatpush.bf16.msra.mxu0 0
        %1377 = vmatpush.bf16.msra.mxu0 0
        %1378 = vmatpush.bf16.msra.mxu0 %v1251
        %1379 = vmatpush.bf16.msra.mxu0 %v1243
        %1380 = vmatmul.bf16.gmra.mxu0 %v1272
        %v1381 = vpop.f32.mrf.mxu0
        %v1382 = vadd.f32 0.0, %v1381
        %v1383 = vpop.f32.mrf.mxu0
        %v1384 = vadd.f32 0.0, %v1383
        %1385 = vmatmul.bf16.gmra.mxu0 %v1275
        %v1386 = vpop.f32.mrf.mxu0
        %v1387 = vadd.f32 0.0, %v1386
        %v1388 = vpop.f32.mrf.mxu0
        %v1389 = vadd.f32 0.0, %v1388
        %1390 = vdwg.mxu0
        %1391 = vmatpush.bf16.msra.mxu0 0
        %1392 = vmatpush.bf16.msra.mxu0 0
        %1393 = vmatpush.bf16.msra.mxu0 0
        %1394 = vmatpush.bf16.msra.mxu0 0
        %1395 = vmatpush.bf16.msra.mxu0 0
        %1396 = vmatpush.bf16.msra.mxu0 0
        %1397 = vmatpush.bf16.msra.mxu0 %v1252
        %1398 = vmatpush.bf16.msra.mxu0 %v1244
        %1399 = vmatmul.bf16.gmra.mxu0 %v1272
        %v1400 = vpop.f32.mrf.mxu0
        %v1401 = vadd.f32 0.0, %v1400
        %v1402 = vpop.f32.mrf.mxu0
        %v1403 = vadd.f32 0.0, %v1402
        %1404 = vmatmul.bf16.gmra.mxu0 %v1275
        %v1405 = vpop.f32.mrf.mxu0
        %v1406 = vadd.f32 0.0, %v1405
        %v1407 = vpop.f32.mrf.mxu0
        %v1408 = vadd.f32 0.0, %v1407
        %1409 = vdwg.mxu0
        %1410 = vmatpush.bf16.msra.mxu0 0
        %1411 = vmatpush.bf16.msra.mxu0 0
        %1412 = vmatpush.bf16.msra.mxu0 0
        %1413 = vmatpush.bf16.msra.mxu0 0
        %1414 = vmatpush.bf16.msra.mxu0 0
        %1415 = vmatpush.bf16.msra.mxu0 0
        %1416 = vmatpush.bf16.msra.mxu0 %v1253
        %1417 = vmatpush.bf16.msra.mxu0 %v1245
        %1418 = vmatmul.bf16.gmra.mxu0 %v1272
        %v1419 = vpop.f32.mrf.mxu0
        %v1420 = vadd.f32 0.0, %v1419
        %v1421 = vpop.f32.mrf.mxu0
        %v1422 = vadd.f32 0.0, %v1421
        %1423 = vmatmul.bf16.gmra.mxu0 %v1275
        %v1424 = vpop.f32.mrf.mxu0
        %v1425 = vadd.f32 0.0, %v1424
        %v1426 = vpop.f32.mrf.mxu0
        %v1427 = vadd.f32 0.0, %v1426
        %1428 = vdwg.mxu0
        %v1429 = vld [vmem:[#allocation7] sm:$0xff]
        %v1430 = vld [vmem:[#allocation7 + $0x8] sm:$0xff]
        %s1431 = scalar_lea.vmem [#allocation7], 16
        %v1432 = vld [vmem:[%s1431] sm:$0xff]
        %v1433 = vld [vmem:[%s1431 + $0x8] sm:$0xff]
        %v1435 = vsel %vm1270, %v1432, 0
        %v1438 = vsel %vm1270, %v1433, 0
        %1440 = vmatpush.msra.mxu0 0.0
        %1441 = vmatpush.msra.mxu0 0.0
        %1442 = vmatpush.msra.mxu0 0.0
        %1443 = vmatpush.msra.mxu0 0.0
        %1444 = vmatpush.msra.mxu0 0.0
        %1445 = vmatpush.msra.mxu0 0.0
        %1446 = vmatpush.msra.mxu0 0.0
        %1447 = vmatpush.msra.mxu0 0.0
        %1448 = vmatpush.msra.mxu0 0.0
        %1449 = vmatpush.msra.mxu0 0.0
        %1450 = vmatpush.msra.mxu0 0.0
        %1451 = vmatpush.msra.mxu0 0.0
        %1452 = vmatpush.msra.mxu0 %v1332
        %1453 = vmatpush.msra.mxu0 %v1330
        %1454 = vmatpush.msra.mxu0 %v1327
        %1455 = vmatpush.msra.mxu0 %v1325
        %1456 = vmatmul.f32.gmra.mxu0 %v1435
        %v1457 = vpop.f32.mrf.mxu0
        %v1458 = vadd.f32 0.0, %v1457
        %1459 = vmatmul.f32.gmra.mxu0 %v1438
        %v1460 = vpop.f32.mrf.mxu0
        %v1461 = vadd.f32 0.0, %v1460
        %1462 = vdwg.mxu0
        %1463 = vmatpush.msra.mxu0 0.0
        %1464 = vmatpush.msra.mxu0 0.0
        %1465 = vmatpush.msra.mxu0 0.0
        %1466 = vmatpush.msra.mxu0 0.0
        %1467 = vmatpush.msra.mxu0 0.0
        %1468 = vmatpush.msra.mxu0 0.0
        %1469 = vmatpush.msra.mxu0 0.0
        %1470 = vmatpush.msra.mxu0 0.0
        %1471 = vmatpush.msra.mxu0 0.0
        %1472 = vmatpush.msra.mxu0 0.0
        %1473 = vmatpush.msra.mxu0 0.0
        %1474 = vmatpush.msra.mxu0 0.0
        %1475 = vmatpush.msra.mxu0 %v1351
        %1476 = vmatpush.msra.mxu0 %v1349
        %1477 = vmatpush.msra.mxu0 %v1346
        %1478 = vmatpush.msra.mxu0 %v1344
        %1479 = vmatmul.f32.gmra.mxu0 %v1435
        %v1480 = vpop.f32.mrf.mxu0
        %v1481 = vadd.f32 0.0, %v1480
        %1482 = vmatmul.f32.gmra.mxu0 %v1438
        %v1483 = vpop.f32.mrf.mxu0
        %v1484 = vadd.f32 0.0, %v1483
        %1485 = vdwg.mxu0
        %v1487 = vsel %vm1270, %v1429, 0
        %v1490 = vsel %vm1270, %v1430, 0
        %1492 = vmatpush.msra.mxu0 0.0
        %1493 = vmatpush.msra.mxu0 0.0
        %1494 = vmatpush.msra.mxu0 0.0
        %1495 = vmatpush.msra.mxu0 0.0
        %1496 = vmatpush.msra.mxu0 0.0
        %1497 = vmatpush.msra.mxu0 0.0
        %1498 = vmatpush.msra.mxu0 0.0
        %1499 = vmatpush.msra.mxu0 0.0
        %1500 = vmatpush.msra.mxu0 0.0
        %1501 = vmatpush.msra.mxu0 0.0
        %1502 = vmatpush.msra.mxu0 0.0
        %1503 = vmatpush.msra.mxu0 0.0
        %1504 = vmatpush.msra.mxu0 %v1294
        %1505 = vmatpush.msra.mxu0 %v1292
        %1506 = vmatpush.msra.mxu0 %v1289
        %1507 = vmatpush.msra.mxu0 %v1287
        %1508 = vmatmul.f32.gmra.mxu0 %v1487
        %v1509 = vpop.f32.mrf.mxu0
        %v1510 = vadd.f32 %v1458, %v1509
        %1511 = vmatmul.f32.gmra.mxu0 %v1490
        %v1512 = vpop.f32.mrf.mxu0
        %v1513 = vadd.f32 %v1461, %v1512
        %1514 = vdwg.mxu0
        %1515 = vmatpush.msra.mxu0 0.0
        %1516 = vmatpush.msra.mxu0 0.0
        %1517 = vmatpush.msra.mxu0 0.0
        %1518 = vmatpush.msra.mxu0 0.0
        %1519 = vmatpush.msra.mxu0 0.0
        %1520 = vmatpush.msra.mxu0 0.0
        %1521 = vmatpush.msra.mxu0 0.0
        %1522 = vmatpush.msra.mxu0 0.0
        %1523 = vmatpush.msra.mxu0 0.0
        %1524 = vmatpush.msra.mxu0 0.0
        %1525 = vmatpush.msra.mxu0 0.0
        %1526 = vmatpush.msra.mxu0 0.0
        %1527 = vmatpush.msra.mxu0 %v1313
        %1528 = vmatpush.msra.mxu0 %v1311
        %1529 = vmatpush.msra.mxu0 %v1308
        %1530 = vmatpush.msra.mxu0 %v1306
        %1531 = vmatmul.f32.gmra.mxu0 %v1487
        %v1532 = vpop.f32.mrf.mxu0
        %v1533 = vadd.f32 %v1481, %v1532
        %1534 = vmatmul.f32.gmra.mxu0 %v1490
        %v1535 = vpop.f32.mrf.mxu0
        %v1536 = vadd.f32 %v1484, %v1535
        %1537 = vdwg.mxu0
        %s1538 = scalar_lea.vmem [#allocation7], 32
        %v1539 = vld [vmem:[%s1538] sm:$0xff]
        %v1540 = vld [vmem:[%s1538 + $0x8] sm:$0xff]
        %v1542 = vsel %vm1270, %v1539, 0
        %v1545 = vsel %vm1270, %v1540, 0
        %1547 = vmatpush.msra.mxu0 0.0
        %1548 = vmatpush.msra.mxu0 0.0
        %1549 = vmatpush.msra.mxu0 0.0
        %1550 = vmatpush.msra.mxu0 0.0
        %1551 = vmatpush.msra.mxu0 0.0
        %1552 = vmatpush.msra.mxu0 0.0
        %1553 = vmatpush.msra.mxu0 0.0
        %1554 = vmatpush.msra.mxu0 0.0
        %1555 = vmatpush.msra.mxu0 0.0
        %1556 = vmatpush.msra.mxu0 0.0
        %1557 = vmatpush.msra.mxu0 0.0
        %1558 = vmatpush.msra.mxu0 0.0
        %1559 = vmatpush.msra.mxu0 %v1370
        %1560 = vmatpush.msra.mxu0 %v1368
        %1561 = vmatpush.msra.mxu0 %v1365
        %1562 = vmatpush.msra.mxu0 %v1363
        %1563 = vmatmul.f32.gmra.mxu0 %v1542
        %v1564 = vpop.f32.mrf.mxu0
        %v1565 = vadd.f32 0.0, %v1564
        %1566 = vmatmul.f32.gmra.mxu0 %v1545
        %v1567 = vpop.f32.mrf.mxu0
        %v1568 = vadd.f32 0.0, %v1567
        %1569 = vdwg.mxu0
        %1570 = vmatpush.msra.mxu0 0.0
        %1571 = vmatpush.msra.mxu0 0.0
        %1572 = vmatpush.msra.mxu0 0.0
        %1573 = vmatpush.msra.mxu0 0.0
        %1574 = vmatpush.msra.mxu0 0.0
        %1575 = vmatpush.msra.mxu0 0.0
        %1576 = vmatpush.msra.mxu0 0.0
        %1577 = vmatpush.msra.mxu0 0.0
        %1578 = vmatpush.msra.mxu0 0.0
        %1579 = vmatpush.msra.mxu0 0.0
        %1580 = vmatpush.msra.mxu0 0.0
        %1581 = vmatpush.msra.mxu0 0.0
        %1582 = vmatpush.msra.mxu0 %v1389
        %1583 = vmatpush.msra.mxu0 %v1387
        %1584 = vmatpush.msra.mxu0 %v1384
        %1585 = vmatpush.msra.mxu0 %v1382
        %1586 = vmatmul.f32.gmra.mxu0 %v1542
        %v1587 = vpop.f32.mrf.mxu0
        %v1588 = vadd.f32 0.0, %v1587
        %1589 = vmatmul.f32.gmra.mxu0 %v1545
        %v1590 = vpop.f32.mrf.mxu0
        %v1591 = vadd.f32 0.0, %v1590
        %1592 = vdwg.mxu0
        %v1593 = vadd.f32 %v1510, %v1565
        %v1594 = vadd.f32 %v1533, %v1588
        %v1595 = vadd.f32 %v1513, %v1568
        %v1596 = vadd.f32 %v1536, %v1591
        %s1597 = scalar_lea.vmem [#allocation7], 48
        %v1598 = vld [vmem:[%s1597] sm:$0xff]
        %v1599 = vld [vmem:[%s1597 + $0x8] sm:$0xff]
        %v1601 = vsel %vm1270, %v1598, 0
        %v1604 = vsel %vm1270, %v1599, 0
        %1606 = vmatpush.msra.mxu0 0.0
        %1607 = vmatpush.msra.mxu0 0.0
        %1608 = vmatpush.msra.mxu0 0.0
        %1609 = vmatpush.msra.mxu0 0.0
        %1610 = vmatpush.msra.mxu0 0.0
        %1611 = vmatpush.msra.mxu0 0.0
        %1612 = vmatpush.msra.mxu0 0.0
        %1613 = vmatpush.msra.mxu0 0.0
        %1614 = vmatpush.msra.mxu0 0.0
        %1615 = vmatpush.msra.mxu0 0.0
        %1616 = vmatpush.msra.mxu0 0.0
        %1617 = vmatpush.msra.mxu0 0.0
        %1618 = vmatpush.msra.mxu0 %v1408
        %1619 = vmatpush.msra.mxu0 %v1406
        %1620 = vmatpush.msra.mxu0 %v1403
        %1621 = vmatpush.msra.mxu0 %v1401
        %1622 = vmatmul.f32.gmra.mxu0 %v1601
        %v1623 = vpop.f32.mrf.mxu0
        %v1624 = vadd.f32 0.0, %v1623
        %1625 = vmatmul.f32.gmra.mxu0 %v1604
        %v1626 = vpop.f32.mrf.mxu0
        %v1627 = vadd.f32 0.0, %v1626
        %1628 = vdwg.mxu0
        %1629 = vmatpush.msra.mxu0 0.0
        %1630 = vmatpush.msra.mxu0 0.0
        %1631 = vmatpush.msra.mxu0 0.0
        %1632 = vmatpush.msra.mxu0 0.0
        %1633 = vmatpush.msra.mxu0 0.0
        %1634 = vmatpush.msra.mxu0 0.0
        %1635 = vmatpush.msra.mxu0 0.0
        %1636 = vmatpush.msra.mxu0 0.0
        %1637 = vmatpush.msra.mxu0 0.0
        %1638 = vmatpush.msra.mxu0 0.0
        %1639 = vmatpush.msra.mxu0 0.0
        %1640 = vmatpush.msra.mxu0 0.0
        %1641 = vmatpush.msra.mxu0 %v1427
        %1642 = vmatpush.msra.mxu0 %v1425
        %1643 = vmatpush.msra.mxu0 %v1422
        %1644 = vmatpush.msra.mxu0 %v1420
        %1645 = vmatmul.f32.gmra.mxu0 %v1601
        %v1646 = vpop.f32.mrf.mxu0
        %v1647 = vadd.f32 0.0, %v1646
        %1648 = vmatmul.f32.gmra.mxu0 %v1604
        %v1649 = vpop.f32.mrf.mxu0
        %v1650 = vadd.f32 0.0, %v1649
        %1651 = vdwg.mxu0
        %v1652 = vadd.f32 %v1593, %v1624
        %v1653 = vadd.f32 %v1594, %v1647
        %v1654 = vadd.f32 %v1595, %v1627
        %v1655 = vadd.f32 %v1596, %v1650
        %v1656 = vld [vmem:[#allocation8] sm:$0x3]
        %v1658 = vperm.slane %v1656, 0
        %v1659 = vperm.slane %v1656, 1
        %v1662 = vadd.f32 %v1652, %v1658
        %v1663 = vadd.f32 %v1653, %v1659
        %v1664 = vadd.f32 %v1654, %v1658
        %v1665 = vadd.f32 %v1655, %v1659
        %v1666 = vmax.f32 %v1662, 0.0
        %v1667 = vmax.f32 %v1663, 0.0
        %v1668 = vmax.f32 %v1664, 0.0
        %v1669 = vmax.f32 %v1665, 0.0
        %v1670 = vpack.c.bf16 %v1668, %v1666
        %v1671 = vpack.c.bf16 %v1669, %v1667
        %v1672 = vld [vmem:[#allocation10] sm:$0xff]
        %v1673 = vld [vmem:[#allocation10 + $0x8] sm:$0xff]
        %v1674 = vld [vmem:[#allocation10 + $0x10] sm:$0xff]
        %v1675 = vld [vmem:[#allocation10 + $0x18] sm:$0xff]
        %v1676 = vld [vmem:[#allocation10 + $0x20] sm:$0xff]
        %v1677 = vld [vmem:[#allocation10 + $0x28] sm:$0xff]
        %v1678 = vld [vmem:[#allocation10 + $0x30] sm:$0xff]
        %v1679 = vld [vmem:[#allocation10 + $0x38] sm:$0xff]
        %v1680 = vld [vmem:[#allocation10 + $0x40] sm:$0xff]
        %v1681 = vld [vmem:[#allocation10 + $0x48] sm:$0xff]
        %v1682 = vld [vmem:[#allocation10 + $0x50] sm:$0xff]
        %v1683 = vld [vmem:[#allocation10 + $0x58] sm:$0xff]
        %v1684 = vld [vmem:[#allocation10 + $0x60] sm:$0xff]
        %v1685 = vld [vmem:[#allocation10 + $0x68] sm:$0xff]
        %v1686 = vld [vmem:[#allocation10 + $0x70] sm:$0xff]
        %v1687 = vld [vmem:[#allocation10 + $0x78] sm:$0xff]
        %v1688 = vld [vmem:[#allocation10 + $0x80] sm:$0xff]
        %v1689 = vld [vmem:[#allocation10 + $0x88] sm:$0xff]
        %v1690 = vld [vmem:[#allocation10 + $0x90] sm:$0xff]
        %v1691 = vld [vmem:[#allocation10 + $0x98] sm:$0xff]
        %v1692 = vld [vmem:[#allocation10 + $0xa0] sm:$0xff]
        %v1693 = vld [vmem:[#allocation10 + $0xa8] sm:$0xff]
        %v1694 = vld [vmem:[#allocation10 + $0xb0] sm:$0xff]
        %v1695 = vld [vmem:[#allocation10 + $0xb8] sm:$0xff]
        %v1696 = vld [vmem:[#allocation10 + $0xc0] sm:$0xff]
        %v1697 = vld [vmem:[#allocation10 + $0xc8] sm:$0xff]
        %v1698 = vld [vmem:[#allocation10 + $0xd0] sm:$0xff]
        %v1699 = vld [vmem:[#allocation10 + $0xd8] sm:$0xff]
        %v1700 = vld [vmem:[#allocation10 + $0xe0] sm:$0xff]
        %v1701 = vld [vmem:[#allocation10 + $0xe8] sm:$0xff]
        %v1702 = vld [vmem:[#allocation10 + $0xf0] sm:$0xff]
        %v1703 = vld [vmem:[#allocation10 + $0xf8] sm:$0xff]
        %v1704 = vld [vmem:[#allocation10 + $0x100] sm:$0xff]
        %v1705 = vld [vmem:[#allocation10 + $0x108] sm:$0xff]
        %v1706 = vld [vmem:[#allocation10 + $0x110] sm:$0xff]
        %v1707 = vld [vmem:[#allocation10 + $0x118] sm:$0xff]
        %v1708 = vld [vmem:[#allocation10 + $0x120] sm:$0xff]
        %v1709 = vld [vmem:[#allocation10 + $0x128] sm:$0xff]
        %v1710 = vld [vmem:[#allocation10 + $0x130] sm:$0xff]
        %v1711 = vld [vmem:[#allocation10 + $0x138] sm:$0xff]
        %v1712 = vld [vmem:[#allocation10 + $0x140] sm:$0xff]
        %v1713 = vld [vmem:[#allocation10 + $0x148] sm:$0xff]
        %v1714 = vld [vmem:[#allocation10 + $0x150] sm:$0xff]
        %v1715 = vld [vmem:[#allocation10 + $0x158] sm:$0xff]
        %v1716 = vld [vmem:[#allocation10 + $0x160] sm:$0xff]
        %v1717 = vld [vmem:[#allocation10 + $0x168] sm:$0xff]
        %v1718 = vld [vmem:[#allocation10 + $0x170] sm:$0xff]
        %v1719 = vld [vmem:[#allocation10 + $0x178] sm:$0xff]
        %v1720 = vld [vmem:[#allocation10 + $0x180] sm:$0xff]
        %v1721 = vld [vmem:[#allocation10 + $0x188] sm:$0xff]
        %v1722 = vld [vmem:[#allocation10 + $0x190] sm:$0xff]
        %v1723 = vld [vmem:[#allocation10 + $0x198] sm:$0xff]
        %v1724 = vld [vmem:[#allocation10 + $0x1a0] sm:$0xff]
        %v1725 = vld [vmem:[#allocation10 + $0x1a8] sm:$0xff]
        %v1726 = vld [vmem:[#allocation10 + $0x1b0] sm:$0xff]
        %v1727 = vld [vmem:[#allocation10 + $0x1b8] sm:$0xff]
        %v1728 = vld [vmem:[#allocation10 + $0x1c0] sm:$0xff]
        %v1729 = vld [vmem:[#allocation10 + $0x1c8] sm:$0xff]
        %v1730 = vld [vmem:[#allocation10 + $0x1d0] sm:$0xff]
        %v1731 = vld [vmem:[#allocation10 + $0x1d8] sm:$0xff]
        %v1732 = vld [vmem:[#allocation10 + $0x1e0] sm:$0xff]
        %v1733 = vld [vmem:[#allocation10 + $0x1e8] sm:$0xff]
        %v1734 = vld [vmem:[#allocation10 + $0x1f0] sm:$0xff]
        %v1735 = vld [vmem:[#allocation10 + $0x1f8] sm:$0xff]
        %v1736 = vld [vmem:[#allocation10 + $0x200] sm:$0xff]
        %v1737 = vld [vmem:[#allocation10 + $0x208] sm:$0xff]
        %v1738 = vld [vmem:[#allocation10 + $0x210] sm:$0xff]
        %v1739 = vld [vmem:[#allocation10 + $0x218] sm:$0xff]
        %v1740 = vld [vmem:[#allocation10 + $0x220] sm:$0xff]
        %v1741 = vld [vmem:[#allocation10 + $0x228] sm:$0xff]
        %v1742 = vld [vmem:[#allocation10 + $0x230] sm:$0xff]
        %v1743 = vld [vmem:[#allocation10 + $0x238] sm:$0xff]
        %v1744 = vld [vmem:[#allocation10 + $0x240] sm:$0xff]
        %v1745 = vld [vmem:[#allocation10 + $0x248] sm:$0xff]
        %v1746 = vld [vmem:[#allocation10 + $0x250] sm:$0xff]
        %v1747 = vld [vmem:[#allocation10 + $0x258] sm:$0xff]
        %v1748 = vld [vmem:[#allocation10 + $0x260] sm:$0xff]
        %v1749 = vld [vmem:[#allocation10 + $0x268] sm:$0xff]
        %v1750 = vld [vmem:[#allocation10 + $0x270] sm:$0xff]
        %v1751 = vld [vmem:[#allocation10 + $0x278] sm:$0xff]
        %v1752 = vld [vmem:[#allocation10 + $0x280] sm:$0xff]
        %v1753 = vld [vmem:[#allocation10 + $0x288] sm:$0xff]
        %v1754 = vld [vmem:[#allocation10 + $0x290] sm:$0xff]
        %v1755 = vld [vmem:[#allocation10 + $0x298] sm:$0xff]
        %v1756 = vld [vmem:[#allocation10 + $0x2a0] sm:$0xff]
        %v1757 = vld [vmem:[#allocation10 + $0x2a8] sm:$0xff]
        %v1758 = vld [vmem:[#allocation10 + $0x2b0] sm:$0xff]
        %v1759 = vld [vmem:[#allocation10 + $0x2b8] sm:$0xff]
        %v1760 = vld [vmem:[#allocation10 + $0x2c0] sm:$0xff]
        %v1761 = vld [vmem:[#allocation10 + $0x2c8] sm:$0xff]
        %v1762 = vld [vmem:[#allocation10 + $0x2d0] sm:$0xff]
        %v1763 = vld [vmem:[#allocation10 + $0x2d8] sm:$0xff]
        %v1764 = vld [vmem:[#allocation10 + $0x2e0] sm:$0xff]
        %v1765 = vld [vmem:[#allocation10 + $0x2e8] sm:$0xff]
        %v1766 = vld [vmem:[#allocation10 + $0x2f0] sm:$0xff]
        %v1767 = vld [vmem:[#allocation10 + $0x2f8] sm:$0xff]
        %v1768 = vld [vmem:[#allocation10 + $0x300] sm:$0xff]
        %v1769 = vld [vmem:[#allocation10 + $0x308] sm:$0xff]
        %v1770 = vld [vmem:[#allocation10 + $0x310] sm:$0xff]
        %v1771 = vld [vmem:[#allocation10 + $0x318] sm:$0xff]
        %v1772 = vld [vmem:[#allocation10 + $0x320] sm:$0xff]
        %v1773 = vld [vmem:[#allocation10 + $0x328] sm:$0xff]
        %v1774 = vld [vmem:[#allocation10 + $0x330] sm:$0xff]
        %v1775 = vld [vmem:[#allocation10 + $0x338] sm:$0xff]
        %v1776 = vld [vmem:[#allocation10 + $0x340] sm:$0xff]
        %v1777 = vld [vmem:[#allocation10 + $0x348] sm:$0xff]
        %v1778 = vld [vmem:[#allocation10 + $0x350] sm:$0xff]
        %v1779 = vld [vmem:[#allocation10 + $0x358] sm:$0xff]
        %v1780 = vld [vmem:[#allocation10 + $0x360] sm:$0xff]
        %v1781 = vld [vmem:[#allocation10 + $0x368] sm:$0xff]
        %v1782 = vld [vmem:[#allocation10 + $0x370] sm:$0xff]
        %v1783 = vld [vmem:[#allocation10 + $0x378] sm:$0xff]
        %v1784 = vld [vmem:[#allocation10 + $0x380] sm:$0xff]
        %v1785 = vld [vmem:[#allocation10 + $0x388] sm:$0xff]
        %v1786 = vld [vmem:[#allocation10 + $0x390] sm:$0xff]
        %v1787 = vld [vmem:[#allocation10 + $0x398] sm:$0xff]
        %v1788 = vld [vmem:[#allocation10 + $0x3a0] sm:$0xff]
        %v1789 = vld [vmem:[#allocation10 + $0x3a8] sm:$0xff]
        %v1790 = vld [vmem:[#allocation10 + $0x3b0] sm:$0xff]
        %v1791 = vld [vmem:[#allocation10 + $0x3b8] sm:$0xff]
        %v1792 = vld [vmem:[#allocation10 + $0x3c0] sm:$0xff]
        %v1793 = vld [vmem:[#allocation10 + $0x3c8] sm:$0xff]
        %v1794 = vld [vmem:[#allocation10 + $0x3d0] sm:$0xff]
        %v1795 = vld [vmem:[#allocation10 + $0x3d8] sm:$0xff]
        %v1796 = vld [vmem:[#allocation10 + $0x3e0] sm:$0xff]
        %v1797 = vld [vmem:[#allocation10 + $0x3e8] sm:$0xff]
        %v1798 = vld [vmem:[#allocation10 + $0x3f0] sm:$0xff]
        %v1799 = vld [vmem:[#allocation10 + $0x3f8] sm:$0xff]
        %v1928 = vunpack.c.l.b16 %v1672
        %v1929 = vunpack.c.h.b16 %v1672
        %v1930 = vunpack.c.l.b16 %v1673
        %v1931 = vunpack.c.h.b16 %v1673
        %v1932 = vunpack.c.l.b16 %v1674
        %v1933 = vunpack.c.h.b16 %v1674
        %v1934 = vunpack.c.l.b16 %v1675
        %v1935 = vunpack.c.h.b16 %v1675
        %v1936 = vunpack.c.l.b16 %v1676
        %v1937 = vunpack.c.h.b16 %v1676
        %v1938 = vunpack.c.l.b16 %v1677
        %v1939 = vunpack.c.h.b16 %v1677
        %v1940 = vunpack.c.l.b16 %v1678
        %v1941 = vunpack.c.h.b16 %v1678
        %v1942 = vunpack.c.l.b16 %v1679
        %v1943 = vunpack.c.h.b16 %v1679
        %v1944 = vunpack.c.l.b16 %v1680
        %v1945 = vunpack.c.h.b16 %v1680
        %v1946 = vunpack.c.l.b16 %v1681
        %v1947 = vunpack.c.h.b16 %v1681
        %v1948 = vunpack.c.l.b16 %v1682
        %v1949 = vunpack.c.h.b16 %v1682
        %v1950 = vunpack.c.l.b16 %v1683
        %v1951 = vunpack.c.h.b16 %v1683
        %v1952 = vunpack.c.l.b16 %v1684
        %v1953 = vunpack.c.h.b16 %v1684
        %v1954 = vunpack.c.l.b16 %v1685
        %v1955 = vunpack.c.h.b16 %v1685
        %v1956 = vunpack.c.l.b16 %v1686
        %v1957 = vunpack.c.h.b16 %v1686
        %v1958 = vunpack.c.l.b16 %v1687
        %v1959 = vunpack.c.h.b16 %v1687
        %v1960 = vunpack.c.l.b16 %v1688
        %v1961 = vunpack.c.h.b16 %v1688
        %v1962 = vunpack.c.l.b16 %v1689
        %v1963 = vunpack.c.h.b16 %v1689
        %v1964 = vunpack.c.l.b16 %v1690
        %v1965 = vunpack.c.h.b16 %v1690
        %v1966 = vunpack.c.l.b16 %v1691
        %v1967 = vunpack.c.h.b16 %v1691
        %v1968 = vunpack.c.l.b16 %v1692
        %v1969 = vunpack.c.h.b16 %v1692
        %v1970 = vunpack.c.l.b16 %v1693
        %v1971 = vunpack.c.h.b16 %v1693
        %v1972 = vunpack.c.l.b16 %v1694
        %v1973 = vunpack.c.h.b16 %v1694
        %v1974 = vunpack.c.l.b16 %v1695
        %v1975 = vunpack.c.h.b16 %v1695
        %v1976 = vunpack.c.l.b16 %v1696
        %v1977 = vunpack.c.h.b16 %v1696
        %v1978 = vunpack.c.l.b16 %v1697
        %v1979 = vunpack.c.h.b16 %v1697
        %v1980 = vunpack.c.l.b16 %v1698
        %v1981 = vunpack.c.h.b16 %v1698
        %v1982 = vunpack.c.l.b16 %v1699
        %v1983 = vunpack.c.h.b16 %v1699
        %v1984 = vunpack.c.l.b16 %v1700
        %v1985 = vunpack.c.h.b16 %v1700
        %v1986 = vunpack.c.l.b16 %v1701
        %v1987 = vunpack.c.h.b16 %v1701
        %v1988 = vunpack.c.l.b16 %v1702
        %v1989 = vunpack.c.h.b16 %v1702
        %v1990 = vunpack.c.l.b16 %v1703
        %v1991 = vunpack.c.h.b16 %v1703
        %v1992 = vunpack.c.l.b16 %v1704
        %v1993 = vunpack.c.h.b16 %v1704
        %v1994 = vunpack.c.l.b16 %v1705
        %v1995 = vunpack.c.h.b16 %v1705
        %v1996 = vunpack.c.l.b16 %v1706
        %v1997 = vunpack.c.h.b16 %v1706
        %v1998 = vunpack.c.l.b16 %v1707
        %v1999 = vunpack.c.h.b16 %v1707
        %v2000 = vunpack.c.l.b16 %v1708
        %v2001 = vunpack.c.h.b16 %v1708
        %v2002 = vunpack.c.l.b16 %v1709
        %v2003 = vunpack.c.h.b16 %v1709
        %v2004 = vunpack.c.l.b16 %v1710
        %v2005 = vunpack.c.h.b16 %v1710
        %v2006 = vunpack.c.l.b16 %v1711
        %v2007 = vunpack.c.h.b16 %v1711
        %v2008 = vunpack.c.l.b16 %v1712
        %v2009 = vunpack.c.h.b16 %v1712
        %v2010 = vunpack.c.l.b16 %v1713
        %v2011 = vunpack.c.h.b16 %v1713
        %v2012 = vunpack.c.l.b16 %v1714
        %v2013 = vunpack.c.h.b16 %v1714
        %v2014 = vunpack.c.l.b16 %v1715
        %v2015 = vunpack.c.h.b16 %v1715
        %v2016 = vunpack.c.l.b16 %v1716
        %v2017 = vunpack.c.h.b16 %v1716
        %v2018 = vunpack.c.l.b16 %v1717
        %v2019 = vunpack.c.h.b16 %v1717
        %v2020 = vunpack.c.l.b16 %v1718
        %v2021 = vunpack.c.h.b16 %v1718
        %v2022 = vunpack.c.l.b16 %v1719
        %v2023 = vunpack.c.h.b16 %v1719
        %v2024 = vunpack.c.l.b16 %v1720
        %v2025 = vunpack.c.h.b16 %v1720
        %v2026 = vunpack.c.l.b16 %v1721
        %v2027 = vunpack.c.h.b16 %v1721
        %v2028 = vunpack.c.l.b16 %v1722
        %v2029 = vunpack.c.h.b16 %v1722
        %v2030 = vunpack.c.l.b16 %v1723
        %v2031 = vunpack.c.h.b16 %v1723
        %v2032 = vunpack.c.l.b16 %v1724
        %v2033 = vunpack.c.h.b16 %v1724
        %v2034 = vunpack.c.l.b16 %v1725
        %v2035 = vunpack.c.h.b16 %v1725
        %v2036 = vunpack.c.l.b16 %v1726
        %v2037 = vunpack.c.h.b16 %v1726
        %v2038 = vunpack.c.l.b16 %v1727
        %v2039 = vunpack.c.h.b16 %v1727
        %v2040 = vunpack.c.l.b16 %v1728
        %v2041 = vunpack.c.h.b16 %v1728
        %v2042 = vunpack.c.l.b16 %v1729
        %v2043 = vunpack.c.h.b16 %v1729
        %v2044 = vunpack.c.l.b16 %v1730
        %v2045 = vunpack.c.h.b16 %v1730
        %v2046 = vunpack.c.l.b16 %v1731
        %v2047 = vunpack.c.h.b16 %v1731
        %v2048 = vunpack.c.l.b16 %v1732
        %v2049 = vunpack.c.h.b16 %v1732
        %v2050 = vunpack.c.l.b16 %v1733
        %v2051 = vunpack.c.h.b16 %v1733
        %v2052 = vunpack.c.l.b16 %v1734
        %v2053 = vunpack.c.h.b16 %v1734
        %v2054 = vunpack.c.l.b16 %v1735
        %v2055 = vunpack.c.h.b16 %v1735
        %v2056 = vunpack.c.l.b16 %v1736
        %v2057 = vunpack.c.h.b16 %v1736
        %v2058 = vunpack.c.l.b16 %v1737
        %v2059 = vunpack.c.h.b16 %v1737
        %v2060 = vunpack.c.l.b16 %v1738
        %v2061 = vunpack.c.h.b16 %v1738
        %v2062 = vunpack.c.l.b16 %v1739
        %v2063 = vunpack.c.h.b16 %v1739
        %v2064 = vunpack.c.l.b16 %v1740
        %v2065 = vunpack.c.h.b16 %v1740
        %v2066 = vunpack.c.l.b16 %v1741
        %v2067 = vunpack.c.h.b16 %v1741
        %v2068 = vunpack.c.l.b16 %v1742
        %v2069 = vunpack.c.h.b16 %v1742
        %v2070 = vunpack.c.l.b16 %v1743
        %v2071 = vunpack.c.h.b16 %v1743
        %v2072 = vunpack.c.l.b16 %v1744
        %v2073 = vunpack.c.h.b16 %v1744
        %v2074 = vunpack.c.l.b16 %v1745
        %v2075 = vunpack.c.h.b16 %v1745
        %v2076 = vunpack.c.l.b16 %v1746
        %v2077 = vunpack.c.h.b16 %v1746
        %v2078 = vunpack.c.l.b16 %v1747
        %v2079 = vunpack.c.h.b16 %v1747
        %v2080 = vunpack.c.l.b16 %v1748
        %v2081 = vunpack.c.h.b16 %v1748
        %v2082 = vunpack.c.l.b16 %v1749
        %v2083 = vunpack.c.h.b16 %v1749
        %v2084 = vunpack.c.l.b16 %v1750
        %v2085 = vunpack.c.h.b16 %v1750
        %v2086 = vunpack.c.l.b16 %v1751
        %v2087 = vunpack.c.h.b16 %v1751
        %v2088 = vunpack.c.l.b16 %v1752
        %v2089 = vunpack.c.h.b16 %v1752
        %v2090 = vunpack.c.l.b16 %v1753
        %v2091 = vunpack.c.h.b16 %v1753
        %v2092 = vunpack.c.l.b16 %v1754
        %v2093 = vunpack.c.h.b16 %v1754
        %v2094 = vunpack.c.l.b16 %v1755
        %v2095 = vunpack.c.h.b16 %v1755
        %v2096 = vunpack.c.l.b16 %v1756
        %v2097 = vunpack.c.h.b16 %v1756
        %v2098 = vunpack.c.l.b16 %v1757
        %v2099 = vunpack.c.h.b16 %v1757
        %v2100 = vunpack.c.l.b16 %v1758
        %v2101 = vunpack.c.h.b16 %v1758
        %v2102 = vunpack.c.l.b16 %v1759
        %v2103 = vunpack.c.h.b16 %v1759
        %v2104 = vunpack.c.l.b16 %v1760
        %v2105 = vunpack.c.h.b16 %v1760
        %v2106 = vunpack.c.l.b16 %v1761
        %v2107 = vunpack.c.h.b16 %v1761
        %v2108 = vunpack.c.l.b16 %v1762
        %v2109 = vunpack.c.h.b16 %v1762
        %v2110 = vunpack.c.l.b16 %v1763
        %v2111 = vunpack.c.h.b16 %v1763
        %v2112 = vunpack.c.l.b16 %v1764
        %v2113 = vunpack.c.h.b16 %v1764
        %v2114 = vunpack.c.l.b16 %v1765
        %v2115 = vunpack.c.h.b16 %v1765
        %v2116 = vunpack.c.l.b16 %v1766
        %v2117 = vunpack.c.h.b16 %v1766
        %v2118 = vunpack.c.l.b16 %v1767
        %v2119 = vunpack.c.h.b16 %v1767
        %v2120 = vunpack.c.l.b16 %v1768
        %v2121 = vunpack.c.h.b16 %v1768
        %v2122 = vunpack.c.l.b16 %v1769
        %v2123 = vunpack.c.h.b16 %v1769
        %v2124 = vunpack.c.l.b16 %v1770
        %v2125 = vunpack.c.h.b16 %v1770
        %v2126 = vunpack.c.l.b16 %v1771
        %v2127 = vunpack.c.h.b16 %v1771
        %v2128 = vunpack.c.l.b16 %v1772
        %v2129 = vunpack.c.h.b16 %v1772
        %v2130 = vunpack.c.l.b16 %v1773
        %v2131 = vunpack.c.h.b16 %v1773
        %v2132 = vunpack.c.l.b16 %v1774
        %v2133 = vunpack.c.h.b16 %v1774
        %v2134 = vunpack.c.l.b16 %v1775
        %v2135 = vunpack.c.h.b16 %v1775
        %v2136 = vunpack.c.l.b16 %v1776
        %v2137 = vunpack.c.h.b16 %v1776
        %v2138 = vunpack.c.l.b16 %v1777
        %v2139 = vunpack.c.h.b16 %v1777
        %v2140 = vunpack.c.l.b16 %v1778
        %v2141 = vunpack.c.h.b16 %v1778
        %v2142 = vunpack.c.l.b16 %v1779
        %v2143 = vunpack.c.h.b16 %v1779
        %v2144 = vunpack.c.l.b16 %v1780
        %v2145 = vunpack.c.h.b16 %v1780
        %v2146 = vunpack.c.l.b16 %v1781
        %v2147 = vunpack.c.h.b16 %v1781
        %v2148 = vunpack.c.l.b16 %v1782
        %v2149 = vunpack.c.h.b16 %v1782
        %v2150 = vunpack.c.l.b16 %v1783
        %v2151 = vunpack.c.h.b16 %v1783
        %v2152 = vunpack.c.l.b16 %v1784
        %v2153 = vunpack.c.h.b16 %v1784
        %v2154 = vunpack.c.l.b16 %v1785
        %v2155 = vunpack.c.h.b16 %v1785
        %v2156 = vunpack.c.l.b16 %v1786
        %v2157 = vunpack.c.h.b16 %v1786
        %v2158 = vunpack.c.l.b16 %v1787
        %v2159 = vunpack.c.h.b16 %v1787
        %v2160 = vunpack.c.l.b16 %v1788
        %v2161 = vunpack.c.h.b16 %v1788
        %v2162 = vunpack.c.l.b16 %v1789
        %v2163 = vunpack.c.h.b16 %v1789
        %v2164 = vunpack.c.l.b16 %v1790
        %v2165 = vunpack.c.h.b16 %v1790
        %v2166 = vunpack.c.l.b16 %v1791
        %v2167 = vunpack.c.h.b16 %v1791
        %v2168 = vunpack.c.l.b16 %v1792
        %v2169 = vunpack.c.h.b16 %v1792
        %v2170 = vunpack.c.l.b16 %v1793
        %v2171 = vunpack.c.h.b16 %v1793
        %v2172 = vunpack.c.l.b16 %v1794
        %v2173 = vunpack.c.h.b16 %v1794
        %v2174 = vunpack.c.l.b16 %v1795
        %v2175 = vunpack.c.h.b16 %v1795
        %v2176 = vunpack.c.l.b16 %v1796
        %v2177 = vunpack.c.h.b16 %v1796
        %v2178 = vunpack.c.l.b16 %v1797
        %v2179 = vunpack.c.h.b16 %v1797
        %v2180 = vunpack.c.l.b16 %v1798
        %v2181 = vunpack.c.h.b16 %v1798
        %v2182 = vunpack.c.l.b16 %v1799
        %v2183 = vunpack.c.h.b16 %v1799
        %v2184 = vpack.c.b16 %v1936, %v1928
        %v2185 = vpack.c.b16 %v1937, %v1929
        %v2186 = vpack.c.b16 %v1938, %v1930
        %v2187 = vpack.c.b16 %v1939, %v1931
        %v2188 = vpack.c.b16 %v1940, %v1932
        %v2189 = vpack.c.b16 %v1941, %v1933
        %v2190 = vpack.c.b16 %v1942, %v1934
        %v2191 = vpack.c.b16 %v1943, %v1935
        %v2192 = vpack.c.b16 %v1952, %v1944
        %v2193 = vpack.c.b16 %v1953, %v1945
        %v2194 = vpack.c.b16 %v1954, %v1946
        %v2195 = vpack.c.b16 %v1955, %v1947
        %v2196 = vpack.c.b16 %v1956, %v1948
        %v2197 = vpack.c.b16 %v1957, %v1949
        %v2198 = vpack.c.b16 %v1958, %v1950
        %v2199 = vpack.c.b16 %v1959, %v1951
        %v2200 = vpack.c.b16 %v1968, %v1960
        %v2201 = vpack.c.b16 %v1969, %v1961
        %v2202 = vpack.c.b16 %v1970, %v1962
        %v2203 = vpack.c.b16 %v1971, %v1963
        %v2204 = vpack.c.b16 %v1972, %v1964
        %v2205 = vpack.c.b16 %v1973, %v1965
        %v2206 = vpack.c.b16 %v1974, %v1966
        %v2207 = vpack.c.b16 %v1975, %v1967
        %v2208 = vpack.c.b16 %v1984, %v1976
        %v2209 = vpack.c.b16 %v1985, %v1977
        %v2210 = vpack.c.b16 %v1986, %v1978
        %v2211 = vpack.c.b16 %v1987, %v1979
        %v2212 = vpack.c.b16 %v1988, %v1980
        %v2213 = vpack.c.b16 %v1989, %v1981
        %v2214 = vpack.c.b16 %v1990, %v1982
        %v2215 = vpack.c.b16 %v1991, %v1983
        %v2216 = vpack.c.b16 %v2000, %v1992
        %v2217 = vpack.c.b16 %v2001, %v1993
        %v2218 = vpack.c.b16 %v2002, %v1994
        %v2219 = vpack.c.b16 %v2003, %v1995
        %v2220 = vpack.c.b16 %v2004, %v1996
        %v2221 = vpack.c.b16 %v2005, %v1997
        %v2222 = vpack.c.b16 %v2006, %v1998
        %v2223 = vpack.c.b16 %v2007, %v1999
        %v2224 = vpack.c.b16 %v2016, %v2008
        %v2225 = vpack.c.b16 %v2017, %v2009
        %v2226 = vpack.c.b16 %v2018, %v2010
        %v2227 = vpack.c.b16 %v2019, %v2011
        %v2228 = vpack.c.b16 %v2020, %v2012
        %v2229 = vpack.c.b16 %v2021, %v2013
        %v2230 = vpack.c.b16 %v2022, %v2014
        %v2231 = vpack.c.b16 %v2023, %v2015
        %v2232 = vpack.c.b16 %v2032, %v2024
        %v2233 = vpack.c.b16 %v2033, %v2025
        %v2234 = vpack.c.b16 %v2034, %v2026
        %v2235 = vpack.c.b16 %v2035, %v2027
        %v2236 = vpack.c.b16 %v2036, %v2028
        %v2237 = vpack.c.b16 %v2037, %v2029
        %v2238 = vpack.c.b16 %v2038, %v2030
        %v2239 = vpack.c.b16 %v2039, %v2031
        %v2240 = vpack.c.b16 %v2048, %v2040
        %v2241 = vpack.c.b16 %v2049, %v2041
        %v2242 = vpack.c.b16 %v2050, %v2042
        %v2243 = vpack.c.b16 %v2051, %v2043
        %v2244 = vpack.c.b16 %v2052, %v2044
        %v2245 = vpack.c.b16 %v2053, %v2045
        %v2246 = vpack.c.b16 %v2054, %v2046
        %v2247 = vpack.c.b16 %v2055, %v2047
        %v2248 = vpack.c.b16 %v2064, %v2056
        %v2249 = vpack.c.b16 %v2065, %v2057
        %v2250 = vpack.c.b16 %v2066, %v2058
        %v2251 = vpack.c.b16 %v2067, %v2059
        %v2252 = vpack.c.b16 %v2068, %v2060
        %v2253 = vpack.c.b16 %v2069, %v2061
        %v2254 = vpack.c.b16 %v2070, %v2062
        %v2255 = vpack.c.b16 %v2071, %v2063
        %v2256 = vpack.c.b16 %v2080, %v2072
        %v2257 = vpack.c.b16 %v2081, %v2073
        %v2258 = vpack.c.b16 %v2082, %v2074
        %v2259 = vpack.c.b16 %v2083, %v2075
        %v2260 = vpack.c.b16 %v2084, %v2076
        %v2261 = vpack.c.b16 %v2085, %v2077
        %v2262 = vpack.c.b16 %v2086, %v2078
        %v2263 = vpack.c.b16 %v2087, %v2079
        %v2264 = vpack.c.b16 %v2096, %v2088
        %v2265 = vpack.c.b16 %v2097, %v2089
        %v2266 = vpack.c.b16 %v2098, %v2090
        %v2267 = vpack.c.b16 %v2099, %v2091
        %v2268 = vpack.c.b16 %v2100, %v2092
        %v2269 = vpack.c.b16 %v2101, %v2093
        %v2270 = vpack.c.b16 %v2102, %v2094
        %v2271 = vpack.c.b16 %v2103, %v2095
        %v2272 = vpack.c.b16 %v2112, %v2104
        %v2273 = vpack.c.b16 %v2113, %v2105
        %v2274 = vpack.c.b16 %v2114, %v2106
        %v2275 = vpack.c.b16 %v2115, %v2107
        %v2276 = vpack.c.b16 %v2116, %v2108
        %v2277 = vpack.c.b16 %v2117, %v2109
        %v2278 = vpack.c.b16 %v2118, %v2110
        %v2279 = vpack.c.b16 %v2119, %v2111
        %v2280 = vpack.c.b16 %v2128, %v2120
        %v2281 = vpack.c.b16 %v2129, %v2121
        %v2282 = vpack.c.b16 %v2130, %v2122
        %v2283 = vpack.c.b16 %v2131, %v2123
        %v2284 = vpack.c.b16 %v2132, %v2124
        %v2285 = vpack.c.b16 %v2133, %v2125
        %v2286 = vpack.c.b16 %v2134, %v2126
        %v2287 = vpack.c.b16 %v2135, %v2127
        %v2288 = vpack.c.b16 %v2144, %v2136
        %v2289 = vpack.c.b16 %v2145, %v2137
        %v2290 = vpack.c.b16 %v2146, %v2138
        %v2291 = vpack.c.b16 %v2147, %v2139
        %v2292 = vpack.c.b16 %v2148, %v2140
        %v2293 = vpack.c.b16 %v2149, %v2141
        %v2294 = vpack.c.b16 %v2150, %v2142
        %v2295 = vpack.c.b16 %v2151, %v2143
        %v2296 = vpack.c.b16 %v2160, %v2152
        %v2297 = vpack.c.b16 %v2161, %v2153
        %v2298 = vpack.c.b16 %v2162, %v2154
        %v2299 = vpack.c.b16 %v2163, %v2155
        %v2300 = vpack.c.b16 %v2164, %v2156
        %v2301 = vpack.c.b16 %v2165, %v2157
        %v2302 = vpack.c.b16 %v2166, %v2158
        %v2303 = vpack.c.b16 %v2167, %v2159
        %v2304 = vpack.c.b16 %v2176, %v2168
        %v2305 = vpack.c.b16 %v2177, %v2169
        %v2306 = vpack.c.b16 %v2178, %v2170
        %v2307 = vpack.c.b16 %v2179, %v2171
        %v2308 = vpack.c.b16 %v2180, %v2172
        %v2309 = vpack.c.b16 %v2181, %v2173
        %v2310 = vpack.c.b16 %v2182, %v2174
        %v2311 = vpack.c.b16 %v2183, %v2175
        %2440 = vmatpush.bf16.msra.mxu0 %v2240
        %2441 = vmatpush.bf16.msra.mxu0 %v2232
        %2442 = vmatpush.bf16.msra.mxu0 %v2224
        %2443 = vmatpush.bf16.msra.mxu0 %v2216
        %2444 = vmatpush.bf16.msra.mxu0 %v2208
        %2445 = vmatpush.bf16.msra.mxu0 %v2200
        %2446 = vmatpush.bf16.msra.mxu0 %v2192
        %2447 = vmatpush.bf16.msra.mxu0 %v2184
        %2448 = vmatmul.bf16.gmra.mxu0 %v1670
        %v2449 = vpop.f32.mrf.mxu0
        %v2450 = vadd.f32 0.0, %v2449
        %v2451 = vpop.f32.mrf.mxu0
        %v2452 = vadd.f32 0.0, %v2451
        %2453 = vdwg.mxu0
        %2454 = vmatpush.bf16.msra.mxu0 %v2304
        %2455 = vmatpush.bf16.msra.mxu0 %v2296
        %2456 = vmatpush.bf16.msra.mxu0 %v2288
        %2457 = vmatpush.bf16.msra.mxu0 %v2280
        %2458 = vmatpush.bf16.msra.mxu0 %v2272
        %2459 = vmatpush.bf16.msra.mxu0 %v2264
        %2460 = vmatpush.bf16.msra.mxu0 %v2256
        %2461 = vmatpush.bf16.msra.mxu0 %v2248
        %2462 = vmatmul.bf16.gmra.mxu0 %v1671
        %v2463 = vpop.f32.mrf.mxu0
        %v2464 = vadd.f32 %v2450, %v2463
        %v2465 = vpop.f32.mrf.mxu0
        %v2466 = vadd.f32 %v2452, %v2465
        %2467 = vdwg.mxu0
        %2468 = vmatpush.bf16.msra.mxu0 %v2241
        %2469 = vmatpush.bf16.msra.mxu0 %v2233
        %2470 = vmatpush.bf16.msra.mxu0 %v2225
        %2471 = vmatpush.bf16.msra.mxu0 %v2217
        %2472 = vmatpush.bf16.msra.mxu0 %v2209
        %2473 = vmatpush.bf16.msra.mxu0 %v2201
        %2474 = vmatpush.bf16.msra.mxu0 %v2193
        %2475 = vmatpush.bf16.msra.mxu0 %v2185
        %2476 = vmatmul.bf16.gmra.mxu0 %v1670
        %v2477 = vpop.f32.mrf.mxu0
        %v2478 = vadd.f32 0.0, %v2477
        %v2479 = vpop.f32.mrf.mxu0
        %v2480 = vadd.f32 0.0, %v2479
        %2481 = vdwg.mxu0
        %2482 = vmatpush.bf16.msra.mxu0 %v2305
        %2483 = vmatpush.bf16.msra.mxu0 %v2297
        %2484 = vmatpush.bf16.msra.mxu0 %v2289
        %2485 = vmatpush.bf16.msra.mxu0 %v2281
        %2486 = vmatpush.bf16.msra.mxu0 %v2273
        %2487 = vmatpush.bf16.msra.mxu0 %v2265
        %2488 = vmatpush.bf16.msra.mxu0 %v2257
        %2489 = vmatpush.bf16.msra.mxu0 %v2249
        %2490 = vmatmul.bf16.gmra.mxu0 %v1671
        %v2491 = vpop.f32.mrf.mxu0
        %v2492 = vadd.f32 %v2478, %v2491
        %v2493 = vpop.f32.mrf.mxu0
        %v2494 = vadd.f32 %v2480, %v2493
        %2495 = vdwg.mxu0
        %2496 = vmatpush.bf16.msra.mxu0 %v2242
        %2497 = vmatpush.bf16.msra.mxu0 %v2234
        %2498 = vmatpush.bf16.msra.mxu0 %v2226
        %2499 = vmatpush.bf16.msra.mxu0 %v2218
        %2500 = vmatpush.bf16.msra.mxu0 %v2210
        %2501 = vmatpush.bf16.msra.mxu0 %v2202
        %2502 = vmatpush.bf16.msra.mxu0 %v2194
        %2503 = vmatpush.bf16.msra.mxu0 %v2186
        %2504 = vmatmul.bf16.gmra.mxu0 %v1670
        %v2505 = vpop.f32.mrf.mxu0
        %v2506 = vadd.f32 0.0, %v2505
        %v2507 = vpop.f32.mrf.mxu0
        %v2508 = vadd.f32 0.0, %v2507
        %2509 = vdwg.mxu0
        %2510 = vmatpush.bf16.msra.mxu0 %v2306
        %2511 = vmatpush.bf16.msra.mxu0 %v2298
        %2512 = vmatpush.bf16.msra.mxu0 %v2290
        %2513 = vmatpush.bf16.msra.mxu0 %v2282
        %2514 = vmatpush.bf16.msra.mxu0 %v2274
        %2515 = vmatpush.bf16.msra.mxu0 %v2266
        %2516 = vmatpush.bf16.msra.mxu0 %v2258
        %2517 = vmatpush.bf16.msra.mxu0 %v2250
        %2518 = vmatmul.bf16.gmra.mxu0 %v1671
        %v2519 = vpop.f32.mrf.mxu0
        %v2520 = vadd.f32 %v2506, %v2519
        %v2521 = vpop.f32.mrf.mxu0
        %v2522 = vadd.f32 %v2508, %v2521
        %2523 = vdwg.mxu0
        %2524 = vmatpush.bf16.msra.mxu0 %v2243
        %2525 = vmatpush.bf16.msra.mxu0 %v2235
        %2526 = vmatpush.bf16.msra.mxu0 %v2227
        %2527 = vmatpush.bf16.msra.mxu0 %v2219
        %2528 = vmatpush.bf16.msra.mxu0 %v2211
        %2529 = vmatpush.bf16.msra.mxu0 %v2203
        %2530 = vmatpush.bf16.msra.mxu0 %v2195
        %2531 = vmatpush.bf16.msra.mxu0 %v2187
        %2532 = vmatmul.bf16.gmra.mxu0 %v1670
        %v2533 = vpop.f32.mrf.mxu0
        %v2534 = vadd.f32 0.0, %v2533
        %v2535 = vpop.f32.mrf.mxu0
        %v2536 = vadd.f32 0.0, %v2535
        %2537 = vdwg.mxu0
        %2538 = vmatpush.bf16.msra.mxu0 %v2307
        %2539 = vmatpush.bf16.msra.mxu0 %v2299
        %2540 = vmatpush.bf16.msra.mxu0 %v2291
        %2541 = vmatpush.bf16.msra.mxu0 %v2283
        %2542 = vmatpush.bf16.msra.mxu0 %v2275
        %2543 = vmatpush.bf16.msra.mxu0 %v2267
        %2544 = vmatpush.bf16.msra.mxu0 %v2259
        %2545 = vmatpush.bf16.msra.mxu0 %v2251
        %2546 = vmatmul.bf16.gmra.mxu0 %v1671
        %v2547 = vpop.f32.mrf.mxu0
        %v2548 = vadd.f32 %v2534, %v2547
        %v2549 = vpop.f32.mrf.mxu0
        %v2550 = vadd.f32 %v2536, %v2549
        %2551 = vdwg.mxu0
        %2552 = vmatpush.bf16.msra.mxu0 %v2244
        %2553 = vmatpush.bf16.msra.mxu0 %v2236
        %2554 = vmatpush.bf16.msra.mxu0 %v2228
        %2555 = vmatpush.bf16.msra.mxu0 %v2220
        %2556 = vmatpush.bf16.msra.mxu0 %v2212
        %2557 = vmatpush.bf16.msra.mxu0 %v2204
        %2558 = vmatpush.bf16.msra.mxu0 %v2196
        %2559 = vmatpush.bf16.msra.mxu0 %v2188
        %2560 = vmatmul.bf16.gmra.mxu0 %v1670
        %v2561 = vpop.f32.mrf.mxu0
        %v2562 = vadd.f32 0.0, %v2561
        %v2563 = vpop.f32.mrf.mxu0
        %v2564 = vadd.f32 0.0, %v2563
        %2565 = vdwg.mxu0
        %2566 = vmatpush.bf16.msra.mxu0 %v2308
        %2567 = vmatpush.bf16.msra.mxu0 %v2300
        %2568 = vmatpush.bf16.msra.mxu0 %v2292
        %2569 = vmatpush.bf16.msra.mxu0 %v2284
        %2570 = vmatpush.bf16.msra.mxu0 %v2276
        %2571 = vmatpush.bf16.msra.mxu0 %v2268
        %2572 = vmatpush.bf16.msra.mxu0 %v2260
        %2573 = vmatpush.bf16.msra.mxu0 %v2252
        %2574 = vmatmul.bf16.gmra.mxu0 %v1671
        %v2575 = vpop.f32.mrf.mxu0
        %v2576 = vadd.f32 %v2562, %v2575
        %v2577 = vpop.f32.mrf.mxu0
        %v2578 = vadd.f32 %v2564, %v2577
        %2579 = vdwg.mxu0
        %2580 = vmatpush.bf16.msra.mxu0 %v2245
        %2581 = vmatpush.bf16.msra.mxu0 %v2237
        %2582 = vmatpush.bf16.msra.mxu0 %v2229
        %2583 = vmatpush.bf16.msra.mxu0 %v2221
        %2584 = vmatpush.bf16.msra.mxu0 %v2213
        %2585 = vmatpush.bf16.msra.mxu0 %v2205
        %2586 = vmatpush.bf16.msra.mxu0 %v2197
        %2587 = vmatpush.bf16.msra.mxu0 %v2189
        %2588 = vmatmul.bf16.gmra.mxu0 %v1670
        %v2589 = vpop.f32.mrf.mxu0
        %v2590 = vadd.f32 0.0, %v2589
        %v2591 = vpop.f32.mrf.mxu0
        %v2592 = vadd.f32 0.0, %v2591
        %2593 = vdwg.mxu0
        %2594 = vmatpush.bf16.msra.mxu0 %v2309
        %2595 = vmatpush.bf16.msra.mxu0 %v2301
        %2596 = vmatpush.bf16.msra.mxu0 %v2293
        %2597 = vmatpush.bf16.msra.mxu0 %v2285
        %2598 = vmatpush.bf16.msra.mxu0 %v2277
        %2599 = vmatpush.bf16.msra.mxu0 %v2269
        %2600 = vmatpush.bf16.msra.mxu0 %v2261
        %2601 = vmatpush.bf16.msra.mxu0 %v2253
        %2602 = vmatmul.bf16.gmra.mxu0 %v1671
        %v2603 = vpop.f32.mrf.mxu0
        %v2604 = vadd.f32 %v2590, %v2603
        %v2605 = vpop.f32.mrf.mxu0
        %v2606 = vadd.f32 %v2592, %v2605
        %2607 = vdwg.mxu0
        %2608 = vmatpush.bf16.msra.mxu0 %v2246
        %2609 = vmatpush.bf16.msra.mxu0 %v2238
        %2610 = vmatpush.bf16.msra.mxu0 %v2230
        %2611 = vmatpush.bf16.msra.mxu0 %v2222
        %2612 = vmatpush.bf16.msra.mxu0 %v2214
        %2613 = vmatpush.bf16.msra.mxu0 %v2206
        %2614 = vmatpush.bf16.msra.mxu0 %v2198
        %2615 = vmatpush.bf16.msra.mxu0 %v2190
        %2616 = vmatmul.bf16.gmra.mxu0 %v1670
        %v2617 = vpop.f32.mrf.mxu0
        %v2618 = vadd.f32 0.0, %v2617
        %v2619 = vpop.f32.mrf.mxu0
        %v2620 = vadd.f32 0.0, %v2619
        %2621 = vdwg.mxu0
        %2622 = vmatpush.bf16.msra.mxu0 %v2310
        %2623 = vmatpush.bf16.msra.mxu0 %v2302
        %2624 = vmatpush.bf16.msra.mxu0 %v2294
        %2625 = vmatpush.bf16.msra.mxu0 %v2286
        %2626 = vmatpush.bf16.msra.mxu0 %v2278
        %2627 = vmatpush.bf16.msra.mxu0 %v2270
        %2628 = vmatpush.bf16.msra.mxu0 %v2262
        %2629 = vmatpush.bf16.msra.mxu0 %v2254
        %2630 = vmatmul.bf16.gmra.mxu0 %v1671
        %v2631 = vpop.f32.mrf.mxu0
        %v2632 = vadd.f32 %v2618, %v2631
        %v2633 = vpop.f32.mrf.mxu0
        %v2634 = vadd.f32 %v2620, %v2633
        %2635 = vdwg.mxu0
        %2636 = vmatpush.bf16.msra.mxu0 %v2247
        %2637 = vmatpush.bf16.msra.mxu0 %v2239
        %2638 = vmatpush.bf16.msra.mxu0 %v2231
        %2639 = vmatpush.bf16.msra.mxu0 %v2223
        %2640 = vmatpush.bf16.msra.mxu0 %v2215
        %2641 = vmatpush.bf16.msra.mxu0 %v2207
        %2642 = vmatpush.bf16.msra.mxu0 %v2199
        %2643 = vmatpush.bf16.msra.mxu0 %v2191
        %2644 = vmatmul.bf16.gmra.mxu0 %v1670
        %v2645 = vpop.f32.mrf.mxu0
        %v2646 = vadd.f32 0.0, %v2645
        %v2647 = vpop.f32.mrf.mxu0
        %v2648 = vadd.f32 0.0, %v2647
        %2649 = vdwg.mxu0
        %2650 = vmatpush.bf16.msra.mxu0 %v2311
        %2651 = vmatpush.bf16.msra.mxu0 %v2303
        %2652 = vmatpush.bf16.msra.mxu0 %v2295
        %2653 = vmatpush.bf16.msra.mxu0 %v2287
        %2654 = vmatpush.bf16.msra.mxu0 %v2279
        %2655 = vmatpush.bf16.msra.mxu0 %v2271
        %2656 = vmatpush.bf16.msra.mxu0 %v2263
        %2657 = vmatpush.bf16.msra.mxu0 %v2255
        %2658 = vmatmul.bf16.gmra.mxu0 %v1671
        %v2659 = vpop.f32.mrf.mxu0
        %v2660 = vadd.f32 %v2646, %v2659
        %v2661 = vpop.f32.mrf.mxu0
        %v2662 = vadd.f32 %v2648, %v2661
        %2663 = vdwg.mxu0
        %v2664 = vld [vmem:[#allocation11] sm:$0xff]
        %s2665 = scalar_lea.vmem [#allocation11], 8
        %v2666 = vld [vmem:[%s2665] sm:$0xff]
        %vm2667 = vcmask 130048
        %v2669 = vsel %vm2667, %v2666, 0
        %2671 = vmatpush.msra.mxu0 0.0
        %2672 = vmatpush.msra.mxu0 0.0
        %2673 = vmatpush.msra.mxu0 0.0
        %2674 = vmatpush.msra.mxu0 0.0
        %2675 = vmatpush.msra.mxu0 0.0
        %2676 = vmatpush.msra.mxu0 0.0
        %2677 = vmatpush.msra.mxu0 0.0
        %2678 = vmatpush.msra.mxu0 0.0
        %2679 = vmatpush.msra.mxu0 0.0
        %2680 = vmatpush.msra.mxu0 0.0
        %2681 = vmatpush.msra.mxu0 0.0
        %2682 = vmatpush.msra.mxu0 0.0
        %2683 = vmatpush.msra.mxu0 0.0
        %2684 = vmatpush.msra.mxu0 0.0
        %2685 = vmatpush.msra.mxu0 %v2522
        %2686 = vmatpush.msra.mxu0 %v2520
        %2687 = vmatmul.f32.gmra.mxu0 %v2669
        %v2688 = vpop.f32.mrf.mxu0
        %v2689 = vadd.f32 0.0, %v2688
        %2690 = vdwg.mxu0
        %2691 = vmatpush.msra.mxu0 0.0
        %2692 = vmatpush.msra.mxu0 0.0
        %2693 = vmatpush.msra.mxu0 0.0
        %2694 = vmatpush.msra.mxu0 0.0
        %2695 = vmatpush.msra.mxu0 0.0
        %2696 = vmatpush.msra.mxu0 0.0
        %2697 = vmatpush.msra.mxu0 0.0
        %2698 = vmatpush.msra.mxu0 0.0
        %2699 = vmatpush.msra.mxu0 0.0
        %2700 = vmatpush.msra.mxu0 0.0
        %2701 = vmatpush.msra.mxu0 0.0
        %2702 = vmatpush.msra.mxu0 0.0
        %2703 = vmatpush.msra.mxu0 0.0
        %2704 = vmatpush.msra.mxu0 0.0
        %2705 = vmatpush.msra.mxu0 %v2550
        %2706 = vmatpush.msra.mxu0 %v2548
        %2707 = vmatmul.f32.gmra.mxu0 %v2669
        %v2708 = vpop.f32.mrf.mxu0
        %v2709 = vadd.f32 0.0, %v2708
        %2710 = vdwg.mxu0
        %v2712 = vsel %vm2667, %v2664, 0
        %2714 = vmatpush.msra.mxu0 0.0
        %2715 = vmatpush.msra.mxu0 0.0
        %2716 = vmatpush.msra.mxu0 0.0
        %2717 = vmatpush.msra.mxu0 0.0
        %2718 = vmatpush.msra.mxu0 0.0
        %2719 = vmatpush.msra.mxu0 0.0
        %2720 = vmatpush.msra.mxu0 0.0
        %2721 = vmatpush.msra.mxu0 0.0
        %2722 = vmatpush.msra.mxu0 0.0
        %2723 = vmatpush.msra.mxu0 0.0
        %2724 = vmatpush.msra.mxu0 0.0
        %2725 = vmatpush.msra.mxu0 0.0
        %2726 = vmatpush.msra.mxu0 0.0
        %2727 = vmatpush.msra.mxu0 0.0
        %2728 = vmatpush.msra.mxu0 %v2466
        %2729 = vmatpush.msra.mxu0 %v2464
        %2730 = vmatmul.f32.gmra.mxu0 %v2712
        %v2731 = vpop.f32.mrf.mxu0
        %v2732 = vadd.f32 %v2689, %v2731
        %2733 = vdwg.mxu0
        %2734 = vmatpush.msra.mxu0 0.0
        %2735 = vmatpush.msra.mxu0 0.0
        %2736 = vmatpush.msra.mxu0 0.0
        %2737 = vmatpush.msra.mxu0 0.0
        %2738 = vmatpush.msra.mxu0 0.0
        %2739 = vmatpush.msra.mxu0 0.0
        %2740 = vmatpush.msra.mxu0 0.0
        %2741 = vmatpush.msra.mxu0 0.0
        %2742 = vmatpush.msra.mxu0 0.0
        %2743 = vmatpush.msra.mxu0 0.0
        %2744 = vmatpush.msra.mxu0 0.0
        %2745 = vmatpush.msra.mxu0 0.0
        %2746 = vmatpush.msra.mxu0 0.0
        %2747 = vmatpush.msra.mxu0 0.0
        %2748 = vmatpush.msra.mxu0 %v2494
        %2749 = vmatpush.msra.mxu0 %v2492
        %2750 = vmatmul.f32.gmra.mxu0 %v2712
        %v2751 = vpop.f32.mrf.mxu0
        %v2752 = vadd.f32 %v2709, %v2751
        %2753 = vdwg.mxu0
        %s2754 = scalar_lea.vmem [#allocation11], 16
        %v2755 = vld [vmem:[%s2754] sm:$0xff]
        %v2757 = vsel %vm2667, %v2755, 0
        %2759 = vmatpush.msra.mxu0 0.0
        %2760 = vmatpush.msra.mxu0 0.0
        %2761 = vmatpush.msra.mxu0 0.0
        %2762 = vmatpush.msra.mxu0 0.0
        %2763 = vmatpush.msra.mxu0 0.0
        %2764 = vmatpush.msra.mxu0 0.0
        %2765 = vmatpush.msra.mxu0 0.0
        %2766 = vmatpush.msra.mxu0 0.0
        %2767 = vmatpush.msra.mxu0 0.0
        %2768 = vmatpush.msra.mxu0 0.0
        %2769 = vmatpush.msra.mxu0 0.0
        %2770 = vmatpush.msra.mxu0 0.0
        %2771 = vmatpush.msra.mxu0 0.0
        %2772 = vmatpush.msra.mxu0 0.0
        %2773 = vmatpush.msra.mxu0 %v2578
        %2774 = vmatpush.msra.mxu0 %v2576
        %2775 = vmatmul.f32.gmra.mxu0 %v2757
        %v2776 = vpop.f32.mrf.mxu0
        %v2777 = vadd.f32 0.0, %v2776
        %2778 = vdwg.mxu0
        %2779 = vmatpush.msra.mxu0 0.0
        %2780 = vmatpush.msra.mxu0 0.0
        %2781 = vmatpush.msra.mxu0 0.0
        %2782 = vmatpush.msra.mxu0 0.0
        %2783 = vmatpush.msra.mxu0 0.0
        %2784 = vmatpush.msra.mxu0 0.0
        %2785 = vmatpush.msra.mxu0 0.0
        %2786 = vmatpush.msra.mxu0 0.0
        %2787 = vmatpush.msra.mxu0 0.0
        %2788 = vmatpush.msra.mxu0 0.0
        %2789 = vmatpush.msra.mxu0 0.0
        %2790 = vmatpush.msra.mxu0 0.0
        %2791 = vmatpush.msra.mxu0 0.0
        %2792 = vmatpush.msra.mxu0 0.0
        %2793 = vmatpush.msra.mxu0 %v2606
        %2794 = vmatpush.msra.mxu0 %v2604
        %2795 = vmatmul.f32.gmra.mxu0 %v2757
        %v2796 = vpop.f32.mrf.mxu0
        %v2797 = vadd.f32 0.0, %v2796
        %2798 = vdwg.mxu0
        %v2799 = vadd.f32 %v2732, %v2777
        %v2800 = vadd.f32 %v2752, %v2797
        %s2801 = scalar_lea.vmem [#allocation11], 24
        %v2802 = vld [vmem:[%s2801] sm:$0xff]
        %v2804 = vsel %vm2667, %v2802, 0
        %2806 = vmatpush.msra.mxu0 0.0
        %2807 = vmatpush.msra.mxu0 0.0
        %2808 = vmatpush.msra.mxu0 0.0
        %2809 = vmatpush.msra.mxu0 0.0
        %2810 = vmatpush.msra.mxu0 0.0
        %2811 = vmatpush.msra.mxu0 0.0
        %2812 = vmatpush.msra.mxu0 0.0
        %2813 = vmatpush.msra.mxu0 0.0
        %2814 = vmatpush.msra.mxu0 0.0
        %2815 = vmatpush.msra.mxu0 0.0
        %2816 = vmatpush.msra.mxu0 0.0
        %2817 = vmatpush.msra.mxu0 0.0
        %2818 = vmatpush.msra.mxu0 0.0
        %2819 = vmatpush.msra.mxu0 0.0
        %2820 = vmatpush.msra.mxu0 %v2634
        %2821 = vmatpush.msra.mxu0 %v2632
        %2822 = vmatmul.f32.gmra.mxu0 %v2804
        %v2823 = vpop.f32.mrf.mxu0
        %v2824 = vadd.f32 0.0, %v2823
        %2825 = vdwg.mxu0
        %2826 = vmatpush.msra.mxu0 0.0
        %2827 = vmatpush.msra.mxu0 0.0
        %2828 = vmatpush.msra.mxu0 0.0
        %2829 = vmatpush.msra.mxu0 0.0
        %2830 = vmatpush.msra.mxu0 0.0
        %2831 = vmatpush.msra.mxu0 0.0
        %2832 = vmatpush.msra.mxu0 0.0
        %2833 = vmatpush.msra.mxu0 0.0
        %2834 = vmatpush.msra.mxu0 0.0
        %2835 = vmatpush.msra.mxu0 0.0
        %2836 = vmatpush.msra.mxu0 0.0
        %2837 = vmatpush.msra.mxu0 0.0
        %2838 = vmatpush.msra.mxu0 0.0
        %2839 = vmatpush.msra.mxu0 0.0
        %2840 = vmatpush.msra.mxu0 %v2662
        %2841 = vmatpush.msra.mxu0 %v2660
        %2842 = vmatmul.f32.gmra.mxu0 %v2804
        %v2843 = vpop.f32.mrf.mxu0
        %v2844 = vadd.f32 0.0, %v2843
        %2845 = vdwg.mxu0
        %v2846 = vadd.f32 %v2799, %v2824
        %v2847 = vadd.f32 %v2800, %v2844
        %v2848 = vld [vmem:[#allocation13] sm:$0x3]
        %v2850 = vperm.slane %v2848, 0
        %v2851 = vperm.slane %v2848, 1
        %v2854 = vadd.f32 %v2846, %v2850
        %v2855 = vadd.f32 %v2847, %v2851
        %v2856 = vmax.f32 %v2854, 0.0
        %v2857 = vmax.f32 %v2855, 0.0
        %v2858 = vpack.c.bf16 %v2856, %v2856
        %v2859 = vpack.c.bf16 %v2857, %v2857
        %v2860 = vld [vmem:[#allocation14] sm:$0xff]
        %v2861 = vld [vmem:[#allocation14 + $0x8] sm:$0xff]
        %v2862 = vld [vmem:[#allocation14 + $0x10] sm:$0xff]
        %v2863 = vld [vmem:[#allocation14 + $0x18] sm:$0xff]
        %v2864 = vld [vmem:[#allocation14 + $0x20] sm:$0xff]
        %v2865 = vld [vmem:[#allocation14 + $0x28] sm:$0xff]
        %v2866 = vld [vmem:[#allocation14 + $0x30] sm:$0xff]
        %v2867 = vld [vmem:[#allocation14 + $0x38] sm:$0xff]
        %v2868 = vld [vmem:[#allocation14 + $0x40] sm:$0xff]
        %v2869 = vld [vmem:[#allocation14 + $0x48] sm:$0xff]
        %v2870 = vld [vmem:[#allocation14 + $0x50] sm:$0xff]
        %v2871 = vld [vmem:[#allocation14 + $0x58] sm:$0xff]
        %v2872 = vld [vmem:[#allocation14 + $0x60] sm:$0xff]
        %v2873 = vld [vmem:[#allocation14 + $0x68] sm:$0xff]
        %v2874 = vld [vmem:[#allocation14 + $0x70] sm:$0xff]
        %v2875 = vld [vmem:[#allocation14 + $0x78] sm:$0xff]
        %v2876 = vld [vmem:[#allocation14 + $0x80] sm:$0xff]
        %v2877 = vld [vmem:[#allocation14 + $0x88] sm:$0xff]
        %v2878 = vld [vmem:[#allocation14 + $0x90] sm:$0xff]
        %v2879 = vld [vmem:[#allocation14 + $0x98] sm:$0xff]
        %v2880 = vld [vmem:[#allocation14 + $0xa0] sm:$0xff]
        %v2881 = vld [vmem:[#allocation14 + $0xa8] sm:$0xff]
        %v2882 = vld [vmem:[#allocation14 + $0xb0] sm:$0xff]
        %v2883 = vld [vmem:[#allocation14 + $0xb8] sm:$0xff]
        %v2884 = vld [vmem:[#allocation14 + $0xc0] sm:$0xff]
        %v2885 = vld [vmem:[#allocation14 + $0xc8] sm:$0xff]
        %v2886 = vld [vmem:[#allocation14 + $0xd0] sm:$0xff]
        %v2887 = vld [vmem:[#allocation14 + $0xd8] sm:$0xff]
        %v2888 = vld [vmem:[#allocation14 + $0xe0] sm:$0xff]
        %v2889 = vld [vmem:[#allocation14 + $0xe8] sm:$0xff]
        %v2890 = vld [vmem:[#allocation14 + $0xf0] sm:$0xff]
        %v2891 = vld [vmem:[#allocation14 + $0xf8] sm:$0xff]
        %v2892 = vld [vmem:[#allocation14 + $0x100] sm:$0xff]
        %v2893 = vld [vmem:[#allocation14 + $0x108] sm:$0xff]
        %v2894 = vld [vmem:[#allocation14 + $0x110] sm:$0xff]
        %v2895 = vld [vmem:[#allocation14 + $0x118] sm:$0xff]
        %v2896 = vld [vmem:[#allocation14 + $0x120] sm:$0xff]
        %v2897 = vld [vmem:[#allocation14 + $0x128] sm:$0xff]
        %v2898 = vld [vmem:[#allocation14 + $0x130] sm:$0xff]
        %v2899 = vld [vmem:[#allocation14 + $0x138] sm:$0xff]
        %v2900 = vld [vmem:[#allocation14 + $0x140] sm:$0xff]
        %v2901 = vld [vmem:[#allocation14 + $0x148] sm:$0xff]
        %v2902 = vld [vmem:[#allocation14 + $0x150] sm:$0xff]
        %v2903 = vld [vmem:[#allocation14 + $0x158] sm:$0xff]
        %v2904 = vld [vmem:[#allocation14 + $0x160] sm:$0xff]
        %v2905 = vld [vmem:[#allocation14 + $0x168] sm:$0xff]
        %v2906 = vld [vmem:[#allocation14 + $0x170] sm:$0xff]
        %v2907 = vld [vmem:[#allocation14 + $0x178] sm:$0xff]
        %v2908 = vld [vmem:[#allocation14 + $0x180] sm:$0xff]
        %v2909 = vld [vmem:[#allocation14 + $0x188] sm:$0xff]
        %v2910 = vld [vmem:[#allocation14 + $0x190] sm:$0xff]
        %v2911 = vld [vmem:[#allocation14 + $0x198] sm:$0xff]
        %v2912 = vld [vmem:[#allocation14 + $0x1a0] sm:$0xff]
        %v2913 = vld [vmem:[#allocation14 + $0x1a8] sm:$0xff]
        %v2914 = vld [vmem:[#allocation14 + $0x1b0] sm:$0xff]
        %v2915 = vld [vmem:[#allocation14 + $0x1b8] sm:$0xff]
        %v2916 = vld [vmem:[#allocation14 + $0x1c0] sm:$0xff]
        %v2917 = vld [vmem:[#allocation14 + $0x1c8] sm:$0xff]
        %v2918 = vld [vmem:[#allocation14 + $0x1d0] sm:$0xff]
        %v2919 = vld [vmem:[#allocation14 + $0x1d8] sm:$0xff]
        %v2920 = vld [vmem:[#allocation14 + $0x1e0] sm:$0xff]
        %v2921 = vld [vmem:[#allocation14 + $0x1e8] sm:$0xff]
        %v2922 = vld [vmem:[#allocation14 + $0x1f0] sm:$0xff]
        %v2923 = vld [vmem:[#allocation14 + $0x1f8] sm:$0xff]
        %v2924 = vld [vmem:[#allocation14 + $0x200] sm:$0xff]
        %v2925 = vld [vmem:[#allocation14 + $0x208] sm:$0xff]
        %v2926 = vld [vmem:[#allocation14 + $0x210] sm:$0xff]
        %v2927 = vld [vmem:[#allocation14 + $0x218] sm:$0xff]
        %v2928 = vld [vmem:[#allocation14 + $0x220] sm:$0xff]
        %v2929 = vld [vmem:[#allocation14 + $0x228] sm:$0xff]
        %v2930 = vld [vmem:[#allocation14 + $0x230] sm:$0xff]
        %v2931 = vld [vmem:[#allocation14 + $0x238] sm:$0xff]
        %v2932 = vld [vmem:[#allocation14 + $0x240] sm:$0xff]
        %v2933 = vld [vmem:[#allocation14 + $0x248] sm:$0xff]
        %v2934 = vld [vmem:[#allocation14 + $0x250] sm:$0xff]
        %v2935 = vld [vmem:[#allocation14 + $0x258] sm:$0xff]
        %v2936 = vld [vmem:[#allocation14 + $0x260] sm:$0xff]
        %v2937 = vld [vmem:[#allocation14 + $0x268] sm:$0xff]
        %v2938 = vld [vmem:[#allocation14 + $0x270] sm:$0xff]
        %v2939 = vld [vmem:[#allocation14 + $0x278] sm:$0xff]
        %v2940 = vld [vmem:[#allocation14 + $0x280] sm:$0xff]
        %v2941 = vld [vmem:[#allocation14 + $0x288] sm:$0xff]
        %v2942 = vld [vmem:[#allocation14 + $0x290] sm:$0xff]
        %v2943 = vld [vmem:[#allocation14 + $0x298] sm:$0xff]
        %v2944 = vld [vmem:[#allocation14 + $0x2a0] sm:$0xff]
        %v2945 = vld [vmem:[#allocation14 + $0x2a8] sm:$0xff]
        %v2946 = vld [vmem:[#allocation14 + $0x2b0] sm:$0xff]
        %v2947 = vld [vmem:[#allocation14 + $0x2b8] sm:$0xff]
        %v2948 = vld [vmem:[#allocation14 + $0x2c0] sm:$0xff]
        %v2949 = vld [vmem:[#allocation14 + $0x2c8] sm:$0xff]
        %v2950 = vld [vmem:[#allocation14 + $0x2d0] sm:$0xff]
        %v2951 = vld [vmem:[#allocation14 + $0x2d8] sm:$0xff]
        %v2952 = vld [vmem:[#allocation14 + $0x2e0] sm:$0xff]
        %v2953 = vld [vmem:[#allocation14 + $0x2e8] sm:$0xff]
        %v2954 = vld [vmem:[#allocation14 + $0x2f0] sm:$0xff]
        %v2955 = vld [vmem:[#allocation14 + $0x2f8] sm:$0xff]
        %v2956 = vld [vmem:[#allocation14 + $0x300] sm:$0xff]
        %v2957 = vld [vmem:[#allocation14 + $0x308] sm:$0xff]
        %v2958 = vld [vmem:[#allocation14 + $0x310] sm:$0xff]
        %v2959 = vld [vmem:[#allocation14 + $0x318] sm:$0xff]
        %v2960 = vld [vmem:[#allocation14 + $0x320] sm:$0xff]
        %v2961 = vld [vmem:[#allocation14 + $0x328] sm:$0xff]
        %v2962 = vld [vmem:[#allocation14 + $0x330] sm:$0xff]
        %v2963 = vld [vmem:[#allocation14 + $0x338] sm:$0xff]
        %v2964 = vld [vmem:[#allocation14 + $0x340] sm:$0xff]
        %v2965 = vld [vmem:[#allocation14 + $0x348] sm:$0xff]
        %v2966 = vld [vmem:[#allocation14 + $0x350] sm:$0xff]
        %v2967 = vld [vmem:[#allocation14 + $0x358] sm:$0xff]
        %v2968 = vld [vmem:[#allocation14 + $0x360] sm:$0xff]
        %v2969 = vld [vmem:[#allocation14 + $0x368] sm:$0xff]
        %v2970 = vld [vmem:[#allocation14 + $0x370] sm:$0xff]
        %v2971 = vld [vmem:[#allocation14 + $0x378] sm:$0xff]
        %v2972 = vld [vmem:[#allocation14 + $0x380] sm:$0xff]
        %v2973 = vld [vmem:[#allocation14 + $0x388] sm:$0xff]
        %v2974 = vld [vmem:[#allocation14 + $0x390] sm:$0xff]
        %v2975 = vld [vmem:[#allocation14 + $0x398] sm:$0xff]
        %v2976 = vld [vmem:[#allocation14 + $0x3a0] sm:$0xff]
        %v2977 = vld [vmem:[#allocation14 + $0x3a8] sm:$0xff]
        %v2978 = vld [vmem:[#allocation14 + $0x3b0] sm:$0xff]
        %v2979 = vld [vmem:[#allocation14 + $0x3b8] sm:$0xff]
        %v2980 = vld [vmem:[#allocation14 + $0x3c0] sm:$0xff]
        %v2981 = vld [vmem:[#allocation14 + $0x3c8] sm:$0xff]
        %v2982 = vld [vmem:[#allocation14 + $0x3d0] sm:$0xff]
        %v2983 = vld [vmem:[#allocation14 + $0x3d8] sm:$0xff]
        %v2984 = vld [vmem:[#allocation14 + $0x3e0] sm:$0xff]
        %v2985 = vld [vmem:[#allocation14 + $0x3e8] sm:$0xff]
        %v2986 = vld [vmem:[#allocation14 + $0x3f0] sm:$0xff]
        %v2987 = vld [vmem:[#allocation14 + $0x3f8] sm:$0xff]
        %v3116 = vunpack.c.l.b16 %v2860
        %v3117 = vunpack.c.h.b16 %v2860
        %v3118 = vunpack.c.l.b16 %v2861
        %v3119 = vunpack.c.h.b16 %v2861
        %v3120 = vunpack.c.l.b16 %v2862
        %v3121 = vunpack.c.h.b16 %v2862
        %v3122 = vunpack.c.l.b16 %v2863
        %v3123 = vunpack.c.h.b16 %v2863
        %v3124 = vunpack.c.l.b16 %v2864
        %v3125 = vunpack.c.h.b16 %v2864
        %v3126 = vunpack.c.l.b16 %v2865
        %v3127 = vunpack.c.h.b16 %v2865
        %v3128 = vunpack.c.l.b16 %v2866
        %v3129 = vunpack.c.h.b16 %v2866
        %v3130 = vunpack.c.l.b16 %v2867
        %v3131 = vunpack.c.h.b16 %v2867
        %v3132 = vunpack.c.l.b16 %v2868
        %v3133 = vunpack.c.h.b16 %v2868
        %v3134 = vunpack.c.l.b16 %v2869
        %v3135 = vunpack.c.h.b16 %v2869
        %v3136 = vunpack.c.l.b16 %v2870
        %v3137 = vunpack.c.h.b16 %v2870
        %v3138 = vunpack.c.l.b16 %v2871
        %v3139 = vunpack.c.h.b16 %v2871
        %v3140 = vunpack.c.l.b16 %v2872
        %v3141 = vunpack.c.h.b16 %v2872
        %v3142 = vunpack.c.l.b16 %v2873
        %v3143 = vunpack.c.h.b16 %v2873
        %v3144 = vunpack.c.l.b16 %v2874
        %v3145 = vunpack.c.h.b16 %v2874
        %v3146 = vunpack.c.l.b16 %v2875
        %v3147 = vunpack.c.h.b16 %v2875
        %v3148 = vunpack.c.l.b16 %v2876
        %v3149 = vunpack.c.h.b16 %v2876
        %v3150 = vunpack.c.l.b16 %v2877
        %v3151 = vunpack.c.h.b16 %v2877
        %v3152 = vunpack.c.l.b16 %v2878
        %v3153 = vunpack.c.h.b16 %v2878
        %v3154 = vunpack.c.l.b16 %v2879
        %v3155 = vunpack.c.h.b16 %v2879
        %v3156 = vunpack.c.l.b16 %v2880
        %v3157 = vunpack.c.h.b16 %v2880
        %v3158 = vunpack.c.l.b16 %v2881
        %v3159 = vunpack.c.h.b16 %v2881
        %v3160 = vunpack.c.l.b16 %v2882
        %v3161 = vunpack.c.h.b16 %v2882
        %v3162 = vunpack.c.l.b16 %v2883
        %v3163 = vunpack.c.h.b16 %v2883
        %v3164 = vunpack.c.l.b16 %v2884
        %v3165 = vunpack.c.h.b16 %v2884
        %v3166 = vunpack.c.l.b16 %v2885
        %v3167 = vunpack.c.h.b16 %v2885
        %v3168 = vunpack.c.l.b16 %v2886
        %v3169 = vunpack.c.h.b16 %v2886
        %v3170 = vunpack.c.l.b16 %v2887
        %v3171 = vunpack.c.h.b16 %v2887
        %v3172 = vunpack.c.l.b16 %v2888
        %v3173 = vunpack.c.h.b16 %v2888
        %v3174 = vunpack.c.l.b16 %v2889
        %v3175 = vunpack.c.h.b16 %v2889
        %v3176 = vunpack.c.l.b16 %v2890
        %v3177 = vunpack.c.h.b16 %v2890
        %v3178 = vunpack.c.l.b16 %v2891
        %v3179 = vunpack.c.h.b16 %v2891
        %v3180 = vunpack.c.l.b16 %v2892
        %v3181 = vunpack.c.h.b16 %v2892
        %v3182 = vunpack.c.l.b16 %v2893
        %v3183 = vunpack.c.h.b16 %v2893
        %v3184 = vunpack.c.l.b16 %v2894
        %v3185 = vunpack.c.h.b16 %v2894
        %v3186 = vunpack.c.l.b16 %v2895
        %v3187 = vunpack.c.h.b16 %v2895
        %v3188 = vunpack.c.l.b16 %v2896
        %v3189 = vunpack.c.h.b16 %v2896
        %v3190 = vunpack.c.l.b16 %v2897
        %v3191 = vunpack.c.h.b16 %v2897
        %v3192 = vunpack.c.l.b16 %v2898
        %v3193 = vunpack.c.h.b16 %v2898
        %v3194 = vunpack.c.l.b16 %v2899
        %v3195 = vunpack.c.h.b16 %v2899
        %v3196 = vunpack.c.l.b16 %v2900
        %v3197 = vunpack.c.h.b16 %v2900
        %v3198 = vunpack.c.l.b16 %v2901
        %v3199 = vunpack.c.h.b16 %v2901
        %v3200 = vunpack.c.l.b16 %v2902
        %v3201 = vunpack.c.h.b16 %v2902
        %v3202 = vunpack.c.l.b16 %v2903
        %v3203 = vunpack.c.h.b16 %v2903
        %v3204 = vunpack.c.l.b16 %v2904
        %v3205 = vunpack.c.h.b16 %v2904
        %v3206 = vunpack.c.l.b16 %v2905
        %v3207 = vunpack.c.h.b16 %v2905
        %v3208 = vunpack.c.l.b16 %v2906
        %v3209 = vunpack.c.h.b16 %v2906
        %v3210 = vunpack.c.l.b16 %v2907
        %v3211 = vunpack.c.h.b16 %v2907
        %v3212 = vunpack.c.l.b16 %v2908
        %v3213 = vunpack.c.h.b16 %v2908
        %v3214 = vunpack.c.l.b16 %v2909
        %v3215 = vunpack.c.h.b16 %v2909
        %v3216 = vunpack.c.l.b16 %v2910
        %v3217 = vunpack.c.h.b16 %v2910
        %v3218 = vunpack.c.l.b16 %v2911
        %v3219 = vunpack.c.h.b16 %v2911
        %v3220 = vunpack.c.l.b16 %v2912
        %v3221 = vunpack.c.h.b16 %v2912
        %v3222 = vunpack.c.l.b16 %v2913
        %v3223 = vunpack.c.h.b16 %v2913
        %v3224 = vunpack.c.l.b16 %v2914
        %v3225 = vunpack.c.h.b16 %v2914
        %v3226 = vunpack.c.l.b16 %v2915
        %v3227 = vunpack.c.h.b16 %v2915
        %v3228 = vunpack.c.l.b16 %v2916
        %v3229 = vunpack.c.h.b16 %v2916
        %v3230 = vunpack.c.l.b16 %v2917
        %v3231 = vunpack.c.h.b16 %v2917
        %v3232 = vunpack.c.l.b16 %v2918
        %v3233 = vunpack.c.h.b16 %v2918
        %v3234 = vunpack.c.l.b16 %v2919
        %v3235 = vunpack.c.h.b16 %v2919
        %v3236 = vunpack.c.l.b16 %v2920
        %v3237 = vunpack.c.h.b16 %v2920
        %v3238 = vunpack.c.l.b16 %v2921
        %v3239 = vunpack.c.h.b16 %v2921
        %v3240 = vunpack.c.l.b16 %v2922
        %v3241 = vunpack.c.h.b16 %v2922
        %v3242 = vunpack.c.l.b16 %v2923
        %v3243 = vunpack.c.h.b16 %v2923
        %v3244 = vunpack.c.l.b16 %v2924
        %v3245 = vunpack.c.h.b16 %v2924
        %v3246 = vunpack.c.l.b16 %v2925
        %v3247 = vunpack.c.h.b16 %v2925
        %v3248 = vunpack.c.l.b16 %v2926
        %v3249 = vunpack.c.h.b16 %v2926
        %v3250 = vunpack.c.l.b16 %v2927
        %v3251 = vunpack.c.h.b16 %v2927
        %v3252 = vunpack.c.l.b16 %v2928
        %v3253 = vunpack.c.h.b16 %v2928
        %v3254 = vunpack.c.l.b16 %v2929
        %v3255 = vunpack.c.h.b16 %v2929
        %v3256 = vunpack.c.l.b16 %v2930
        %v3257 = vunpack.c.h.b16 %v2930
        %v3258 = vunpack.c.l.b16 %v2931
        %v3259 = vunpack.c.h.b16 %v2931
        %v3260 = vunpack.c.l.b16 %v2932
        %v3261 = vunpack.c.h.b16 %v2932
        %v3262 = vunpack.c.l.b16 %v2933
        %v3263 = vunpack.c.h.b16 %v2933
        %v3264 = vunpack.c.l.b16 %v2934
        %v3265 = vunpack.c.h.b16 %v2934
        %v3266 = vunpack.c.l.b16 %v2935
        %v3267 = vunpack.c.h.b16 %v2935
        %v3268 = vunpack.c.l.b16 %v2936
        %v3269 = vunpack.c.h.b16 %v2936
        %v3270 = vunpack.c.l.b16 %v2937
        %v3271 = vunpack.c.h.b16 %v2937
        %v3272 = vunpack.c.l.b16 %v2938
        %v3273 = vunpack.c.h.b16 %v2938
        %v3274 = vunpack.c.l.b16 %v2939
        %v3275 = vunpack.c.h.b16 %v2939
        %v3276 = vunpack.c.l.b16 %v2940
        %v3277 = vunpack.c.h.b16 %v2940
        %v3278 = vunpack.c.l.b16 %v2941
        %v3279 = vunpack.c.h.b16 %v2941
        %v3280 = vunpack.c.l.b16 %v2942
        %v3281 = vunpack.c.h.b16 %v2942
        %v3282 = vunpack.c.l.b16 %v2943
        %v3283 = vunpack.c.h.b16 %v2943
        %v3284 = vunpack.c.l.b16 %v2944
        %v3285 = vunpack.c.h.b16 %v2944
        %v3286 = vunpack.c.l.b16 %v2945
        %v3287 = vunpack.c.h.b16 %v2945
        %v3288 = vunpack.c.l.b16 %v2946
        %v3289 = vunpack.c.h.b16 %v2946
        %v3290 = vunpack.c.l.b16 %v2947
        %v3291 = vunpack.c.h.b16 %v2947
        %v3292 = vunpack.c.l.b16 %v2948
        %v3293 = vunpack.c.h.b16 %v2948
        %v3294 = vunpack.c.l.b16 %v2949
        %v3295 = vunpack.c.h.b16 %v2949
        %v3296 = vunpack.c.l.b16 %v2950
        %v3297 = vunpack.c.h.b16 %v2950
        %v3298 = vunpack.c.l.b16 %v2951
        %v3299 = vunpack.c.h.b16 %v2951
        %v3300 = vunpack.c.l.b16 %v2952
        %v3301 = vunpack.c.h.b16 %v2952
        %v3302 = vunpack.c.l.b16 %v2953
        %v3303 = vunpack.c.h.b16 %v2953
        %v3304 = vunpack.c.l.b16 %v2954
        %v3305 = vunpack.c.h.b16 %v2954
        %v3306 = vunpack.c.l.b16 %v2955
        %v3307 = vunpack.c.h.b16 %v2955
        %v3308 = vunpack.c.l.b16 %v2956
        %v3309 = vunpack.c.h.b16 %v2956
        %v3310 = vunpack.c.l.b16 %v2957
        %v3311 = vunpack.c.h.b16 %v2957
        %v3312 = vunpack.c.l.b16 %v2958
        %v3313 = vunpack.c.h.b16 %v2958
        %v3314 = vunpack.c.l.b16 %v2959
        %v3315 = vunpack.c.h.b16 %v2959
        %v3316 = vunpack.c.l.b16 %v2960
        %v3317 = vunpack.c.h.b16 %v2960
        %v3318 = vunpack.c.l.b16 %v2961
        %v3319 = vunpack.c.h.b16 %v2961
        %v3320 = vunpack.c.l.b16 %v2962
        %v3321 = vunpack.c.h.b16 %v2962
        %v3322 = vunpack.c.l.b16 %v2963
        %v3323 = vunpack.c.h.b16 %v2963
        %v3324 = vunpack.c.l.b16 %v2964
        %v3325 = vunpack.c.h.b16 %v2964
        %v3326 = vunpack.c.l.b16 %v2965
        %v3327 = vunpack.c.h.b16 %v2965
        %v3328 = vunpack.c.l.b16 %v2966
        %v3329 = vunpack.c.h.b16 %v2966
        %v3330 = vunpack.c.l.b16 %v2967
        %v3331 = vunpack.c.h.b16 %v2967
        %v3332 = vunpack.c.l.b16 %v2968
        %v3333 = vunpack.c.h.b16 %v2968
        %v3334 = vunpack.c.l.b16 %v2969
        %v3335 = vunpack.c.h.b16 %v2969
        %v3336 = vunpack.c.l.b16 %v2970
        %v3337 = vunpack.c.h.b16 %v2970
        %v3338 = vunpack.c.l.b16 %v2971
        %v3339 = vunpack.c.h.b16 %v2971
        %v3340 = vunpack.c.l.b16 %v2972
        %v3341 = vunpack.c.h.b16 %v2972
        %v3342 = vunpack.c.l.b16 %v2973
        %v3343 = vunpack.c.h.b16 %v2973
        %v3344 = vunpack.c.l.b16 %v2974
        %v3345 = vunpack.c.h.b16 %v2974
        %v3346 = vunpack.c.l.b16 %v2975
        %v3347 = vunpack.c.h.b16 %v2975
        %v3348 = vunpack.c.l.b16 %v2976
        %v3349 = vunpack.c.h.b16 %v2976
        %v3350 = vunpack.c.l.b16 %v2977
        %v3351 = vunpack.c.h.b16 %v2977
        %v3352 = vunpack.c.l.b16 %v2978
        %v3353 = vunpack.c.h.b16 %v2978
        %v3354 = vunpack.c.l.b16 %v2979
        %v3355 = vunpack.c.h.b16 %v2979
        %v3356 = vunpack.c.l.b16 %v2980
        %v3357 = vunpack.c.h.b16 %v2980
        %v3358 = vunpack.c.l.b16 %v2981
        %v3359 = vunpack.c.h.b16 %v2981
        %v3360 = vunpack.c.l.b16 %v2982
        %v3361 = vunpack.c.h.b16 %v2982
        %v3362 = vunpack.c.l.b16 %v2983
        %v3363 = vunpack.c.h.b16 %v2983
        %v3364 = vunpack.c.l.b16 %v2984
        %v3365 = vunpack.c.h.b16 %v2984
        %v3366 = vunpack.c.l.b16 %v2985
        %v3367 = vunpack.c.h.b16 %v2985
        %v3368 = vunpack.c.l.b16 %v2986
        %v3369 = vunpack.c.h.b16 %v2986
        %v3370 = vunpack.c.l.b16 %v2987
        %v3371 = vunpack.c.h.b16 %v2987
        %v3372 = vpack.c.b16 %v3124, %v3116
        %v3373 = vpack.c.b16 %v3125, %v3117
        %v3374 = vpack.c.b16 %v3126, %v3118
        %v3375 = vpack.c.b16 %v3127, %v3119
        %v3376 = vpack.c.b16 %v3128, %v3120
        %v3377 = vpack.c.b16 %v3129, %v3121
        %v3378 = vpack.c.b16 %v3130, %v3122
        %v3379 = vpack.c.b16 %v3131, %v3123
        %v3380 = vpack.c.b16 %v3140, %v3132
        %v3381 = vpack.c.b16 %v3141, %v3133
        %v3382 = vpack.c.b16 %v3142, %v3134
        %v3383 = vpack.c.b16 %v3143, %v3135
        %v3384 = vpack.c.b16 %v3144, %v3136
        %v3385 = vpack.c.b16 %v3145, %v3137
        %v3386 = vpack.c.b16 %v3146, %v3138
        %v3387 = vpack.c.b16 %v3147, %v3139
        %v3388 = vpack.c.b16 %v3156, %v3148
        %v3389 = vpack.c.b16 %v3157, %v3149
        %v3390 = vpack.c.b16 %v3158, %v3150
        %v3391 = vpack.c.b16 %v3159, %v3151
        %v3392 = vpack.c.b16 %v3160, %v3152
        %v3393 = vpack.c.b16 %v3161, %v3153
        %v3394 = vpack.c.b16 %v3162, %v3154
        %v3395 = vpack.c.b16 %v3163, %v3155
        %v3396 = vpack.c.b16 %v3172, %v3164
        %v3397 = vpack.c.b16 %v3173, %v3165
        %v3398 = vpack.c.b16 %v3174, %v3166
        %v3399 = vpack.c.b16 %v3175, %v3167
        %v3400 = vpack.c.b16 %v3176, %v3168
        %v3401 = vpack.c.b16 %v3177, %v3169
        %v3402 = vpack.c.b16 %v3178, %v3170
        %v3403 = vpack.c.b16 %v3179, %v3171
        %v3404 = vpack.c.b16 %v3188, %v3180
        %v3405 = vpack.c.b16 %v3189, %v3181
        %v3406 = vpack.c.b16 %v3190, %v3182
        %v3407 = vpack.c.b16 %v3191, %v3183
        %v3408 = vpack.c.b16 %v3192, %v3184
        %v3409 = vpack.c.b16 %v3193, %v3185
        %v3410 = vpack.c.b16 %v3194, %v3186
        %v3411 = vpack.c.b16 %v3195, %v3187
        %v3412 = vpack.c.b16 %v3204, %v3196
        %v3413 = vpack.c.b16 %v3205, %v3197
        %v3414 = vpack.c.b16 %v3206, %v3198
        %v3415 = vpack.c.b16 %v3207, %v3199
        %v3416 = vpack.c.b16 %v3208, %v3200
        %v3417 = vpack.c.b16 %v3209, %v3201
        %v3418 = vpack.c.b16 %v3210, %v3202
        %v3419 = vpack.c.b16 %v3211, %v3203
        %v3420 = vpack.c.b16 %v3220, %v3212
        %v3421 = vpack.c.b16 %v3221, %v3213
        %v3422 = vpack.c.b16 %v3222, %v3214
        %v3423 = vpack.c.b16 %v3223, %v3215
        %v3424 = vpack.c.b16 %v3224, %v3216
        %v3425 = vpack.c.b16 %v3225, %v3217
        %v3426 = vpack.c.b16 %v3226, %v3218
        %v3427 = vpack.c.b16 %v3227, %v3219
        %v3428 = vpack.c.b16 %v3236, %v3228
        %v3429 = vpack.c.b16 %v3237, %v3229
        %v3430 = vpack.c.b16 %v3238, %v3230
        %v3431 = vpack.c.b16 %v3239, %v3231
        %v3432 = vpack.c.b16 %v3240, %v3232
        %v3433 = vpack.c.b16 %v3241, %v3233
        %v3434 = vpack.c.b16 %v3242, %v3234
        %v3435 = vpack.c.b16 %v3243, %v3235
        %v3436 = vpack.c.b16 %v3252, %v3244
        %v3437 = vpack.c.b16 %v3253, %v3245
        %v3438 = vpack.c.b16 %v3254, %v3246
        %v3439 = vpack.c.b16 %v3255, %v3247
        %v3440 = vpack.c.b16 %v3256, %v3248
        %v3441 = vpack.c.b16 %v3257, %v3249
        %v3442 = vpack.c.b16 %v3258, %v3250
        %v3443 = vpack.c.b16 %v3259, %v3251
        %v3444 = vpack.c.b16 %v3268, %v3260
        %v3445 = vpack.c.b16 %v3269, %v3261
        %v3446 = vpack.c.b16 %v3270, %v3262
        %v3447 = vpack.c.b16 %v3271, %v3263
        %v3448 = vpack.c.b16 %v3272, %v3264
        %v3449 = vpack.c.b16 %v3273, %v3265
        %v3450 = vpack.c.b16 %v3274, %v3266
        %v3451 = vpack.c.b16 %v3275, %v3267
        %v3452 = vpack.c.b16 %v3284, %v3276
        %v3453 = vpack.c.b16 %v3285, %v3277
        %v3454 = vpack.c.b16 %v3286, %v3278
        %v3455 = vpack.c.b16 %v3287, %v3279
        %v3456 = vpack.c.b16 %v3288, %v3280
        %v3457 = vpack.c.b16 %v3289, %v3281
        %v3458 = vpack.c.b16 %v3290, %v3282
        %v3459 = vpack.c.b16 %v3291, %v3283
        %v3460 = vpack.c.b16 %v3300, %v3292
        %v3461 = vpack.c.b16 %v3301, %v3293
        %v3462 = vpack.c.b16 %v3302, %v3294
        %v3463 = vpack.c.b16 %v3303, %v3295
        %v3464 = vpack.c.b16 %v3304, %v3296
        %v3465 = vpack.c.b16 %v3305, %v3297
        %v3466 = vpack.c.b16 %v3306, %v3298
        %v3467 = vpack.c.b16 %v3307, %v3299
        %v3468 = vpack.c.b16 %v3316, %v3308
        %v3469 = vpack.c.b16 %v3317, %v3309
        %v3470 = vpack.c.b16 %v3318, %v3310
        %v3471 = vpack.c.b16 %v3319, %v3311
        %v3472 = vpack.c.b16 %v3320, %v3312
        %v3473 = vpack.c.b16 %v3321, %v3313
        %v3474 = vpack.c.b16 %v3322, %v3314
        %v3475 = vpack.c.b16 %v3323, %v3315
        %v3476 = vpack.c.b16 %v3332, %v3324
        %v3477 = vpack.c.b16 %v3333, %v3325
        %v3478 = vpack.c.b16 %v3334, %v3326
        %v3479 = vpack.c.b16 %v3335, %v3327
        %v3480 = vpack.c.b16 %v3336, %v3328
        %v3481 = vpack.c.b16 %v3337, %v3329
        %v3482 = vpack.c.b16 %v3338, %v3330
        %v3483 = vpack.c.b16 %v3339, %v3331
        %v3484 = vpack.c.b16 %v3348, %v3340
        %v3485 = vpack.c.b16 %v3349, %v3341
        %v3486 = vpack.c.b16 %v3350, %v3342
        %v3487 = vpack.c.b16 %v3351, %v3343
        %v3488 = vpack.c.b16 %v3352, %v3344
        %v3489 = vpack.c.b16 %v3353, %v3345
        %v3490 = vpack.c.b16 %v3354, %v3346
        %v3491 = vpack.c.b16 %v3355, %v3347
        %v3492 = vpack.c.b16 %v3364, %v3356
        %v3493 = vpack.c.b16 %v3365, %v3357
        %v3494 = vpack.c.b16 %v3366, %v3358
        %v3495 = vpack.c.b16 %v3367, %v3359
        %v3496 = vpack.c.b16 %v3368, %v3360
        %v3497 = vpack.c.b16 %v3369, %v3361
        %v3498 = vpack.c.b16 %v3370, %v3362
        %v3499 = vpack.c.b16 %v3371, %v3363
        %3628 = vmatpush.bf16.msra.mxu0 %v3428
        %3629 = vmatpush.bf16.msra.mxu0 %v3420
        %3630 = vmatpush.bf16.msra.mxu0 %v3412
        %3631 = vmatpush.bf16.msra.mxu0 %v3404
        %3632 = vmatpush.bf16.msra.mxu0 %v3396
        %3633 = vmatpush.bf16.msra.mxu0 %v3388
        %3634 = vmatpush.bf16.msra.mxu0 %v3380
        %3635 = vmatpush.bf16.msra.mxu0 %v3372
        %3636 = vmatmul.bf16.gmra.mxu0 %v2858
        %v3637 = vpop.f32.mrf.mxu0
        %v3638 = vadd.f32 0.0, %v3637
        %v3639 = vpop.f32.mrf.mxu0
        %3640 = vdwg.mxu0
        %3641 = vmatpush.bf16.msra.mxu0 %v3492
        %3642 = vmatpush.bf16.msra.mxu0 %v3484
        %3643 = vmatpush.bf16.msra.mxu0 %v3476
        %3644 = vmatpush.bf16.msra.mxu0 %v3468
        %3645 = vmatpush.bf16.msra.mxu0 %v3460
        %3646 = vmatpush.bf16.msra.mxu0 %v3452
        %3647 = vmatpush.bf16.msra.mxu0 %v3444
        %3648 = vmatpush.bf16.msra.mxu0 %v3436
        %3649 = vmatmul.bf16.gmra.mxu0 %v2859
        %v3650 = vpop.f32.mrf.mxu0
        %v3651 = vadd.f32 %v3638, %v3650
        %v3652 = vpop.f32.mrf.mxu0
        %3653 = vdwg.mxu0
        %3654 = vmatpush.bf16.msra.mxu0 %v3429
        %3655 = vmatpush.bf16.msra.mxu0 %v3421
        %3656 = vmatpush.bf16.msra.mxu0 %v3413
        %3657 = vmatpush.bf16.msra.mxu0 %v3405
        %3658 = vmatpush.bf16.msra.mxu0 %v3397
        %3659 = vmatpush.bf16.msra.mxu0 %v3389
        %3660 = vmatpush.bf16.msra.mxu0 %v3381
        %3661 = vmatpush.bf16.msra.mxu0 %v3373
        %3662 = vmatmul.bf16.gmra.mxu0 %v2858
        %v3663 = vpop.f32.mrf.mxu0
        %v3664 = vadd.f32 0.0, %v3663
        %v3665 = vpop.f32.mrf.mxu0
        %3666 = vdwg.mxu0
        %3667 = vmatpush.bf16.msra.mxu0 %v3493
        %3668 = vmatpush.bf16.msra.mxu0 %v3485
        %3669 = vmatpush.bf16.msra.mxu0 %v3477
        %3670 = vmatpush.bf16.msra.mxu0 %v3469
        %3671 = vmatpush.bf16.msra.mxu0 %v3461
        %3672 = vmatpush.bf16.msra.mxu0 %v3453
        %3673 = vmatpush.bf16.msra.mxu0 %v3445
        %3674 = vmatpush.bf16.msra.mxu0 %v3437
        %3675 = vmatmul.bf16.gmra.mxu0 %v2859
        %v3676 = vpop.f32.mrf.mxu0
        %v3677 = vadd.f32 %v3664, %v3676
        %v3678 = vpop.f32.mrf.mxu0
        %3679 = vdwg.mxu0
        %3680 = vmatpush.bf16.msra.mxu0 %v3430
        %3681 = vmatpush.bf16.msra.mxu0 %v3422
        %3682 = vmatpush.bf16.msra.mxu0 %v3414
        %3683 = vmatpush.bf16.msra.mxu0 %v3406
        %3684 = vmatpush.bf16.msra.mxu0 %v3398
        %3685 = vmatpush.bf16.msra.mxu0 %v3390
        %3686 = vmatpush.bf16.msra.mxu0 %v3382
        %3687 = vmatpush.bf16.msra.mxu0 %v3374
        %3688 = vmatmul.bf16.gmra.mxu0 %v2858
        %v3689 = vpop.f32.mrf.mxu0
        %v3690 = vadd.f32 0.0, %v3689
        %v3691 = vpop.f32.mrf.mxu0
        %3692 = vdwg.mxu0
        %3693 = vmatpush.bf16.msra.mxu0 %v3494
        %3694 = vmatpush.bf16.msra.mxu0 %v3486
        %3695 = vmatpush.bf16.msra.mxu0 %v3478
        %3696 = vmatpush.bf16.msra.mxu0 %v3470
        %3697 = vmatpush.bf16.msra.mxu0 %v3462
        %3698 = vmatpush.bf16.msra.mxu0 %v3454
        %3699 = vmatpush.bf16.msra.mxu0 %v3446
        %3700 = vmatpush.bf16.msra.mxu0 %v3438
        %3701 = vmatmul.bf16.gmra.mxu0 %v2859
        %v3702 = vpop.f32.mrf.mxu0
        %v3703 = vadd.f32 %v3690, %v3702
        %v3704 = vpop.f32.mrf.mxu0
        %3705 = vdwg.mxu0
        %3706 = vmatpush.bf16.msra.mxu0 %v3431
        %3707 = vmatpush.bf16.msra.mxu0 %v3423
        %3708 = vmatpush.bf16.msra.mxu0 %v3415
        %3709 = vmatpush.bf16.msra.mxu0 %v3407
        %3710 = vmatpush.bf16.msra.mxu0 %v3399
        %3711 = vmatpush.bf16.msra.mxu0 %v3391
        %3712 = vmatpush.bf16.msra.mxu0 %v3383
        %3713 = vmatpush.bf16.msra.mxu0 %v3375
        %3714 = vmatmul.bf16.gmra.mxu0 %v2858
        %v3715 = vpop.f32.mrf.mxu0
        %v3716 = vadd.f32 0.0, %v3715
        %v3717 = vpop.f32.mrf.mxu0
        %3718 = vdwg.mxu0
        %3719 = vmatpush.bf16.msra.mxu0 %v3495
        %3720 = vmatpush.bf16.msra.mxu0 %v3487
        %3721 = vmatpush.bf16.msra.mxu0 %v3479
        %3722 = vmatpush.bf16.msra.mxu0 %v3471
        %3723 = vmatpush.bf16.msra.mxu0 %v3463
        %3724 = vmatpush.bf16.msra.mxu0 %v3455
        %3725 = vmatpush.bf16.msra.mxu0 %v3447
        %3726 = vmatpush.bf16.msra.mxu0 %v3439
        %3727 = vmatmul.bf16.gmra.mxu0 %v2859
        %v3728 = vpop.f32.mrf.mxu0
        %v3729 = vadd.f32 %v3716, %v3728
        %v3730 = vpop.f32.mrf.mxu0
        %3731 = vdwg.mxu0
        %3732 = vmatpush.bf16.msra.mxu0 %v3432
        %3733 = vmatpush.bf16.msra.mxu0 %v3424
        %3734 = vmatpush.bf16.msra.mxu0 %v3416
        %3735 = vmatpush.bf16.msra.mxu0 %v3408
        %3736 = vmatpush.bf16.msra.mxu0 %v3400
        %3737 = vmatpush.bf16.msra.mxu0 %v3392
        %3738 = vmatpush.bf16.msra.mxu0 %v3384
        %3739 = vmatpush.bf16.msra.mxu0 %v3376
        %3740 = vmatmul.bf16.gmra.mxu0 %v2858
        %v3741 = vpop.f32.mrf.mxu0
        %v3742 = vadd.f32 0.0, %v3741
        %v3743 = vpop.f32.mrf.mxu0
        %3744 = vdwg.mxu0
        %3745 = vmatpush.bf16.msra.mxu0 %v3496
        %3746 = vmatpush.bf16.msra.mxu0 %v3488
        %3747 = vmatpush.bf16.msra.mxu0 %v3480
        %3748 = vmatpush.bf16.msra.mxu0 %v3472
        %3749 = vmatpush.bf16.msra.mxu0 %v3464
        %3750 = vmatpush.bf16.msra.mxu0 %v3456
        %3751 = vmatpush.bf16.msra.mxu0 %v3448
        %3752 = vmatpush.bf16.msra.mxu0 %v3440
        %3753 = vmatmul.bf16.gmra.mxu0 %v2859
        %v3754 = vpop.f32.mrf.mxu0
        %v3755 = vadd.f32 %v3742, %v3754
        %v3756 = vpop.f32.mrf.mxu0
        %3757 = vdwg.mxu0
        %3758 = vmatpush.bf16.msra.mxu0 %v3433
        %3759 = vmatpush.bf16.msra.mxu0 %v3425
        %3760 = vmatpush.bf16.msra.mxu0 %v3417
        %3761 = vmatpush.bf16.msra.mxu0 %v3409
        %3762 = vmatpush.bf16.msra.mxu0 %v3401
        %3763 = vmatpush.bf16.msra.mxu0 %v3393
        %3764 = vmatpush.bf16.msra.mxu0 %v3385
        %3765 = vmatpush.bf16.msra.mxu0 %v3377
        %3766 = vmatmul.bf16.gmra.mxu0 %v2858
        %v3767 = vpop.f32.mrf.mxu0
        %v3768 = vadd.f32 0.0, %v3767
        %v3769 = vpop.f32.mrf.mxu0
        %3770 = vdwg.mxu0
        %3771 = vmatpush.bf16.msra.mxu0 %v3497
        %3772 = vmatpush.bf16.msra.mxu0 %v3489
        %3773 = vmatpush.bf16.msra.mxu0 %v3481
        %3774 = vmatpush.bf16.msra.mxu0 %v3473
        %3775 = vmatpush.bf16.msra.mxu0 %v3465
        %3776 = vmatpush.bf16.msra.mxu0 %v3457
        %3777 = vmatpush.bf16.msra.mxu0 %v3449
        %3778 = vmatpush.bf16.msra.mxu0 %v3441
        %3779 = vmatmul.bf16.gmra.mxu0 %v2859
        %v3780 = vpop.f32.mrf.mxu0
        %v3781 = vadd.f32 %v3768, %v3780
        %v3782 = vpop.f32.mrf.mxu0
        %3783 = vdwg.mxu0
        %3784 = vmatpush.bf16.msra.mxu0 %v3434
        %3785 = vmatpush.bf16.msra.mxu0 %v3426
        %3786 = vmatpush.bf16.msra.mxu0 %v3418
        %3787 = vmatpush.bf16.msra.mxu0 %v3410
        %3788 = vmatpush.bf16.msra.mxu0 %v3402
        %3789 = vmatpush.bf16.msra.mxu0 %v3394
        %3790 = vmatpush.bf16.msra.mxu0 %v3386
        %3791 = vmatpush.bf16.msra.mxu0 %v3378
        %3792 = vmatmul.bf16.gmra.mxu0 %v2858
        %v3793 = vpop.f32.mrf.mxu0
        %v3794 = vadd.f32 0.0, %v3793
        %v3795 = vpop.f32.mrf.mxu0
        %3796 = vdwg.mxu0
        %3797 = vmatpush.bf16.msra.mxu0 %v3498
        %3798 = vmatpush.bf16.msra.mxu0 %v3490
        %3799 = vmatpush.bf16.msra.mxu0 %v3482
        %3800 = vmatpush.bf16.msra.mxu0 %v3474
        %3801 = vmatpush.bf16.msra.mxu0 %v3466
        %3802 = vmatpush.bf16.msra.mxu0 %v3458
        %3803 = vmatpush.bf16.msra.mxu0 %v3450
        %3804 = vmatpush.bf16.msra.mxu0 %v3442
        %3805 = vmatmul.bf16.gmra.mxu0 %v2859
        %v3806 = vpop.f32.mrf.mxu0
        %v3807 = vadd.f32 %v3794, %v3806
        %v3808 = vpop.f32.mrf.mxu0
        %3809 = vdwg.mxu0
        %3810 = vmatpush.bf16.msra.mxu0 %v3435
        %3811 = vmatpush.bf16.msra.mxu0 %v3427
        %3812 = vmatpush.bf16.msra.mxu0 %v3419
        %3813 = vmatpush.bf16.msra.mxu0 %v3411
        %3814 = vmatpush.bf16.msra.mxu0 %v3403
        %3815 = vmatpush.bf16.msra.mxu0 %v3395
        %3816 = vmatpush.bf16.msra.mxu0 %v3387
        %3817 = vmatpush.bf16.msra.mxu0 %v3379
        %3818 = vmatmul.bf16.gmra.mxu0 %v2858
        %v3819 = vpop.f32.mrf.mxu0
        %v3820 = vadd.f32 0.0, %v3819
        %v3821 = vpop.f32.mrf.mxu0
        %3822 = vdwg.mxu0
        %3823 = vmatpush.bf16.msra.mxu0 %v3499
        %3824 = vmatpush.bf16.msra.mxu0 %v3491
        %3825 = vmatpush.bf16.msra.mxu0 %v3483
        %3826 = vmatpush.bf16.msra.mxu0 %v3475
        %3827 = vmatpush.bf16.msra.mxu0 %v3467
        %3828 = vmatpush.bf16.msra.mxu0 %v3459
        %3829 = vmatpush.bf16.msra.mxu0 %v3451
        %3830 = vmatpush.bf16.msra.mxu0 %v3443
        %3831 = vmatmul.bf16.gmra.mxu0 %v2859
        %v3832 = vpop.f32.mrf.mxu0
        %v3833 = vadd.f32 %v3820, %v3832
        %v3834 = vpop.f32.mrf.mxu0
        %3835 = vdwg.mxu0
        %v3836 = vld [vmem:[#allocation16] sm:$0xf]
        %s3837 = scalar_lea.vmem [#allocation16], 4
        %v3838 = vld [vmem:[%s3837] sm:$0xf]
        %vm3839 = vcmask 64512
        %v3841 = vsel %vm3839, %v3838, 0
        %3843 = vmatpush.msra.mxu0 0.0
        %3844 = vmatpush.msra.mxu0 0.0
        %3845 = vmatpush.msra.mxu0 0.0
        %3846 = vmatpush.msra.mxu0 0.0
        %3847 = vmatpush.msra.mxu0 0.0
        %3848 = vmatpush.msra.mxu0 0.0
        %3849 = vmatpush.msra.mxu0 0.0
        %3850 = vmatpush.msra.mxu0 0.0
        %3851 = vmatpush.msra.mxu0 0.0
        %3852 = vmatpush.msra.mxu0 0.0
        %3853 = vmatpush.msra.mxu0 0.0
        %3854 = vmatpush.msra.mxu0 0.0
        %3855 = vmatpush.msra.mxu0 0.0
        %3856 = vmatpush.msra.mxu0 0.0
        %3857 = vmatpush.msra.mxu0 0.0
        %3858 = vmatpush.msra.mxu0 %v3703
        %3859 = vmatmul.f32.gmra.mxu0 %v3841
        %v3860 = vpop.f32.mrf.mxu0
        %v3861 = vadd.f32 0.0, %v3860
        %3862 = vdwg.mxu0
        %3863 = vmatpush.msra.mxu0 0.0
        %3864 = vmatpush.msra.mxu0 0.0
        %3865 = vmatpush.msra.mxu0 0.0
        %3866 = vmatpush.msra.mxu0 0.0
        %3867 = vmatpush.msra.mxu0 0.0
        %3868 = vmatpush.msra.mxu0 0.0
        %3869 = vmatpush.msra.mxu0 0.0
        %3870 = vmatpush.msra.mxu0 0.0
        %3871 = vmatpush.msra.mxu0 0.0
        %3872 = vmatpush.msra.mxu0 0.0
        %3873 = vmatpush.msra.mxu0 0.0
        %3874 = vmatpush.msra.mxu0 0.0
        %3875 = vmatpush.msra.mxu0 0.0
        %3876 = vmatpush.msra.mxu0 0.0
        %3877 = vmatpush.msra.mxu0 0.0
        %3878 = vmatpush.msra.mxu0 %v3729
        %3879 = vmatmul.f32.gmra.mxu0 %v3841
        %v3880 = vpop.f32.mrf.mxu0
        %v3881 = vadd.f32 0.0, %v3880
        %3882 = vdwg.mxu0
        %v3884 = vsel %vm3839, %v3836, 0
        %3886 = vmatpush.msra.mxu0 0.0
        %3887 = vmatpush.msra.mxu0 0.0
        %3888 = vmatpush.msra.mxu0 0.0
        %3889 = vmatpush.msra.mxu0 0.0
        %3890 = vmatpush.msra.mxu0 0.0
        %3891 = vmatpush.msra.mxu0 0.0
        %3892 = vmatpush.msra.mxu0 0.0
        %3893 = vmatpush.msra.mxu0 0.0
        %3894 = vmatpush.msra.mxu0 0.0
        %3895 = vmatpush.msra.mxu0 0.0
        %3896 = vmatpush.msra.mxu0 0.0
        %3897 = vmatpush.msra.mxu0 0.0
        %3898 = vmatpush.msra.mxu0 0.0
        %3899 = vmatpush.msra.mxu0 0.0
        %3900 = vmatpush.msra.mxu0 0.0
        %3901 = vmatpush.msra.mxu0 %v3651
        %3902 = vmatmul.f32.gmra.mxu0 %v3884
        %v3903 = vpop.f32.mrf.mxu0
        %v3904 = vadd.f32 %v3861, %v3903
        %3905 = vdwg.mxu0
        %3906 = vmatpush.msra.mxu0 0.0
        %3907 = vmatpush.msra.mxu0 0.0
        %3908 = vmatpush.msra.mxu0 0.0
        %3909 = vmatpush.msra.mxu0 0.0
        %3910 = vmatpush.msra.mxu0 0.0
        %3911 = vmatpush.msra.mxu0 0.0
        %3912 = vmatpush.msra.mxu0 0.0
        %3913 = vmatpush.msra.mxu0 0.0
        %3914 = vmatpush.msra.mxu0 0.0
        %3915 = vmatpush.msra.mxu0 0.0
        %3916 = vmatpush.msra.mxu0 0.0
        %3917 = vmatpush.msra.mxu0 0.0
        %3918 = vmatpush.msra.mxu0 0.0
        %3919 = vmatpush.msra.mxu0 0.0
        %3920 = vmatpush.msra.mxu0 0.0
        %3921 = vmatpush.msra.mxu0 %v3677
        %3922 = vmatmul.f32.gmra.mxu0 %v3884
        %v3923 = vpop.f32.mrf.mxu0
        %v3924 = vadd.f32 %v3881, %v3923
        %3925 = vdwg.mxu0
        %s3926 = scalar_lea.vmem [#allocation16], 8
        %v3927 = vld [vmem:[%s3926] sm:$0xf]
        %v3929 = vsel %vm3839, %v3927, 0
        %3931 = vmatpush.msra.mxu0 0.0
        %3932 = vmatpush.msra.mxu0 0.0
        %3933 = vmatpush.msra.mxu0 0.0
        %3934 = vmatpush.msra.mxu0 0.0
        %3935 = vmatpush.msra.mxu0 0.0
        %3936 = vmatpush.msra.mxu0 0.0
        %3937 = vmatpush.msra.mxu0 0.0
        %3938 = vmatpush.msra.mxu0 0.0
        %3939 = vmatpush.msra.mxu0 0.0
        %3940 = vmatpush.msra.mxu0 0.0
        %3941 = vmatpush.msra.mxu0 0.0
        %3942 = vmatpush.msra.mxu0 0.0
        %3943 = vmatpush.msra.mxu0 0.0
        %3944 = vmatpush.msra.mxu0 0.0
        %3945 = vmatpush.msra.mxu0 0.0
        %3946 = vmatpush.msra.mxu0 %v3755
        %3947 = vmatmul.f32.gmra.mxu0 %v3929
        %v3948 = vpop.f32.mrf.mxu0
        %v3949 = vadd.f32 0.0, %v3948
        %3950 = vdwg.mxu0
        %3951 = vmatpush.msra.mxu0 0.0
        %3952 = vmatpush.msra.mxu0 0.0
        %3953 = vmatpush.msra.mxu0 0.0
        %3954 = vmatpush.msra.mxu0 0.0
        %3955 = vmatpush.msra.mxu0 0.0
        %3956 = vmatpush.msra.mxu0 0.0
        %3957 = vmatpush.msra.mxu0 0.0
        %3958 = vmatpush.msra.mxu0 0.0
        %3959 = vmatpush.msra.mxu0 0.0
        %3960 = vmatpush.msra.mxu0 0.0
        %3961 = vmatpush.msra.mxu0 0.0
        %3962 = vmatpush.msra.mxu0 0.0
        %3963 = vmatpush.msra.mxu0 0.0
        %3964 = vmatpush.msra.mxu0 0.0
        %3965 = vmatpush.msra.mxu0 0.0
        %3966 = vmatpush.msra.mxu0 %v3781
        %3967 = vmatmul.f32.gmra.mxu0 %v3929
        %v3968 = vpop.f32.mrf.mxu0
        %v3969 = vadd.f32 0.0, %v3968
        %3970 = vdwg.mxu0
        %v3971 = vadd.f32 %v3904, %v3949
        %v3972 = vadd.f32 %v3924, %v3969
        %s3973 = scalar_lea.vmem [#allocation16], 12
        %v3974 = vld [vmem:[%s3973] sm:$0xf]
        %v3976 = vsel %vm3839, %v3974, 0
        %3978 = vmatpush.msra.mxu0 0.0
        %3979 = vmatpush.msra.mxu0 0.0
        %3980 = vmatpush.msra.mxu0 0.0
        %3981 = vmatpush.msra.mxu0 0.0
        %3982 = vmatpush.msra.mxu0 0.0
        %3983 = vmatpush.msra.mxu0 0.0
        %3984 = vmatpush.msra.mxu0 0.0
        %3985 = vmatpush.msra.mxu0 0.0
        %3986 = vmatpush.msra.mxu0 0.0
        %3987 = vmatpush.msra.mxu0 0.0
        %3988 = vmatpush.msra.mxu0 0.0
        %3989 = vmatpush.msra.mxu0 0.0
        %3990 = vmatpush.msra.mxu0 0.0
        %3991 = vmatpush.msra.mxu0 0.0
        %3992 = vmatpush.msra.mxu0 0.0
        %3993 = vmatpush.msra.mxu0 %v3807
        %3994 = vmatmul.f32.gmra.mxu0 %v3976
        %v3995 = vpop.f32.mrf.mxu0
        %v3996 = vadd.f32 0.0, %v3995
        %3997 = vdwg.mxu0
        %3998 = vmatpush.msra.mxu0 0.0
        %3999 = vmatpush.msra.mxu0 0.0
        %4000 = vmatpush.msra.mxu0 0.0
        %4001 = vmatpush.msra.mxu0 0.0
        %4002 = vmatpush.msra.mxu0 0.0
        %4003 = vmatpush.msra.mxu0 0.0
        %4004 = vmatpush.msra.mxu0 0.0
        %4005 = vmatpush.msra.mxu0 0.0
        %4006 = vmatpush.msra.mxu0 0.0
        %4007 = vmatpush.msra.mxu0 0.0
        %4008 = vmatpush.msra.mxu0 0.0
        %4009 = vmatpush.msra.mxu0 0.0
        %4010 = vmatpush.msra.mxu0 0.0
        %4011 = vmatpush.msra.mxu0 0.0
        %4012 = vmatpush.msra.mxu0 0.0
        %4013 = vmatpush.msra.mxu0 %v3833
        %4014 = vmatmul.f32.gmra.mxu0 %v3976
        %v4015 = vpop.f32.mrf.mxu0
        %v4016 = vadd.f32 0.0, %v4015
        %4017 = vdwg.mxu0
        %v4018 = vadd.f32 %v3971, %v3996
        %v4019 = vadd.f32 %v3972, %v4016
        %v4020 = vld [vmem:[%s9] sm:$0x3]
        %v4022 = vperm.slane %v4020, 0
        %v4023 = vperm.slane %v4020, 1
        %v4026 = vadd.f32 %v4018, %v4022
        %v4027 = vadd.f32 %v4019, %v4023
        %v4028 = vmax.f32 %v4026, 0.0
        %v4029 = vmax.f32 %v4027, 0.0
        %v4030 = vld [vmem:[#allocation17] sm:$0xff]
        %v4031 = vld [vmem:[#allocation17 + $0x8] sm:$0xff]
        %v4032 = vld [vmem:[#allocation17 + $0x10] sm:$0xff]
        %v4033 = vld [vmem:[#allocation17 + $0x18] sm:$0xff]
        %v4034 = vld [vmem:[#allocation17 + $0x20] sm:$0xff]
        %v4035 = vld [vmem:[#allocation17 + $0x28] sm:$0xff]
        %v4036 = vld [vmem:[#allocation17 + $0x30] sm:$0xff]
        %v4037 = vld [vmem:[#allocation17 + $0x38] sm:$0xff]
        %v4038 = vld [vmem:[#allocation17 + $0x40] sm:$0xff]
        %v4039 = vld [vmem:[#allocation17 + $0x48] sm:$0xff]
        %v4040 = vld [vmem:[#allocation17 + $0x50] sm:$0xff]
        %v4041 = vld [vmem:[#allocation17 + $0x58] sm:$0xff]
        %v4042 = vld [vmem:[#allocation17 + $0x60] sm:$0xff]
        %v4043 = vld [vmem:[#allocation17 + $0x68] sm:$0xff]
        %v4044 = vld [vmem:[#allocation17 + $0x70] sm:$0xff]
        %v4045 = vld [vmem:[#allocation17 + $0x78] sm:$0xff]
        %v4046 = vld [vmem:[#allocation17 + $0x80] sm:$0xff]
        %v4047 = vld [vmem:[#allocation17 + $0x88] sm:$0xff]
        %v4048 = vld [vmem:[#allocation17 + $0x90] sm:$0xff]
        %v4049 = vld [vmem:[#allocation17 + $0x98] sm:$0xff]
        %v4050 = vld [vmem:[#allocation17 + $0xa0] sm:$0xff]
        %v4051 = vld [vmem:[#allocation17 + $0xa8] sm:$0xff]
        %v4052 = vld [vmem:[#allocation17 + $0xb0] sm:$0xff]
        %v4053 = vld [vmem:[#allocation17 + $0xb8] sm:$0xff]
        %v4054 = vld [vmem:[#allocation17 + $0xc0] sm:$0xff]
        %v4055 = vld [vmem:[#allocation17 + $0xc8] sm:$0xff]
        %v4056 = vld [vmem:[#allocation17 + $0xd0] sm:$0xff]
        %v4057 = vld [vmem:[#allocation17 + $0xd8] sm:$0xff]
        %v4058 = vld [vmem:[#allocation17 + $0xe0] sm:$0xff]
        %v4059 = vld [vmem:[#allocation17 + $0xe8] sm:$0xff]
        %v4060 = vld [vmem:[#allocation17 + $0xf0] sm:$0xff]
        %v4061 = vld [vmem:[#allocation17 + $0xf8] sm:$0xff]
        %4062 = vmatpush.msra.mxu0 %v4045
        %4063 = vmatpush.msra.mxu0 %v4044
        %4064 = vmatpush.msra.mxu0 %v4043
        %4065 = vmatpush.msra.mxu0 %v4042
        %4066 = vmatpush.msra.mxu0 %v4041
        %4067 = vmatpush.msra.mxu0 %v4040
        %4068 = vmatpush.msra.mxu0 %v4039
        %4069 = vmatpush.msra.mxu0 %v4038
        %4070 = vmatpush.msra.mxu0 %v4037
        %4071 = vmatpush.msra.mxu0 %v4036
        %4072 = vmatpush.msra.mxu0 %v4035
        %4073 = vmatpush.msra.mxu0 %v4034
        %4074 = vmatpush.msra.mxu0 %v4033
        %4075 = vmatpush.msra.mxu0 %v4032
        %4076 = vmatpush.msra.mxu0 %v4031
        %4077 = vmatpush.msra.mxu0 %v4030
        %4078 = vmatmul.f32.gmra.mxu0 %v4028
        %v4079 = vpop.f32.mrf.mxu0
        %v4080 = vadd.f32 0.0, %v4079
        %4081 = vdwg.mxu0
        %4082 = vmatpush.msra.mxu0 %v4061
        %4083 = vmatpush.msra.mxu0 %v4060
        %4084 = vmatpush.msra.mxu0 %v4059
        %4085 = vmatpush.msra.mxu0 %v4058
        %4086 = vmatpush.msra.mxu0 %v4057
        %4087 = vmatpush.msra.mxu0 %v4056
        %4088 = vmatpush.msra.mxu0 %v4055
        %4089 = vmatpush.msra.mxu0 %v4054
        %4090 = vmatpush.msra.mxu0 %v4053
        %4091 = vmatpush.msra.mxu0 %v4052
        %4092 = vmatpush.msra.mxu0 %v4051
        %4093 = vmatpush.msra.mxu0 %v4050
        %4094 = vmatpush.msra.mxu0 %v4049
        %4095 = vmatpush.msra.mxu0 %v4048
        %4096 = vmatpush.msra.mxu0 %v4047
        %4097 = vmatpush.msra.mxu0 %v4046
        %4098 = vmatmul.f32.gmra.mxu0 %v4029
        %v4099 = vpop.f32.mrf.mxu0
        %v4100 = vadd.f32 %v4080, %v4099
        %4101 = vdwg.mxu0
        %v4103 = vrot.slane %v4100, 1
        %4104 = vrot.lane.b32.xlu0 %v4103, 112
        %v4105 = vpop.permute.xlu0 %4104
        %v4107 = vadd.f32 %v4100, %v4105
        %v4108 = vrot.slane %v4100, 2
        %4109 = vrot.lane.b32.xlu0 %v4108, 96
        %v4110 = vpop.permute.xlu0 %4109
        %v4112 = vadd.f32 %v4107, %v4110
        %v4113 = vrot.slane %v4100, 3
        %4114 = vrot.lane.b32.xlu0 %v4113, 80
        %v4115 = vpop.permute.xlu0 %4114
        %v4117 = vadd.f32 %v4112, %v4115
        %v4118 = vld [vmem:[#allocation19] sm:$0x1]
        %v4119 = vadd.f32 %v4117, %v4118
        %v4120 = vmax.f32 %v4119, 0.0
        %v4121 = vperm.slane %v4120, 0
        %v4122 = vld [vmem:[#allocation20] sm:$0xff]
        %v4123 = vld [vmem:[#allocation20 + $0x8] sm:$0xff]
        %v4124 = vld [vmem:[%s13] sm:$0x1]
        %v4126 = vperm.slane %v4124, 0
        %v4129 = vsel %vm2667, %v4121, 0
        %4131 = vmatpush.msra.mxu0 0.0
        %4132 = vmatpush.msra.mxu0 0.0
        %4133 = vmatpush.msra.mxu0 0.0
        %4134 = vmatpush.msra.mxu0 0.0
        %4135 = vmatpush.msra.mxu0 0.0
        %4136 = vmatpush.msra.mxu0 0.0
        %4137 = vmatpush.msra.mxu0 0.0
        %4138 = vmatpush.msra.mxu0 0.0
        %4139 = vmatpush.msra.mxu0 0.0
        %4140 = vmatpush.msra.mxu0 0.0
        %4141 = vmatpush.msra.mxu0 0.0
        %4142 = vmatpush.msra.mxu0 0.0
        %4143 = vmatpush.msra.mxu0 0.0
        %4144 = vmatpush.msra.mxu0 0.0
        %4145 = vmatpush.msra.mxu0 %v4123
        %4146 = vmatpush.msra.mxu0 %v4122
        %4147 = vmatmul.f32.gmra.mxu0 %v4129
        %v4148 = vpop.f32.mrf.mxu0
        %v4149 = vadd.f32 %v4126, %v4148
        %4150 = vdwg.mxu0
        %v4151 = vtanh.pop %v4149
        %vm4152 = vcmp.gt.f32.partialorder %v4151, 0.0
        %v4153 = vsel %vm4152, 1.0, -1.0
        %vm4154 = vcmask 24576
        %4155 = vst.msk [vmem:[%s1166] sm:$0x1] %vm4154, %v4153
        %v4156 = vld [vmem:[%s14] sm:$0xf]
        %v4157 = vld [vmem:[%s15] sm:$0x1]
        %v4159 = vperm.slane %v4157, 0
        %vm4161 = vcmask 31744
        %v4163 = vsel %vm4161, %v4153, 0
        %vm4165 = vcmask 1043456
        %v4167 = vsel %vm4165, %v4156, 0
        %4169 = vmatpush.msra.mxu0 0.0
        %4170 = vmatpush.msra.mxu0 0.0
        %4171 = vmatpush.msra.mxu0 0.0
        %4172 = vmatpush.msra.mxu0 0.0
        %4173 = vmatpush.msra.mxu0 0.0
        %4174 = vmatpush.msra.mxu0 0.0
        %4175 = vmatpush.msra.mxu0 0.0
        %4176 = vmatpush.msra.mxu0 0.0
        %4177 = vmatpush.msra.mxu0 0.0
        %4178 = vmatpush.msra.mxu0 0.0
        %4179 = vmatpush.msra.mxu0 0.0
        %4180 = vmatpush.msra.mxu0 0.0
        %4181 = vmatpush.msra.mxu0 0.0
        %4182 = vmatpush.msra.mxu0 0.0
        %4183 = vmatpush.msra.mxu0 0.0
        %4184 = vmatpush.msra.mxu0 %v4167
        %4185 = vmatmul.f32.gmra.mxu0 %v4163
        %v4186 = vpop.f32.mrf.mxu0
        %v4187 = vadd.f32 %v4159, %v4186
        %4188 = vdwg.mxu0
        %v4189 = vmax.f32 %v4187, 0.0
        %v4190 = vld [vmem:[#allocation22] sm:$0xff]
        %v4191 = vld [vmem:[#allocation22 + $0x8] sm:$0xff]
        %v4192 = vld [vmem:[#allocation22 + $0x10] sm:$0xff]
        %v4193 = vld [vmem:[#allocation22 + $0x18] sm:$0xff]
        %v4194 = vld [vmem:[#allocation22 + $0x20] sm:$0xff]
        %v4195 = vld [vmem:[#allocation22 + $0x28] sm:$0xff]
        %v4196 = vld [vmem:[#allocation22 + $0x30] sm:$0xff]
        %v4197 = vld [vmem:[#allocation22 + $0x38] sm:$0xff]
        %v4198 = vld [vmem:[#allocation22 + $0x40] sm:$0xff]
        %v4199 = vld [vmem:[#allocation22 + $0x48] sm:$0xff]
        %v4200 = vld [vmem:[#allocation22 + $0x50] sm:$0xff]
        %v4201 = vld [vmem:[#allocation22 + $0x58] sm:$0xff]
        %v4202 = vld [vmem:[#allocation22 + $0x60] sm:$0xff]
        %v4203 = vld [vmem:[#allocation22 + $0x68] sm:$0xff]
        %v4204 = vld [vmem:[#allocation22 + $0x70] sm:$0xff]
        %v4205 = vld [vmem:[#allocation22 + $0x78] sm:$0xff]
        %v4207 = vsel %vm2667, %v4189, 0
        %4209 = vmatpush.msra.mxu0 0.0
        %4210 = vmatpush.msra.mxu0 0.0
        %4211 = vmatpush.msra.mxu0 0.0
        %4212 = vmatpush.msra.mxu0 0.0
        %4213 = vmatpush.msra.mxu0 0.0
        %4214 = vmatpush.msra.mxu0 0.0
        %4215 = vmatpush.msra.mxu0 0.0
        %4216 = vmatpush.msra.mxu0 0.0
        %4217 = vmatpush.msra.mxu0 0.0
        %4218 = vmatpush.msra.mxu0 0.0
        %4219 = vmatpush.msra.mxu0 0.0
        %4220 = vmatpush.msra.mxu0 0.0
        %4221 = vmatpush.msra.mxu0 0.0
        %4222 = vmatpush.msra.mxu0 0.0
        %4223 = vmatpush.msra.mxu0 %v4198
        %4224 = vmatpush.msra.mxu0 %v4190
        %4225 = vmatmul.f32.gmra.mxu0 %v4207
        %v4226 = vpop.f32.mrf.mxu0
        %v4227 = vadd.f32 0.0, %v4226
        %4228 = vdwg.mxu0
        %4229 = vmatpush.msra.mxu0 0.0
        %4230 = vmatpush.msra.mxu0 0.0
        %4231 = vmatpush.msra.mxu0 0.0
        %4232 = vmatpush.msra.mxu0 0.0
        %4233 = vmatpush.msra.mxu0 0.0
        %4234 = vmatpush.msra.mxu0 0.0
        %4235 = vmatpush.msra.mxu0 0.0
        %4236 = vmatpush.msra.mxu0 0.0
        %4237 = vmatpush.msra.mxu0 0.0
        %4238 = vmatpush.msra.mxu0 0.0
        %4239 = vmatpush.msra.mxu0 0.0
        %4240 = vmatpush.msra.mxu0 0.0
        %4241 = vmatpush.msra.mxu0 0.0
        %4242 = vmatpush.msra.mxu0 0.0
        %4243 = vmatpush.msra.mxu0 %v4199
        %4244 = vmatpush.msra.mxu0 %v4191
        %4245 = vmatmul.f32.gmra.mxu0 %v4207
        %v4246 = vpop.f32.mrf.mxu0
        %v4247 = vadd.f32 0.0, %v4246
        %4248 = vdwg.mxu0
        %4249 = vmatpush.msra.mxu0 0.0
        %4250 = vmatpush.msra.mxu0 0.0
        %4251 = vmatpush.msra.mxu0 0.0
        %4252 = vmatpush.msra.mxu0 0.0
        %4253 = vmatpush.msra.mxu0 0.0
        %4254 = vmatpush.msra.mxu0 0.0
        %4255 = vmatpush.msra.mxu0 0.0
        %4256 = vmatpush.msra.mxu0 0.0
        %4257 = vmatpush.msra.mxu0 0.0
        %4258 = vmatpush.msra.mxu0 0.0
        %4259 = vmatpush.msra.mxu0 0.0
        %4260 = vmatpush.msra.mxu0 0.0
        %4261 = vmatpush.msra.mxu0 0.0
        %4262 = vmatpush.msra.mxu0 0.0
        %4263 = vmatpush.msra.mxu0 %v4200
        %4264 = vmatpush.msra.mxu0 %v4192
        %4265 = vmatmul.f32.gmra.mxu0 %v4207
        %v4266 = vpop.f32.mrf.mxu0
        %v4267 = vadd.f32 0.0, %v4266
        %4268 = vdwg.mxu0
        %4269 = vmatpush.msra.mxu0 0.0
        %4270 = vmatpush.msra.mxu0 0.0
        %4271 = vmatpush.msra.mxu0 0.0
        %4272 = vmatpush.msra.mxu0 0.0
        %4273 = vmatpush.msra.mxu0 0.0
        %4274 = vmatpush.msra.mxu0 0.0
        %4275 = vmatpush.msra.mxu0 0.0
        %4276 = vmatpush.msra.mxu0 0.0
        %4277 = vmatpush.msra.mxu0 0.0
        %4278 = vmatpush.msra.mxu0 0.0
        %4279 = vmatpush.msra.mxu0 0.0
        %4280 = vmatpush.msra.mxu0 0.0
        %4281 = vmatpush.msra.mxu0 0.0
        %4282 = vmatpush.msra.mxu0 0.0
        %4283 = vmatpush.msra.mxu0 %v4201
        %4284 = vmatpush.msra.mxu0 %v4193
        %4285 = vmatmul.f32.gmra.mxu0 %v4207
        %v4286 = vpop.f32.mrf.mxu0
        %v4287 = vadd.f32 0.0, %v4286
        %4288 = vdwg.mxu0
        %4289 = vmatpush.msra.mxu0 0.0
        %4290 = vmatpush.msra.mxu0 0.0
        %4291 = vmatpush.msra.mxu0 0.0
        %4292 = vmatpush.msra.mxu0 0.0
        %4293 = vmatpush.msra.mxu0 0.0
        %4294 = vmatpush.msra.mxu0 0.0
        %4295 = vmatpush.msra.mxu0 0.0
        %4296 = vmatpush.msra.mxu0 0.0
        %4297 = vmatpush.msra.mxu0 0.0
        %4298 = vmatpush.msra.mxu0 0.0
        %4299 = vmatpush.msra.mxu0 0.0
        %4300 = vmatpush.msra.mxu0 0.0
        %4301 = vmatpush.msra.mxu0 0.0
        %4302 = vmatpush.msra.mxu0 0.0
        %4303 = vmatpush.msra.mxu0 %v4202
        %4304 = vmatpush.msra.mxu0 %v4194
        %4305 = vmatmul.f32.gmra.mxu0 %v4207
        %v4306 = vpop.f32.mrf.mxu0
        %v4307 = vadd.f32 0.0, %v4306
        %4308 = vdwg.mxu0
        %4309 = vmatpush.msra.mxu0 0.0
        %4310 = vmatpush.msra.mxu0 0.0
        %4311 = vmatpush.msra.mxu0 0.0
        %4312 = vmatpush.msra.mxu0 0.0
        %4313 = vmatpush.msra.mxu0 0.0
        %4314 = vmatpush.msra.mxu0 0.0
        %4315 = vmatpush.msra.mxu0 0.0
        %4316 = vmatpush.msra.mxu0 0.0
        %4317 = vmatpush.msra.mxu0 0.0
        %4318 = vmatpush.msra.mxu0 0.0
        %4319 = vmatpush.msra.mxu0 0.0
        %4320 = vmatpush.msra.mxu0 0.0
        %4321 = vmatpush.msra.mxu0 0.0
        %4322 = vmatpush.msra.mxu0 0.0
        %4323 = vmatpush.msra.mxu0 %v4203
        %4324 = vmatpush.msra.mxu0 %v4195
        %4325 = vmatmul.f32.gmra.mxu0 %v4207
        %v4326 = vpop.f32.mrf.mxu0
        %v4327 = vadd.f32 0.0, %v4326
        %4328 = vdwg.mxu0
        %4329 = vmatpush.msra.mxu0 0.0
        %4330 = vmatpush.msra.mxu0 0.0
        %4331 = vmatpush.msra.mxu0 0.0
        %4332 = vmatpush.msra.mxu0 0.0
        %4333 = vmatpush.msra.mxu0 0.0
        %4334 = vmatpush.msra.mxu0 0.0
        %4335 = vmatpush.msra.mxu0 0.0
        %4336 = vmatpush.msra.mxu0 0.0
        %4337 = vmatpush.msra.mxu0 0.0
        %4338 = vmatpush.msra.mxu0 0.0
        %4339 = vmatpush.msra.mxu0 0.0
        %4340 = vmatpush.msra.mxu0 0.0
        %4341 = vmatpush.msra.mxu0 0.0
        %4342 = vmatpush.msra.mxu0 0.0
        %4343 = vmatpush.msra.mxu0 %v4204
        %4344 = vmatpush.msra.mxu0 %v4196
        %4345 = vmatmul.f32.gmra.mxu0 %v4207
        %v4346 = vpop.f32.mrf.mxu0
        %v4347 = vadd.f32 0.0, %v4346
        %4348 = vdwg.mxu0
        %4349 = vmatpush.msra.mxu0 0.0
        %4350 = vmatpush.msra.mxu0 0.0
        %4351 = vmatpush.msra.mxu0 0.0
        %4352 = vmatpush.msra.mxu0 0.0
        %4353 = vmatpush.msra.mxu0 0.0
        %4354 = vmatpush.msra.mxu0 0.0
        %4355 = vmatpush.msra.mxu0 0.0
        %4356 = vmatpush.msra.mxu0 0.0
        %4357 = vmatpush.msra.mxu0 0.0
        %4358 = vmatpush.msra.mxu0 0.0
        %4359 = vmatpush.msra.mxu0 0.0
        %4360 = vmatpush.msra.mxu0 0.0
        %4361 = vmatpush.msra.mxu0 0.0
        %4362 = vmatpush.msra.mxu0 0.0
        %4363 = vmatpush.msra.mxu0 %v4205
        %4364 = vmatpush.msra.mxu0 %v4197
        %4365 = vmatmul.f32.gmra.mxu0 %v4207
        %v4366 = vpop.f32.mrf.mxu0
        %v4367 = vadd.f32 0.0, %v4366
        %4368 = vdwg.mxu0
        %v4369 = vlaneseq
        %v4370 = vshrl.u32 %v4369, 7
        %vm4371 = vcmp.eq.s32.totalorder %v4370, 0
        %v4372 = vsel %vm4371, 1, 0
        %v4373 = vcvt.s32.f32 %v4372
        %v4374 = vperm.slane %v4227, 0
        %v4375 = vperm.slane %v4247, 0
        %v4376 = vmul.f32 %v4373, %v4374
        %v4377 = vmul.f32 %v4373, %v4375
        %vm4378 = vcmp.eq.s32.totalorder %v4370, 1
        %v4379 = vsel %vm4378, 1, 0
        %v4380 = vcvt.s32.f32 %v4379
        %v4381 = vperm.slane %v4267, 0
        %v4382 = vperm.slane %v4287, 0
        %v4383 = vmul.f32 %v4380, %v4381
        %v4384 = vmul.f32 %v4380, %v4382
        %v4385 = vadd.f32 %v4376, %v4383
        %v4386 = vadd.f32 %v4377, %v4384
        %vm4387 = vcmp.eq.s32.totalorder %v4370, 2
        %v4388 = vsel %vm4387, 1, 0
        %v4389 = vcvt.s32.f32 %v4388
        %v4390 = vperm.slane %v4307, 0
        %v4391 = vperm.slane %v4327, 0
        %v4392 = vmul.f32 %v4389, %v4390
        %v4393 = vmul.f32 %v4389, %v4391
        %v4394 = vadd.f32 %v4385, %v4392
        %v4395 = vadd.f32 %v4386, %v4393
        %vm4396 = vcmp.eq.s32.totalorder %v4370, 3
        %v4397 = vsel %vm4396, 1, 0
        %v4398 = vcvt.s32.f32 %v4397
        %v4399 = vperm.slane %v4347, 0
        %v4400 = vperm.slane %v4367, 0
        %v4401 = vmul.f32 %v4398, %v4399
        %v4402 = vmul.f32 %v4398, %v4400
        %v4403 = vadd.f32 %v4394, %v4401
        %v4404 = vadd.f32 %v4395, %v4402
        %v4405 = vld [vmem:[%s17] sm:$0x3]
        %v4407 = vperm.slane %v4405, 0
        %v4408 = vperm.slane %v4405, 1
        %v4411 = vadd.f32 %v4403, %v4407
        %v4412 = vadd.f32 %v4404, %v4408
        %v4413 = vmax.f32 %v4411, 0.0
        %v4414 = vmax.f32 %v4412, 0.0
        %v4415 = vpack.c.bf16 %v4413, %v4413
        %v4416 = vpack.c.bf16 %v4414, %v4414
        %v4417 = vld [vmem:[#allocation23] sm:$0xff]
        %v4418 = vld [vmem:[#allocation23 + $0x8] sm:$0xff]
        %v4419 = vld [vmem:[#allocation23 + $0x10] sm:$0xff]
        %v4420 = vld [vmem:[#allocation23 + $0x18] sm:$0xff]
        %v4421 = vld [vmem:[#allocation23 + $0x20] sm:$0xff]
        %v4422 = vld [vmem:[#allocation23 + $0x28] sm:$0xff]
        %v4423 = vld [vmem:[#allocation23 + $0x30] sm:$0xff]
        %v4424 = vld [vmem:[#allocation23 + $0x38] sm:$0xff]
        %v4425 = vld [vmem:[#allocation23 + $0x40] sm:$0xff]
        %v4426 = vld [vmem:[#allocation23 + $0x48] sm:$0xff]
        %v4427 = vld [vmem:[#allocation23 + $0x50] sm:$0xff]
        %v4428 = vld [vmem:[#allocation23 + $0x58] sm:$0xff]
        %v4429 = vld [vmem:[#allocation23 + $0x60] sm:$0xff]
        %v4430 = vld [vmem:[#allocation23 + $0x68] sm:$0xff]
        %v4431 = vld [vmem:[#allocation23 + $0x70] sm:$0xff]
        %v4432 = vld [vmem:[#allocation23 + $0x78] sm:$0xff]
        %v4433 = vld [vmem:[#allocation23 + $0x80] sm:$0xff]
        %v4434 = vld [vmem:[#allocation23 + $0x88] sm:$0xff]
        %v4435 = vld [vmem:[#allocation23 + $0x90] sm:$0xff]
        %v4436 = vld [vmem:[#allocation23 + $0x98] sm:$0xff]
        %v4437 = vld [vmem:[#allocation23 + $0xa0] sm:$0xff]
        %v4438 = vld [vmem:[#allocation23 + $0xa8] sm:$0xff]
        %v4439 = vld [vmem:[#allocation23 + $0xb0] sm:$0xff]
        %v4440 = vld [vmem:[#allocation23 + $0xb8] sm:$0xff]
        %v4441 = vld [vmem:[#allocation23 + $0xc0] sm:$0xff]
        %v4442 = vld [vmem:[#allocation23 + $0xc8] sm:$0xff]
        %v4443 = vld [vmem:[#allocation23 + $0xd0] sm:$0xff]
        %v4444 = vld [vmem:[#allocation23 + $0xd8] sm:$0xff]
        %v4445 = vld [vmem:[#allocation23 + $0xe0] sm:$0xff]
        %v4446 = vld [vmem:[#allocation23 + $0xe8] sm:$0xff]
        %v4447 = vld [vmem:[#allocation23 + $0xf0] sm:$0xff]
        %v4448 = vld [vmem:[#allocation23 + $0xf8] sm:$0xff]
        %v4449 = vld [vmem:[#allocation23 + $0x100] sm:$0xff]
        %v4450 = vld [vmem:[#allocation23 + $0x108] sm:$0xff]
        %v4451 = vld [vmem:[#allocation23 + $0x110] sm:$0xff]
        %v4452 = vld [vmem:[#allocation23 + $0x118] sm:$0xff]
        %v4453 = vld [vmem:[#allocation23 + $0x120] sm:$0xff]
        %v4454 = vld [vmem:[#allocation23 + $0x128] sm:$0xff]
        %v4455 = vld [vmem:[#allocation23 + $0x130] sm:$0xff]
        %v4456 = vld [vmem:[#allocation23 + $0x138] sm:$0xff]
        %v4457 = vld [vmem:[#allocation23 + $0x140] sm:$0xff]
        %v4458 = vld [vmem:[#allocation23 + $0x148] sm:$0xff]
        %v4459 = vld [vmem:[#allocation23 + $0x150] sm:$0xff]
        %v4460 = vld [vmem:[#allocation23 + $0x158] sm:$0xff]
        %v4461 = vld [vmem:[#allocation23 + $0x160] sm:$0xff]
        %v4462 = vld [vmem:[#allocation23 + $0x168] sm:$0xff]
        %v4463 = vld [vmem:[#allocation23 + $0x170] sm:$0xff]
        %v4464 = vld [vmem:[#allocation23 + $0x178] sm:$0xff]
        %v4465 = vld [vmem:[#allocation23 + $0x180] sm:$0xff]
        %v4466 = vld [vmem:[#allocation23 + $0x188] sm:$0xff]
        %v4467 = vld [vmem:[#allocation23 + $0x190] sm:$0xff]
        %v4468 = vld [vmem:[#allocation23 + $0x198] sm:$0xff]
        %v4469 = vld [vmem:[#allocation23 + $0x1a0] sm:$0xff]
        %v4470 = vld [vmem:[#allocation23 + $0x1a8] sm:$0xff]
        %v4471 = vld [vmem:[#allocation23 + $0x1b0] sm:$0xff]
        %v4472 = vld [vmem:[#allocation23 + $0x1b8] sm:$0xff]
        %v4473 = vld [vmem:[#allocation23 + $0x1c0] sm:$0xff]
        %v4474 = vld [vmem:[#allocation23 + $0x1c8] sm:$0xff]
        %v4475 = vld [vmem:[#allocation23 + $0x1d0] sm:$0xff]
        %v4476 = vld [vmem:[#allocation23 + $0x1d8] sm:$0xff]
        %v4477 = vld [vmem:[#allocation23 + $0x1e0] sm:$0xff]
        %v4478 = vld [vmem:[#allocation23 + $0x1e8] sm:$0xff]
        %v4479 = vld [vmem:[#allocation23 + $0x1f0] sm:$0xff]
        %v4480 = vld [vmem:[#allocation23 + $0x1f8] sm:$0xff]
        %v4481 = vld [vmem:[#allocation23 + $0x200] sm:$0xff]
        %v4482 = vld [vmem:[#allocation23 + $0x208] sm:$0xff]
        %v4483 = vld [vmem:[#allocation23 + $0x210] sm:$0xff]
        %v4484 = vld [vmem:[#allocation23 + $0x218] sm:$0xff]
        %v4485 = vld [vmem:[#allocation23 + $0x220] sm:$0xff]
        %v4486 = vld [vmem:[#allocation23 + $0x228] sm:$0xff]
        %v4487 = vld [vmem:[#allocation23 + $0x230] sm:$0xff]
        %v4488 = vld [vmem:[#allocation23 + $0x238] sm:$0xff]
        %v4489 = vld [vmem:[#allocation23 + $0x240] sm:$0xff]
        %v4490 = vld [vmem:[#allocation23 + $0x248] sm:$0xff]
        %v4491 = vld [vmem:[#allocation23 + $0x250] sm:$0xff]
        %v4492 = vld [vmem:[#allocation23 + $0x258] sm:$0xff]
        %v4493 = vld [vmem:[#allocation23 + $0x260] sm:$0xff]
        %v4494 = vld [vmem:[#allocation23 + $0x268] sm:$0xff]
        %v4495 = vld [vmem:[#allocation23 + $0x270] sm:$0xff]
        %v4496 = vld [vmem:[#allocation23 + $0x278] sm:$0xff]
        %v4497 = vld [vmem:[#allocation23 + $0x280] sm:$0xff]
        %v4498 = vld [vmem:[#allocation23 + $0x288] sm:$0xff]
        %v4499 = vld [vmem:[#allocation23 + $0x290] sm:$0xff]
        %v4500 = vld [vmem:[#allocation23 + $0x298] sm:$0xff]
        %v4501 = vld [vmem:[#allocation23 + $0x2a0] sm:$0xff]
        %v4502 = vld [vmem:[#allocation23 + $0x2a8] sm:$0xff]
        %v4503 = vld [vmem:[#allocation23 + $0x2b0] sm:$0xff]
        %v4504 = vld [vmem:[#allocation23 + $0x2b8] sm:$0xff]
        %v4505 = vld [vmem:[#allocation23 + $0x2c0] sm:$0xff]
        %v4506 = vld [vmem:[#allocation23 + $0x2c8] sm:$0xff]
        %v4507 = vld [vmem:[#allocation23 + $0x2d0] sm:$0xff]
        %v4508 = vld [vmem:[#allocation23 + $0x2d8] sm:$0xff]
        %v4509 = vld [vmem:[#allocation23 + $0x2e0] sm:$0xff]
        %v4510 = vld [vmem:[#allocation23 + $0x2e8] sm:$0xff]
        %v4511 = vld [vmem:[#allocation23 + $0x2f0] sm:$0xff]
        %v4512 = vld [vmem:[#allocation23 + $0x2f8] sm:$0xff]
        %v4513 = vld [vmem:[#allocation23 + $0x300] sm:$0xff]
        %v4514 = vld [vmem:[#allocation23 + $0x308] sm:$0xff]
        %v4515 = vld [vmem:[#allocation23 + $0x310] sm:$0xff]
        %v4516 = vld [vmem:[#allocation23 + $0x318] sm:$0xff]
        %v4517 = vld [vmem:[#allocation23 + $0x320] sm:$0xff]
        %v4518 = vld [vmem:[#allocation23 + $0x328] sm:$0xff]
        %v4519 = vld [vmem:[#allocation23 + $0x330] sm:$0xff]
        %v4520 = vld [vmem:[#allocation23 + $0x338] sm:$0xff]
        %v4521 = vld [vmem:[#allocation23 + $0x340] sm:$0xff]
        %v4522 = vld [vmem:[#allocation23 + $0x348] sm:$0xff]
        %v4523 = vld [vmem:[#allocation23 + $0x350] sm:$0xff]
        %v4524 = vld [vmem:[#allocation23 + $0x358] sm:$0xff]
        %v4525 = vld [vmem:[#allocation23 + $0x360] sm:$0xff]
        %v4526 = vld [vmem:[#allocation23 + $0x368] sm:$0xff]
        %v4527 = vld [vmem:[#allocation23 + $0x370] sm:$0xff]
        %v4528 = vld [vmem:[#allocation23 + $0x378] sm:$0xff]
        %v4529 = vld [vmem:[#allocation23 + $0x380] sm:$0xff]
        %v4530 = vld [vmem:[#allocation23 + $0x388] sm:$0xff]
        %v4531 = vld [vmem:[#allocation23 + $0x390] sm:$0xff]
        %v4532 = vld [vmem:[#allocation23 + $0x398] sm:$0xff]
        %v4533 = vld [vmem:[#allocation23 + $0x3a0] sm:$0xff]
        %v4534 = vld [vmem:[#allocation23 + $0x3a8] sm:$0xff]
        %v4535 = vld [vmem:[#allocation23 + $0x3b0] sm:$0xff]
        %v4536 = vld [vmem:[#allocation23 + $0x3b8] sm:$0xff]
        %v4537 = vld [vmem:[#allocation23 + $0x3c0] sm:$0xff]
        %v4538 = vld [vmem:[#allocation23 + $0x3c8] sm:$0xff]
        %v4539 = vld [vmem:[#allocation23 + $0x3d0] sm:$0xff]
        %v4540 = vld [vmem:[#allocation23 + $0x3d8] sm:$0xff]
        %v4541 = vld [vmem:[#allocation23 + $0x3e0] sm:$0xff]
        %v4542 = vld [vmem:[#allocation23 + $0x3e8] sm:$0xff]
        %v4543 = vld [vmem:[#allocation23 + $0x3f0] sm:$0xff]
        %v4544 = vld [vmem:[#allocation23 + $0x3f8] sm:$0xff]
        %v4673 = vunpack.c.l.b16 %v4417
        %v4674 = vunpack.c.h.b16 %v4417
        %v4675 = vunpack.c.l.b16 %v4418
        %v4676 = vunpack.c.h.b16 %v4418
        %v4677 = vunpack.c.l.b16 %v4419
        %v4678 = vunpack.c.h.b16 %v4419
        %v4679 = vunpack.c.l.b16 %v4420
        %v4680 = vunpack.c.h.b16 %v4420
        %v4681 = vunpack.c.l.b16 %v4421
        %v4682 = vunpack.c.h.b16 %v4421
        %v4683 = vunpack.c.l.b16 %v4422
        %v4684 = vunpack.c.h.b16 %v4422
        %v4685 = vunpack.c.l.b16 %v4423
        %v4686 = vunpack.c.h.b16 %v4423
        %v4687 = vunpack.c.l.b16 %v4424
        %v4688 = vunpack.c.h.b16 %v4424
        %v4689 = vunpack.c.l.b16 %v4425
        %v4690 = vunpack.c.h.b16 %v4425
        %v4691 = vunpack.c.l.b16 %v4426
        %v4692 = vunpack.c.h.b16 %v4426
        %v4693 = vunpack.c.l.b16 %v4427
        %v4694 = vunpack.c.h.b16 %v4427
        %v4695 = vunpack.c.l.b16 %v4428
        %v4696 = vunpack.c.h.b16 %v4428
        %v4697 = vunpack.c.l.b16 %v4429
        %v4698 = vunpack.c.h.b16 %v4429
        %v4699 = vunpack.c.l.b16 %v4430
        %v4700 = vunpack.c.h.b16 %v4430
        %v4701 = vunpack.c.l.b16 %v4431
        %v4702 = vunpack.c.h.b16 %v4431
        %v4703 = vunpack.c.l.b16 %v4432
        %v4704 = vunpack.c.h.b16 %v4432
        %v4705 = vunpack.c.l.b16 %v4433
        %v4706 = vunpack.c.h.b16 %v4433
        %v4707 = vunpack.c.l.b16 %v4434
        %v4708 = vunpack.c.h.b16 %v4434
        %v4709 = vunpack.c.l.b16 %v4435
        %v4710 = vunpack.c.h.b16 %v4435
        %v4711 = vunpack.c.l.b16 %v4436
        %v4712 = vunpack.c.h.b16 %v4436
        %v4713 = vunpack.c.l.b16 %v4437
        %v4714 = vunpack.c.h.b16 %v4437
        %v4715 = vunpack.c.l.b16 %v4438
        %v4716 = vunpack.c.h.b16 %v4438
        %v4717 = vunpack.c.l.b16 %v4439
        %v4718 = vunpack.c.h.b16 %v4439
        %v4719 = vunpack.c.l.b16 %v4440
        %v4720 = vunpack.c.h.b16 %v4440
        %v4721 = vunpack.c.l.b16 %v4441
        %v4722 = vunpack.c.h.b16 %v4441
        %v4723 = vunpack.c.l.b16 %v4442
        %v4724 = vunpack.c.h.b16 %v4442
        %v4725 = vunpack.c.l.b16 %v4443
        %v4726 = vunpack.c.h.b16 %v4443
        %v4727 = vunpack.c.l.b16 %v4444
        %v4728 = vunpack.c.h.b16 %v4444
        %v4729 = vunpack.c.l.b16 %v4445
        %v4730 = vunpack.c.h.b16 %v4445
        %v4731 = vunpack.c.l.b16 %v4446
        %v4732 = vunpack.c.h.b16 %v4446
        %v4733 = vunpack.c.l.b16 %v4447
        %v4734 = vunpack.c.h.b16 %v4447
        %v4735 = vunpack.c.l.b16 %v4448
        %v4736 = vunpack.c.h.b16 %v4448
        %v4737 = vunpack.c.l.b16 %v4449
        %v4738 = vunpack.c.h.b16 %v4449
        %v4739 = vunpack.c.l.b16 %v4450
        %v4740 = vunpack.c.h.b16 %v4450
        %v4741 = vunpack.c.l.b16 %v4451
        %v4742 = vunpack.c.h.b16 %v4451
        %v4743 = vunpack.c.l.b16 %v4452
        %v4744 = vunpack.c.h.b16 %v4452
        %v4745 = vunpack.c.l.b16 %v4453
        %v4746 = vunpack.c.h.b16 %v4453
        %v4747 = vunpack.c.l.b16 %v4454
        %v4748 = vunpack.c.h.b16 %v4454
        %v4749 = vunpack.c.l.b16 %v4455
        %v4750 = vunpack.c.h.b16 %v4455
        %v4751 = vunpack.c.l.b16 %v4456
        %v4752 = vunpack.c.h.b16 %v4456
        %v4753 = vunpack.c.l.b16 %v4457
        %v4754 = vunpack.c.h.b16 %v4457
        %v4755 = vunpack.c.l.b16 %v4458
        %v4756 = vunpack.c.h.b16 %v4458
        %v4757 = vunpack.c.l.b16 %v4459
        %v4758 = vunpack.c.h.b16 %v4459
        %v4759 = vunpack.c.l.b16 %v4460
        %v4760 = vunpack.c.h.b16 %v4460
        %v4761 = vunpack.c.l.b16 %v4461
        %v4762 = vunpack.c.h.b16 %v4461
        %v4763 = vunpack.c.l.b16 %v4462
        %v4764 = vunpack.c.h.b16 %v4462
        %v4765 = vunpack.c.l.b16 %v4463
        %v4766 = vunpack.c.h.b16 %v4463
        %v4767 = vunpack.c.l.b16 %v4464
        %v4768 = vunpack.c.h.b16 %v4464
        %v4769 = vunpack.c.l.b16 %v4465
        %v4770 = vunpack.c.h.b16 %v4465
        %v4771 = vunpack.c.l.b16 %v4466
        %v4772 = vunpack.c.h.b16 %v4466
        %v4773 = vunpack.c.l.b16 %v4467
        %v4774 = vunpack.c.h.b16 %v4467
        %v4775 = vunpack.c.l.b16 %v4468
        %v4776 = vunpack.c.h.b16 %v4468
        %v4777 = vunpack.c.l.b16 %v4469
        %v4778 = vunpack.c.h.b16 %v4469
        %v4779 = vunpack.c.l.b16 %v4470
        %v4780 = vunpack.c.h.b16 %v4470
        %v4781 = vunpack.c.l.b16 %v4471
        %v4782 = vunpack.c.h.b16 %v4471
        %v4783 = vunpack.c.l.b16 %v4472
        %v4784 = vunpack.c.h.b16 %v4472
        %v4785 = vunpack.c.l.b16 %v4473
        %v4786 = vunpack.c.h.b16 %v4473
        %v4787 = vunpack.c.l.b16 %v4474
        %v4788 = vunpack.c.h.b16 %v4474
        %v4789 = vunpack.c.l.b16 %v4475
        %v4790 = vunpack.c.h.b16 %v4475
        %v4791 = vunpack.c.l.b16 %v4476
        %v4792 = vunpack.c.h.b16 %v4476
        %v4793 = vunpack.c.l.b16 %v4477
        %v4794 = vunpack.c.h.b16 %v4477
        %v4795 = vunpack.c.l.b16 %v4478
        %v4796 = vunpack.c.h.b16 %v4478
        %v4797 = vunpack.c.l.b16 %v4479
        %v4798 = vunpack.c.h.b16 %v4479
        %v4799 = vunpack.c.l.b16 %v4480
        %v4800 = vunpack.c.h.b16 %v4480
        %v4801 = vunpack.c.l.b16 %v4481
        %v4802 = vunpack.c.h.b16 %v4481
        %v4803 = vunpack.c.l.b16 %v4482
        %v4804 = vunpack.c.h.b16 %v4482
        %v4805 = vunpack.c.l.b16 %v4483
        %v4806 = vunpack.c.h.b16 %v4483
        %v4807 = vunpack.c.l.b16 %v4484
        %v4808 = vunpack.c.h.b16 %v4484
        %v4809 = vunpack.c.l.b16 %v4485
        %v4810 = vunpack.c.h.b16 %v4485
        %v4811 = vunpack.c.l.b16 %v4486
        %v4812 = vunpack.c.h.b16 %v4486
        %v4813 = vunpack.c.l.b16 %v4487
        %v4814 = vunpack.c.h.b16 %v4487
        %v4815 = vunpack.c.l.b16 %v4488
        %v4816 = vunpack.c.h.b16 %v4488
        %v4817 = vunpack.c.l.b16 %v4489
        %v4818 = vunpack.c.h.b16 %v4489
        %v4819 = vunpack.c.l.b16 %v4490
        %v4820 = vunpack.c.h.b16 %v4490
        %v4821 = vunpack.c.l.b16 %v4491
        %v4822 = vunpack.c.h.b16 %v4491
        %v4823 = vunpack.c.l.b16 %v4492
        %v4824 = vunpack.c.h.b16 %v4492
        %v4825 = vunpack.c.l.b16 %v4493
        %v4826 = vunpack.c.h.b16 %v4493
        %v4827 = vunpack.c.l.b16 %v4494
        %v4828 = vunpack.c.h.b16 %v4494
        %v4829 = vunpack.c.l.b16 %v4495
        %v4830 = vunpack.c.h.b16 %v4495
        %v4831 = vunpack.c.l.b16 %v4496
        %v4832 = vunpack.c.h.b16 %v4496
        %v4833 = vunpack.c.l.b16 %v4497
        %v4834 = vunpack.c.h.b16 %v4497
        %v4835 = vunpack.c.l.b16 %v4498
        %v4836 = vunpack.c.h.b16 %v4498
        %v4837 = vunpack.c.l.b16 %v4499
        %v4838 = vunpack.c.h.b16 %v4499
        %v4839 = vunpack.c.l.b16 %v4500
        %v4840 = vunpack.c.h.b16 %v4500
        %v4841 = vunpack.c.l.b16 %v4501
        %v4842 = vunpack.c.h.b16 %v4501
        %v4843 = vunpack.c.l.b16 %v4502
        %v4844 = vunpack.c.h.b16 %v4502
        %v4845 = vunpack.c.l.b16 %v4503
        %v4846 = vunpack.c.h.b16 %v4503
        %v4847 = vunpack.c.l.b16 %v4504
        %v4848 = vunpack.c.h.b16 %v4504
        %v4849 = vunpack.c.l.b16 %v4505
        %v4850 = vunpack.c.h.b16 %v4505
        %v4851 = vunpack.c.l.b16 %v4506
        %v4852 = vunpack.c.h.b16 %v4506
        %v4853 = vunpack.c.l.b16 %v4507
        %v4854 = vunpack.c.h.b16 %v4507
        %v4855 = vunpack.c.l.b16 %v4508
        %v4856 = vunpack.c.h.b16 %v4508
        %v4857 = vunpack.c.l.b16 %v4509
        %v4858 = vunpack.c.h.b16 %v4509
        %v4859 = vunpack.c.l.b16 %v4510
        %v4860 = vunpack.c.h.b16 %v4510
        %v4861 = vunpack.c.l.b16 %v4511
        %v4862 = vunpack.c.h.b16 %v4511
        %v4863 = vunpack.c.l.b16 %v4512
        %v4864 = vunpack.c.h.b16 %v4512
        %v4865 = vunpack.c.l.b16 %v4513
        %v4866 = vunpack.c.h.b16 %v4513
        %v4867 = vunpack.c.l.b16 %v4514
        %v4868 = vunpack.c.h.b16 %v4514
        %v4869 = vunpack.c.l.b16 %v4515
        %v4870 = vunpack.c.h.b16 %v4515
        %v4871 = vunpack.c.l.b16 %v4516
        %v4872 = vunpack.c.h.b16 %v4516
        %v4873 = vunpack.c.l.b16 %v4517
        %v4874 = vunpack.c.h.b16 %v4517
        %v4875 = vunpack.c.l.b16 %v4518
        %v4876 = vunpack.c.h.b16 %v4518
        %v4877 = vunpack.c.l.b16 %v4519
        %v4878 = vunpack.c.h.b16 %v4519
        %v4879 = vunpack.c.l.b16 %v4520
        %v4880 = vunpack.c.h.b16 %v4520
        %v4881 = vunpack.c.l.b16 %v4521
        %v4882 = vunpack.c.h.b16 %v4521
        %v4883 = vunpack.c.l.b16 %v4522
        %v4884 = vunpack.c.h.b16 %v4522
        %v4885 = vunpack.c.l.b16 %v4523
        %v4886 = vunpack.c.h.b16 %v4523
        %v4887 = vunpack.c.l.b16 %v4524
        %v4888 = vunpack.c.h.b16 %v4524
        %v4889 = vunpack.c.l.b16 %v4525
        %v4890 = vunpack.c.h.b16 %v4525
        %v4891 = vunpack.c.l.b16 %v4526
        %v4892 = vunpack.c.h.b16 %v4526
        %v4893 = vunpack.c.l.b16 %v4527
        %v4894 = vunpack.c.h.b16 %v4527
        %v4895 = vunpack.c.l.b16 %v4528
        %v4896 = vunpack.c.h.b16 %v4528
        %v4897 = vunpack.c.l.b16 %v4529
        %v4898 = vunpack.c.h.b16 %v4529
        %v4899 = vunpack.c.l.b16 %v4530
        %v4900 = vunpack.c.h.b16 %v4530
        %v4901 = vunpack.c.l.b16 %v4531
        %v4902 = vunpack.c.h.b16 %v4531
        %v4903 = vunpack.c.l.b16 %v4532
        %v4904 = vunpack.c.h.b16 %v4532
        %v4905 = vunpack.c.l.b16 %v4533
        %v4906 = vunpack.c.h.b16 %v4533
        %v4907 = vunpack.c.l.b16 %v4534
        %v4908 = vunpack.c.h.b16 %v4534
        %v4909 = vunpack.c.l.b16 %v4535
        %v4910 = vunpack.c.h.b16 %v4535
        %v4911 = vunpack.c.l.b16 %v4536
        %v4912 = vunpack.c.h.b16 %v4536
        %v4913 = vunpack.c.l.b16 %v4537
        %v4914 = vunpack.c.h.b16 %v4537
        %v4915 = vunpack.c.l.b16 %v4538
        %v4916 = vunpack.c.h.b16 %v4538
        %v4917 = vunpack.c.l.b16 %v4539
        %v4918 = vunpack.c.h.b16 %v4539
        %v4919 = vunpack.c.l.b16 %v4540
        %v4920 = vunpack.c.h.b16 %v4540
        %v4921 = vunpack.c.l.b16 %v4541
        %v4922 = vunpack.c.h.b16 %v4541
        %v4923 = vunpack.c.l.b16 %v4542
        %v4924 = vunpack.c.h.b16 %v4542
        %v4925 = vunpack.c.l.b16 %v4543
        %v4926 = vunpack.c.h.b16 %v4543
        %v4927 = vunpack.c.l.b16 %v4544
        %v4928 = vunpack.c.h.b16 %v4544
        %v4929 = vpack.c.b16 %v4681, %v4673
        %v4930 = vpack.c.b16 %v4682, %v4674
        %v4931 = vpack.c.b16 %v4683, %v4675
        %v4932 = vpack.c.b16 %v4684, %v4676
        %v4933 = vpack.c.b16 %v4685, %v4677
        %v4934 = vpack.c.b16 %v4686, %v4678
        %v4935 = vpack.c.b16 %v4687, %v4679
        %v4936 = vpack.c.b16 %v4688, %v4680
        %v4937 = vpack.c.b16 %v4697, %v4689
        %v4938 = vpack.c.b16 %v4698, %v4690
        %v4939 = vpack.c.b16 %v4699, %v4691
        %v4940 = vpack.c.b16 %v4700, %v4692
        %v4941 = vpack.c.b16 %v4701, %v4693
        %v4942 = vpack.c.b16 %v4702, %v4694
        %v4943 = vpack.c.b16 %v4703, %v4695
        %v4944 = vpack.c.b16 %v4704, %v4696
        %v4945 = vpack.c.b16 %v4713, %v4705
        %v4946 = vpack.c.b16 %v4714, %v4706
        %v4947 = vpack.c.b16 %v4715, %v4707
        %v4948 = vpack.c.b16 %v4716, %v4708
        %v4949 = vpack.c.b16 %v4717, %v4709
        %v4950 = vpack.c.b16 %v4718, %v4710
        %v4951 = vpack.c.b16 %v4719, %v4711
        %v4952 = vpack.c.b16 %v4720, %v4712
        %v4953 = vpack.c.b16 %v4729, %v4721
        %v4954 = vpack.c.b16 %v4730, %v4722
        %v4955 = vpack.c.b16 %v4731, %v4723
        %v4956 = vpack.c.b16 %v4732, %v4724
        %v4957 = vpack.c.b16 %v4733, %v4725
        %v4958 = vpack.c.b16 %v4734, %v4726
        %v4959 = vpack.c.b16 %v4735, %v4727
        %v4960 = vpack.c.b16 %v4736, %v4728
        %v4961 = vpack.c.b16 %v4745, %v4737
        %v4962 = vpack.c.b16 %v4746, %v4738
        %v4963 = vpack.c.b16 %v4747, %v4739
        %v4964 = vpack.c.b16 %v4748, %v4740
        %v4965 = vpack.c.b16 %v4749, %v4741
        %v4966 = vpack.c.b16 %v4750, %v4742
        %v4967 = vpack.c.b16 %v4751, %v4743
        %v4968 = vpack.c.b16 %v4752, %v4744
        %v4969 = vpack.c.b16 %v4761, %v4753
        %v4970 = vpack.c.b16 %v4762, %v4754
        %v4971 = vpack.c.b16 %v4763, %v4755
        %v4972 = vpack.c.b16 %v4764, %v4756
        %v4973 = vpack.c.b16 %v4765, %v4757
        %v4974 = vpack.c.b16 %v4766, %v4758
        %v4975 = vpack.c.b16 %v4767, %v4759
        %v4976 = vpack.c.b16 %v4768, %v4760
        %v4977 = vpack.c.b16 %v4777, %v4769
        %v4978 = vpack.c.b16 %v4778, %v4770
        %v4979 = vpack.c.b16 %v4779, %v4771
        %v4980 = vpack.c.b16 %v4780, %v4772
        %v4981 = vpack.c.b16 %v4781, %v4773
        %v4982 = vpack.c.b16 %v4782, %v4774
        %v4983 = vpack.c.b16 %v4783, %v4775
        %v4984 = vpack.c.b16 %v4784, %v4776
        %v4985 = vpack.c.b16 %v4793, %v4785
        %v4986 = vpack.c.b16 %v4794, %v4786
        %v4987 = vpack.c.b16 %v4795, %v4787
        %v4988 = vpack.c.b16 %v4796, %v4788
        %v4989 = vpack.c.b16 %v4797, %v4789
        %v4990 = vpack.c.b16 %v4798, %v4790
        %v4991 = vpack.c.b16 %v4799, %v4791
        %v4992 = vpack.c.b16 %v4800, %v4792
        %v4993 = vpack.c.b16 %v4809, %v4801
        %v4994 = vpack.c.b16 %v4810, %v4802
        %v4995 = vpack.c.b16 %v4811, %v4803
        %v4996 = vpack.c.b16 %v4812, %v4804
        %v4997 = vpack.c.b16 %v4813, %v4805
        %v4998 = vpack.c.b16 %v4814, %v4806
        %v4999 = vpack.c.b16 %v4815, %v4807
        %v5000 = vpack.c.b16 %v4816, %v4808
        %v5001 = vpack.c.b16 %v4825, %v4817
        %v5002 = vpack.c.b16 %v4826, %v4818
        %v5003 = vpack.c.b16 %v4827, %v4819
        %v5004 = vpack.c.b16 %v4828, %v4820
        %v5005 = vpack.c.b16 %v4829, %v4821
        %v5006 = vpack.c.b16 %v4830, %v4822
        %v5007 = vpack.c.b16 %v4831, %v4823
        %v5008 = vpack.c.b16 %v4832, %v4824
        %v5009 = vpack.c.b16 %v4841, %v4833
        %v5010 = vpack.c.b16 %v4842, %v4834
        %v5011 = vpack.c.b16 %v4843, %v4835
        %v5012 = vpack.c.b16 %v4844, %v4836
        %v5013 = vpack.c.b16 %v4845, %v4837
        %v5014 = vpack.c.b16 %v4846, %v4838
        %v5015 = vpack.c.b16 %v4847, %v4839
        %v5016 = vpack.c.b16 %v4848, %v4840
        %v5017 = vpack.c.b16 %v4857, %v4849
        %v5018 = vpack.c.b16 %v4858, %v4850
        %v5019 = vpack.c.b16 %v4859, %v4851
        %v5020 = vpack.c.b16 %v4860, %v4852
        %v5021 = vpack.c.b16 %v4861, %v4853
        %v5022 = vpack.c.b16 %v4862, %v4854
        %v5023 = vpack.c.b16 %v4863, %v4855
        %v5024 = vpack.c.b16 %v4864, %v4856
        %v5025 = vpack.c.b16 %v4873, %v4865
        %v5026 = vpack.c.b16 %v4874, %v4866
        %v5027 = vpack.c.b16 %v4875, %v4867
        %v5028 = vpack.c.b16 %v4876, %v4868
        %v5029 = vpack.c.b16 %v4877, %v4869
        %v5030 = vpack.c.b16 %v4878, %v4870
        %v5031 = vpack.c.b16 %v4879, %v4871
        %v5032 = vpack.c.b16 %v4880, %v4872
        %v5033 = vpack.c.b16 %v4889, %v4881
        %v5034 = vpack.c.b16 %v4890, %v4882
        %v5035 = vpack.c.b16 %v4891, %v4883
        %v5036 = vpack.c.b16 %v4892, %v4884
        %v5037 = vpack.c.b16 %v4893, %v4885
        %v5038 = vpack.c.b16 %v4894, %v4886
        %v5039 = vpack.c.b16 %v4895, %v4887
        %v5040 = vpack.c.b16 %v4896, %v4888
        %v5041 = vpack.c.b16 %v4905, %v4897
        %v5042 = vpack.c.b16 %v4906, %v4898
        %v5043 = vpack.c.b16 %v4907, %v4899
        %v5044 = vpack.c.b16 %v4908, %v4900
        %v5045 = vpack.c.b16 %v4909, %v4901
        %v5046 = vpack.c.b16 %v4910, %v4902
        %v5047 = vpack.c.b16 %v4911, %v4903
        %v5048 = vpack.c.b16 %v4912, %v4904
        %v5049 = vpack.c.b16 %v4921, %v4913
        %v5050 = vpack.c.b16 %v4922, %v4914
        %v5051 = vpack.c.b16 %v4923, %v4915
        %v5052 = vpack.c.b16 %v4924, %v4916
        %v5053 = vpack.c.b16 %v4925, %v4917
        %v5054 = vpack.c.b16 %v4926, %v4918
        %v5055 = vpack.c.b16 %v4927, %v4919
        %v5056 = vpack.c.b16 %v4928, %v4920
        %5185 = vmatpush.bf16.msra.mxu0 %v4985
        %5186 = vmatpush.bf16.msra.mxu0 %v4977
        %5187 = vmatpush.bf16.msra.mxu0 %v4969
        %5188 = vmatpush.bf16.msra.mxu0 %v4961
        %5189 = vmatpush.bf16.msra.mxu0 %v4953
        %5190 = vmatpush.bf16.msra.mxu0 %v4945
        %5191 = vmatpush.bf16.msra.mxu0 %v4937
        %5192 = vmatpush.bf16.msra.mxu0 %v4929
        %5193 = vmatmul.bf16.gmra.mxu0 %v4415
        %v5194 = vpop.f32.mrf.mxu0
        %v5195 = vadd.f32 0.0, %v5194
        %v5196 = vpop.f32.mrf.mxu0
        %5197 = vdwg.mxu0
        %5198 = vmatpush.bf16.msra.mxu0 %v5049
        %5199 = vmatpush.bf16.msra.mxu0 %v5041
        %5200 = vmatpush.bf16.msra.mxu0 %v5033
        %5201 = vmatpush.bf16.msra.mxu0 %v5025
        %5202 = vmatpush.bf16.msra.mxu0 %v5017
        %5203 = vmatpush.bf16.msra.mxu0 %v5009
        %5204 = vmatpush.bf16.msra.mxu0 %v5001
        %5205 = vmatpush.bf16.msra.mxu0 %v4993
        %5206 = vmatmul.bf16.gmra.mxu0 %v4416
        %v5207 = vpop.f32.mrf.mxu0
        %v5208 = vadd.f32 %v5195, %v5207
        %v5209 = vpop.f32.mrf.mxu0
        %5210 = vdwg.mxu0
        %5211 = vmatpush.bf16.msra.mxu0 %v4986
        %5212 = vmatpush.bf16.msra.mxu0 %v4978
        %5213 = vmatpush.bf16.msra.mxu0 %v4970
        %5214 = vmatpush.bf16.msra.mxu0 %v4962
        %5215 = vmatpush.bf16.msra.mxu0 %v4954
        %5216 = vmatpush.bf16.msra.mxu0 %v4946
        %5217 = vmatpush.bf16.msra.mxu0 %v4938
        %5218 = vmatpush.bf16.msra.mxu0 %v4930
        %5219 = vmatmul.bf16.gmra.mxu0 %v4415
        %v5220 = vpop.f32.mrf.mxu0
        %v5221 = vadd.f32 0.0, %v5220
        %v5222 = vpop.f32.mrf.mxu0
        %5223 = vdwg.mxu0
        %5224 = vmatpush.bf16.msra.mxu0 %v5050
        %5225 = vmatpush.bf16.msra.mxu0 %v5042
        %5226 = vmatpush.bf16.msra.mxu0 %v5034
        %5227 = vmatpush.bf16.msra.mxu0 %v5026
        %5228 = vmatpush.bf16.msra.mxu0 %v5018
        %5229 = vmatpush.bf16.msra.mxu0 %v5010
        %5230 = vmatpush.bf16.msra.mxu0 %v5002
        %5231 = vmatpush.bf16.msra.mxu0 %v4994
        %5232 = vmatmul.bf16.gmra.mxu0 %v4416
        %v5233 = vpop.f32.mrf.mxu0
        %v5234 = vadd.f32 %v5221, %v5233
        %v5235 = vpop.f32.mrf.mxu0
        %5236 = vdwg.mxu0
        %5237 = vmatpush.bf16.msra.mxu0 %v4987
        %5238 = vmatpush.bf16.msra.mxu0 %v4979
        %5239 = vmatpush.bf16.msra.mxu0 %v4971
        %5240 = vmatpush.bf16.msra.mxu0 %v4963
        %5241 = vmatpush.bf16.msra.mxu0 %v4955
        %5242 = vmatpush.bf16.msra.mxu0 %v4947
        %5243 = vmatpush.bf16.msra.mxu0 %v4939
        %5244 = vmatpush.bf16.msra.mxu0 %v4931
        %5245 = vmatmul.bf16.gmra.mxu0 %v4415
        %v5246 = vpop.f32.mrf.mxu0
        %v5247 = vadd.f32 0.0, %v5246
        %v5248 = vpop.f32.mrf.mxu0
        %5249 = vdwg.mxu0
        %5250 = vmatpush.bf16.msra.mxu0 %v5051
        %5251 = vmatpush.bf16.msra.mxu0 %v5043
        %5252 = vmatpush.bf16.msra.mxu0 %v5035
        %5253 = vmatpush.bf16.msra.mxu0 %v5027
        %5254 = vmatpush.bf16.msra.mxu0 %v5019
        %5255 = vmatpush.bf16.msra.mxu0 %v5011
        %5256 = vmatpush.bf16.msra.mxu0 %v5003
        %5257 = vmatpush.bf16.msra.mxu0 %v4995
        %5258 = vmatmul.bf16.gmra.mxu0 %v4416
        %v5259 = vpop.f32.mrf.mxu0
        %v5260 = vadd.f32 %v5247, %v5259
        %v5261 = vpop.f32.mrf.mxu0
        %5262 = vdwg.mxu0
        %5263 = vmatpush.bf16.msra.mxu0 %v4988
        %5264 = vmatpush.bf16.msra.mxu0 %v4980
        %5265 = vmatpush.bf16.msra.mxu0 %v4972
        %5266 = vmatpush.bf16.msra.mxu0 %v4964
        %5267 = vmatpush.bf16.msra.mxu0 %v4956
        %5268 = vmatpush.bf16.msra.mxu0 %v4948
        %5269 = vmatpush.bf16.msra.mxu0 %v4940
        %5270 = vmatpush.bf16.msra.mxu0 %v4932
        %5271 = vmatmul.bf16.gmra.mxu0 %v4415
        %v5272 = vpop.f32.mrf.mxu0
        %v5273 = vadd.f32 0.0, %v5272
        %v5274 = vpop.f32.mrf.mxu0
        %5275 = vdwg.mxu0
        %5276 = vmatpush.bf16.msra.mxu0 %v5052
        %5277 = vmatpush.bf16.msra.mxu0 %v5044
        %5278 = vmatpush.bf16.msra.mxu0 %v5036
        %5279 = vmatpush.bf16.msra.mxu0 %v5028
        %5280 = vmatpush.bf16.msra.mxu0 %v5020
        %5281 = vmatpush.bf16.msra.mxu0 %v5012
        %5282 = vmatpush.bf16.msra.mxu0 %v5004
        %5283 = vmatpush.bf16.msra.mxu0 %v4996
        %5284 = vmatmul.bf16.gmra.mxu0 %v4416
        %v5285 = vpop.f32.mrf.mxu0
        %v5286 = vadd.f32 %v5273, %v5285
        %v5287 = vpop.f32.mrf.mxu0
        %5288 = vdwg.mxu0
        %5289 = vmatpush.bf16.msra.mxu0 %v4989
        %5290 = vmatpush.bf16.msra.mxu0 %v4981
        %5291 = vmatpush.bf16.msra.mxu0 %v4973
        %5292 = vmatpush.bf16.msra.mxu0 %v4965
        %5293 = vmatpush.bf16.msra.mxu0 %v4957
        %5294 = vmatpush.bf16.msra.mxu0 %v4949
        %5295 = vmatpush.bf16.msra.mxu0 %v4941
        %5296 = vmatpush.bf16.msra.mxu0 %v4933
        %5297 = vmatmul.bf16.gmra.mxu0 %v4415
        %v5298 = vpop.f32.mrf.mxu0
        %v5299 = vadd.f32 0.0, %v5298
        %v5300 = vpop.f32.mrf.mxu0
        %5301 = vdwg.mxu0
        %5302 = vmatpush.bf16.msra.mxu0 %v5053
        %5303 = vmatpush.bf16.msra.mxu0 %v5045
        %5304 = vmatpush.bf16.msra.mxu0 %v5037
        %5305 = vmatpush.bf16.msra.mxu0 %v5029
        %5306 = vmatpush.bf16.msra.mxu0 %v5021
        %5307 = vmatpush.bf16.msra.mxu0 %v5013
        %5308 = vmatpush.bf16.msra.mxu0 %v5005
        %5309 = vmatpush.bf16.msra.mxu0 %v4997
        %5310 = vmatmul.bf16.gmra.mxu0 %v4416
        %v5311 = vpop.f32.mrf.mxu0
        %v5312 = vadd.f32 %v5299, %v5311
        %v5313 = vpop.f32.mrf.mxu0
        %5314 = vdwg.mxu0
        %5315 = vmatpush.bf16.msra.mxu0 %v4990
        %5316 = vmatpush.bf16.msra.mxu0 %v4982
        %5317 = vmatpush.bf16.msra.mxu0 %v4974
        %5318 = vmatpush.bf16.msra.mxu0 %v4966
        %5319 = vmatpush.bf16.msra.mxu0 %v4958
        %5320 = vmatpush.bf16.msra.mxu0 %v4950
        %5321 = vmatpush.bf16.msra.mxu0 %v4942
        %5322 = vmatpush.bf16.msra.mxu0 %v4934
        %5323 = vmatmul.bf16.gmra.mxu0 %v4415
        %v5324 = vpop.f32.mrf.mxu0
        %v5325 = vadd.f32 0.0, %v5324
        %v5326 = vpop.f32.mrf.mxu0
        %5327 = vdwg.mxu0
        %5328 = vmatpush.bf16.msra.mxu0 %v5054
        %5329 = vmatpush.bf16.msra.mxu0 %v5046
        %5330 = vmatpush.bf16.msra.mxu0 %v5038
        %5331 = vmatpush.bf16.msra.mxu0 %v5030
        %5332 = vmatpush.bf16.msra.mxu0 %v5022
        %5333 = vmatpush.bf16.msra.mxu0 %v5014
        %5334 = vmatpush.bf16.msra.mxu0 %v5006
        %5335 = vmatpush.bf16.msra.mxu0 %v4998
        %5336 = vmatmul.bf16.gmra.mxu0 %v4416
        %v5337 = vpop.f32.mrf.mxu0
        %v5338 = vadd.f32 %v5325, %v5337
        %v5339 = vpop.f32.mrf.mxu0
        %5340 = vdwg.mxu0
        %5341 = vmatpush.bf16.msra.mxu0 %v4991
        %5342 = vmatpush.bf16.msra.mxu0 %v4983
        %5343 = vmatpush.bf16.msra.mxu0 %v4975
        %5344 = vmatpush.bf16.msra.mxu0 %v4967
        %5345 = vmatpush.bf16.msra.mxu0 %v4959
        %5346 = vmatpush.bf16.msra.mxu0 %v4951
        %5347 = vmatpush.bf16.msra.mxu0 %v4943
        %5348 = vmatpush.bf16.msra.mxu0 %v4935
        %5349 = vmatmul.bf16.gmra.mxu0 %v4415
        %v5350 = vpop.f32.mrf.mxu0
        %v5351 = vadd.f32 0.0, %v5350
        %v5352 = vpop.f32.mrf.mxu0
        %5353 = vdwg.mxu0
        %5354 = vmatpush.bf16.msra.mxu0 %v5055
        %5355 = vmatpush.bf16.msra.mxu0 %v5047
        %5356 = vmatpush.bf16.msra.mxu0 %v5039
        %5357 = vmatpush.bf16.msra.mxu0 %v5031
        %5358 = vmatpush.bf16.msra.mxu0 %v5023
        %5359 = vmatpush.bf16.msra.mxu0 %v5015
        %5360 = vmatpush.bf16.msra.mxu0 %v5007
        %5361 = vmatpush.bf16.msra.mxu0 %v4999
        %5362 = vmatmul.bf16.gmra.mxu0 %v4416
        %v5363 = vpop.f32.mrf.mxu0
        %v5364 = vadd.f32 %v5351, %v5363
        %v5365 = vpop.f32.mrf.mxu0
        %5366 = vdwg.mxu0
        %5367 = vmatpush.bf16.msra.mxu0 %v4992
        %5368 = vmatpush.bf16.msra.mxu0 %v4984
        %5369 = vmatpush.bf16.msra.mxu0 %v4976
        %5370 = vmatpush.bf16.msra.mxu0 %v4968
        %5371 = vmatpush.bf16.msra.mxu0 %v4960
        %5372 = vmatpush.bf16.msra.mxu0 %v4952
        %5373 = vmatpush.bf16.msra.mxu0 %v4944
        %5374 = vmatpush.bf16.msra.mxu0 %v4936
        %5375 = vmatmul.bf16.gmra.mxu0 %v4415
        %v5376 = vpop.f32.mrf.mxu0
        %v5377 = vadd.f32 0.0, %v5376
        %v5378 = vpop.f32.mrf.mxu0
        %5379 = vdwg.mxu0
        %5380 = vmatpush.bf16.msra.mxu0 %v5056
        %5381 = vmatpush.bf16.msra.mxu0 %v5048
        %5382 = vmatpush.bf16.msra.mxu0 %v5040
        %5383 = vmatpush.bf16.msra.mxu0 %v5032
        %5384 = vmatpush.bf16.msra.mxu0 %v5024
        %5385 = vmatpush.bf16.msra.mxu0 %v5016
        %5386 = vmatpush.bf16.msra.mxu0 %v5008
        %5387 = vmatpush.bf16.msra.mxu0 %v5000
        %5388 = vmatmul.bf16.gmra.mxu0 %v4416
        %v5389 = vpop.f32.mrf.mxu0
        %v5390 = vadd.f32 %v5377, %v5389
        %v5391 = vpop.f32.mrf.mxu0
        %5392 = vdwg.mxu0
        %v5393 = vld [vmem:[#allocation25] sm:$0xff]
        %s5394 = scalar_lea.vmem [#allocation25], 8
        %v5395 = vld [vmem:[%s5394] sm:$0xff]
        %v5397 = vsel %vm4161, %v5395, 0
        %v5400 = vsel %vm4165, %v5260, 0
        %v5403 = vsel %vm4165, %v5286, 0
        %5405 = vmatpush.msra.mxu0 0.0
        %5406 = vmatpush.msra.mxu0 0.0
        %5407 = vmatpush.msra.mxu0 0.0
        %5408 = vmatpush.msra.mxu0 0.0
        %5409 = vmatpush.msra.mxu0 0.0
        %5410 = vmatpush.msra.mxu0 0.0
        %5411 = vmatpush.msra.mxu0 0.0
        %5412 = vmatpush.msra.mxu0 0.0
        %5413 = vmatpush.msra.mxu0 0.0
        %5414 = vmatpush.msra.mxu0 0.0
        %5415 = vmatpush.msra.mxu0 0.0
        %5416 = vmatpush.msra.mxu0 0.0
        %5417 = vmatpush.msra.mxu0 0.0
        %5418 = vmatpush.msra.mxu0 0.0
        %5419 = vmatpush.msra.mxu0 0.0
        %5420 = vmatpush.msra.mxu0 %v5400
        %5421 = vmatmul.f32.gmra.mxu0 %v5397
        %v5422 = vpop.f32.mrf.mxu0
        %v5423 = vadd.f32 0.0, %v5422
        %5424 = vdwg.mxu0
        %5425 = vmatpush.msra.mxu0 0.0
        %5426 = vmatpush.msra.mxu0 0.0
        %5427 = vmatpush.msra.mxu0 0.0
        %5428 = vmatpush.msra.mxu0 0.0
        %5429 = vmatpush.msra.mxu0 0.0
        %5430 = vmatpush.msra.mxu0 0.0
        %5431 = vmatpush.msra.mxu0 0.0
        %5432 = vmatpush.msra.mxu0 0.0
        %5433 = vmatpush.msra.mxu0 0.0
        %5434 = vmatpush.msra.mxu0 0.0
        %5435 = vmatpush.msra.mxu0 0.0
        %5436 = vmatpush.msra.mxu0 0.0
        %5437 = vmatpush.msra.mxu0 0.0
        %5438 = vmatpush.msra.mxu0 0.0
        %5439 = vmatpush.msra.mxu0 0.0
        %5440 = vmatpush.msra.mxu0 %v5403
        %5441 = vmatmul.f32.gmra.mxu0 %v5397
        %v5442 = vpop.f32.mrf.mxu0
        %v5443 = vadd.f32 0.0, %v5442
        %5444 = vdwg.mxu0
        %v5446 = vsel %vm4161, %v5393, 0
        %v5449 = vsel %vm4165, %v5208, 0
        %v5452 = vsel %vm4165, %v5234, 0
        %5454 = vmatpush.msra.mxu0 0.0
        %5455 = vmatpush.msra.mxu0 0.0
        %5456 = vmatpush.msra.mxu0 0.0
        %5457 = vmatpush.msra.mxu0 0.0
        %5458 = vmatpush.msra.mxu0 0.0
        %5459 = vmatpush.msra.mxu0 0.0
        %5460 = vmatpush.msra.mxu0 0.0
        %5461 = vmatpush.msra.mxu0 0.0
        %5462 = vmatpush.msra.mxu0 0.0
        %5463 = vmatpush.msra.mxu0 0.0
        %5464 = vmatpush.msra.mxu0 0.0
        %5465 = vmatpush.msra.mxu0 0.0
        %5466 = vmatpush.msra.mxu0 0.0
        %5467 = vmatpush.msra.mxu0 0.0
        %5468 = vmatpush.msra.mxu0 0.0
        %5469 = vmatpush.msra.mxu0 %v5449
        %5470 = vmatmul.f32.gmra.mxu0 %v5446
        %v5471 = vpop.f32.mrf.mxu0
        %v5472 = vadd.f32 %v5423, %v5471
        %5473 = vdwg.mxu0
        %5474 = vmatpush.msra.mxu0 0.0
        %5475 = vmatpush.msra.mxu0 0.0
        %5476 = vmatpush.msra.mxu0 0.0
        %5477 = vmatpush.msra.mxu0 0.0
        %5478 = vmatpush.msra.mxu0 0.0
        %5479 = vmatpush.msra.mxu0 0.0
        %5480 = vmatpush.msra.mxu0 0.0
        %5481 = vmatpush.msra.mxu0 0.0
        %5482 = vmatpush.msra.mxu0 0.0
        %5483 = vmatpush.msra.mxu0 0.0
        %5484 = vmatpush.msra.mxu0 0.0
        %5485 = vmatpush.msra.mxu0 0.0
        %5486 = vmatpush.msra.mxu0 0.0
        %5487 = vmatpush.msra.mxu0 0.0
        %5488 = vmatpush.msra.mxu0 0.0
        %5489 = vmatpush.msra.mxu0 %v5452
        %5490 = vmatmul.f32.gmra.mxu0 %v5446
        %v5491 = vpop.f32.mrf.mxu0
        %v5492 = vadd.f32 %v5443, %v5491
        %5493 = vdwg.mxu0
        %s5494 = scalar_lea.vmem [#allocation25], 16
        %v5495 = vld [vmem:[%s5494] sm:$0xff]
        %v5497 = vsel %vm4161, %v5495, 0
        %v5500 = vsel %vm4165, %v5312, 0
        %v5503 = vsel %vm4165, %v5338, 0
        %5505 = vmatpush.msra.mxu0 0.0
        %5506 = vmatpush.msra.mxu0 0.0
        %5507 = vmatpush.msra.mxu0 0.0
        %5508 = vmatpush.msra.mxu0 0.0
        %5509 = vmatpush.msra.mxu0 0.0
        %5510 = vmatpush.msra.mxu0 0.0
        %5511 = vmatpush.msra.mxu0 0.0
        %5512 = vmatpush.msra.mxu0 0.0
        %5513 = vmatpush.msra.mxu0 0.0
        %5514 = vmatpush.msra.mxu0 0.0
        %5515 = vmatpush.msra.mxu0 0.0
        %5516 = vmatpush.msra.mxu0 0.0
        %5517 = vmatpush.msra.mxu0 0.0
        %5518 = vmatpush.msra.mxu0 0.0
        %5519 = vmatpush.msra.mxu0 0.0
        %5520 = vmatpush.msra.mxu0 %v5500
        %5521 = vmatmul.f32.gmra.mxu0 %v5497
        %v5522 = vpop.f32.mrf.mxu0
        %v5523 = vadd.f32 0.0, %v5522
        %5524 = vdwg.mxu0
        %5525 = vmatpush.msra.mxu0 0.0
        %5526 = vmatpush.msra.mxu0 0.0
        %5527 = vmatpush.msra.mxu0 0.0
        %5528 = vmatpush.msra.mxu0 0.0
        %5529 = vmatpush.msra.mxu0 0.0
        %5530 = vmatpush.msra.mxu0 0.0
        %5531 = vmatpush.msra.mxu0 0.0
        %5532 = vmatpush.msra.mxu0 0.0
        %5533 = vmatpush.msra.mxu0 0.0
        %5534 = vmatpush.msra.mxu0 0.0
        %5535 = vmatpush.msra.mxu0 0.0
        %5536 = vmatpush.msra.mxu0 0.0
        %5537 = vmatpush.msra.mxu0 0.0
        %5538 = vmatpush.msra.mxu0 0.0
        %5539 = vmatpush.msra.mxu0 0.0
        %5540 = vmatpush.msra.mxu0 %v5503
        %5541 = vmatmul.f32.gmra.mxu0 %v5497
        %v5542 = vpop.f32.mrf.mxu0
        %v5543 = vadd.f32 0.0, %v5542
        %5544 = vdwg.mxu0
        %v5545 = vadd.f32 %v5472, %v5523
        %v5546 = vadd.f32 %v5492, %v5543
        %s5547 = scalar_lea.vmem [#allocation25], 24
        %v5548 = vld [vmem:[%s5547] sm:$0xff]
        %v5550 = vsel %vm4161, %v5548, 0
        %v5553 = vsel %vm4165, %v5364, 0
        %v5556 = vsel %vm4165, %v5390, 0
        %5558 = vmatpush.msra.mxu0 0.0
        %5559 = vmatpush.msra.mxu0 0.0
        %5560 = vmatpush.msra.mxu0 0.0
        %5561 = vmatpush.msra.mxu0 0.0
        %5562 = vmatpush.msra.mxu0 0.0
        %5563 = vmatpush.msra.mxu0 0.0
        %5564 = vmatpush.msra.mxu0 0.0
        %5565 = vmatpush.msra.mxu0 0.0
        %5566 = vmatpush.msra.mxu0 0.0
        %5567 = vmatpush.msra.mxu0 0.0
        %5568 = vmatpush.msra.mxu0 0.0
        %5569 = vmatpush.msra.mxu0 0.0
        %5570 = vmatpush.msra.mxu0 0.0
        %5571 = vmatpush.msra.mxu0 0.0
        %5572 = vmatpush.msra.mxu0 0.0
        %5573 = vmatpush.msra.mxu0 %v5553
        %5574 = vmatmul.f32.gmra.mxu0 %v5550
        %v5575 = vpop.f32.mrf.mxu0
        %v5576 = vadd.f32 0.0, %v5575
        %5577 = vdwg.mxu0
        %5578 = vmatpush.msra.mxu0 0.0
        %5579 = vmatpush.msra.mxu0 0.0
        %5580 = vmatpush.msra.mxu0 0.0
        %5581 = vmatpush.msra.mxu0 0.0
        %5582 = vmatpush.msra.mxu0 0.0
        %5583 = vmatpush.msra.mxu0 0.0
        %5584 = vmatpush.msra.mxu0 0.0
        %5585 = vmatpush.msra.mxu0 0.0
        %5586 = vmatpush.msra.mxu0 0.0
        %5587 = vmatpush.msra.mxu0 0.0
        %5588 = vmatpush.msra.mxu0 0.0
        %5589 = vmatpush.msra.mxu0 0.0
        %5590 = vmatpush.msra.mxu0 0.0
        %5591 = vmatpush.msra.mxu0 0.0
        %5592 = vmatpush.msra.mxu0 0.0
        %5593 = vmatpush.msra.mxu0 %v5556
        %5594 = vmatmul.f32.gmra.mxu0 %v5550
        %v5595 = vpop.f32.mrf.mxu0
        %v5596 = vadd.f32 0.0, %v5595
        %5597 = vdwg.mxu0
        %v5598 = vadd.f32 %v5545, %v5576
        %v5599 = vadd.f32 %v5546, %v5596
        %v5600 = vld [vmem:[%s20] sm:$0x3]
        %v5602 = vperm.slane %v5600, 0
        %v5603 = vperm.slane %v5600, 1
        %v5606 = vadd.f32 %v5598, %v5602
        %v5607 = vadd.f32 %v5599, %v5603
        %v5608 = vmax.f32 %v5606, 0.0
        %v5609 = vmax.f32 %v5607, 0.0
        %v5610 = vpack.c.bf16 %v5608, %v5608
        %v5611 = vpack.c.bf16 %v5609, %v5609
        %v5612 = vld [vmem:[#allocation26] sm:$0xff]
        %v5613 = vld [vmem:[#allocation26 + $0x8] sm:$0xff]
        %v5614 = vld [vmem:[#allocation26 + $0x10] sm:$0xff]
        %v5615 = vld [vmem:[#allocation26 + $0x18] sm:$0xff]
        %v5616 = vld [vmem:[#allocation26 + $0x20] sm:$0xff]
        %v5617 = vld [vmem:[#allocation26 + $0x28] sm:$0xff]
        %v5618 = vld [vmem:[#allocation26 + $0x30] sm:$0xff]
        %v5619 = vld [vmem:[#allocation26 + $0x38] sm:$0xff]
        %v5620 = vld [vmem:[#allocation26 + $0x40] sm:$0xff]
        %v5621 = vld [vmem:[#allocation26 + $0x48] sm:$0xff]
        %v5622 = vld [vmem:[#allocation26 + $0x50] sm:$0xff]
        %v5623 = vld [vmem:[#allocation26 + $0x58] sm:$0xff]
        %v5624 = vld [vmem:[#allocation26 + $0x60] sm:$0xff]
        %v5625 = vld [vmem:[#allocation26 + $0x68] sm:$0xff]
        %v5626 = vld [vmem:[#allocation26 + $0x70] sm:$0xff]
        %v5627 = vld [vmem:[#allocation26 + $0x78] sm:$0xff]
        %v5628 = vld [vmem:[#allocation26 + $0x80] sm:$0xff]
        %v5629 = vld [vmem:[#allocation26 + $0x88] sm:$0xff]
        %v5630 = vld [vmem:[#allocation26 + $0x90] sm:$0xff]
        %v5631 = vld [vmem:[#allocation26 + $0x98] sm:$0xff]
        %v5632 = vld [vmem:[#allocation26 + $0xa0] sm:$0xff]
        %v5633 = vld [vmem:[#allocation26 + $0xa8] sm:$0xff]
        %v5634 = vld [vmem:[#allocation26 + $0xb0] sm:$0xff]
        %v5635 = vld [vmem:[#allocation26 + $0xb8] sm:$0xff]
        %v5636 = vld [vmem:[#allocation26 + $0xc0] sm:$0xff]
        %v5637 = vld [vmem:[#allocation26 + $0xc8] sm:$0xff]
        %v5638 = vld [vmem:[#allocation26 + $0xd0] sm:$0xff]
        %v5639 = vld [vmem:[#allocation26 + $0xd8] sm:$0xff]
        %v5640 = vld [vmem:[#allocation26 + $0xe0] sm:$0xff]
        %v5641 = vld [vmem:[#allocation26 + $0xe8] sm:$0xff]
        %v5642 = vld [vmem:[#allocation26 + $0xf0] sm:$0xff]
        %v5643 = vld [vmem:[#allocation26 + $0xf8] sm:$0xff]
        %v5644 = vld [vmem:[#allocation26 + $0x100] sm:$0xff]
        %v5645 = vld [vmem:[#allocation26 + $0x108] sm:$0xff]
        %v5646 = vld [vmem:[#allocation26 + $0x110] sm:$0xff]
        %v5647 = vld [vmem:[#allocation26 + $0x118] sm:$0xff]
        %v5648 = vld [vmem:[#allocation26 + $0x120] sm:$0xff]
        %v5649 = vld [vmem:[#allocation26 + $0x128] sm:$0xff]
        %v5650 = vld [vmem:[#allocation26 + $0x130] sm:$0xff]
        %v5651 = vld [vmem:[#allocation26 + $0x138] sm:$0xff]
        %v5652 = vld [vmem:[#allocation26 + $0x140] sm:$0xff]
        %v5653 = vld [vmem:[#allocation26 + $0x148] sm:$0xff]
        %v5654 = vld [vmem:[#allocation26 + $0x150] sm:$0xff]
        %v5655 = vld [vmem:[#allocation26 + $0x158] sm:$0xff]
        %v5656 = vld [vmem:[#allocation26 + $0x160] sm:$0xff]
        %v5657 = vld [vmem:[#allocation26 + $0x168] sm:$0xff]
        %v5658 = vld [vmem:[#allocation26 + $0x170] sm:$0xff]
        %v5659 = vld [vmem:[#allocation26 + $0x178] sm:$0xff]
        %v5660 = vld [vmem:[#allocation26 + $0x180] sm:$0xff]
        %v5661 = vld [vmem:[#allocation26 + $0x188] sm:$0xff]
        %v5662 = vld [vmem:[#allocation26 + $0x190] sm:$0xff]
        %v5663 = vld [vmem:[#allocation26 + $0x198] sm:$0xff]
        %v5664 = vld [vmem:[#allocation26 + $0x1a0] sm:$0xff]
        %v5665 = vld [vmem:[#allocation26 + $0x1a8] sm:$0xff]
        %v5666 = vld [vmem:[#allocation26 + $0x1b0] sm:$0xff]
        %v5667 = vld [vmem:[#allocation26 + $0x1b8] sm:$0xff]
        %v5668 = vld [vmem:[#allocation26 + $0x1c0] sm:$0xff]
        %v5669 = vld [vmem:[#allocation26 + $0x1c8] sm:$0xff]
        %v5670 = vld [vmem:[#allocation26 + $0x1d0] sm:$0xff]
        %v5671 = vld [vmem:[#allocation26 + $0x1d8] sm:$0xff]
        %v5672 = vld [vmem:[#allocation26 + $0x1e0] sm:$0xff]
        %v5673 = vld [vmem:[#allocation26 + $0x1e8] sm:$0xff]
        %v5674 = vld [vmem:[#allocation26 + $0x1f0] sm:$0xff]
        %v5675 = vld [vmem:[#allocation26 + $0x1f8] sm:$0xff]
        %v5676 = vld [vmem:[#allocation26 + $0x200] sm:$0xff]
        %v5677 = vld [vmem:[#allocation26 + $0x208] sm:$0xff]
        %v5678 = vld [vmem:[#allocation26 + $0x210] sm:$0xff]
        %v5679 = vld [vmem:[#allocation26 + $0x218] sm:$0xff]
        %v5680 = vld [vmem:[#allocation26 + $0x220] sm:$0xff]
        %v5681 = vld [vmem:[#allocation26 + $0x228] sm:$0xff]
        %v5682 = vld [vmem:[#allocation26 + $0x230] sm:$0xff]
        %v5683 = vld [vmem:[#allocation26 + $0x238] sm:$0xff]
        %v5684 = vld [vmem:[#allocation26 + $0x240] sm:$0xff]
        %v5685 = vld [vmem:[#allocation26 + $0x248] sm:$0xff]
        %v5686 = vld [vmem:[#allocation26 + $0x250] sm:$0xff]
        %v5687 = vld [vmem:[#allocation26 + $0x258] sm:$0xff]
        %v5688 = vld [vmem:[#allocation26 + $0x260] sm:$0xff]
        %v5689 = vld [vmem:[#allocation26 + $0x268] sm:$0xff]
        %v5690 = vld [vmem:[#allocation26 + $0x270] sm:$0xff]
        %v5691 = vld [vmem:[#allocation26 + $0x278] sm:$0xff]
        %v5692 = vld [vmem:[#allocation26 + $0x280] sm:$0xff]
        %v5693 = vld [vmem:[#allocation26 + $0x288] sm:$0xff]
        %v5694 = vld [vmem:[#allocation26 + $0x290] sm:$0xff]
        %v5695 = vld [vmem:[#allocation26 + $0x298] sm:$0xff]
        %v5696 = vld [vmem:[#allocation26 + $0x2a0] sm:$0xff]
        %v5697 = vld [vmem:[#allocation26 + $0x2a8] sm:$0xff]
        %v5698 = vld [vmem:[#allocation26 + $0x2b0] sm:$0xff]
        %v5699 = vld [vmem:[#allocation26 + $0x2b8] sm:$0xff]
        %v5700 = vld [vmem:[#allocation26 + $0x2c0] sm:$0xff]
        %v5701 = vld [vmem:[#allocation26 + $0x2c8] sm:$0xff]
        %v5702 = vld [vmem:[#allocation26 + $0x2d0] sm:$0xff]
        %v5703 = vld [vmem:[#allocation26 + $0x2d8] sm:$0xff]
        %v5704 = vld [vmem:[#allocation26 + $0x2e0] sm:$0xff]
        %v5705 = vld [vmem:[#allocation26 + $0x2e8] sm:$0xff]
        %v5706 = vld [vmem:[#allocation26 + $0x2f0] sm:$0xff]
        %v5707 = vld [vmem:[#allocation26 + $0x2f8] sm:$0xff]
        %v5708 = vld [vmem:[#allocation26 + $0x300] sm:$0xff]
        %v5709 = vld [vmem:[#allocation26 + $0x308] sm:$0xff]
        %v5710 = vld [vmem:[#allocation26 + $0x310] sm:$0xff]
        %v5711 = vld [vmem:[#allocation26 + $0x318] sm:$0xff]
        %v5712 = vld [vmem:[#allocation26 + $0x320] sm:$0xff]
        %v5713 = vld [vmem:[#allocation26 + $0x328] sm:$0xff]
        %v5714 = vld [vmem:[#allocation26 + $0x330] sm:$0xff]
        %v5715 = vld [vmem:[#allocation26 + $0x338] sm:$0xff]
        %v5716 = vld [vmem:[#allocation26 + $0x340] sm:$0xff]
        %v5717 = vld [vmem:[#allocation26 + $0x348] sm:$0xff]
        %v5718 = vld [vmem:[#allocation26 + $0x350] sm:$0xff]
        %v5719 = vld [vmem:[#allocation26 + $0x358] sm:$0xff]
        %v5720 = vld [vmem:[#allocation26 + $0x360] sm:$0xff]
        %v5721 = vld [vmem:[#allocation26 + $0x368] sm:$0xff]
        %v5722 = vld [vmem:[#allocation26 + $0x370] sm:$0xff]
        %v5723 = vld [vmem:[#allocation26 + $0x378] sm:$0xff]
        %v5724 = vld [vmem:[#allocation26 + $0x380] sm:$0xff]
        %v5725 = vld [vmem:[#allocation26 + $0x388] sm:$0xff]
        %v5726 = vld [vmem:[#allocation26 + $0x390] sm:$0xff]
        %v5727 = vld [vmem:[#allocation26 + $0x398] sm:$0xff]
        %v5728 = vld [vmem:[#allocation26 + $0x3a0] sm:$0xff]
        %v5729 = vld [vmem:[#allocation26 + $0x3a8] sm:$0xff]
        %v5730 = vld [vmem:[#allocation26 + $0x3b0] sm:$0xff]
        %v5731 = vld [vmem:[#allocation26 + $0x3b8] sm:$0xff]
        %v5732 = vld [vmem:[#allocation26 + $0x3c0] sm:$0xff]
        %v5733 = vld [vmem:[#allocation26 + $0x3c8] sm:$0xff]
        %v5734 = vld [vmem:[#allocation26 + $0x3d0] sm:$0xff]
        %v5735 = vld [vmem:[#allocation26 + $0x3d8] sm:$0xff]
        %v5736 = vld [vmem:[#allocation26 + $0x3e0] sm:$0xff]
        %v5737 = vld [vmem:[#allocation26 + $0x3e8] sm:$0xff]
        %v5738 = vld [vmem:[#allocation26 + $0x3f0] sm:$0xff]
        %v5739 = vld [vmem:[#allocation26 + $0x3f8] sm:$0xff]
        %v5868 = vunpack.c.l.b16 %v5612
        %v5869 = vunpack.c.h.b16 %v5612
        %v5870 = vunpack.c.l.b16 %v5613
        %v5871 = vunpack.c.h.b16 %v5613
        %v5872 = vunpack.c.l.b16 %v5614
        %v5873 = vunpack.c.h.b16 %v5614
        %v5874 = vunpack.c.l.b16 %v5615
        %v5875 = vunpack.c.h.b16 %v5615
        %v5876 = vunpack.c.l.b16 %v5616
        %v5877 = vunpack.c.h.b16 %v5616
        %v5878 = vunpack.c.l.b16 %v5617
        %v5879 = vunpack.c.h.b16 %v5617
        %v5880 = vunpack.c.l.b16 %v5618
        %v5881 = vunpack.c.h.b16 %v5618
        %v5882 = vunpack.c.l.b16 %v5619
        %v5883 = vunpack.c.h.b16 %v5619
        %v5884 = vunpack.c.l.b16 %v5620
        %v5885 = vunpack.c.h.b16 %v5620
        %v5886 = vunpack.c.l.b16 %v5621
        %v5887 = vunpack.c.h.b16 %v5621
        %v5888 = vunpack.c.l.b16 %v5622
        %v5889 = vunpack.c.h.b16 %v5622
        %v5890 = vunpack.c.l.b16 %v5623
        %v5891 = vunpack.c.h.b16 %v5623
        %v5892 = vunpack.c.l.b16 %v5624
        %v5893 = vunpack.c.h.b16 %v5624
        %v5894 = vunpack.c.l.b16 %v5625
        %v5895 = vunpack.c.h.b16 %v5625
        %v5896 = vunpack.c.l.b16 %v5626
        %v5897 = vunpack.c.h.b16 %v5626
        %v5898 = vunpack.c.l.b16 %v5627
        %v5899 = vunpack.c.h.b16 %v5627
        %v5900 = vunpack.c.l.b16 %v5628
        %v5901 = vunpack.c.h.b16 %v5628
        %v5902 = vunpack.c.l.b16 %v5629
        %v5903 = vunpack.c.h.b16 %v5629
        %v5904 = vunpack.c.l.b16 %v5630
        %v5905 = vunpack.c.h.b16 %v5630
        %v5906 = vunpack.c.l.b16 %v5631
        %v5907 = vunpack.c.h.b16 %v5631
        %v5908 = vunpack.c.l.b16 %v5632
        %v5909 = vunpack.c.h.b16 %v5632
        %v5910 = vunpack.c.l.b16 %v5633
        %v5911 = vunpack.c.h.b16 %v5633
        %v5912 = vunpack.c.l.b16 %v5634
        %v5913 = vunpack.c.h.b16 %v5634
        %v5914 = vunpack.c.l.b16 %v5635
        %v5915 = vunpack.c.h.b16 %v5635
        %v5916 = vunpack.c.l.b16 %v5636
        %v5917 = vunpack.c.h.b16 %v5636
        %v5918 = vunpack.c.l.b16 %v5637
        %v5919 = vunpack.c.h.b16 %v5637
        %v5920 = vunpack.c.l.b16 %v5638
        %v5921 = vunpack.c.h.b16 %v5638
        %v5922 = vunpack.c.l.b16 %v5639
        %v5923 = vunpack.c.h.b16 %v5639
        %v5924 = vunpack.c.l.b16 %v5640
        %v5925 = vunpack.c.h.b16 %v5640
        %v5926 = vunpack.c.l.b16 %v5641
        %v5927 = vunpack.c.h.b16 %v5641
        %v5928 = vunpack.c.l.b16 %v5642
        %v5929 = vunpack.c.h.b16 %v5642
        %v5930 = vunpack.c.l.b16 %v5643
        %v5931 = vunpack.c.h.b16 %v5643
        %v5932 = vunpack.c.l.b16 %v5644
        %v5933 = vunpack.c.h.b16 %v5644
        %v5934 = vunpack.c.l.b16 %v5645
        %v5935 = vunpack.c.h.b16 %v5645
        %v5936 = vunpack.c.l.b16 %v5646
        %v5937 = vunpack.c.h.b16 %v5646
        %v5938 = vunpack.c.l.b16 %v5647
        %v5939 = vunpack.c.h.b16 %v5647
        %v5940 = vunpack.c.l.b16 %v5648
        %v5941 = vunpack.c.h.b16 %v5648
        %v5942 = vunpack.c.l.b16 %v5649
        %v5943 = vunpack.c.h.b16 %v5649
        %v5944 = vunpack.c.l.b16 %v5650
        %v5945 = vunpack.c.h.b16 %v5650
        %v5946 = vunpack.c.l.b16 %v5651
        %v5947 = vunpack.c.h.b16 %v5651
        %v5948 = vunpack.c.l.b16 %v5652
        %v5949 = vunpack.c.h.b16 %v5652
        %v5950 = vunpack.c.l.b16 %v5653
        %v5951 = vunpack.c.h.b16 %v5653
        %v5952 = vunpack.c.l.b16 %v5654
        %v5953 = vunpack.c.h.b16 %v5654
        %v5954 = vunpack.c.l.b16 %v5655
        %v5955 = vunpack.c.h.b16 %v5655
        %v5956 = vunpack.c.l.b16 %v5656
        %v5957 = vunpack.c.h.b16 %v5656
        %v5958 = vunpack.c.l.b16 %v5657
        %v5959 = vunpack.c.h.b16 %v5657
        %v5960 = vunpack.c.l.b16 %v5658
        %v5961 = vunpack.c.h.b16 %v5658
        %v5962 = vunpack.c.l.b16 %v5659
        %v5963 = vunpack.c.h.b16 %v5659
        %v5964 = vunpack.c.l.b16 %v5660
        %v5965 = vunpack.c.h.b16 %v5660
        %v5966 = vunpack.c.l.b16 %v5661
        %v5967 = vunpack.c.h.b16 %v5661
        %v5968 = vunpack.c.l.b16 %v5662
        %v5969 = vunpack.c.h.b16 %v5662
        %v5970 = vunpack.c.l.b16 %v5663
        %v5971 = vunpack.c.h.b16 %v5663
        %v5972 = vunpack.c.l.b16 %v5664
        %v5973 = vunpack.c.h.b16 %v5664
        %v5974 = vunpack.c.l.b16 %v5665
        %v5975 = vunpack.c.h.b16 %v5665
        %v5976 = vunpack.c.l.b16 %v5666
        %v5977 = vunpack.c.h.b16 %v5666
        %v5978 = vunpack.c.l.b16 %v5667
        %v5979 = vunpack.c.h.b16 %v5667
        %v5980 = vunpack.c.l.b16 %v5668
        %v5981 = vunpack.c.h.b16 %v5668
        %v5982 = vunpack.c.l.b16 %v5669
        %v5983 = vunpack.c.h.b16 %v5669
        %v5984 = vunpack.c.l.b16 %v5670
        %v5985 = vunpack.c.h.b16 %v5670
        %v5986 = vunpack.c.l.b16 %v5671
        %v5987 = vunpack.c.h.b16 %v5671
        %v5988 = vunpack.c.l.b16 %v5672
        %v5989 = vunpack.c.h.b16 %v5672
        %v5990 = vunpack.c.l.b16 %v5673
        %v5991 = vunpack.c.h.b16 %v5673
        %v5992 = vunpack.c.l.b16 %v5674
        %v5993 = vunpack.c.h.b16 %v5674
        %v5994 = vunpack.c.l.b16 %v5675
        %v5995 = vunpack.c.h.b16 %v5675
        %v5996 = vunpack.c.l.b16 %v5676
        %v5997 = vunpack.c.h.b16 %v5676
        %v5998 = vunpack.c.l.b16 %v5677
        %v5999 = vunpack.c.h.b16 %v5677
        %v6000 = vunpack.c.l.b16 %v5678
        %v6001 = vunpack.c.h.b16 %v5678
        %v6002 = vunpack.c.l.b16 %v5679
        %v6003 = vunpack.c.h.b16 %v5679
        %v6004 = vunpack.c.l.b16 %v5680
        %v6005 = vunpack.c.h.b16 %v5680
        %v6006 = vunpack.c.l.b16 %v5681
        %v6007 = vunpack.c.h.b16 %v5681
        %v6008 = vunpack.c.l.b16 %v5682
        %v6009 = vunpack.c.h.b16 %v5682
        %v6010 = vunpack.c.l.b16 %v5683
        %v6011 = vunpack.c.h.b16 %v5683
        %v6012 = vunpack.c.l.b16 %v5684
        %v6013 = vunpack.c.h.b16 %v5684
        %v6014 = vunpack.c.l.b16 %v5685
        %v6015 = vunpack.c.h.b16 %v5685
        %v6016 = vunpack.c.l.b16 %v5686
        %v6017 = vunpack.c.h.b16 %v5686
        %v6018 = vunpack.c.l.b16 %v5687
        %v6019 = vunpack.c.h.b16 %v5687
        %v6020 = vunpack.c.l.b16 %v5688
        %v6021 = vunpack.c.h.b16 %v5688
        %v6022 = vunpack.c.l.b16 %v5689
        %v6023 = vunpack.c.h.b16 %v5689
        %v6024 = vunpack.c.l.b16 %v5690
        %v6025 = vunpack.c.h.b16 %v5690
        %v6026 = vunpack.c.l.b16 %v5691
        %v6027 = vunpack.c.h.b16 %v5691
        %v6028 = vunpack.c.l.b16 %v5692
        %v6029 = vunpack.c.h.b16 %v5692
        %v6030 = vunpack.c.l.b16 %v5693
        %v6031 = vunpack.c.h.b16 %v5693
        %v6032 = vunpack.c.l.b16 %v5694
        %v6033 = vunpack.c.h.b16 %v5694
        %v6034 = vunpack.c.l.b16 %v5695
        %v6035 = vunpack.c.h.b16 %v5695
        %v6036 = vunpack.c.l.b16 %v5696
        %v6037 = vunpack.c.h.b16 %v5696
        %v6038 = vunpack.c.l.b16 %v5697
        %v6039 = vunpack.c.h.b16 %v5697
        %v6040 = vunpack.c.l.b16 %v5698
        %v6041 = vunpack.c.h.b16 %v5698
        %v6042 = vunpack.c.l.b16 %v5699
        %v6043 = vunpack.c.h.b16 %v5699
        %v6044 = vunpack.c.l.b16 %v5700
        %v6045 = vunpack.c.h.b16 %v5700
        %v6046 = vunpack.c.l.b16 %v5701
        %v6047 = vunpack.c.h.b16 %v5701
        %v6048 = vunpack.c.l.b16 %v5702
        %v6049 = vunpack.c.h.b16 %v5702
        %v6050 = vunpack.c.l.b16 %v5703
        %v6051 = vunpack.c.h.b16 %v5703
        %v6052 = vunpack.c.l.b16 %v5704
        %v6053 = vunpack.c.h.b16 %v5704
        %v6054 = vunpack.c.l.b16 %v5705
        %v6055 = vunpack.c.h.b16 %v5705
        %v6056 = vunpack.c.l.b16 %v5706
        %v6057 = vunpack.c.h.b16 %v5706
        %v6058 = vunpack.c.l.b16 %v5707
        %v6059 = vunpack.c.h.b16 %v5707
        %v6060 = vunpack.c.l.b16 %v5708
        %v6061 = vunpack.c.h.b16 %v5708
        %v6062 = vunpack.c.l.b16 %v5709
        %v6063 = vunpack.c.h.b16 %v5709
        %v6064 = vunpack.c.l.b16 %v5710
        %v6065 = vunpack.c.h.b16 %v5710
        %v6066 = vunpack.c.l.b16 %v5711
        %v6067 = vunpack.c.h.b16 %v5711
        %v6068 = vunpack.c.l.b16 %v5712
        %v6069 = vunpack.c.h.b16 %v5712
        %v6070 = vunpack.c.l.b16 %v5713
        %v6071 = vunpack.c.h.b16 %v5713
        %v6072 = vunpack.c.l.b16 %v5714
        %v6073 = vunpack.c.h.b16 %v5714
        %v6074 = vunpack.c.l.b16 %v5715
        %v6075 = vunpack.c.h.b16 %v5715
        %v6076 = vunpack.c.l.b16 %v5716
        %v6077 = vunpack.c.h.b16 %v5716
        %v6078 = vunpack.c.l.b16 %v5717
        %v6079 = vunpack.c.h.b16 %v5717
        %v6080 = vunpack.c.l.b16 %v5718
        %v6081 = vunpack.c.h.b16 %v5718
        %v6082 = vunpack.c.l.b16 %v5719
        %v6083 = vunpack.c.h.b16 %v5719
        %v6084 = vunpack.c.l.b16 %v5720
        %v6085 = vunpack.c.h.b16 %v5720
        %v6086 = vunpack.c.l.b16 %v5721
        %v6087 = vunpack.c.h.b16 %v5721
        %v6088 = vunpack.c.l.b16 %v5722
        %v6089 = vunpack.c.h.b16 %v5722
        %v6090 = vunpack.c.l.b16 %v5723
        %v6091 = vunpack.c.h.b16 %v5723
        %v6092 = vunpack.c.l.b16 %v5724
        %v6093 = vunpack.c.h.b16 %v5724
        %v6094 = vunpack.c.l.b16 %v5725
        %v6095 = vunpack.c.h.b16 %v5725
        %v6096 = vunpack.c.l.b16 %v5726
        %v6097 = vunpack.c.h.b16 %v5726
        %v6098 = vunpack.c.l.b16 %v5727
        %v6099 = vunpack.c.h.b16 %v5727
        %v6100 = vunpack.c.l.b16 %v5728
        %v6101 = vunpack.c.h.b16 %v5728
        %v6102 = vunpack.c.l.b16 %v5729
        %v6103 = vunpack.c.h.b16 %v5729
        %v6104 = vunpack.c.l.b16 %v5730
        %v6105 = vunpack.c.h.b16 %v5730
        %v6106 = vunpack.c.l.b16 %v5731
        %v6107 = vunpack.c.h.b16 %v5731
        %v6108 = vunpack.c.l.b16 %v5732
        %v6109 = vunpack.c.h.b16 %v5732
        %v6110 = vunpack.c.l.b16 %v5733
        %v6111 = vunpack.c.h.b16 %v5733
        %v6112 = vunpack.c.l.b16 %v5734
        %v6113 = vunpack.c.h.b16 %v5734
        %v6114 = vunpack.c.l.b16 %v5735
        %v6115 = vunpack.c.h.b16 %v5735
        %v6116 = vunpack.c.l.b16 %v5736
        %v6117 = vunpack.c.h.b16 %v5736
        %v6118 = vunpack.c.l.b16 %v5737
        %v6119 = vunpack.c.h.b16 %v5737
        %v6120 = vunpack.c.l.b16 %v5738
        %v6121 = vunpack.c.h.b16 %v5738
        %v6122 = vunpack.c.l.b16 %v5739
        %v6123 = vunpack.c.h.b16 %v5739
        %v6124 = vpack.c.b16 %v5876, %v5868
        %v6125 = vpack.c.b16 %v5877, %v5869
        %v6126 = vpack.c.b16 %v5878, %v5870
        %v6127 = vpack.c.b16 %v5879, %v5871
        %v6128 = vpack.c.b16 %v5880, %v5872
        %v6129 = vpack.c.b16 %v5881, %v5873
        %v6130 = vpack.c.b16 %v5882, %v5874
        %v6131 = vpack.c.b16 %v5883, %v5875
        %v6132 = vpack.c.b16 %v5892, %v5884
        %v6133 = vpack.c.b16 %v5893, %v5885
        %v6134 = vpack.c.b16 %v5894, %v5886
        %v6135 = vpack.c.b16 %v5895, %v5887
        %v6136 = vpack.c.b16 %v5896, %v5888
        %v6137 = vpack.c.b16 %v5897, %v5889
        %v6138 = vpack.c.b16 %v5898, %v5890
        %v6139 = vpack.c.b16 %v5899, %v5891
        %v6140 = vpack.c.b16 %v5908, %v5900
        %v6141 = vpack.c.b16 %v5909, %v5901
        %v6142 = vpack.c.b16 %v5910, %v5902
        %v6143 = vpack.c.b16 %v5911, %v5903
        %v6144 = vpack.c.b16 %v5912, %v5904
        %v6145 = vpack.c.b16 %v5913, %v5905
        %v6146 = vpack.c.b16 %v5914, %v5906
        %v6147 = vpack.c.b16 %v5915, %v5907
        %v6148 = vpack.c.b16 %v5924, %v5916
        %v6149 = vpack.c.b16 %v5925, %v5917
        %v6150 = vpack.c.b16 %v5926, %v5918
        %v6151 = vpack.c.b16 %v5927, %v5919
        %v6152 = vpack.c.b16 %v5928, %v5920
        %v6153 = vpack.c.b16 %v5929, %v5921
        %v6154 = vpack.c.b16 %v5930, %v5922
        %v6155 = vpack.c.b16 %v5931, %v5923
        %v6156 = vpack.c.b16 %v5940, %v5932
        %v6157 = vpack.c.b16 %v5941, %v5933
        %v6158 = vpack.c.b16 %v5942, %v5934
        %v6159 = vpack.c.b16 %v5943, %v5935
        %v6160 = vpack.c.b16 %v5944, %v5936
        %v6161 = vpack.c.b16 %v5945, %v5937
        %v6162 = vpack.c.b16 %v5946, %v5938
        %v6163 = vpack.c.b16 %v5947, %v5939
        %v6164 = vpack.c.b16 %v5956, %v5948
        %v6165 = vpack.c.b16 %v5957, %v5949
        %v6166 = vpack.c.b16 %v5958, %v5950
        %v6167 = vpack.c.b16 %v5959, %v5951
        %v6168 = vpack.c.b16 %v5960, %v5952
        %v6169 = vpack.c.b16 %v5961, %v5953
        %v6170 = vpack.c.b16 %v5962, %v5954
        %v6171 = vpack.c.b16 %v5963, %v5955
        %v6172 = vpack.c.b16 %v5972, %v5964
        %v6173 = vpack.c.b16 %v5973, %v5965
        %v6174 = vpack.c.b16 %v5974, %v5966
        %v6175 = vpack.c.b16 %v5975, %v5967
        %v6176 = vpack.c.b16 %v5976, %v5968
        %v6177 = vpack.c.b16 %v5977, %v5969
        %v6178 = vpack.c.b16 %v5978, %v5970
        %v6179 = vpack.c.b16 %v5979, %v5971
        %v6180 = vpack.c.b16 %v5988, %v5980
        %v6181 = vpack.c.b16 %v5989, %v5981
        %v6182 = vpack.c.b16 %v5990, %v5982
        %v6183 = vpack.c.b16 %v5991, %v5983
        %v6184 = vpack.c.b16 %v5992, %v5984
        %v6185 = vpack.c.b16 %v5993, %v5985
        %v6186 = vpack.c.b16 %v5994, %v5986
        %v6187 = vpack.c.b16 %v5995, %v5987
        %v6188 = vpack.c.b16 %v6004, %v5996
        %v6189 = vpack.c.b16 %v6005, %v5997
        %v6190 = vpack.c.b16 %v6006, %v5998
        %v6191 = vpack.c.b16 %v6007, %v5999
        %v6192 = vpack.c.b16 %v6008, %v6000
        %v6193 = vpack.c.b16 %v6009, %v6001
        %v6194 = vpack.c.b16 %v6010, %v6002
        %v6195 = vpack.c.b16 %v6011, %v6003
        %v6196 = vpack.c.b16 %v6020, %v6012
        %v6197 = vpack.c.b16 %v6021, %v6013
        %v6198 = vpack.c.b16 %v6022, %v6014
        %v6199 = vpack.c.b16 %v6023, %v6015
        %v6200 = vpack.c.b16 %v6024, %v6016
        %v6201 = vpack.c.b16 %v6025, %v6017
        %v6202 = vpack.c.b16 %v6026, %v6018
        %v6203 = vpack.c.b16 %v6027, %v6019
        %v6204 = vpack.c.b16 %v6036, %v6028
        %v6205 = vpack.c.b16 %v6037, %v6029
        %v6206 = vpack.c.b16 %v6038, %v6030
        %v6207 = vpack.c.b16 %v6039, %v6031
        %v6208 = vpack.c.b16 %v6040, %v6032
        %v6209 = vpack.c.b16 %v6041, %v6033
        %v6210 = vpack.c.b16 %v6042, %v6034
        %v6211 = vpack.c.b16 %v6043, %v6035
        %v6212 = vpack.c.b16 %v6052, %v6044
        %v6213 = vpack.c.b16 %v6053, %v6045
        %v6214 = vpack.c.b16 %v6054, %v6046
        %v6215 = vpack.c.b16 %v6055, %v6047
        %v6216 = vpack.c.b16 %v6056, %v6048
        %v6217 = vpack.c.b16 %v6057, %v6049
        %v6218 = vpack.c.b16 %v6058, %v6050
        %v6219 = vpack.c.b16 %v6059, %v6051
        %v6220 = vpack.c.b16 %v6068, %v6060
        %v6221 = vpack.c.b16 %v6069, %v6061
        %v6222 = vpack.c.b16 %v6070, %v6062
        %v6223 = vpack.c.b16 %v6071, %v6063
        %v6224 = vpack.c.b16 %v6072, %v6064
        %v6225 = vpack.c.b16 %v6073, %v6065
        %v6226 = vpack.c.b16 %v6074, %v6066
        %v6227 = vpack.c.b16 %v6075, %v6067
        %v6228 = vpack.c.b16 %v6084, %v6076
        %v6229 = vpack.c.b16 %v6085, %v6077
        %v6230 = vpack.c.b16 %v6086, %v6078
        %v6231 = vpack.c.b16 %v6087, %v6079
        %v6232 = vpack.c.b16 %v6088, %v6080
        %v6233 = vpack.c.b16 %v6089, %v6081
        %v6234 = vpack.c.b16 %v6090, %v6082
        %v6235 = vpack.c.b16 %v6091, %v6083
        %v6236 = vpack.c.b16 %v6100, %v6092
        %v6237 = vpack.c.b16 %v6101, %v6093
        %v6238 = vpack.c.b16 %v6102, %v6094
        %v6239 = vpack.c.b16 %v6103, %v6095
        %v6240 = vpack.c.b16 %v6104, %v6096
        %v6241 = vpack.c.b16 %v6105, %v6097
        %v6242 = vpack.c.b16 %v6106, %v6098
        %v6243 = vpack.c.b16 %v6107, %v6099
        %v6244 = vpack.c.b16 %v6116, %v6108
        %v6245 = vpack.c.b16 %v6117, %v6109
        %v6246 = vpack.c.b16 %v6118, %v6110
        %v6247 = vpack.c.b16 %v6119, %v6111
        %v6248 = vpack.c.b16 %v6120, %v6112
        %v6249 = vpack.c.b16 %v6121, %v6113
        %v6250 = vpack.c.b16 %v6122, %v6114
        %v6251 = vpack.c.b16 %v6123, %v6115
        %6380 = vmatpush.bf16.msra.mxu0 %v6180
        %6381 = vmatpush.bf16.msra.mxu0 %v6172
        %6382 = vmatpush.bf16.msra.mxu0 %v6164
        %6383 = vmatpush.bf16.msra.mxu0 %v6156
        %6384 = vmatpush.bf16.msra.mxu0 %v6148
        %6385 = vmatpush.bf16.msra.mxu0 %v6140
        %6386 = vmatpush.bf16.msra.mxu0 %v6132
        %6387 = vmatpush.bf16.msra.mxu0 %v6124
        %6388 = vmatmul.bf16.gmra.mxu0 %v5610
        %v6389 = vpop.f32.mrf.mxu0
        %v6390 = vadd.f32 0.0, %v6389
        %v6391 = vpop.f32.mrf.mxu0
        %6392 = vdwg.mxu0
        %6393 = vmatpush.bf16.msra.mxu0 %v6244
        %6394 = vmatpush.bf16.msra.mxu0 %v6236
        %6395 = vmatpush.bf16.msra.mxu0 %v6228
        %6396 = vmatpush.bf16.msra.mxu0 %v6220
        %6397 = vmatpush.bf16.msra.mxu0 %v6212
        %6398 = vmatpush.bf16.msra.mxu0 %v6204
        %6399 = vmatpush.bf16.msra.mxu0 %v6196
        %6400 = vmatpush.bf16.msra.mxu0 %v6188
        %6401 = vmatmul.bf16.gmra.mxu0 %v5611
        %v6402 = vpop.f32.mrf.mxu0
        %v6403 = vadd.f32 %v6390, %v6402
        %v6404 = vpop.f32.mrf.mxu0
        %6405 = vdwg.mxu0
        %6406 = vmatpush.bf16.msra.mxu0 %v6181
        %6407 = vmatpush.bf16.msra.mxu0 %v6173
        %6408 = vmatpush.bf16.msra.mxu0 %v6165
        %6409 = vmatpush.bf16.msra.mxu0 %v6157
        %6410 = vmatpush.bf16.msra.mxu0 %v6149
        %6411 = vmatpush.bf16.msra.mxu0 %v6141
        %6412 = vmatpush.bf16.msra.mxu0 %v6133
        %6413 = vmatpush.bf16.msra.mxu0 %v6125
        %6414 = vmatmul.bf16.gmra.mxu0 %v5610
        %v6415 = vpop.f32.mrf.mxu0
        %v6416 = vadd.f32 0.0, %v6415
        %v6417 = vpop.f32.mrf.mxu0
        %6418 = vdwg.mxu0
        %6419 = vmatpush.bf16.msra.mxu0 %v6245
        %6420 = vmatpush.bf16.msra.mxu0 %v6237
        %6421 = vmatpush.bf16.msra.mxu0 %v6229
        %6422 = vmatpush.bf16.msra.mxu0 %v6221
        %6423 = vmatpush.bf16.msra.mxu0 %v6213
        %6424 = vmatpush.bf16.msra.mxu0 %v6205
        %6425 = vmatpush.bf16.msra.mxu0 %v6197
        %6426 = vmatpush.bf16.msra.mxu0 %v6189
        %6427 = vmatmul.bf16.gmra.mxu0 %v5611
        %v6428 = vpop.f32.mrf.mxu0
        %v6429 = vadd.f32 %v6416, %v6428
        %v6430 = vpop.f32.mrf.mxu0
        %6431 = vdwg.mxu0
        %6432 = vmatpush.bf16.msra.mxu0 %v6182
        %6433 = vmatpush.bf16.msra.mxu0 %v6174
        %6434 = vmatpush.bf16.msra.mxu0 %v6166
        %6435 = vmatpush.bf16.msra.mxu0 %v6158
        %6436 = vmatpush.bf16.msra.mxu0 %v6150
        %6437 = vmatpush.bf16.msra.mxu0 %v6142
        %6438 = vmatpush.bf16.msra.mxu0 %v6134
        %6439 = vmatpush.bf16.msra.mxu0 %v6126
        %6440 = vmatmul.bf16.gmra.mxu0 %v5610
        %v6441 = vpop.f32.mrf.mxu0
        %v6442 = vadd.f32 0.0, %v6441
        %v6443 = vpop.f32.mrf.mxu0
        %6444 = vdwg.mxu0
        %6445 = vmatpush.bf16.msra.mxu0 %v6246
        %6446 = vmatpush.bf16.msra.mxu0 %v6238
        %6447 = vmatpush.bf16.msra.mxu0 %v6230
        %6448 = vmatpush.bf16.msra.mxu0 %v6222
        %6449 = vmatpush.bf16.msra.mxu0 %v6214
        %6450 = vmatpush.bf16.msra.mxu0 %v6206
        %6451 = vmatpush.bf16.msra.mxu0 %v6198
        %6452 = vmatpush.bf16.msra.mxu0 %v6190
        %6453 = vmatmul.bf16.gmra.mxu0 %v5611
        %v6454 = vpop.f32.mrf.mxu0
        %v6455 = vadd.f32 %v6442, %v6454
        %v6456 = vpop.f32.mrf.mxu0
        %6457 = vdwg.mxu0
        %6458 = vmatpush.bf16.msra.mxu0 %v6183
        %6459 = vmatpush.bf16.msra.mxu0 %v6175
        %6460 = vmatpush.bf16.msra.mxu0 %v6167
        %6461 = vmatpush.bf16.msra.mxu0 %v6159
        %6462 = vmatpush.bf16.msra.mxu0 %v6151
        %6463 = vmatpush.bf16.msra.mxu0 %v6143
        %6464 = vmatpush.bf16.msra.mxu0 %v6135
        %6465 = vmatpush.bf16.msra.mxu0 %v6127
        %6466 = vmatmul.bf16.gmra.mxu0 %v5610
        %v6467 = vpop.f32.mrf.mxu0
        %v6468 = vadd.f32 0.0, %v6467
        %v6469 = vpop.f32.mrf.mxu0
        %6470 = vdwg.mxu0
        %6471 = vmatpush.bf16.msra.mxu0 %v6247
        %6472 = vmatpush.bf16.msra.mxu0 %v6239
        %6473 = vmatpush.bf16.msra.mxu0 %v6231
        %6474 = vmatpush.bf16.msra.mxu0 %v6223
        %6475 = vmatpush.bf16.msra.mxu0 %v6215
        %6476 = vmatpush.bf16.msra.mxu0 %v6207
        %6477 = vmatpush.bf16.msra.mxu0 %v6199
        %6478 = vmatpush.bf16.msra.mxu0 %v6191
        %6479 = vmatmul.bf16.gmra.mxu0 %v5611
        %v6480 = vpop.f32.mrf.mxu0
        %v6481 = vadd.f32 %v6468, %v6480
        %v6482 = vpop.f32.mrf.mxu0
        %6483 = vdwg.mxu0
        %6484 = vmatpush.bf16.msra.mxu0 %v6184
        %6485 = vmatpush.bf16.msra.mxu0 %v6176
        %6486 = vmatpush.bf16.msra.mxu0 %v6168
        %6487 = vmatpush.bf16.msra.mxu0 %v6160
        %6488 = vmatpush.bf16.msra.mxu0 %v6152
        %6489 = vmatpush.bf16.msra.mxu0 %v6144
        %6490 = vmatpush.bf16.msra.mxu0 %v6136
        %6491 = vmatpush.bf16.msra.mxu0 %v6128
        %6492 = vmatmul.bf16.gmra.mxu0 %v5610
        %v6493 = vpop.f32.mrf.mxu0
        %v6494 = vadd.f32 0.0, %v6493
        %v6495 = vpop.f32.mrf.mxu0
        %6496 = vdwg.mxu0
        %6497 = vmatpush.bf16.msra.mxu0 %v6248
        %6498 = vmatpush.bf16.msra.mxu0 %v6240
        %6499 = vmatpush.bf16.msra.mxu0 %v6232
        %6500 = vmatpush.bf16.msra.mxu0 %v6224
        %6501 = vmatpush.bf16.msra.mxu0 %v6216
        %6502 = vmatpush.bf16.msra.mxu0 %v6208
        %6503 = vmatpush.bf16.msra.mxu0 %v6200
        %6504 = vmatpush.bf16.msra.mxu0 %v6192
        %6505 = vmatmul.bf16.gmra.mxu0 %v5611
        %v6506 = vpop.f32.mrf.mxu0
        %v6507 = vadd.f32 %v6494, %v6506
        %v6508 = vpop.f32.mrf.mxu0
        %6509 = vdwg.mxu0
        %6510 = vmatpush.bf16.msra.mxu0 %v6185
        %6511 = vmatpush.bf16.msra.mxu0 %v6177
        %6512 = vmatpush.bf16.msra.mxu0 %v6169
        %6513 = vmatpush.bf16.msra.mxu0 %v6161
        %6514 = vmatpush.bf16.msra.mxu0 %v6153
        %6515 = vmatpush.bf16.msra.mxu0 %v6145
        %6516 = vmatpush.bf16.msra.mxu0 %v6137
        %6517 = vmatpush.bf16.msra.mxu0 %v6129
        %6518 = vmatmul.bf16.gmra.mxu0 %v5610
        %v6519 = vpop.f32.mrf.mxu0
        %v6520 = vadd.f32 0.0, %v6519
        %v6521 = vpop.f32.mrf.mxu0
        %6522 = vdwg.mxu0
        %6523 = vmatpush.bf16.msra.mxu0 %v6249
        %6524 = vmatpush.bf16.msra.mxu0 %v6241
        %6525 = vmatpush.bf16.msra.mxu0 %v6233
        %6526 = vmatpush.bf16.msra.mxu0 %v6225
        %6527 = vmatpush.bf16.msra.mxu0 %v6217
        %6528 = vmatpush.bf16.msra.mxu0 %v6209
        %6529 = vmatpush.bf16.msra.mxu0 %v6201
        %6530 = vmatpush.bf16.msra.mxu0 %v6193
        %6531 = vmatmul.bf16.gmra.mxu0 %v5611
        %v6532 = vpop.f32.mrf.mxu0
        %v6533 = vadd.f32 %v6520, %v6532
        %v6534 = vpop.f32.mrf.mxu0
        %6535 = vdwg.mxu0
        %6536 = vmatpush.bf16.msra.mxu0 %v6186
        %6537 = vmatpush.bf16.msra.mxu0 %v6178
        %6538 = vmatpush.bf16.msra.mxu0 %v6170
        %6539 = vmatpush.bf16.msra.mxu0 %v6162
        %6540 = vmatpush.bf16.msra.mxu0 %v6154
        %6541 = vmatpush.bf16.msra.mxu0 %v6146
        %6542 = vmatpush.bf16.msra.mxu0 %v6138
        %6543 = vmatpush.bf16.msra.mxu0 %v6130
        %6544 = vmatmul.bf16.gmra.mxu0 %v5610
        %v6545 = vpop.f32.mrf.mxu0
        %v6546 = vadd.f32 0.0, %v6545
        %v6547 = vpop.f32.mrf.mxu0
        %6548 = vdwg.mxu0
        %6549 = vmatpush.bf16.msra.mxu0 %v6250
        %6550 = vmatpush.bf16.msra.mxu0 %v6242
        %6551 = vmatpush.bf16.msra.mxu0 %v6234
        %6552 = vmatpush.bf16.msra.mxu0 %v6226
        %6553 = vmatpush.bf16.msra.mxu0 %v6218
        %6554 = vmatpush.bf16.msra.mxu0 %v6210
        %6555 = vmatpush.bf16.msra.mxu0 %v6202
        %6556 = vmatpush.bf16.msra.mxu0 %v6194
        %6557 = vmatmul.bf16.gmra.mxu0 %v5611
        %v6558 = vpop.f32.mrf.mxu0
        %v6559 = vadd.f32 %v6546, %v6558
        %v6560 = vpop.f32.mrf.mxu0
        %6561 = vdwg.mxu0
        %6562 = vmatpush.bf16.msra.mxu0 %v6187
        %6563 = vmatpush.bf16.msra.mxu0 %v6179
        %6564 = vmatpush.bf16.msra.mxu0 %v6171
        %6565 = vmatpush.bf16.msra.mxu0 %v6163
        %6566 = vmatpush.bf16.msra.mxu0 %v6155
        %6567 = vmatpush.bf16.msra.mxu0 %v6147
        %6568 = vmatpush.bf16.msra.mxu0 %v6139
        %6569 = vmatpush.bf16.msra.mxu0 %v6131
        %6570 = vmatmul.bf16.gmra.mxu0 %v5610
        %v6571 = vpop.f32.mrf.mxu0
        %v6572 = vadd.f32 0.0, %v6571
        %v6573 = vpop.f32.mrf.mxu0
        %6574 = vdwg.mxu0
        %6575 = vmatpush.bf16.msra.mxu0 %v6251
        %6576 = vmatpush.bf16.msra.mxu0 %v6243
        %6577 = vmatpush.bf16.msra.mxu0 %v6235
        %6578 = vmatpush.bf16.msra.mxu0 %v6227
        %6579 = vmatpush.bf16.msra.mxu0 %v6219
        %6580 = vmatpush.bf16.msra.mxu0 %v6211
        %6581 = vmatpush.bf16.msra.mxu0 %v6203
        %6582 = vmatpush.bf16.msra.mxu0 %v6195
        %6583 = vmatmul.bf16.gmra.mxu0 %v5611
        %v6584 = vpop.f32.mrf.mxu0
        %v6585 = vadd.f32 %v6572, %v6584
        %v6586 = vpop.f32.mrf.mxu0
        %6587 = vdwg.mxu0
        %v6588 = vld [vmem:[#allocation28] sm:$0xff]
        %v6589 = vld [vmem:[#allocation28 + $0x8] sm:$0xff]
        %s6590 = scalar_lea.vmem [#allocation28], 16
        %v6591 = vld [vmem:[%s6590] sm:$0xff]
        %v6592 = vld [vmem:[%s6590 + $0x8] sm:$0xff]
        %v6594 = vsel %vm3839, %v6591, 0
        %v6597 = vsel %vm3839, %v6592, 0
        %6599 = vmatpush.msra.mxu0 0.0
        %6600 = vmatpush.msra.mxu0 0.0
        %6601 = vmatpush.msra.mxu0 0.0
        %6602 = vmatpush.msra.mxu0 0.0
        %6603 = vmatpush.msra.mxu0 0.0
        %6604 = vmatpush.msra.mxu0 0.0
        %6605 = vmatpush.msra.mxu0 0.0
        %6606 = vmatpush.msra.mxu0 0.0
        %6607 = vmatpush.msra.mxu0 0.0
        %6608 = vmatpush.msra.mxu0 0.0
        %6609 = vmatpush.msra.mxu0 0.0
        %6610 = vmatpush.msra.mxu0 0.0
        %6611 = vmatpush.msra.mxu0 0.0
        %6612 = vmatpush.msra.mxu0 0.0
        %6613 = vmatpush.msra.mxu0 0.0
        %6614 = vmatpush.msra.mxu0 %v6455
        %6615 = vmatmul.f32.gmra.mxu0 %v6594
        %v6616 = vpop.f32.mrf.mxu0
        %v6617 = vadd.f32 0.0, %v6616
        %6618 = vmatmul.f32.gmra.mxu0 %v6597
        %v6619 = vpop.f32.mrf.mxu0
        %v6620 = vadd.f32 0.0, %v6619
        %6621 = vdwg.mxu0
        %6622 = vmatpush.msra.mxu0 0.0
        %6623 = vmatpush.msra.mxu0 0.0
        %6624 = vmatpush.msra.mxu0 0.0
        %6625 = vmatpush.msra.mxu0 0.0
        %6626 = vmatpush.msra.mxu0 0.0
        %6627 = vmatpush.msra.mxu0 0.0
        %6628 = vmatpush.msra.mxu0 0.0
        %6629 = vmatpush.msra.mxu0 0.0
        %6630 = vmatpush.msra.mxu0 0.0
        %6631 = vmatpush.msra.mxu0 0.0
        %6632 = vmatpush.msra.mxu0 0.0
        %6633 = vmatpush.msra.mxu0 0.0
        %6634 = vmatpush.msra.mxu0 0.0
        %6635 = vmatpush.msra.mxu0 0.0
        %6636 = vmatpush.msra.mxu0 0.0
        %6637 = vmatpush.msra.mxu0 %v6481
        %6638 = vmatmul.f32.gmra.mxu0 %v6594
        %v6639 = vpop.f32.mrf.mxu0
        %v6640 = vadd.f32 0.0, %v6639
        %6641 = vmatmul.f32.gmra.mxu0 %v6597
        %v6642 = vpop.f32.mrf.mxu0
        %v6643 = vadd.f32 0.0, %v6642
        %6644 = vdwg.mxu0
        %v6646 = vsel %vm3839, %v6588, 0
        %v6649 = vsel %vm3839, %v6589, 0
        %6651 = vmatpush.msra.mxu0 0.0
        %6652 = vmatpush.msra.mxu0 0.0
        %6653 = vmatpush.msra.mxu0 0.0
        %6654 = vmatpush.msra.mxu0 0.0
        %6655 = vmatpush.msra.mxu0 0.0
        %6656 = vmatpush.msra.mxu0 0.0
        %6657 = vmatpush.msra.mxu0 0.0
        %6658 = vmatpush.msra.mxu0 0.0
        %6659 = vmatpush.msra.mxu0 0.0
        %6660 = vmatpush.msra.mxu0 0.0
        %6661 = vmatpush.msra.mxu0 0.0
        %6662 = vmatpush.msra.mxu0 0.0
        %6663 = vmatpush.msra.mxu0 0.0
        %6664 = vmatpush.msra.mxu0 0.0
        %6665 = vmatpush.msra.mxu0 0.0
        %6666 = vmatpush.msra.mxu0 %v6403
        %6667 = vmatmul.f32.gmra.mxu0 %v6646
        %v6668 = vpop.f32.mrf.mxu0
        %v6669 = vadd.f32 %v6617, %v6668
        %6670 = vmatmul.f32.gmra.mxu0 %v6649
        %v6671 = vpop.f32.mrf.mxu0
        %v6672 = vadd.f32 %v6620, %v6671
        %6673 = vdwg.mxu0
        %6674 = vmatpush.msra.mxu0 0.0
        %6675 = vmatpush.msra.mxu0 0.0
        %6676 = vmatpush.msra.mxu0 0.0
        %6677 = vmatpush.msra.mxu0 0.0
        %6678 = vmatpush.msra.mxu0 0.0
        %6679 = vmatpush.msra.mxu0 0.0
        %6680 = vmatpush.msra.mxu0 0.0
        %6681 = vmatpush.msra.mxu0 0.0
        %6682 = vmatpush.msra.mxu0 0.0
        %6683 = vmatpush.msra.mxu0 0.0
        %6684 = vmatpush.msra.mxu0 0.0
        %6685 = vmatpush.msra.mxu0 0.0
        %6686 = vmatpush.msra.mxu0 0.0
        %6687 = vmatpush.msra.mxu0 0.0
        %6688 = vmatpush.msra.mxu0 0.0
        %6689 = vmatpush.msra.mxu0 %v6429
        %6690 = vmatmul.f32.gmra.mxu0 %v6646
        %v6691 = vpop.f32.mrf.mxu0
        %v6692 = vadd.f32 %v6640, %v6691
        %6693 = vmatmul.f32.gmra.mxu0 %v6649
        %v6694 = vpop.f32.mrf.mxu0
        %v6695 = vadd.f32 %v6643, %v6694
        %6696 = vdwg.mxu0
        %s6697 = scalar_lea.vmem [#allocation28], 32
        %v6698 = vld [vmem:[%s6697] sm:$0xff]
        %v6699 = vld [vmem:[%s6697 + $0x8] sm:$0xff]
        %v6701 = vsel %vm3839, %v6698, 0
        %v6704 = vsel %vm3839, %v6699, 0
        %6706 = vmatpush.msra.mxu0 0.0
        %6707 = vmatpush.msra.mxu0 0.0
        %6708 = vmatpush.msra.mxu0 0.0
        %6709 = vmatpush.msra.mxu0 0.0
        %6710 = vmatpush.msra.mxu0 0.0
        %6711 = vmatpush.msra.mxu0 0.0
        %6712 = vmatpush.msra.mxu0 0.0
        %6713 = vmatpush.msra.mxu0 0.0
        %6714 = vmatpush.msra.mxu0 0.0
        %6715 = vmatpush.msra.mxu0 0.0
        %6716 = vmatpush.msra.mxu0 0.0
        %6717 = vmatpush.msra.mxu0 0.0
        %6718 = vmatpush.msra.mxu0 0.0
        %6719 = vmatpush.msra.mxu0 0.0
        %6720 = vmatpush.msra.mxu0 0.0
        %6721 = vmatpush.msra.mxu0 %v6507
        %6722 = vmatmul.f32.gmra.mxu0 %v6701
        %v6723 = vpop.f32.mrf.mxu0
        %v6724 = vadd.f32 0.0, %v6723
        %6725 = vmatmul.f32.gmra.mxu0 %v6704
        %v6726 = vpop.f32.mrf.mxu0
        %v6727 = vadd.f32 0.0, %v6726
        %6728 = vdwg.mxu0
        %6729 = vmatpush.msra.mxu0 0.0
        %6730 = vmatpush.msra.mxu0 0.0
        %6731 = vmatpush.msra.mxu0 0.0
        %6732 = vmatpush.msra.mxu0 0.0
        %6733 = vmatpush.msra.mxu0 0.0
        %6734 = vmatpush.msra.mxu0 0.0
        %6735 = vmatpush.msra.mxu0 0.0
        %6736 = vmatpush.msra.mxu0 0.0
        %6737 = vmatpush.msra.mxu0 0.0
        %6738 = vmatpush.msra.mxu0 0.0
        %6739 = vmatpush.msra.mxu0 0.0
        %6740 = vmatpush.msra.mxu0 0.0
        %6741 = vmatpush.msra.mxu0 0.0
        %6742 = vmatpush.msra.mxu0 0.0
        %6743 = vmatpush.msra.mxu0 0.0
        %6744 = vmatpush.msra.mxu0 %v6533
        %6745 = vmatmul.f32.gmra.mxu0 %v6701
        %v6746 = vpop.f32.mrf.mxu0
        %v6747 = vadd.f32 0.0, %v6746
        %6748 = vmatmul.f32.gmra.mxu0 %v6704
        %v6749 = vpop.f32.mrf.mxu0
        %v6750 = vadd.f32 0.0, %v6749
        %6751 = vdwg.mxu0
        %v6752 = vadd.f32 %v6669, %v6724
        %v6753 = vadd.f32 %v6692, %v6747
        %v6754 = vadd.f32 %v6672, %v6727
        %v6755 = vadd.f32 %v6695, %v6750
        %s6756 = scalar_lea.vmem [#allocation28], 48
        %v6757 = vld [vmem:[%s6756] sm:$0xff]
        %v6758 = vld [vmem:[%s6756 + $0x8] sm:$0xff]
        %v6760 = vsel %vm3839, %v6757, 0
        %v6763 = vsel %vm3839, %v6758, 0
        %6765 = vmatpush.msra.mxu0 0.0
        %6766 = vmatpush.msra.mxu0 0.0
        %6767 = vmatpush.msra.mxu0 0.0
        %6768 = vmatpush.msra.mxu0 0.0
        %6769 = vmatpush.msra.mxu0 0.0
        %6770 = vmatpush.msra.mxu0 0.0
        %6771 = vmatpush.msra.mxu0 0.0
        %6772 = vmatpush.msra.mxu0 0.0
        %6773 = vmatpush.msra.mxu0 0.0
        %6774 = vmatpush.msra.mxu0 0.0
        %6775 = vmatpush.msra.mxu0 0.0
        %6776 = vmatpush.msra.mxu0 0.0
        %6777 = vmatpush.msra.mxu0 0.0
        %6778 = vmatpush.msra.mxu0 0.0
        %6779 = vmatpush.msra.mxu0 0.0
        %6780 = vmatpush.msra.mxu0 %v6559
        %6781 = vmatmul.f32.gmra.mxu0 %v6760
        %v6782 = vpop.f32.mrf.mxu0
        %v6783 = vadd.f32 0.0, %v6782
        %6784 = vmatmul.f32.gmra.mxu0 %v6763
        %v6785 = vpop.f32.mrf.mxu0
        %v6786 = vadd.f32 0.0, %v6785
        %6787 = vdwg.mxu0
        %6788 = vmatpush.msra.mxu0 0.0
        %6789 = vmatpush.msra.mxu0 0.0
        %6790 = vmatpush.msra.mxu0 0.0
        %6791 = vmatpush.msra.mxu0 0.0
        %6792 = vmatpush.msra.mxu0 0.0
        %6793 = vmatpush.msra.mxu0 0.0
        %6794 = vmatpush.msra.mxu0 0.0
        %6795 = vmatpush.msra.mxu0 0.0
        %6796 = vmatpush.msra.mxu0 0.0
        %6797 = vmatpush.msra.mxu0 0.0
        %6798 = vmatpush.msra.mxu0 0.0
        %6799 = vmatpush.msra.mxu0 0.0
        %6800 = vmatpush.msra.mxu0 0.0
        %6801 = vmatpush.msra.mxu0 0.0
        %6802 = vmatpush.msra.mxu0 0.0
        %6803 = vmatpush.msra.mxu0 %v6585
        %6804 = vmatmul.f32.gmra.mxu0 %v6760
        %v6805 = vpop.f32.mrf.mxu0
        %v6806 = vadd.f32 0.0, %v6805
        %6807 = vmatmul.f32.gmra.mxu0 %v6763
        %v6808 = vpop.f32.mrf.mxu0
        %v6809 = vadd.f32 0.0, %v6808
        %6810 = vdwg.mxu0
        %v6811 = vadd.f32 %v6752, %v6783
        %v6812 = vadd.f32 %v6753, %v6806
        %v6813 = vadd.f32 %v6754, %v6786
        %v6814 = vadd.f32 %v6755, %v6809
        %v6815 = vld [vmem:[%s23] sm:$0x3]
        %v6817 = vperm.slane %v6815, 0
        %v6818 = vperm.slane %v6815, 1
        %v6821 = vadd.f32 %v6811, %v6817
        %v6822 = vadd.f32 %v6812, %v6818
        %v6823 = vadd.f32 %v6813, %v6817
        %v6824 = vadd.f32 %v6814, %v6818
        %v6825 = vmax.f32 %v6821, 0.0
        %v6826 = vmax.f32 %v6822, 0.0
        %v6827 = vmax.f32 %v6823, 0.0
        %v6828 = vmax.f32 %v6824, 0.0
        %v6829 = vpack.c.bf16 %v6827, %v6825
        %v6830 = vpack.c.bf16 %v6828, %v6826
        %v6831 = vld [vmem:[#allocation29] sm:$0xf]
        %v6832 = vld [vmem:[#allocation29 + $0x4] sm:$0xf]
        %v6833 = vld [vmem:[#allocation29 + $0x8] sm:$0xf]
        %v6834 = vld [vmem:[#allocation29 + $0xc] sm:$0xf]
        %v6835 = vld [vmem:[#allocation29 + $0x10] sm:$0xf]
        %v6836 = vld [vmem:[#allocation29 + $0x14] sm:$0xf]
        %v6837 = vld [vmem:[#allocation29 + $0x18] sm:$0xf]
        %v6838 = vld [vmem:[#allocation29 + $0x1c] sm:$0xf]
        %v6839 = vld [vmem:[#allocation29 + $0x20] sm:$0xf]
        %v6840 = vld [vmem:[#allocation29 + $0x24] sm:$0xf]
        %v6841 = vld [vmem:[#allocation29 + $0x28] sm:$0xf]
        %v6842 = vld [vmem:[#allocation29 + $0x2c] sm:$0xf]
        %v6843 = vld [vmem:[#allocation29 + $0x30] sm:$0xf]
        %v6844 = vld [vmem:[#allocation29 + $0x34] sm:$0xf]
        %v6845 = vld [vmem:[#allocation29 + $0x38] sm:$0xf]
        %v6846 = vld [vmem:[#allocation29 + $0x3c] sm:$0xf]
        %v6847 = vld [vmem:[#allocation29 + $0x40] sm:$0xf]
        %v6848 = vld [vmem:[#allocation29 + $0x44] sm:$0xf]
        %v6849 = vld [vmem:[#allocation29 + $0x48] sm:$0xf]
        %v6850 = vld [vmem:[#allocation29 + $0x4c] sm:$0xf]
        %v6851 = vld [vmem:[#allocation29 + $0x50] sm:$0xf]
        %v6852 = vld [vmem:[#allocation29 + $0x54] sm:$0xf]
        %v6853 = vld [vmem:[#allocation29 + $0x58] sm:$0xf]
        %v6854 = vld [vmem:[#allocation29 + $0x5c] sm:$0xf]
        %v6855 = vld [vmem:[#allocation29 + $0x60] sm:$0xf]
        %v6856 = vld [vmem:[#allocation29 + $0x64] sm:$0xf]
        %v6857 = vld [vmem:[#allocation29 + $0x68] sm:$0xf]
        %v6858 = vld [vmem:[#allocation29 + $0x6c] sm:$0xf]
        %v6859 = vld [vmem:[#allocation29 + $0x70] sm:$0xf]
        %v6860 = vld [vmem:[#allocation29 + $0x74] sm:$0xf]
        %v6861 = vld [vmem:[#allocation29 + $0x78] sm:$0xf]
        %v6862 = vld [vmem:[#allocation29 + $0x7c] sm:$0xf]
        %v6895 = vunpack.c.l.b16 %v6831
        %v6896 = vunpack.c.l.b16 %v6832
        %v6897 = vunpack.c.l.b16 %v6833
        %v6898 = vunpack.c.l.b16 %v6834
        %v6899 = vunpack.c.l.b16 %v6835
        %v6900 = vunpack.c.l.b16 %v6836
        %v6901 = vunpack.c.l.b16 %v6837
        %v6902 = vunpack.c.l.b16 %v6838
        %v6903 = vunpack.c.l.b16 %v6839
        %v6904 = vunpack.c.l.b16 %v6840
        %v6905 = vunpack.c.l.b16 %v6841
        %v6906 = vunpack.c.l.b16 %v6842
        %v6907 = vunpack.c.l.b16 %v6843
        %v6908 = vunpack.c.l.b16 %v6844
        %v6909 = vunpack.c.l.b16 %v6845
        %v6910 = vunpack.c.l.b16 %v6846
        %v6911 = vunpack.c.l.b16 %v6847
        %v6912 = vunpack.c.l.b16 %v6848
        %v6913 = vunpack.c.l.b16 %v6849
        %v6914 = vunpack.c.l.b16 %v6850
        %v6915 = vunpack.c.l.b16 %v6851
        %v6916 = vunpack.c.l.b16 %v6852
        %v6917 = vunpack.c.l.b16 %v6853
        %v6918 = vunpack.c.l.b16 %v6854
        %v6919 = vunpack.c.l.b16 %v6855
        %v6920 = vunpack.c.l.b16 %v6856
        %v6921 = vunpack.c.l.b16 %v6857
        %v6922 = vunpack.c.l.b16 %v6858
        %v6923 = vunpack.c.l.b16 %v6859
        %v6924 = vunpack.c.l.b16 %v6860
        %v6925 = vunpack.c.l.b16 %v6861
        %v6926 = vunpack.c.l.b16 %v6862
        %v6927 = vpack.c.b16 %v6896, %v6895
        %v6928 = vpack.c.b16 %v6898, %v6897
        %v6929 = vpack.c.b16 %v6900, %v6899
        %v6930 = vpack.c.b16 %v6902, %v6901
        %v6931 = vpack.c.b16 %v6904, %v6903
        %v6932 = vpack.c.b16 %v6906, %v6905
        %v6933 = vpack.c.b16 %v6908, %v6907
        %v6934 = vpack.c.b16 %v6910, %v6909
        %v6935 = vpack.c.b16 %v6912, %v6911
        %v6936 = vpack.c.b16 %v6914, %v6913
        %v6937 = vpack.c.b16 %v6916, %v6915
        %v6938 = vpack.c.b16 %v6918, %v6917
        %v6939 = vpack.c.b16 %v6920, %v6919
        %v6940 = vpack.c.b16 %v6922, %v6921
        %v6941 = vpack.c.b16 %v6924, %v6923
        %v6942 = vpack.c.b16 %v6926, %v6925
        %6959 = vmatpush.bf16.msra.mxu0 %v6934
        %6960 = vmatpush.bf16.msra.mxu0 %v6933
        %6961 = vmatpush.bf16.msra.mxu0 %v6932
        %6962 = vmatpush.bf16.msra.mxu0 %v6931
        %6963 = vmatpush.bf16.msra.mxu0 %v6930
        %6964 = vmatpush.bf16.msra.mxu0 %v6929
        %6965 = vmatpush.bf16.msra.mxu0 %v6928
        %6966 = vmatpush.bf16.msra.mxu0 %v6927
        %6967 = vmatmul.bf16.gmra.mxu0 %v6829
        %v6968 = vpop.f32.mrf.mxu0
        %v6969 = vadd.f32 0.0, %v6968
        %v6970 = vpop.f32.mrf.mxu0
        %v6971 = vadd.f32 0.0, %v6970
        %6972 = vdwg.mxu0
        %6973 = vmatpush.bf16.msra.mxu0 %v6942
        %6974 = vmatpush.bf16.msra.mxu0 %v6941
        %6975 = vmatpush.bf16.msra.mxu0 %v6940
        %6976 = vmatpush.bf16.msra.mxu0 %v6939
        %6977 = vmatpush.bf16.msra.mxu0 %v6938
        %6978 = vmatpush.bf16.msra.mxu0 %v6937
        %6979 = vmatpush.bf16.msra.mxu0 %v6936
        %6980 = vmatpush.bf16.msra.mxu0 %v6935
        %6981 = vmatmul.bf16.gmra.mxu0 %v6830
        %v6982 = vpop.f32.mrf.mxu0
        %v6983 = vadd.f32 %v6969, %v6982
        %v6984 = vpop.f32.mrf.mxu0
        %v6985 = vadd.f32 %v6971, %v6984
        %6986 = vdwg.mxu0
        %v6987 = vld [vmem:[#allocation31] sm:$0xff]
        %v6988 = vld [vmem:[#allocation31 + $0x8] sm:$0xff]
        %v6989 = vld [vmem:[#allocation31 + $0x10] sm:$0xff]
        %v6990 = vld [vmem:[#allocation31 + $0x18] sm:$0xff]
        %s6991 = scalar_lea.vmem [#allocation31], 32
        %v6992 = vld [vmem:[%s6991] sm:$0xff]
        %v6993 = vld [vmem:[%s6991 + $0x8] sm:$0xff]
        %v6994 = vld [vmem:[%s6991 + $0x10] sm:$0xff]
        %v6995 = vld [vmem:[%s6991 + $0x18] sm:$0xff]
        %6998 = vrot.lane.b32.xlu0 %v6983, 96
        %v6999 = vpop.permute.xlu0 %6998
        %7000 = vrot.lane.b32.xlu0 %v6985, 96
        %v7001 = vpop.permute.xlu0 %7000
        %v7005 = vsel %vm2667, %v6992, 0
        %v7008 = vsel %vm2667, %v6993, 0
        %v7011 = vsel %vm2667, %v6994, 0
        %v7014 = vsel %vm2667, %v6995, 0
        %7016 = vmatpush.msra.mxu0 0.0
        %7017 = vmatpush.msra.mxu0 0.0
        %7018 = vmatpush.msra.mxu0 0.0
        %7019 = vmatpush.msra.mxu0 0.0
        %7020 = vmatpush.msra.mxu0 0.0
        %7021 = vmatpush.msra.mxu0 0.0
        %7022 = vmatpush.msra.mxu0 0.0
        %7023 = vmatpush.msra.mxu0 0.0
        %7024 = vmatpush.msra.mxu0 0.0
        %7025 = vmatpush.msra.mxu0 0.0
        %7026 = vmatpush.msra.mxu0 0.0
        %7027 = vmatpush.msra.mxu0 0.0
        %7028 = vmatpush.msra.mxu0 0.0
        %7029 = vmatpush.msra.mxu0 0.0
        %7030 = vmatpush.msra.mxu0 %v7001
        %7031 = vmatpush.msra.mxu0 %v6999
        %7032 = vmatmul.f32.gmra.mxu0 %v7005
        %v7033 = vpop.f32.mrf.mxu0
        %v7034 = vadd.f32 0.0, %v7033
        %7035 = vmatmul.f32.gmra.mxu0 %v7008
        %v7036 = vpop.f32.mrf.mxu0
        %v7037 = vadd.f32 0.0, %v7036
        %7038 = vmatmul.f32.gmra.mxu0 %v7011
        %v7039 = vpop.f32.mrf.mxu0
        %v7040 = vadd.f32 0.0, %v7039
        %7041 = vmatmul.f32.gmra.mxu0 %v7014
        %v7042 = vpop.f32.mrf.mxu0
        %v7043 = vadd.f32 0.0, %v7042
        %7044 = vdwg.mxu0
        %v7046 = vsel %vm2667, %v6987, 0
        %v7049 = vsel %vm2667, %v6988, 0
        %v7052 = vsel %vm2667, %v6989, 0
        %v7055 = vsel %vm2667, %v6990, 0
        %7057 = vmatpush.msra.mxu0 0.0
        %7058 = vmatpush.msra.mxu0 0.0
        %7059 = vmatpush.msra.mxu0 0.0
        %7060 = vmatpush.msra.mxu0 0.0
        %7061 = vmatpush.msra.mxu0 0.0
        %7062 = vmatpush.msra.mxu0 0.0
        %7063 = vmatpush.msra.mxu0 0.0
        %7064 = vmatpush.msra.mxu0 0.0
        %7065 = vmatpush.msra.mxu0 0.0
        %7066 = vmatpush.msra.mxu0 0.0
        %7067 = vmatpush.msra.mxu0 0.0
        %7068 = vmatpush.msra.mxu0 0.0
        %7069 = vmatpush.msra.mxu0 0.0
        %7070 = vmatpush.msra.mxu0 0.0
        %7071 = vmatpush.msra.mxu0 %v6985
        %7072 = vmatpush.msra.mxu0 %v6983
        %7073 = vmatmul.f32.gmra.mxu0 %v7046
        %v7074 = vpop.f32.mrf.mxu0
        %v7075 = vadd.f32 %v7034, %v7074
        %7076 = vmatmul.f32.gmra.mxu0 %v7049
        %v7077 = vpop.f32.mrf.mxu0
        %v7078 = vadd.f32 %v7037, %v7077
        %7079 = vmatmul.f32.gmra.mxu0 %v7052
        %v7080 = vpop.f32.mrf.mxu0
        %v7081 = vadd.f32 %v7040, %v7080
        %7082 = vmatmul.f32.gmra.mxu0 %v7055
        %v7083 = vpop.f32.mrf.mxu0
        %v7084 = vadd.f32 %v7043, %v7083
        %7085 = vdwg.mxu0
        %s7086 = scalar_lea.vmem [#allocation31], 64
        %v7087 = vld [vmem:[%s7086] sm:$0xff]
        %v7088 = vld [vmem:[%s7086 + $0x8] sm:$0xff]
        %v7089 = vld [vmem:[%s7086 + $0x10] sm:$0xff]
        %v7090 = vld [vmem:[%s7086 + $0x18] sm:$0xff]
        %7091 = vrot.lane.b32.xlu0 %v6983, 64
        %v7092 = vpop.permute.xlu0 %7091
        %7093 = vrot.lane.b32.xlu0 %v6985, 64
        %v7094 = vpop.permute.xlu0 %7093
        %v7098 = vsel %vm2667, %v7087, 0
        %v7101 = vsel %vm2667, %v7088, 0
        %v7104 = vsel %vm2667, %v7089, 0
        %v7107 = vsel %vm2667, %v7090, 0
        %7109 = vmatpush.msra.mxu0 0.0
        %7110 = vmatpush.msra.mxu0 0.0
        %7111 = vmatpush.msra.mxu0 0.0
        %7112 = vmatpush.msra.mxu0 0.0
        %7113 = vmatpush.msra.mxu0 0.0
        %7114 = vmatpush.msra.mxu0 0.0
        %7115 = vmatpush.msra.mxu0 0.0
        %7116 = vmatpush.msra.mxu0 0.0
        %7117 = vmatpush.msra.mxu0 0.0
        %7118 = vmatpush.msra.mxu0 0.0
        %7119 = vmatpush.msra.mxu0 0.0
        %7120 = vmatpush.msra.mxu0 0.0
        %7121 = vmatpush.msra.mxu0 0.0
        %7122 = vmatpush.msra.mxu0 0.0
        %7123 = vmatpush.msra.mxu0 %v7094
        %7124 = vmatpush.msra.mxu0 %v7092
        %7125 = vmatmul.f32.gmra.mxu0 %v7098
        %v7126 = vpop.f32.mrf.mxu0
        %v7127 = vadd.f32 0.0, %v7126
        %7128 = vmatmul.f32.gmra.mxu0 %v7101
        %v7129 = vpop.f32.mrf.mxu0
        %v7130 = vadd.f32 0.0, %v7129
        %7131 = vmatmul.f32.gmra.mxu0 %v7104
        %v7132 = vpop.f32.mrf.mxu0
        %v7133 = vadd.f32 0.0, %v7132
        %7134 = vmatmul.f32.gmra.mxu0 %v7107
        %v7135 = vpop.f32.mrf.mxu0
        %v7136 = vadd.f32 0.0, %v7135
        %7137 = vdwg.mxu0
        %v7138 = vadd.f32 %v7075, %v7127
        %v7139 = vadd.f32 %v7078, %v7130
        %v7140 = vadd.f32 %v7081, %v7133
        %v7141 = vadd.f32 %v7084, %v7136
        %s7142 = scalar_lea.vmem [#allocation31], 96
        %v7143 = vld [vmem:[%s7142] sm:$0xff]
        %v7144 = vld [vmem:[%s7142 + $0x8] sm:$0xff]
        %v7145 = vld [vmem:[%s7142 + $0x10] sm:$0xff]
        %v7146 = vld [vmem:[%s7142 + $0x18] sm:$0xff]
        %7147 = vrot.lane.b32.xlu0 %v6983, 32
        %v7148 = vpop.permute.xlu0 %7147
        %7149 = vrot.lane.b32.xlu0 %v6985, 32
        %v7150 = vpop.permute.xlu0 %7149
        %v7154 = vsel %vm2667, %v7143, 0
        %v7157 = vsel %vm2667, %v7144, 0
        %v7160 = vsel %vm2667, %v7145, 0
        %v7163 = vsel %vm2667, %v7146, 0
        %7165 = vmatpush.msra.mxu0 0.0
        %7166 = vmatpush.msra.mxu0 0.0
        %7167 = vmatpush.msra.mxu0 0.0
        %7168 = vmatpush.msra.mxu0 0.0
        %7169 = vmatpush.msra.mxu0 0.0
        %7170 = vmatpush.msra.mxu0 0.0
        %7171 = vmatpush.msra.mxu0 0.0
        %7172 = vmatpush.msra.mxu0 0.0
        %7173 = vmatpush.msra.mxu0 0.0
        %7174 = vmatpush.msra.mxu0 0.0
        %7175 = vmatpush.msra.mxu0 0.0
        %7176 = vmatpush.msra.mxu0 0.0
        %7177 = vmatpush.msra.mxu0 0.0
        %7178 = vmatpush.msra.mxu0 0.0
        %7179 = vmatpush.msra.mxu0 %v7150
        %7180 = vmatpush.msra.mxu0 %v7148
        %7181 = vmatmul.f32.gmra.mxu0 %v7154
        %v7182 = vpop.f32.mrf.mxu0
        %v7183 = vadd.f32 0.0, %v7182
        %7184 = vmatmul.f32.gmra.mxu0 %v7157
        %v7185 = vpop.f32.mrf.mxu0
        %v7186 = vadd.f32 0.0, %v7185
        %7187 = vmatmul.f32.gmra.mxu0 %v7160
        %v7188 = vpop.f32.mrf.mxu0
        %v7189 = vadd.f32 0.0, %v7188
        %7190 = vmatmul.f32.gmra.mxu0 %v7163
        %v7191 = vpop.f32.mrf.mxu0
        %v7192 = vadd.f32 0.0, %v7191
        %7193 = vdwg.mxu0
        %v7194 = vadd.f32 %v7138, %v7183
        %v7195 = vadd.f32 %v7139, %v7186
        %v7196 = vadd.f32 %v7140, %v7189
        %v7197 = vadd.f32 %v7141, %v7192
        %v7198 = vld [vmem:[%s26] sm:$0x1]
        %v7200 = vperm.slane %v7198, 0
        %v7202 = vadd.f32 %v7194, %v7200
        %v7203 = vadd.f32 %v7195, %v7200
        %v7204 = vadd.f32 %v7196, %v7200
        %v7205 = vadd.f32 %v7197, %v7200
        %7206 = vst.msk [vmem:[%s1160] sm:$0xff] %vm1270, %v7202
        %7207 = vst.msk [vmem:[%s1160 + $0x8] sm:$0xff] %vm1270, %v7203
        %7208 = vst.msk [vmem:[%s1160 + $0x10] sm:$0xff] %vm1270, %v7204
        %7209 = vst.msk [vmem:[%s1160 + $0x18] sm:$0xff] %vm1270, %v7205
        %s7210 = sand.u32 %s638, 1
        %s7211 = scalar_lea.sflag [#allocation4], %s7210
        %s7212 = sand.u32 %s638, 1
        %s7213 = smul.addr %s7212, 32
        %s7214 = scalar_lea.vmem [#allocation32], %s7213
        %s7215 = sand.u32 %s664, 1
        %s7216 = scalar_lea.sflag [#allocation34], %s7215
        %s7217 = sand.u32 %s664, 1
        %s7218 = scalar_lea.vmem [#allocation33], %s7217
        // Predicated region
        $region205: #{_lambda_.1} parent=127 // pred_check
          %p7219 = pneg %p648
        $region206: #{_lambda_.1} parent=127 // pred_check_branch
          %7221 = sbr.rel (%p7219) target = $region208
        $region207: #{_lambda_.1} parent=127 // pred_region
          %7223 = vsyncadd %s7211, 0
          %s7224 = smul.addr %s58, 4
          %s7225 = smul.addr %s7224, 8
          %s7226 = scalar_lea.hbm %s27, %s7225
          %s7227 = sshll.u32 %s7214, 4
          %s7228 = int_to_ptr.vmem [resolvable:$true] %s7227
          %s7229 = sshll.u32 %s7226, 4
          %s7230 = int_to_ptr.hbm [resolvable:$true] %s7229
          %7235 = dma.vmem_to_hbm [thread:$0]  %s7228, 512, %s7230, %s7211, 128, 128, 8
        $region208: #{_lambda_.1} parent=127 // pred_fallthru
          _
        // Predicated region
        $region209: #{_lambda_.1} parent=127 // pred_check
          %p7236 = pneg %p674
        $region210: #{_lambda_.1} parent=127 // pred_check_branch
          %7238 = sbr.rel (%p7236) target = $region212
        $region211: #{_lambda_.1} parent=127 // pred_region
          %7240 = vsyncadd %s7216, 0
          %s7241 = scalar_lea.hbm %s28, %s58
          %s7243 = sshll.u32 %s7218, 4
          %s7244 = int_to_ptr.vmem [resolvable:$true] %s7243
          %s7245 = sshll.u32 %s7241, 4
          %s7246 = int_to_ptr.hbm [resolvable:$true] %s7245
          %7248 = dma.vmem_to_hbm [thread:$0]  %s7244, 16, %s7246, %s7216
        $region212: #{_lambda_.1} parent=127 // pred_fallthru
          _
      $region128: #{_lambda_.1} parent=5 // pred_fallthru
        _
      %p7249 = scmp.le.s32.totalorder 2, %s53
      // Predicated region
      $region213: #{_lambda_.1} parent=5 // pred_check
        %p7250 = pneg %p7249
      $region214: #{_lambda_.1} parent=5 // pred_check_branch
        %7252 = sbr.rel (%p7250) target = $region216
      $region215: #{_lambda_.1} parent=5 // pred_region
        %s7253 = ssub.s32 %s53, 2
        // Predicated region
        $region217: #{_lambda_.1} parent=215 // pred_check
          %p7254 = pneg %p654
        $region218: #{_lambda_.1} parent=215 // pred_check_branch
          %7256 = sbr.rel (%p7254) target = $region220
        $region219: #{_lambda_.1} parent=215 // pred_region
          %s7257 = sand.u32 %s639, 1
          %s7258 = scalar_lea.sflag [#allocation4], %s7257
          %s7259 = sand.u32 %s639, 1
          %s7260 = smul.addr %s7259, 32
          %s7261 = scalar_lea.vmem [#allocation32], %s7260
          %7263 = dma.done %s7258, 512
        $region220: #{_lambda_.1} parent=215 // pred_fallthru
          _
        // Predicated region
        $region221: #{_lambda_.1} parent=215 // pred_check
          %p7264 = pneg %p680
        $region222: #{_lambda_.1} parent=215 // pred_check_branch
          %7266 = sbr.rel (%p7264) target = $region224
        $region223: #{_lambda_.1} parent=215 // pred_region
          %s7267 = sand.u32 %s665, 1
          %s7268 = scalar_lea.sflag [#allocation34], %s7267
          %s7269 = sand.u32 %s665, 1
          %s7270 = scalar_lea.vmem [#allocation33], %s7269
          %7272 = dma.done %s7268, 16
        $region224: #{_lambda_.1} parent=215 // pred_fallthru
          _
      $region216: #{_lambda_.1} parent=5 // pred_fallthru
        _
    $region6: #{_lambda_.1} parent=1 // loop_footer
      %s57 = sadd.s32 1, %s53
    $region7: #{_lambda_.1} parent=1 // loop_footer_branch
      %52 = sbr.rel target = $region3
    $region8: #{_lambda_.1} parent=1 // loop_exit
      _
    %7273 = vsyncpa [#allocation3], 1
    %s7274 = scalar_lea.sflag [#allocation3], 1
    %7275 = vsyncpa %s7274, 1
    %7276 = vsyncpa [#allocation6], 1
    %7277 = vsyncpa [#allocation9], 1
    %7278 = vsyncpa [#allocation12], 1
    %7279 = vsyncpa [#allocation15], 1
    %7280 = vsyncpa [#allocation18], 1
    %7281 = vsyncpa [#allocation21], 1
    %7282 = vsyncpa [#allocation24], 1
    %7283 = vsyncpa [#allocation27], 1
    %7284 = vsyncpa [#allocation30], 1
    %7285 = vsyncpa [#allocation4], 1
    %s7286 = scalar_lea.sflag [#allocation4], 1
    %7287 = vsyncpa %s7286, 1
    %7288 = vsyncpa [#allocation34], 1
    %s7289 = scalar_lea.sflag [#allocation34], 1
    %7290 = vsyncpa %s7289, 1

</llo_original>
